<compile_context>
chip_gen: v6e
topology: v6e:2x2x1
jax: 0.10.0
libtpu: 0.0.40
codegen_flags: <defaults>
</compile_context>

<pallas_src>
import functools
import math

import jax
import jax.numpy as jnp
from jax.experimental import pallas as pl
from jax.experimental.pallas import tpu as pltpu


# ----------------------------------------------------------------------------
# Fused Pallas kernel (one grid step == one batch element, full forward pass)
# ----------------------------------------------------------------------------
def _rcan_kernel(x_ref, masks_ref, convw_ref, convb_ref,
                 caw_ref, cab1_ref, cab2_ref, mshift_ref,
                 upw_ref, upb_ref, tailw_ref, tailb_ref,
                 o_ref, *, H, W, F, G, R):
    HW = H * W
    f32 = jnp.float32
    bf16 = jnp.bfloat16

    def shift_tap(act, dh, dw):
        # act: (C, HW) f32.  Returns (C, HW) bf16 with
        #   out[:, h*W+w] = act[:, (h+dh)*W + (w+dw)]   (0 outside the image).
        # Lane rotate -> XLU slot; border-mask multiply -> VPU; cast -> bf16.
        if dh == 0 and dw == 0:
            return act.astype(bf16)
        off = dh * W + dw
        shifted = pltpu.roll(act, (-off) % HW, 1)
        return (shifted * masks_ref[(dh + 1) * 3 + (dw + 1)]).astype(bf16)

    def conv3x3(act, w, b):
        # 'same' 3x3 conv as one (Cout, 9F) @ (9F, HW) MXU matmul.
        # Patch blocks are stacked along sublanes (F=16 rows each -> aligned),
        # so no lane-axis relayout is needed.
        taps = [shift_tap(act, dh, dw) for dh in (-1, 0, 1) for dw in (-1, 0, 1)]
        patches = jnp.concatenate(taps, axis=0)                  # (9F, HW) bf16
        return jnp.dot(w, patches, preferred_element_type=f32) + b

    # ---- sub_mean (folded per-channel affine) + head conv -------------------
    x = x_ref[0].astype(f32)                                     # (F, HW)
    x = x * mshift_ref[0] + mshift_ref[1]
    ci = 0
    head = conv3x3(x, convw_ref[ci], convb_ref[ci]); ci += 1

    # ---- body: residual groups of RCABs -------------------------------------
    # TODO(synk): for production depths (n_resgroups*n_resblocks >> 4) move the
    # group/block loops onto an "arbitrary" grid axis with a VMEM carry instead
    # of unrolling them at trace time.
    res = head
    for g in range(G):
        gx = res
        for r in range(R):
            h1 = jnp.maximum(conv3x3(gx, convw_ref[ci], convb_ref[ci]), 0.0); ci += 1
            h2 = conv3x3(h1, convw_ref[ci], convb_ref[ci]); ci += 1
            # Channel attention (global avg pool -> squeeze/excite -> gate),
            # done on VPU/XLU (no M=1 MXU matmuls), fused with the residual add.
            pooled = jnp.sum(h2, axis=1, keepdims=True) * (1.0 / HW)        # (F,1)
            y = jnp.sum(caw_ref[g, r, 0] * pooled, axis=0, keepdims=True)   # (1,R4)
            y = jnp.maximum(y + cab1_ref[g, r], 0.0)
            glog = jnp.sum(caw_ref[g, r, 1] * y, axis=1, keepdims=True)     # (F,1)
            gate = jax.nn.sigmoid(glog + cab2_ref[g, r])
            gx = h2 * gate + gx
        res = conv3x3(gx, convw_ref[ci], convb_ref[ci]) + res; ci += 1

    res = conv3x3(res, convw_ref[ci], convb_ref[ci]) + head; ci += 1

    # ---- tail: upsampler conv (F -> 4F) + fused PixelShuffle + tail conv ----
    up = conv3x3(res, upw_ref[...], upb_ref[...])     # (4F, HW), phase-major rows
    tw = tailw_ref[...]                               # (n_colors, 9F) bf16
    tb = tailb_ref[...]                               # (n_colors, 1)  f32
    # Sub-pixel decomposition of (PixelShuffle(2) -> zero-pad -> 3x3 conv):
    # each output phase (i, j) and tap (dy, dx) maps to a static spatial shift
    # of one contiguous phase block of the un-shuffled upsampler output.
    for i in range(2):
        for j in range(2):
            taps = []
            for dy in range(3):
                a, ip = divmod(i + dy - 1, 2)          # LR row offset / phase
                for dx in range(3):
                    bo, jp = divmod(j + dx - 1, 2)     # LR col offset / phase
                    p = ip * 2 + jp
                    taps.append(shift_tap(up[p * F:(p + 1) * F, :], a, bo))
            patches = jnp.concatenate(taps, axis=0)               # (9F, HW) bf16
            o_phase = jnp.dot(tw, patches, preferred_element_type=f32) + tb
            o_ref[0, i * 2 + j] = o_phase.astype(o_ref.dtype)     # (3, HW) lane-dense


# ----------------------------------------------------------------------------
# Parameter init (deterministic, synthetic) — PyTorch-like per-layer params
# ----------------------------------------------------------------------------
def init_params(key, n_colors=3, n_feats=16, n_resgroups=2, n_resblocks=2,
                reduction=4, scale=2):
    keys = iter(jax.random.split(key, 256))

    def conv_p(cin, cout, k=3):
        w = jax.random.normal(next(keys), (k, k, cin, cout), jnp.float32) \
            * (1.0 / math.sqrt(k * k * cin))
        b = jax.random.normal(next(keys), (cout,), jnp.float32) * 0.01
        return w, b

    params = {}
    params["head_w"], params["head_b"] = conv_p(n_colors, n_feats)

    groups = []
    for _ in range(n_resgroups):
        blocks = []
        for _ in range(n_resblocks):
            w1, b1 = conv_p(n_feats, n_feats)
            w2, b2 = conv_p(n_feats, n_feats)
            ca_w1 = jax.random.normal(next(keys), (n_feats, n_feats // reduction),
                                      jnp.float32) * (1.0 / math.sqrt(n_feats))
            ca_b1 = jax.random.normal(next(keys), (n_feats // reduction,),
                                      jnp.float32) * 0.01
            ca_w2 = jax.random.normal(next(keys), (n_feats // reduction, n_feats),
                                      jnp.float32) * (1.0 / math.sqrt(n_feats // reduction))
            ca_b2 = jax.random.normal(next(keys), (n_feats,), jnp.float32) * 0.01
            blocks.append(dict(w1=w1, b1=b1, w2=w2, b2=b2,
                               ca_w1=ca_w1, ca_b1=ca_b1, ca_w2=ca_w2, ca_b2=ca_b2))
        gw, gb = conv_p(n_feats, n_feats)
        groups.append(dict(blocks=blocks, w=gw, b=gb))
    params["groups"] = groups

    params["body_w"], params["body_b"] = conv_p(n_feats, n_feats)

    ups = []
    for _ in range(int(math.log2(scale))):
        uw, ub = conv_p(n_feats, 4 * n_feats)
        ups.append(dict(w=uw, b=ub))
    params["upsampler"] = ups

    params["tail_w"], params["tail_b"] = conv_p(n_feats, n_colors)
    return params


# ----------------------------------------------------------------------------
# One-time parameter preparation: folds / transposes / packing for the kernel
# ----------------------------------------------------------------------------
def prepare_params(params, rgb_range=1.0):
    F = int(params["head_b"].shape[0])
    n_colors = int(params["head_w"].shape[2])
    rgb_mean = jnp.array([0.4488, 0.4371, 0.4040], jnp.float32)
    rgb_std = jnp.ones((n_colors,), jnp.float32)

    def wt(w):   # HWIO (3,3,cin,cout) -> MXU-transposed (cout, 9*cin)
        kh, kw, cin, cout = w.shape
        return jnp.transpose(w.reshape(kh * kw * cin, cout)).astype(jnp.float32)

    def colv(b):  # bias -> (cout, 1) column (broadcasts over the HW lane axis)
        return b.reshape(-1, 1).astype(jnp.float32)

    # sub_mean as a per-channel affine on the zero-extended (F, HW) input.
    sub_s = jnp.concatenate([1.0 / rgb_std, jnp.zeros((F - n_colors,), jnp.float32)])
    sub_b = jnp.concatenate([-rgb_range * rgb_mean / rgb_std,
                             jnp.zeros((F - n_colors,), jnp.float32)])
    mshift = jnp.stack([sub_s.reshape(F, 1), sub_b.reshape(F, 1)])       # (2, F, 1)

    # Pack every F->F conv (head + RCAB convs + group tails + body) into one
    # stacked bf16 weight operand and one f32 bias operand, in traversal order.
    conv_ws, conv_bs = [], []
    head_w = jnp.pad(params["head_w"], ((0, 0), (0, 0), (0, F - n_colors), (0, 0)))
    conv_ws.append(wt(head_w)); conv_bs.append(colv(params["head_b"]))
    caw_l, cab1_l, cab2_l = [], [], []
    for g in params["groups"]:
        cg, c1g, c2g = [], [], []
        for blk in g["blocks"]:
            conv_ws.append(wt(blk["w1"])); conv_bs.append(colv(blk["b1"]))
            conv_ws.append(wt(blk["w2"])); conv_bs.append(colv(blk["b2"]))
            cg.append(jnp.stack([blk["ca_w1"].astype(jnp.float32),
                                 jnp.transpose(blk["ca_w2"]).astype(jnp.float32)]))
            c1g.append(blk["ca_b1"].reshape(1, -1).astype(jnp.float32))
            c2g.append(blk["ca_b2"].reshape(-1, 1).astype(jnp.float32))
        conv_ws.append(wt(g["w"])); conv_bs.append(colv(g["b"]))
        caw_l.append(jnp.stack(cg)); cab1_l.append(jnp.stack(c1g)); cab2_l.append(jnp.stack(c2g))
    conv_ws.append(wt(params["body_w"])); conv_bs.append(colv(params["body_b"]))

    convw = jnp.stack(conv_ws).astype(jnp.bfloat16)   # (N_CONV, F, 9F)
    convb = jnp.stack(conv_bs)                        # (N_CONV, F, 1)
    caw = jnp.stack(caw_l)                            # (G, R, 2, F, F//red)
    cab1 = jnp.stack(cab1_l)                          # (G, R, 1, F//red)
    cab2 = jnp.stack(cab2_l)                          # (G, R, F, 1)

    # Upsampler (scale=2 -> one stage): permute output channels so each
    # PixelShuffle phase (i, j) is a contiguous block of F rows:
    # new channel (i*2+j)*F + c  <-  original channel c*4 + (i*2+j).
    # TODO(synk): generalize the fused upsampler to scale=4 / scale=3 stages.
    assert len(params["upsampler"]) == 1, "fused kernel implements scale=2"
    uw, ub = params["upsampler"][0]["w"], params["upsampler"][0]["b"]
    perm = (4 * jnp.arange(F)[None, :] + jnp.arange(4)[:, None]).reshape(-1)
    up_w = wt(uw[:, :, :, perm]).astype(jnp.bfloat16)                    # (4F, 9F)
    up_b = ub[perm].reshape(-1, 1).astype(jnp.float32)                   # (4F, 1)

    # Tail conv with add_mean folded in exactly (post-conv per-channel affine).
    tail_w = (wt(params["tail_w"]) / rgb_std[:, None]).astype(jnp.bfloat16)   # (3, 9F)
    tail_b = (params["tail_b"] / rgb_std
              + rgb_range * rgb_mean / rgb_std).reshape(-1, 1).astype(jnp.float32)

    return (convw, convb, caw, cab1, cab2, mshift, up_w, up_b, tail_w, tail_b)


# ----------------------------------------------------------------------------
# Forward wrapper (NCHW in / NCHW out)
# ----------------------------------------------------------------------------
def rcan_forward(prepped, x_nchw):
    (convw, convb, caw, cab1, cab2, mshift, up_w, up_b, tail_w, tail_b) = prepped

    B, C, H, W = x_nchw.shape
    F = convw.shape[1]
    G, R = caw.shape[0], caw.shape[1]
    n_colors = tail_b.shape[0]
    HW = H * W

    # Lane-dense input slab: NCHW -> (B, F, H*W) with channels zero-extended.
    x = x_nchw.reshape(B, C, HW)
    x = jnp.pad(x, ((0, 0), (0, F - C), (0, 0)))

    # Per-tap border-validity masks (constants), shape (9, 1, HW), index
    # (dh+1)*3 + (dw+1):  1 where pixel (h+dh, w+dw) is inside the image.
    hh = jnp.arange(H).reshape(H, 1)
    ww = jnp.arange(W).reshape(1, W)
    masks = jnp.stack(
        [((hh + dh >= 0) & (hh + dh < H) & (ww + dw >= 0) & (ww + dw < W))
         .astype(jnp.float32).reshape(1, HW)
         for dh in (-1, 0, 1) for dw in (-1, 0, 1)], axis=0)             # (9,1,HW)

    weights = (masks, convw, convb, caw, cab1, cab2, mshift,
               up_w, up_b, tail_w, tail_b)

    def const_spec(a):
        nd = a.ndim
        return pl.BlockSpec(a.shape, lambda i, _n=nd: (0,) * _n)

    out = pl.pallas_call(
        functools.partial(_rcan_kernel, H=H, W=W, F=F, G=G, R=R),
        out_shape=jax.ShapeDtypeStruct((B, 4, n_colors, HW), x_nchw.dtype),
        grid=(B,),
        in_specs=[pl.BlockSpec((1, F, HW), lambda i: (i, 0, 0))]
                 + [const_spec(a) for a in weights],
        out_specs=pl.BlockSpec((1, 4, n_colors, HW), lambda i: (i, 0, 0, 0)),
        compiler_params=pltpu.CompilerParams(
            dimension_semantics=("parallel",),
            vmem_limit_bytes=32 * 1024 * 1024),
    )(x, *weights)

    # Re-interleave the 4 sub-pixel phases (tiny output-only rearrange), NCHW out.
    out = out.reshape(B, 2, 2, n_colors, H, W)
    out = jnp.transpose(out, (0, 3, 4, 1, 5, 2)).reshape(B, n_colors, 2 * H, 2 * W)
    return out


# ----------------------------------------------------------------------------
if __name__ == "__main__":
    root = jax.random.PRNGKey(0)
    k_params, k_input = jax.random.split(root)

    params = init_params(k_params, n_colors=3, n_feats=16, n_resgroups=2,
                         n_resblocks=2, reduction=4, scale=2)
    prepped = prepare_params(params, rgb_range=1.0)

    # NCHW input, rgb_range = 1.0
    x = jax.random.uniform(k_input, (2, 3, 16, 16), jnp.float32)

    fwd = jax.jit(rcan_forward)
    y = fwd(prepped, x)
    y = jax.block_until_ready(y)

    assert y.shape == (2, 3, 32, 32), y.shape
    assert bool(jnp.all(jnp.isfinite(y)))
    print("KERNEL_OK")
</pallas_src>

<mosaic_0001>
module attributes {stable_mosaic.version = 11 : i64} {
  func.func @_rcan_kernel(%arg0: i32, %arg1: memref<1x16x256xf32, #tpu.memory_space<vmem>>, %arg2: memref<9x1x256xf32, #tpu.memory_space<vmem>>, %arg3: memref<12x16x144xbf16, #tpu.memory_space<vmem>>, %arg4: memref<12x16x1xf32, #tpu.memory_space<vmem>>, %arg5: memref<2x2x2x16x4xf32, #tpu.memory_space<vmem>>, %arg6: memref<2x2x1x4xf32, #tpu.memory_space<vmem>>, %arg7: memref<2x2x16x1xf32, #tpu.memory_space<vmem>>, %arg8: memref<2x16x1xf32, #tpu.memory_space<vmem>>, %arg9: memref<64x144xbf16, #tpu.memory_space<vmem>>, %arg10: memref<64x1xf32, #tpu.memory_space<vmem>>, %arg11: memref<3x144xbf16, #tpu.memory_space<vmem>>, %arg12: memref<3x1xf32, #tpu.memory_space<vmem>>, %arg13: memref<1x4x3x256xf32, #tpu.memory_space<vmem>>) attributes {dimension_semantics = [#tpu.dimension_semantics<parallel>], iteration_bounds = array<i64: 2>, scalar_prefetch = 0 : i64, scratch_operands = 0 : i64, tpu.core_type = #tpu.core_type<tc>, window_params = [{transform_indices = @transform_0, window_bounds = array<i64: 1, 16, 256>}, {pipeline_mode = #tpu.pipeline_mode<synchronous>, transform_indices = @transform_1, window_bounds = array<i64: 9, 1, 256>}, {pipeline_mode = #tpu.pipeline_mode<synchronous>, transform_indices = @transform_2, window_bounds = array<i64: 12, 16, 144>}, {pipeline_mode = #tpu.pipeline_mode<synchronous>, transform_indices = @transform_3, window_bounds = array<i64: 12, 16, 1>}, {pipeline_mode = #tpu.pipeline_mode<synchronous>, transform_indices = @transform_4, window_bounds = array<i64: 2, 2, 2, 16, 4>}, {pipeline_mode = #tpu.pipeline_mode<synchronous>, transform_indices = @transform_5, window_bounds = array<i64: 2, 2, 1, 4>}, {pipeline_mode = #tpu.pipeline_mode<synchronous>, transform_indices = @transform_6, window_bounds = array<i64: 2, 2, 16, 1>}, {pipeline_mode = #tpu.pipeline_mode<synchronous>, transform_indices = @transform_7, window_bounds = array<i64: 2, 16, 1>}, {pipeline_mode = #tpu.pipeline_mode<synchronous>, transform_indices = @transform_8, window_bounds = array<i64: 64, 144>}, {pipeline_mode = #tpu.pipeline_mode<synchronous>, transform_indices = @transform_9, window_bounds = array<i64: 64, 1>}, {pipeline_mode = #tpu.pipeline_mode<synchronous>, transform_indices = @transform_10, window_bounds = array<i64: 3, 144>}, {pipeline_mode = #tpu.pipeline_mode<synchronous>, transform_indices = @transform_11, window_bounds = array<i64: 3, 1>}, {transform_indices = @transform_12, window_bounds = array<i64: 1, 4, 3, 256>}]} {
    %c0 = arith.constant 0 : index
    %c0_0 = arith.constant 0 : index
    %c0_1 = arith.constant 0 : index
    %0 = vector.load %arg1[%c0, %c0_0, %c0_1] : memref<1x16x256xf32, #tpu.memory_space<vmem>>, vector<1x16x256xf32>
    %1 = vector.shape_cast %0 : vector<1x16x256xf32> to vector<16x256xf32>
    %c0_2 = arith.constant 0 : index
    %c0_3 = arith.constant 0 : index
    %c0_4 = arith.constant 0 : index
    %2 = vector.load %arg8[%c0_2, %c0_3, %c0_4] : memref<2x16x1xf32, #tpu.memory_space<vmem>>, vector<1x16x1xf32>
    %3 = vector.shape_cast %2 : vector<1x16x1xf32> to vector<16x1xf32>
    %4 = vector.broadcast %3 : vector<16x1xf32> to vector<16x256xf32>
    %5 = arith.mulf %1, %4 : vector<16x256xf32>
    %c1 = arith.constant 1 : index
    %c0_5 = arith.constant 0 : index
    %c0_6 = arith.constant 0 : index
    %6 = vector.load %arg8[%c1, %c0_5, %c0_6] : memref<2x16x1xf32, #tpu.memory_space<vmem>>, vector<1x16x1xf32>
    %7 = vector.shape_cast %6 : vector<1x16x1xf32> to vector<16x1xf32>
    %8 = vector.broadcast %7 : vector<16x1xf32> to vector<16x256xf32>
    %9 = arith.addf %5, %8 : vector<16x256xf32>
    %c0_7 = arith.constant 0 : index
    %c0_8 = arith.constant 0 : index
    %c0_9 = arith.constant 0 : index
    %10 = vector.load %arg3[%c0_7, %c0_8, %c0_9] : memref<12x16x144xbf16, #tpu.memory_space<vmem>>, vector<1x16x144xbf16>
    %11 = vector.shape_cast %10 : vector<1x16x144xbf16> to vector<16x144xbf16>
    %c0_10 = arith.constant 0 : index
    %c0_11 = arith.constant 0 : index
    %c0_12 = arith.constant 0 : index
    %12 = vector.load %arg4[%c0_10, %c0_11, %c0_12] : memref<12x16x1xf32, #tpu.memory_space<vmem>>, vector<1x16x1xf32>
    %13 = vector.shape_cast %12 : vector<1x16x1xf32> to vector<16x1xf32>
    %c17_i32 = arith.constant 17 : i32
    %14 = tpu.dynamic_rotate %9 by %c17_i32 dim 1 : vector<16x256xf32>, i32 -> vector<16x256xf32>
    %c0_13 = arith.constant 0 : index
    %c0_14 = arith.constant 0 : index
    %c0_15 = arith.constant 0 : index
    %15 = vector.load %arg2[%c0_13, %c0_14, %c0_15] : memref<9x1x256xf32, #tpu.memory_space<vmem>>, vector<1x1x256xf32>
    %16 = vector.shape_cast %15 : vector<1x1x256xf32> to vector<1x256xf32>
    %17 = vector.broadcast %16 : vector<1x256xf32> to vector<16x256xf32>
    %18 = arith.mulf %14, %17 : vector<16x256xf32>
    %19 = arith.truncf %18 : vector<16x256xf32> to vector<16x256xbf16>
    %c16_i32 = arith.constant 16 : i32
    %20 = tpu.dynamic_rotate %9 by %c16_i32 dim 1 : vector<16x256xf32>, i32 -> vector<16x256xf32>
    %c1_16 = arith.constant 1 : index
    %c0_17 = arith.constant 0 : index
    %c0_18 = arith.constant 0 : index
    %21 = vector.load %arg2[%c1_16, %c0_17, %c0_18] : memref<9x1x256xf32, #tpu.memory_space<vmem>>, vector<1x1x256xf32>
    %22 = vector.shape_cast %21 : vector<1x1x256xf32> to vector<1x256xf32>
    %23 = vector.broadcast %22 : vector<1x256xf32> to vector<16x256xf32>
    %24 = arith.mulf %20, %23 : vector<16x256xf32>
    %25 = arith.truncf %24 : vector<16x256xf32> to vector<16x256xbf16>
    %c15_i32 = arith.constant 15 : i32
    %26 = tpu.dynamic_rotate %9 by %c15_i32 dim 1 : vector<16x256xf32>, i32 -> vector<16x256xf32>
    %c2 = arith.constant 2 : index
    %c0_19 = arith.constant 0 : index
    %c0_20 = arith.constant 0 : index
    %27 = vector.load %arg2[%c2, %c0_19, %c0_20] : memref<9x1x256xf32, #tpu.memory_space<vmem>>, vector<1x1x256xf32>
    %28 = vector.shape_cast %27 : vector<1x1x256xf32> to vector<1x256xf32>
    %29 = vector.broadcast %28 : vector<1x256xf32> to vector<16x256xf32>
    %30 = arith.mulf %26, %29 : vector<16x256xf32>
    %31 = arith.truncf %30 : vector<16x256xf32> to vector<16x256xbf16>
    %c1_i32 = arith.constant 1 : i32
    %32 = tpu.dynamic_rotate %9 by %c1_i32 dim 1 : vector<16x256xf32>, i32 -> vector<16x256xf32>
    %c3 = arith.constant 3 : index
    %c0_21 = arith.constant 0 : index
    %c0_22 = arith.constant 0 : index
    %33 = vector.load %arg2[%c3, %c0_21, %c0_22] : memref<9x1x256xf32, #tpu.memory_space<vmem>>, vector<1x1x256xf32>
    %34 = vector.shape_cast %33 : vector<1x1x256xf32> to vector<1x256xf32>
    %35 = vector.broadcast %34 : vector<1x256xf32> to vector<16x256xf32>
    %36 = arith.mulf %32, %35 : vector<16x256xf32>
    %37 = arith.truncf %36 : vector<16x256xf32> to vector<16x256xbf16>
    %38 = arith.truncf %9 : vector<16x256xf32> to vector<16x256xbf16>
    %c255_i32 = arith.constant 255 : i32
    %39 = tpu.dynamic_rotate %9 by %c255_i32 dim 1 : vector<16x256xf32>, i32 -> vector<16x256xf32>
    %c5 = arith.constant 5 : index
    %c0_23 = arith.constant 0 : index
    %c0_24 = arith.constant 0 : index
    %40 = vector.load %arg2[%c5, %c0_23, %c0_24] : memref<9x1x256xf32, #tpu.memory_space<vmem>>, vector<1x1x256xf32>
    %41 = vector.shape_cast %40 : vector<1x1x256xf32> to vector<1x256xf32>
    %42 = vector.broadcast %41 : vector<1x256xf32> to vector<16x256xf32>
    %43 = arith.mulf %39, %42 : vector<16x256xf32>
    %44 = arith.truncf %43 : vector<16x256xf32> to vector<16x256xbf16>
    %c241_i32 = arith.constant 241 : i32
    %45 = tpu.dynamic_rotate %9 by %c241_i32 dim 1 : vector<16x256xf32>, i32 -> vector<16x256xf32>
    %c6 = arith.constant 6 : index
    %c0_25 = arith.constant 0 : index
    %c0_26 = arith.constant 0 : index
    %46 = vector.load %arg2[%c6, %c0_25, %c0_26] : memref<9x1x256xf32, #tpu.memory_space<vmem>>, vector<1x1x256xf32>
    %47 = vector.shape_cast %46 : vector<1x1x256xf32> to vector<1x256xf32>
    %48 = vector.broadcast %47 : vector<1x256xf32> to vector<16x256xf32>
    %49 = arith.mulf %45, %48 : vector<16x256xf32>
    %50 = arith.truncf %49 : vector<16x256xf32> to vector<16x256xbf16>
    %c240_i32 = arith.constant 240 : i32
    %51 = tpu.dynamic_rotate %9 by %c240_i32 dim 1 : vector<16x256xf32>, i32 -> vector<16x256xf32>
    %c7 = arith.constant 7 : index
    %c0_27 = arith.constant 0 : index
    %c0_28 = arith.constant 0 : index
    %52 = vector.load %arg2[%c7, %c0_27, %c0_28] : memref<9x1x256xf32, #tpu.memory_space<vmem>>, vector<1x1x256xf32>
    %53 = vector.shape_cast %52 : vector<1x1x256xf32> to vector<1x256xf32>
    %54 = vector.broadcast %53 : vector<1x256xf32> to vector<16x256xf32>
    %55 = arith.mulf %51, %54 : vector<16x256xf32>
    %56 = arith.truncf %55 : vector<16x256xf32> to vector<16x256xbf16>
    %c239_i32 = arith.constant 239 : i32
    %57 = tpu.dynamic_rotate %9 by %c239_i32 dim 1 : vector<16x256xf32>, i32 -> vector<16x256xf32>
    %c8 = arith.constant 8 : index
    %c0_29 = arith.constant 0 : index
    %c0_30 = arith.constant 0 : index
    %58 = vector.load %arg2[%c8, %c0_29, %c0_30] : memref<9x1x256xf32, #tpu.memory_space<vmem>>, vector<1x1x256xf32>
    %59 = vector.shape_cast %58 : vector<1x1x256xf32> to vector<1x256xf32>
    %60 = vector.broadcast %59 : vector<1x256xf32> to vector<16x256xf32>
    %61 = arith.mulf %57, %60 : vector<16x256xf32>
    %62 = arith.truncf %61 : vector<16x256xf32> to vector<16x256xbf16>
    %63 = tpu.concatenate %19, %25, %31, %37, %38, %44, %50, %56, %62 in 0 : vector<16x256xbf16>, vector<16x256xbf16>, vector<16x256xbf16>, vector<16x256xbf16>, vector<16x256xbf16>, vector<16x256xbf16>, vector<16x256xbf16>, vector<16x256xbf16>, vector<16x256xbf16> -> vector<144x256xbf16>
    %cst = arith.constant dense<0.000000e+00> : vector<16x256xf32>
    %64 = tpu.matmul %11, %63, %cst {dimension_numbers = #tpu.dot_dimension_numbers<[1], [0], [0], [1], [0, 0, 1, 1], [], []>} : vector<16x144xbf16>, vector<144x256xbf16>, vector<16x256xf32> -> vector<16x256xf32>
    %65 = vector.broadcast %13 : vector<16x1xf32> to vector<16x256xf32>
    %66 = arith.addf %64, %65 : vector<16x256xf32>
    %c1_31 = arith.constant 1 : index
    %c0_32 = arith.constant 0 : index
    %c0_33 = arith.constant 0 : index
    %67 = vector.load %arg3[%c1_31, %c0_32, %c0_33] : memref<12x16x144xbf16, #tpu.memory_space<vmem>>, vector<1x16x144xbf16>
    %68 = vector.shape_cast %67 : vector<1x16x144xbf16> to vector<16x144xbf16>
    %c1_34 = arith.constant 1 : index
    %c0_35 = arith.constant 0 : index
    %c0_36 = arith.constant 0 : index
    %69 = vector.load %arg4[%c1_34, %c0_35, %c0_36] : memref<12x16x1xf32, #tpu.memory_space<vmem>>, vector<1x16x1xf32>
    %70 = vector.shape_cast %69 : vector<1x16x1xf32> to vector<16x1xf32>
    %c17_i32_37 = arith.constant 17 : i32
    %71 = tpu.dynamic_rotate %66 by %c17_i32_37 dim 1 : vector<16x256xf32>, i32 -> vector<16x256xf32>
    %c0_38 = arith.constant 0 : index
    %c0_39 = arith.constant 0 : index
    %c0_40 = arith.constant 0 : index
    %72 = vector.load %arg2[%c0_38, %c0_39, %c0_40] : memref<9x1x256xf32, #tpu.memory_space<vmem>>, vector<1x1x256xf32>
    %73 = vector.shape_cast %72 : vector<1x1x256xf32> to vector<1x256xf32>
    %74 = vector.broadcast %73 : vector<1x256xf32> to vector<16x256xf32>
    %75 = arith.mulf %71, %74 : vector<16x256xf32>
    %76 = arith.truncf %75 : vector<16x256xf32> to vector<16x256xbf16>
    %c16_i32_41 = arith.constant 16 : i32
    %77 = tpu.dynamic_rotate %66 by %c16_i32_41 dim 1 : vector<16x256xf32>, i32 -> vector<16x256xf32>
    %c1_42 = arith.constant 1 : index
    %c0_43 = arith.constant 0 : index
    %c0_44 = arith.constant 0 : index
    %78 = vector.load %arg2[%c1_42, %c0_43, %c0_44] : memref<9x1x256xf32, #tpu.memory_space<vmem>>, vector<1x1x256xf32>
    %79 = vector.shape_cast %78 : vector<1x1x256xf32> to vector<1x256xf32>
    %80 = vector.broadcast %79 : vector<1x256xf32> to vector<16x256xf32>
    %81 = arith.mulf %77, %80 : vector<16x256xf32>
    %82 = arith.truncf %81 : vector<16x256xf32> to vector<16x256xbf16>
    %c15_i32_45 = arith.constant 15 : i32
    %83 = tpu.dynamic_rotate %66 by %c15_i32_45 dim 1 : vector<16x256xf32>, i32 -> vector<16x256xf32>
    %c2_46 = arith.constant 2 : index
    %c0_47 = arith.constant 0 : index
    %c0_48 = arith.constant 0 : index
    %84 = vector.load %arg2[%c2_46, %c0_47, %c0_48] : memref<9x1x256xf32, #tpu.memory_space<vmem>>, vector<1x1x256xf32>
    %85 = vector.shape_cast %84 : vector<1x1x256xf32> to vector<1x256xf32>
    %86 = vector.broadcast %85 : vector<1x256xf32> to vector<16x256xf32>
    %87 = arith.mulf %83, %86 : vector<16x256xf32>
    %88 = arith.truncf %87 : vector<16x256xf32> to vector<16x256xbf16>
    %c1_i32_49 = arith.constant 1 : i32
    %89 = tpu.dynamic_rotate %66 by %c1_i32_49 dim 1 : vector<16x256xf32>, i32 -> vector<16x256xf32>
    %c3_50 = arith.constant 3 : index
    %c0_51 = arith.constant 0 : index
    %c0_52 = arith.constant 0 : index
    %90 = vector.load %arg2[%c3_50, %c0_51, %c0_52] : memref<9x1x256xf32, #tpu.memory_space<vmem>>, vector<1x1x256xf32>
    %91 = vector.shape_cast %90 : vector<1x1x256xf32> to vector<1x256xf32>
    %92 = vector.broadcast %91 : vector<1x256xf32> to vector<16x256xf32>
    %93 = arith.mulf %89, %92 : vector<16x256xf32>
    %94 = arith.truncf %93 : vector<16x256xf32> to vector<16x256xbf16>
    %95 = arith.truncf %66 : vector<16x256xf32> to vector<16x256xbf16>
    %c255_i32_53 = arith.constant 255 : i32
    %96 = tpu.dynamic_rotate %66 by %c255_i32_53 dim 1 : vector<16x256xf32>, i32 -> vector<16x256xf32>
    %c5_54 = arith.constant 5 : index
    %c0_55 = arith.constant 0 : index
    %c0_56 = arith.constant 0 : index
    %97 = vector.load %arg2[%c5_54, %c0_55, %c0_56] : memref<9x1x256xf32, #tpu.memory_space<vmem>>, vector<1x1x256xf32>
    %98 = vector.shape_cast %97 : vector<1x1x256xf32> to vector<1x256xf32>
    %99 = vector.broadcast %98 : vector<1x256xf32> to vector<16x256xf32>
    %100 = arith.mulf %96, %99 : vector<16x256xf32>
    %101 = arith.truncf %100 : vector<16x256xf32> to vector<16x256xbf16>
    %c241_i32_57 = arith.constant 241 : i32
    %102 = tpu.dynamic_rotate %66 by %c241_i32_57 dim 1 : vector<16x256xf32>, i32 -> vector<16x256xf32>
    %c6_58 = arith.constant 6 : index
    %c0_59 = arith.constant 0 : index
    %c0_60 = arith.constant 0 : index
    %103 = vector.load %arg2[%c6_58, %c0_59, %c0_60] : memref<9x1x256xf32, #tpu.memory_space<vmem>>, vector<1x1x256xf32>
    %104 = vector.shape_cast %103 : vector<1x1x256xf32> to vector<1x256xf32>
    %105 = vector.broadcast %104 : vector<1x256xf32> to vector<16x256xf32>
    %106 = arith.mulf %102, %105 : vector<16x256xf32>
    %107 = arith.truncf %106 : vector<16x256xf32> to vector<16x256xbf16>
    %c240_i32_61 = arith.constant 240 : i32
    %108 = tpu.dynamic_rotate %66 by %c240_i32_61 dim 1 : vector<16x256xf32>, i32 -> vector<16x256xf32>
    %c7_62 = arith.constant 7 : index
    %c0_63 = arith.constant 0 : index
    %c0_64 = arith.constant 0 : index
    %109 = vector.load %arg2[%c7_62, %c0_63, %c0_64] : memref<9x1x256xf32, #tpu.memory_space<vmem>>, vector<1x1x256xf32>
    %110 = vector.shape_cast %109 : vector<1x1x256xf32> to vector<1x256xf32>
    %111 = vector.broadcast %110 : vector<1x256xf32> to vector<16x256xf32>
    %112 = arith.mulf %108, %111 : vector<16x256xf32>
    %113 = arith.truncf %112 : vector<16x256xf32> to vector<16x256xbf16>
    %c239_i32_65 = arith.constant 239 : i32
    %114 = tpu.dynamic_rotate %66 by %c239_i32_65 dim 1 : vector<16x256xf32>, i32 -> vector<16x256xf32>
    %c8_66 = arith.constant 8 : index
    %c0_67 = arith.constant 0 : index
    %c0_68 = arith.constant 0 : index
    %115 = vector.load %arg2[%c8_66, %c0_67, %c0_68] : memref<9x1x256xf32, #tpu.memory_space<vmem>>, vector<1x1x256xf32>
    %116 = vector.shape_cast %115 : vector<1x1x256xf32> to vector<1x256xf32>
    %117 = vector.broadcast %116 : vector<1x256xf32> to vector<16x256xf32>
    %118 = arith.mulf %114, %117 : vector<16x256xf32>
    %119 = arith.truncf %118 : vector<16x256xf32> to vector<16x256xbf16>
    %120 = tpu.concatenate %76, %82, %88, %94, %95, %101, %107, %113, %119 in 0 : vector<16x256xbf16>, vector<16x256xbf16>, vector<16x256xbf16>, vector<16x256xbf16>, vector<16x256xbf16>, vector<16x256xbf16>, vector<16x256xbf16>, vector<16x256xbf16>, vector<16x256xbf16> -> vector<144x256xbf16>
    %cst_69 = arith.constant dense<0.000000e+00> : vector<16x256xf32>
    %121 = tpu.matmul %68, %120, %cst_69 {dimension_numbers = #tpu.dot_dimension_numbers<[1], [0], [0], [1], [0, 0, 1, 1], [], []>} : vector<16x144xbf16>, vector<144x256xbf16>, vector<16x256xf32> -> vector<16x256xf32>
    %122 = vector.broadcast %70 : vector<16x1xf32> to vector<16x256xf32>
    %123 = arith.addf %121, %122 : vector<16x256xf32>
    %cst_70 = arith.constant 0.000000e+00 : f32
    %124 = vector.broadcast %cst_70 : f32 to vector<16x256xf32>
    %125 = arith.maximumf %123, %124 : vector<16x256xf32>
    %c2_71 = arith.constant 2 : index
    %c0_72 = arith.constant 0 : index
    %c0_73 = arith.constant 0 : index
    %126 = vector.load %arg3[%c2_71, %c0_72, %c0_73] : memref<12x16x144xbf16, #tpu.memory_space<vmem>>, vector<1x16x144xbf16>
    %127 = vector.shape_cast %126 : vector<1x16x144xbf16> to vector<16x144xbf16>
    %c2_74 = arith.constant 2 : index
    %c0_75 = arith.constant 0 : index
    %c0_76 = arith.constant 0 : index
    %128 = vector.load %arg4[%c2_74, %c0_75, %c0_76] : memref<12x16x1xf32, #tpu.memory_space<vmem>>, vector<1x16x1xf32>
    %129 = vector.shape_cast %128 : vector<1x16x1xf32> to vector<16x1xf32>
    %c17_i32_77 = arith.constant 17 : i32
    %130 = tpu.dynamic_rotate %125 by %c17_i32_77 dim 1 : vector<16x256xf32>, i32 -> vector<16x256xf32>
    %c0_78 = arith.constant 0 : index
    %c0_79 = arith.constant 0 : index
    %c0_80 = arith.constant 0 : index
    %131 = vector.load %arg2[%c0_78, %c0_79, %c0_80] : memref<9x1x256xf32, #tpu.memory_space<vmem>>, vector<1x1x256xf32>
    %132 = vector.shape_cast %131 : vector<1x1x256xf32> to vector<1x256xf32>
    %133 = vector.broadcast %132 : vector<1x256xf32> to vector<16x256xf32>
    %134 = arith.mulf %130, %133 : vector<16x256xf32>
    %135 = arith.truncf %134 : vector<16x256xf32> to vector<16x256xbf16>
    %c16_i32_81 = arith.constant 16 : i32
    %136 = tpu.dynamic_rotate %125 by %c16_i32_81 dim 1 : vector<16x256xf32>, i32 -> vector<16x256xf32>
    %c1_82 = arith.constant 1 : index
    %c0_83 = arith.constant 0 : index
    %c0_84 = arith.constant 0 : index
    %137 = vector.load %arg2[%c1_82, %c0_83, %c0_84] : memref<9x1x256xf32, #tpu.memory_space<vmem>>, vector<1x1x256xf32>
    %138 = vector.shape_cast %137 : vector<1x1x256xf32> to vector<1x256xf32>
    %139 = vector.broadcast %138 : vector<1x256xf32> to vector<16x256xf32>
    %140 = arith.mulf %136, %139 : vector<16x256xf32>
    %141 = arith.truncf %140 : vector<16x256xf32> to vector<16x256xbf16>
    %c15_i32_85 = arith.constant 15 : i32
    %142 = tpu.dynamic_rotate %125 by %c15_i32_85 dim 1 : vector<16x256xf32>, i32 -> vector<16x256xf32>
    %c2_86 = arith.constant 2 : index
    %c0_87 = arith.constant 0 : index
    %c0_88 = arith.constant 0 : index
    %143 = vector.load %arg2[%c2_86, %c0_87, %c0_88] : memref<9x1x256xf32, #tpu.memory_space<vmem>>, vector<1x1x256xf32>
    %144 = vector.shape_cast %143 : vector<1x1x256xf32> to vector<1x256xf32>
    %145 = vector.broadcast %144 : vector<1x256xf32> to vector<16x256xf32>
    %146 = arith.mulf %142, %145 : vector<16x256xf32>
    %147 = arith.truncf %146 : vector<16x256xf32> to vector<16x256xbf16>
    %c1_i32_89 = arith.constant 1 : i32
    %148 = tpu.dynamic_rotate %125 by %c1_i32_89 dim 1 : vector<16x256xf32>, i32 -> vector<16x256xf32>
    %c3_90 = arith.constant 3 : index
    %c0_91 = arith.constant 0 : index
    %c0_92 = arith.constant 0 : index
    %149 = vector.load %arg2[%c3_90, %c0_91, %c0_92] : memref<9x1x256xf32, #tpu.memory_space<vmem>>, vector<1x1x256xf32>
    %150 = vector.shape_cast %149 : vector<1x1x256xf32> to vector<1x256xf32>
    %151 = vector.broadcast %150 : vector<1x256xf32> to vector<16x256xf32>
    %152 = arith.mulf %148, %151 : vector<16x256xf32>
    %153 = arith.truncf %152 : vector<16x256xf32> to vector<16x256xbf16>
    %154 = arith.truncf %125 : vector<16x256xf32> to vector<16x256xbf16>
    %c255_i32_93 = arith.constant 255 : i32
    %155 = tpu.dynamic_rotate %125 by %c255_i32_93 dim 1 : vector<16x256xf32>, i32 -> vector<16x256xf32>
    %c5_94 = arith.constant 5 : index
    %c0_95 = arith.constant 0 : index
    %c0_96 = arith.constant 0 : index
    %156 = vector.load %arg2[%c5_94, %c0_95, %c0_96] : memref<9x1x256xf32, #tpu.memory_space<vmem>>, vector<1x1x256xf32>
    %157 = vector.shape_cast %156 : vector<1x1x256xf32> to vector<1x256xf32>
    %158 = vector.broadcast %157 : vector<1x256xf32> to vector<16x256xf32>
    %159 = arith.mulf %155, %158 : vector<16x256xf32>
    %160 = arith.truncf %159 : vector<16x256xf32> to vector<16x256xbf16>
    %c241_i32_97 = arith.constant 241 : i32
    %161 = tpu.dynamic_rotate %125 by %c241_i32_97 dim 1 : vector<16x256xf32>, i32 -> vector<16x256xf32>
    %c6_98 = arith.constant 6 : index
    %c0_99 = arith.constant 0 : index
    %c0_100 = arith.constant 0 : index
    %162 = vector.load %arg2[%c6_98, %c0_99, %c0_100] : memref<9x1x256xf32, #tpu.memory_space<vmem>>, vector<1x1x256xf32>
    %163 = vector.shape_cast %162 : vector<1x1x256xf32> to vector<1x256xf32>
    %164 = vector.broadcast %163 : vector<1x256xf32> to vector<16x256xf32>
    %165 = arith.mulf %161, %164 : vector<16x256xf32>
    %166 = arith.truncf %165 : vector<16x256xf32> to vector<16x256xbf16>
    %c240_i32_101 = arith.constant 240 : i32
    %167 = tpu.dynamic_rotate %125 by %c240_i32_101 dim 1 : vector<16x256xf32>, i32 -> vector<16x256xf32>
    %c7_102 = arith.constant 7 : index
    %c0_103 = arith.constant 0 : index
    %c0_104 = arith.constant 0 : index
    %168 = vector.load %arg2[%c7_102, %c0_103, %c0_104] : memref<9x1x256xf32, #tpu.memory_space<vmem>>, vector<1x1x256xf32>
    %169 = vector.shape_cast %168 : vector<1x1x256xf32> to vector<1x256xf32>
    %170 = vector.broadcast %169 : vector<1x256xf32> to vector<16x256xf32>
    %171 = arith.mulf %167, %170 : vector<16x256xf32>
    %172 = arith.truncf %171 : vector<16x256xf32> to vector<16x256xbf16>
    %c239_i32_105 = arith.constant 239 : i32
    %173 = tpu.dynamic_rotate %125 by %c239_i32_105 dim 1 : vector<16x256xf32>, i32 -> vector<16x256xf32>
    %c8_106 = arith.constant 8 : index
    %c0_107 = arith.constant 0 : index
    %c0_108 = arith.constant 0 : index
    %174 = vector.load %arg2[%c8_106, %c0_107, %c0_108] : memref<9x1x256xf32, #tpu.memory_space<vmem>>, vector<1x1x256xf32>
    %175 = vector.shape_cast %174 : vector<1x1x256xf32> to vector<1x256xf32>
    %176 = vector.broadcast %175 : vector<1x256xf32> to vector<16x256xf32>
    %177 = arith.mulf %173, %176 : vector<16x256xf32>
    %178 = arith.truncf %177 : vector<16x256xf32> to vector<16x256xbf16>
    %179 = tpu.concatenate %135, %141, %147, %153, %154, %160, %166, %172, %178 in 0 : vector<16x256xbf16>, vector<16x256xbf16>, vector<16x256xbf16>, vector<16x256xbf16>, vector<16x256xbf16>, vector<16x256xbf16>, vector<16x256xbf16>, vector<16x256xbf16>, vector<16x256xbf16> -> vector<144x256xbf16>
    %cst_109 = arith.constant dense<0.000000e+00> : vector<16x256xf32>
    %180 = tpu.matmul %127, %179, %cst_109 {dimension_numbers = #tpu.dot_dimension_numbers<[1], [0], [0], [1], [0, 0, 1, 1], [], []>} : vector<16x144xbf16>, vector<144x256xbf16>, vector<16x256xf32> -> vector<16x256xf32>
    %181 = vector.broadcast %129 : vector<16x1xf32> to vector<16x256xf32>
    %182 = arith.addf %180, %181 : vector<16x256xf32>
    %cst_110 = arith.constant dense<0.000000e+00> : vector<16xf32>
    %183 = vector.multi_reduction <add>, %182, %cst_110 [1] : vector<16x256xf32> to vector<16xf32>
    %184 = vector.shape_cast %183 : vector<16xf32> to vector<16x1xf32>
    %cst_111 = arith.constant 3.906250e-03 : f32
    %185 = vector.broadcast %cst_111 : f32 to vector<16x1xf32>
    %186 = arith.mulf %184, %185 : vector<16x1xf32>
    %c0_112 = arith.constant 0 : index
    %c0_113 = arith.constant 0 : index
    %c0_114 = arith.constant 0 : index
    %c0_115 = arith.constant 0 : index
    %c0_116 = arith.constant 0 : index
    %187 = vector.load %arg5[%c0_112, %c0_113, %c0_114, %c0_115, %c0_116] : memref<2x2x2x16x4xf32, #tpu.memory_space<vmem>>, vector<1x1x1x16x4xf32>
    %188 = vector.shape_cast %187 : vector<1x1x1x16x4xf32> to vector<16x4xf32>
    %189 = vector.broadcast %186 : vector<16x1xf32> to vector<16x4xf32>
    %190 = arith.mulf %188, %189 : vector<16x4xf32>
    %cst_117 = arith.constant dense<0.000000e+00> : vector<4xf32>
    %191 = vector.multi_reduction <add>, %190, %cst_117 [0] : vector<16x4xf32> to vector<4xf32>
    %192 = vector.shape_cast %191 : vector<4xf32> to vector<1x4xf32>
    %c0_118 = arith.constant 0 : index
    %c0_119 = arith.constant 0 : index
    %c0_120 = arith.constant 0 : index
    %c0_121 = arith.constant 0 : index
    %193 = vector.load %arg6[%c0_118, %c0_119, %c0_120, %c0_121] : memref<2x2x1x4xf32, #tpu.memory_space<vmem>>, vector<1x1x1x4xf32>
    %194 = vector.shape_cast %193 : vector<1x1x1x4xf32> to vector<1x4xf32>
    %195 = arith.addf %192, %194 : vector<1x4xf32>
    %cst_122 = arith.constant 0.000000e+00 : f32
    %196 = vector.broadcast %cst_122 : f32 to vector<1x4xf32>
    %197 = arith.maximumf %195, %196 : vector<1x4xf32>
    %c0_123 = arith.constant 0 : index
    %c0_124 = arith.constant 0 : index
    %c1_125 = arith.constant 1 : index
    %c0_126 = arith.constant 0 : index
    %c0_127 = arith.constant 0 : index
    %198 = vector.load %arg5[%c0_123, %c0_124, %c1_125, %c0_126, %c0_127] : memref<2x2x2x16x4xf32, #tpu.memory_space<vmem>>, vector<1x1x1x16x4xf32>
    %199 = vector.shape_cast %198 : vector<1x1x1x16x4xf32> to vector<16x4xf32>
    %200 = vector.broadcast %197 : vector<1x4xf32> to vector<16x4xf32>
    %201 = arith.mulf %199, %200 : vector<16x4xf32>
    %cst_128 = arith.constant dense<0.000000e+00> : vector<16xf32>
    %202 = vector.multi_reduction <add>, %201, %cst_128 [1] : vector<16x4xf32> to vector<16xf32>
    %203 = vector.shape_cast %202 : vector<16xf32> to vector<16x1xf32>
    %c0_129 = arith.constant 0 : index
    %c0_130 = arith.constant 0 : index
    %c0_131 = arith.constant 0 : index
    %c0_132 = arith.constant 0 : index
    %204 = vector.load %arg7[%c0_129, %c0_130, %c0_131, %c0_132] : memref<2x2x16x1xf32, #tpu.memory_space<vmem>>, vector<1x1x16x1xf32>
    %205 = vector.shape_cast %204 : vector<1x1x16x1xf32> to vector<16x1xf32>
    %206 = arith.addf %203, %205 : vector<16x1xf32>
    %207 = arith.negf %206 : vector<16x1xf32>
    %208 = math.exp %207 : vector<16x1xf32>
    %cst_133 = arith.constant 1.000000e+00 : f32
    %209 = vector.broadcast %cst_133 : f32 to vector<16x1xf32>
    %210 = arith.addf %209, %208 : vector<16x1xf32>
    %211 = arith.divf %209, %210 : vector<16x1xf32>
    %212 = vector.broadcast %211 : vector<16x1xf32> to vector<16x256xf32>
    %213 = arith.mulf %182, %212 : vector<16x256xf32>
    %214 = arith.addf %213, %66 : vector<16x256xf32>
    %c3_134 = arith.constant 3 : index
    %c0_135 = arith.constant 0 : index
    %c0_136 = arith.constant 0 : index
    %215 = vector.load %arg3[%c3_134, %c0_135, %c0_136] : memref<12x16x144xbf16, #tpu.memory_space<vmem>>, vector<1x16x144xbf16>
    %216 = vector.shape_cast %215 : vector<1x16x144xbf16> to vector<16x144xbf16>
    %c3_137 = arith.constant 3 : index
    %c0_138 = arith.constant 0 : index
    %c0_139 = arith.constant 0 : index
    %217 = vector.load %arg4[%c3_137, %c0_138, %c0_139] : memref<12x16x1xf32, #tpu.memory_space<vmem>>, vector<1x16x1xf32>
    %218 = vector.shape_cast %217 : vector<1x16x1xf32> to vector<16x1xf32>
    %c17_i32_140 = arith.constant 17 : i32
    %219 = tpu.dynamic_rotate %214 by %c17_i32_140 dim 1 : vector<16x256xf32>, i32 -> vector<16x256xf32>
    %c0_141 = arith.constant 0 : index
    %c0_142 = arith.constant 0 : index
    %c0_143 = arith.constant 0 : index
    %220 = vector.load %arg2[%c0_141, %c0_142, %c0_143] : memref<9x1x256xf32, #tpu.memory_space<vmem>>, vector<1x1x256xf32>
    %221 = vector.shape_cast %220 : vector<1x1x256xf32> to vector<1x256xf32>
    %222 = vector.broadcast %221 : vector<1x256xf32> to vector<16x256xf32>
    %223 = arith.mulf %219, %222 : vector<16x256xf32>
    %224 = arith.truncf %223 : vector<16x256xf32> to vector<16x256xbf16>
    %c16_i32_144 = arith.constant 16 : i32
    %225 = tpu.dynamic_rotate %214 by %c16_i32_144 dim 1 : vector<16x256xf32>, i32 -> vector<16x256xf32>
    %c1_145 = arith.constant 1 : index
    %c0_146 = arith.constant 0 : index
    %c0_147 = arith.constant 0 : index
    %226 = vector.load %arg2[%c1_145, %c0_146, %c0_147] : memref<9x1x256xf32, #tpu.memory_space<vmem>>, vector<1x1x256xf32>
    %227 = vector.shape_cast %226 : vector<1x1x256xf32> to vector<1x256xf32>
    %228 = vector.broadcast %227 : vector<1x256xf32> to vector<16x256xf32>
    %229 = arith.mulf %225, %228 : vector<16x256xf32>
    %230 = arith.truncf %229 : vector<16x256xf32> to vector<16x256xbf16>
    %c15_i32_148 = arith.constant 15 : i32
    %231 = tpu.dynamic_rotate %214 by %c15_i32_148 dim 1 : vector<16x256xf32>, i32 -> vector<16x256xf32>
    %c2_149 = arith.constant 2 : index
    %c0_150 = arith.constant 0 : index
    %c0_151 = arith.constant 0 : index
    %232 = vector.load %arg2[%c2_149, %c0_150, %c0_151] : memref<9x1x256xf32, #tpu.memory_space<vmem>>, vector<1x1x256xf32>
    %233 = vector.shape_cast %232 : vector<1x1x256xf32> to vector<1x256xf32>
    %234 = vector.broadcast %233 : vector<1x256xf32> to vector<16x256xf32>
    %235 = arith.mulf %231, %234 : vector<16x256xf32>
    %236 = arith.truncf %235 : vector<16x256xf32> to vector<16x256xbf16>
    %c1_i32_152 = arith.constant 1 : i32
    %237 = tpu.dynamic_rotate %214 by %c1_i32_152 dim 1 : vector<16x256xf32>, i32 -> vector<16x256xf32>
    %c3_153 = arith.constant 3 : index
    %c0_154 = arith.constant 0 : index
    %c0_155 = arith.constant 0 : index
    %238 = vector.load %arg2[%c3_153, %c0_154, %c0_155] : memref<9x1x256xf32, #tpu.memory_space<vmem>>, vector<1x1x256xf32>
    %239 = vector.shape_cast %238 : vector<1x1x256xf32> to vector<1x256xf32>
    %240 = vector.broadcast %239 : vector<1x256xf32> to vector<16x256xf32>
    %241 = arith.mulf %237, %240 : vector<16x256xf32>
    %242 = arith.truncf %241 : vector<16x256xf32> to vector<16x256xbf16>
    %243 = arith.truncf %214 : vector<16x256xf32> to vector<16x256xbf16>
    %c255_i32_156 = arith.constant 255 : i32
    %244 = tpu.dynamic_rotate %214 by %c255_i32_156 dim 1 : vector<16x256xf32>, i32 -> vector<16x256xf32>
    %c5_157 = arith.constant 5 : index
    %c0_158 = arith.constant 0 : index
    %c0_159 = arith.constant 0 : index
    %245 = vector.load %arg2[%c5_157, %c0_158, %c0_159] : memref<9x1x256xf32, #tpu.memory_space<vmem>>, vector<1x1x256xf32>
    %246 = vector.shape_cast %245 : vector<1x1x256xf32> to vector<1x256xf32>
    %247 = vector.broadcast %246 : vector<1x256xf32> to vector<16x256xf32>
    %248 = arith.mulf %244, %247 : vector<16x256xf32>
    %249 = arith.truncf %248 : vector<16x256xf32> to vector<16x256xbf16>
    %c241_i32_160 = arith.constant 241 : i32
    %250 = tpu.dynamic_rotate %214 by %c241_i32_160 dim 1 : vector<16x256xf32>, i32 -> vector<16x256xf32>
    %c6_161 = arith.constant 6 : index
    %c0_162 = arith.constant 0 : index
    %c0_163 = arith.constant 0 : index
    %251 = vector.load %arg2[%c6_161, %c0_162, %c0_163] : memref<9x1x256xf32, #tpu.memory_space<vmem>>, vector<1x1x256xf32>
    %252 = vector.shape_cast %251 : vector<1x1x256xf32> to vector<1x256xf32>
    %253 = vector.broadcast %252 : vector<1x256xf32> to vector<16x256xf32>
    %254 = arith.mulf %250, %253 : vector<16x256xf32>
    %255 = arith.truncf %254 : vector<16x256xf32> to vector<16x256xbf16>
    %c240_i32_164 = arith.constant 240 : i32
    %256 = tpu.dynamic_rotate %214 by %c240_i32_164 dim 1 : vector<16x256xf32>, i32 -> vector<16x256xf32>
    %c7_165 = arith.constant 7 : index
    %c0_166 = arith.constant 0 : index
    %c0_167 = arith.constant 0 : index
    %257 = vector.load %arg2[%c7_165, %c0_166, %c0_167] : memref<9x1x256xf32, #tpu.memory_space<vmem>>, vector<1x1x256xf32>
    %258 = vector.shape_cast %257 : vector<1x1x256xf32> to vector<1x256xf32>
    %259 = vector.broadcast %258 : vector<1x256xf32> to vector<16x256xf32>
    %260 = arith.mulf %256, %259 : vector<16x256xf32>
    %261 = arith.truncf %260 : vector<16x256xf32> to vector<16x256xbf16>
    %c239_i32_168 = arith.constant 239 : i32
    %262 = tpu.dynamic_rotate %214 by %c239_i32_168 dim 1 : vector<16x256xf32>, i32 -> vector<16x256xf32>
    %c8_169 = arith.constant 8 : index
    %c0_170 = arith.constant 0 : index
    %c0_171 = arith.constant 0 : index
    %263 = vector.load %arg2[%c8_169, %c0_170, %c0_171] : memref<9x1x256xf32, #tpu.memory_space<vmem>>, vector<1x1x256xf32>
    %264 = vector.shape_cast %263 : vector<1x1x256xf32> to vector<1x256xf32>
    %265 = vector.broadcast %264 : vector<1x256xf32> to vector<16x256xf32>
    %266 = arith.mulf %262, %265 : vector<16x256xf32>
    %267 = arith.truncf %266 : vector<16x256xf32> to vector<16x256xbf16>
    %268 = tpu.concatenate %224, %230, %236, %242, %243, %249, %255, %261, %267 in 0 : vector<16x256xbf16>, vector<16x256xbf16>, vector<16x256xbf16>, vector<16x256xbf16>, vector<16x256xbf16>, vector<16x256xbf16>, vector<16x256xbf16>, vector<16x256xbf16>, vector<16x256xbf16> -> vector<144x256xbf16>
    %cst_172 = arith.constant dense<0.000000e+00> : vector<16x256xf32>
    %269 = tpu.matmul %216, %268, %cst_172 {dimension_numbers = #tpu.dot_dimension_numbers<[1], [0], [0], [1], [0, 0, 1, 1], [], []>} : vector<16x144xbf16>, vector<144x256xbf16>, vector<16x256xf32> -> vector<16x256xf32>
    %270 = vector.broadcast %218 : vector<16x1xf32> to vector<16x256xf32>
    %271 = arith.addf %269, %270 : vector<16x256xf32>
    %cst_173 = arith.constant 0.000000e+00 : f32
    %272 = vector.broadcast %cst_173 : f32 to vector<16x256xf32>
    %273 = arith.maximumf %271, %272 : vector<16x256xf32>
    %c4 = arith.constant 4 : index
    %c0_174 = arith.constant 0 : index
    %c0_175 = arith.constant 0 : index
    %274 = vector.load %arg3[%c4, %c0_174, %c0_175] : memref<12x16x144xbf16, #tpu.memory_space<vmem>>, vector<1x16x144xbf16>
    %275 = vector.shape_cast %274 : vector<1x16x144xbf16> to vector<16x144xbf16>
    %c4_176 = arith.constant 4 : index
    %c0_177 = arith.constant 0 : index
    %c0_178 = arith.constant 0 : index
    %276 = vector.load %arg4[%c4_176, %c0_177, %c0_178] : memref<12x16x1xf32, #tpu.memory_space<vmem>>, vector<1x16x1xf32>
    %277 = vector.shape_cast %276 : vector<1x16x1xf32> to vector<16x1xf32>
    %c17_i32_179 = arith.constant 17 : i32
    %278 = tpu.dynamic_rotate %273 by %c17_i32_179 dim 1 : vector<16x256xf32>, i32 -> vector<16x256xf32>
    %c0_180 = arith.constant 0 : index
    %c0_181 = arith.constant 0 : index
    %c0_182 = arith.constant 0 : index
    %279 = vector.load %arg2[%c0_180, %c0_181, %c0_182] : memref<9x1x256xf32, #tpu.memory_space<vmem>>, vector<1x1x256xf32>
    %280 = vector.shape_cast %279 : vector<1x1x256xf32> to vector<1x256xf32>
    %281 = vector.broadcast %280 : vector<1x256xf32> to vector<16x256xf32>
    %282 = arith.mulf %278, %281 : vector<16x256xf32>
    %283 = arith.truncf %282 : vector<16x256xf32> to vector<16x256xbf16>
    %c16_i32_183 = arith.constant 16 : i32
    %284 = tpu.dynamic_rotate %273 by %c16_i32_183 dim 1 : vector<16x256xf32>, i32 -> vector<16x256xf32>
    %c1_184 = arith.constant 1 : index
    %c0_185 = arith.constant 0 : index
    %c0_186 = arith.constant 0 : index
    %285 = vector.load %arg2[%c1_184, %c0_185, %c0_186] : memref<9x1x256xf32, #tpu.memory_space<vmem>>, vector<1x1x256xf32>
    %286 = vector.shape_cast %285 : vector<1x1x256xf32> to vector<1x256xf32>
    %287 = vector.broadcast %286 : vector<1x256xf32> to vector<16x256xf32>
    %288 = arith.mulf %284, %287 : vector<16x256xf32>
    %289 = arith.truncf %288 : vector<16x256xf32> to vector<16x256xbf16>
    %c15_i32_187 = arith.constant 15 : i32
    %290 = tpu.dynamic_rotate %273 by %c15_i32_187 dim 1 : vector<16x256xf32>, i32 -> vector<16x256xf32>
    %c2_188 = arith.constant 2 : index
    %c0_189 = arith.constant 0 : index
    %c0_190 = arith.constant 0 : index
    %291 = vector.load %arg2[%c2_188, %c0_189, %c0_190] : memref<9x1x256xf32, #tpu.memory_space<vmem>>, vector<1x1x256xf32>
    %292 = vector.shape_cast %291 : vector<1x1x256xf32> to vector<1x256xf32>
    %293 = vector.broadcast %292 : vector<1x256xf32> to vector<16x256xf32>
    %294 = arith.mulf %290, %293 : vector<16x256xf32>
    %295 = arith.truncf %294 : vector<16x256xf32> to vector<16x256xbf16>
    %c1_i32_191 = arith.constant 1 : i32
    %296 = tpu.dynamic_rotate %273 by %c1_i32_191 dim 1 : vector<16x256xf32>, i32 -> vector<16x256xf32>
    %c3_192 = arith.constant 3 : index
    %c0_193 = arith.constant 0 : index
    %c0_194 = arith.constant 0 : index
    %297 = vector.load %arg2[%c3_192, %c0_193, %c0_194] : memref<9x1x256xf32, #tpu.memory_space<vmem>>, vector<1x1x256xf32>
    %298 = vector.shape_cast %297 : vector<1x1x256xf32> to vector<1x256xf32>
    %299 = vector.broadcast %298 : vector<1x256xf32> to vector<16x256xf32>
    %300 = arith.mulf %296, %299 : vector<16x256xf32>
    %301 = arith.truncf %300 : vector<16x256xf32> to vector<16x256xbf16>
    %302 = arith.truncf %273 : vector<16x256xf32> to vector<16x256xbf16>
    %c255_i32_195 = arith.constant 255 : i32
    %303 = tpu.dynamic_rotate %273 by %c255_i32_195 dim 1 : vector<16x256xf32>, i32 -> vector<16x256xf32>
    %c5_196 = arith.constant 5 : index
    %c0_197 = arith.constant 0 : index
    %c0_198 = arith.constant 0 : index
    %304 = vector.load %arg2[%c5_196, %c0_197, %c0_198] : memref<9x1x256xf32, #tpu.memory_space<vmem>>, vector<1x1x256xf32>
    %305 = vector.shape_cast %304 : vector<1x1x256xf32> to vector<1x256xf32>
    %306 = vector.broadcast %305 : vector<1x256xf32> to vector<16x256xf32>
    %307 = arith.mulf %303, %306 : vector<16x256xf32>
    %308 = arith.truncf %307 : vector<16x256xf32> to vector<16x256xbf16>
    %c241_i32_199 = arith.constant 241 : i32
    %309 = tpu.dynamic_rotate %273 by %c241_i32_199 dim 1 : vector<16x256xf32>, i32 -> vector<16x256xf32>
    %c6_200 = arith.constant 6 : index
    %c0_201 = arith.constant 0 : index
    %c0_202 = arith.constant 0 : index
    %310 = vector.load %arg2[%c6_200, %c0_201, %c0_202] : memref<9x1x256xf32, #tpu.memory_space<vmem>>, vector<1x1x256xf32>
    %311 = vector.shape_cast %310 : vector<1x1x256xf32> to vector<1x256xf32>
    %312 = vector.broadcast %311 : vector<1x256xf32> to vector<16x256xf32>
    %313 = arith.mulf %309, %312 : vector<16x256xf32>
    %314 = arith.truncf %313 : vector<16x256xf32> to vector<16x256xbf16>
    %c240_i32_203 = arith.constant 240 : i32
    %315 = tpu.dynamic_rotate %273 by %c240_i32_203 dim 1 : vector<16x256xf32>, i32 -> vector<16x256xf32>
    %c7_204 = arith.constant 7 : index
    %c0_205 = arith.constant 0 : index
    %c0_206 = arith.constant 0 : index
    %316 = vector.load %arg2[%c7_204, %c0_205, %c0_206] : memref<9x1x256xf32, #tpu.memory_space<vmem>>, vector<1x1x256xf32>
    %317 = vector.shape_cast %316 : vector<1x1x256xf32> to vector<1x256xf32>
    %318 = vector.broadcast %317 : vector<1x256xf32> to vector<16x256xf32>
    %319 = arith.mulf %315, %318 : vector<16x256xf32>
    %320 = arith.truncf %319 : vector<16x256xf32> to vector<16x256xbf16>
    %c239_i32_207 = arith.constant 239 : i32
    %321 = tpu.dynamic_rotate %273 by %c239_i32_207 dim 1 : vector<16x256xf32>, i32 -> vector<16x256xf32>
    %c8_208 = arith.constant 8 : index
    %c0_209 = arith.constant 0 : index
    %c0_210 = arith.constant 0 : index
    %322 = vector.load %arg2[%c8_208, %c0_209, %c0_210] : memref<9x1x256xf32, #tpu.memory_space<vmem>>, vector<1x1x256xf32>
    %323 = vector.shape_cast %322 : vector<1x1x256xf32> to vector<1x256xf32>
    %324 = vector.broadcast %323 : vector<1x256xf32> to vector<16x256xf32>
    %325 = arith.mulf %321, %324 : vector<16x256xf32>
    %326 = arith.truncf %325 : vector<16x256xf32> to vector<16x256xbf16>
    %327 = tpu.concatenate %283, %289, %295, %301, %302, %308, %314, %320, %326 in 0 : vector<16x256xbf16>, vector<16x256xbf16>, vector<16x256xbf16>, vector<16x256xbf16>, vector<16x256xbf16>, vector<16x256xbf16>, vector<16x256xbf16>, vector<16x256xbf16>, vector<16x256xbf16> -> vector<144x256xbf16>
    %cst_211 = arith.constant dense<0.000000e+00> : vector<16x256xf32>
    %328 = tpu.matmul %275, %327, %cst_211 {dimension_numbers = #tpu.dot_dimension_numbers<[1], [0], [0], [1], [0, 0, 1, 1], [], []>} : vector<16x144xbf16>, vector<144x256xbf16>, vector<16x256xf32> -> vector<16x256xf32>
    %329 = vector.broadcast %277 : vector<16x1xf32> to vector<16x256xf32>
    %330 = arith.addf %328, %329 : vector<16x256xf32>
    %cst_212 = arith.constant dense<0.000000e+00> : vector<16xf32>
    %331 = vector.multi_reduction <add>, %330, %cst_212 [1] : vector<16x256xf32> to vector<16xf32>
    %332 = vector.shape_cast %331 : vector<16xf32> to vector<16x1xf32>
    %cst_213 = arith.constant 3.906250e-03 : f32
    %333 = vector.broadcast %cst_213 : f32 to vector<16x1xf32>
    %334 = arith.mulf %332, %333 : vector<16x1xf32>
    %c0_214 = arith.constant 0 : index
    %c1_215 = arith.constant 1 : index
    %c0_216 = arith.constant 0 : index
    %c0_217 = arith.constant 0 : index
    %c0_218 = arith.constant 0 : index
    %335 = vector.load %arg5[%c0_214, %c1_215, %c0_216, %c0_217, %c0_218] : memref<2x2x2x16x4xf32, #tpu.memory_space<vmem>>, vector<1x1x1x16x4xf32>
    %336 = vector.shape_cast %335 : vector<1x1x1x16x4xf32> to vector<16x4xf32>
    %337 = vector.broadcast %334 : vector<16x1xf32> to vector<16x4xf32>
    %338 = arith.mulf %336, %337 : vector<16x4xf32>
    %cst_219 = arith.constant dense<0.000000e+00> : vector<4xf32>
    %339 = vector.multi_reduction <add>, %338, %cst_219 [0] : vector<16x4xf32> to vector<4xf32>
    %340 = vector.shape_cast %339 : vector<4xf32> to vector<1x4xf32>
    %c0_220 = arith.constant 0 : index
    %c1_221 = arith.constant 1 : index
    %c0_222 = arith.constant 0 : index
    %c0_223 = arith.constant 0 : index
    %341 = vector.load %arg6[%c0_220, %c1_221, %c0_222, %c0_223] : memref<2x2x1x4xf32, #tpu.memory_space<vmem>>, vector<1x1x1x4xf32>
    %342 = vector.shape_cast %341 : vector<1x1x1x4xf32> to vector<1x4xf32>
    %343 = arith.addf %340, %342 : vector<1x4xf32>
    %cst_224 = arith.constant 0.000000e+00 : f32
    %344 = vector.broadcast %cst_224 : f32 to vector<1x4xf32>
    %345 = arith.maximumf %343, %344 : vector<1x4xf32>
    %c0_225 = arith.constant 0 : index
    %c1_226 = arith.constant 1 : index
    %c1_227 = arith.constant 1 : index
    %c0_228 = arith.constant 0 : index
    %c0_229 = arith.constant 0 : index
    %346 = vector.load %arg5[%c0_225, %c1_226, %c1_227, %c0_228, %c0_229] : memref<2x2x2x16x4xf32, #tpu.memory_space<vmem>>, vector<1x1x1x16x4xf32>
    %347 = vector.shape_cast %346 : vector<1x1x1x16x4xf32> to vector<16x4xf32>
    %348 = vector.broadcast %345 : vector<1x4xf32> to vector<16x4xf32>
    %349 = arith.mulf %347, %348 : vector<16x4xf32>
    %cst_230 = arith.constant dense<0.000000e+00> : vector<16xf32>
    %350 = vector.multi_reduction <add>, %349, %cst_230 [1] : vector<16x4xf32> to vector<16xf32>
    %351 = vector.shape_cast %350 : vector<16xf32> to vector<16x1xf32>
    %c0_231 = arith.constant 0 : index
    %c1_232 = arith.constant 1 : index
    %c0_233 = arith.constant 0 : index
    %c0_234 = arith.constant 0 : index
    %352 = vector.load %arg7[%c0_231, %c1_232, %c0_233, %c0_234] : memref<2x2x16x1xf32, #tpu.memory_space<vmem>>, vector<1x1x16x1xf32>
    %353 = vector.shape_cast %352 : vector<1x1x16x1xf32> to vector<16x1xf32>
    %354 = arith.addf %351, %353 : vector<16x1xf32>
    %355 = arith.negf %354 : vector<16x1xf32>
    %356 = math.exp %355 : vector<16x1xf32>
    %cst_235 = arith.constant 1.000000e+00 : f32
    %357 = vector.broadcast %cst_235 : f32 to vector<16x1xf32>
    %358 = arith.addf %357, %356 : vector<16x1xf32>
    %359 = arith.divf %357, %358 : vector<16x1xf32>
    %360 = vector.broadcast %359 : vector<16x1xf32> to vector<16x256xf32>
    %361 = arith.mulf %330, %360 : vector<16x256xf32>
    %362 = arith.addf %361, %214 : vector<16x256xf32>
    %c5_236 = arith.constant 5 : index
    %c0_237 = arith.constant 0 : index
    %c0_238 = arith.constant 0 : index
    %363 = vector.load %arg3[%c5_236, %c0_237, %c0_238] : memref<12x16x144xbf16, #tpu.memory_space<vmem>>, vector<1x16x144xbf16>
    %364 = vector.shape_cast %363 : vector<1x16x144xbf16> to vector<16x144xbf16>
    %c5_239 = arith.constant 5 : index
    %c0_240 = arith.constant 0 : index
    %c0_241 = arith.constant 0 : index
    %365 = vector.load %arg4[%c5_239, %c0_240, %c0_241] : memref<12x16x1xf32, #tpu.memory_space<vmem>>, vector<1x16x1xf32>
    %366 = vector.shape_cast %365 : vector<1x16x1xf32> to vector<16x1xf32>
    %c17_i32_242 = arith.constant 17 : i32
    %367 = tpu.dynamic_rotate %362 by %c17_i32_242 dim 1 : vector<16x256xf32>, i32 -> vector<16x256xf32>
    %c0_243 = arith.constant 0 : index
    %c0_244 = arith.constant 0 : index
    %c0_245 = arith.constant 0 : index
    %368 = vector.load %arg2[%c0_243, %c0_244, %c0_245] : memref<9x1x256xf32, #tpu.memory_space<vmem>>, vector<1x1x256xf32>
    %369 = vector.shape_cast %368 : vector<1x1x256xf32> to vector<1x256xf32>
    %370 = vector.broadcast %369 : vector<1x256xf32> to vector<16x256xf32>
    %371 = arith.mulf %367, %370 : vector<16x256xf32>
    %372 = arith.truncf %371 : vector<16x256xf32> to vector<16x256xbf16>
    %c16_i32_246 = arith.constant 16 : i32
    %373 = tpu.dynamic_rotate %362 by %c16_i32_246 dim 1 : vector<16x256xf32>, i32 -> vector<16x256xf32>
    %c1_247 = arith.constant 1 : index
    %c0_248 = arith.constant 0 : index
    %c0_249 = arith.constant 0 : index
    %374 = vector.load %arg2[%c1_247, %c0_248, %c0_249] : memref<9x1x256xf32, #tpu.memory_space<vmem>>, vector<1x1x256xf32>
    %375 = vector.shape_cast %374 : vector<1x1x256xf32> to vector<1x256xf32>
    %376 = vector.broadcast %375 : vector<1x256xf32> to vector<16x256xf32>
    %377 = arith.mulf %373, %376 : vector<16x256xf32>
    %378 = arith.truncf %377 : vector<16x256xf32> to vector<16x256xbf16>
    %c15_i32_250 = arith.constant 15 : i32
    %379 = tpu.dynamic_rotate %362 by %c15_i32_250 dim 1 : vector<16x256xf32>, i32 -> vector<16x256xf32>
    %c2_251 = arith.constant 2 : index
    %c0_252 = arith.constant 0 : index
    %c0_253 = arith.constant 0 : index
    %380 = vector.load %arg2[%c2_251, %c0_252, %c0_253] : memref<9x1x256xf32, #tpu.memory_space<vmem>>, vector<1x1x256xf32>
    %381 = vector.shape_cast %380 : vector<1x1x256xf32> to vector<1x256xf32>
    %382 = vector.broadcast %381 : vector<1x256xf32> to vector<16x256xf32>
    %383 = arith.mulf %379, %382 : vector<16x256xf32>
    %384 = arith.truncf %383 : vector<16x256xf32> to vector<16x256xbf16>
    %c1_i32_254 = arith.constant 1 : i32
    %385 = tpu.dynamic_rotate %362 by %c1_i32_254 dim 1 : vector<16x256xf32>, i32 -> vector<16x256xf32>
    %c3_255 = arith.constant 3 : index
    %c0_256 = arith.constant 0 : index
    %c0_257 = arith.constant 0 : index
    %386 = vector.load %arg2[%c3_255, %c0_256, %c0_257] : memref<9x1x256xf32, #tpu.memory_space<vmem>>, vector<1x1x256xf32>
    %387 = vector.shape_cast %386 : vector<1x1x256xf32> to vector<1x256xf32>
    %388 = vector.broadcast %387 : vector<1x256xf32> to vector<16x256xf32>
    %389 = arith.mulf %385, %388 : vector<16x256xf32>
    %390 = arith.truncf %389 : vector<16x256xf32> to vector<16x256xbf16>
    %391 = arith.truncf %362 : vector<16x256xf32> to vector<16x256xbf16>
    %c255_i32_258 = arith.constant 255 : i32
    %392 = tpu.dynamic_rotate %362 by %c255_i32_258 dim 1 : vector<16x256xf32>, i32 -> vector<16x256xf32>
    %c5_259 = arith.constant 5 : index
    %c0_260 = arith.constant 0 : index
    %c0_261 = arith.constant 0 : index
    %393 = vector.load %arg2[%c5_259, %c0_260, %c0_261] : memref<9x1x256xf32, #tpu.memory_space<vmem>>, vector<1x1x256xf32>
    %394 = vector.shape_cast %393 : vector<1x1x256xf32> to vector<1x256xf32>
    %395 = vector.broadcast %394 : vector<1x256xf32> to vector<16x256xf32>
    %396 = arith.mulf %392, %395 : vector<16x256xf32>
    %397 = arith.truncf %396 : vector<16x256xf32> to vector<16x256xbf16>
    %c241_i32_262 = arith.constant 241 : i32
    %398 = tpu.dynamic_rotate %362 by %c241_i32_262 dim 1 : vector<16x256xf32>, i32 -> vector<16x256xf32>
    %c6_263 = arith.constant 6 : index
    %c0_264 = arith.constant 0 : index
    %c0_265 = arith.constant 0 : index
    %399 = vector.load %arg2[%c6_263, %c0_264, %c0_265] : memref<9x1x256xf32, #tpu.memory_space<vmem>>, vector<1x1x256xf32>
    %400 = vector.shape_cast %399 : vector<1x1x256xf32> to vector<1x256xf32>
    %401 = vector.broadcast %400 : vector<1x256xf32> to vector<16x256xf32>
    %402 = arith.mulf %398, %401 : vector<16x256xf32>
    %403 = arith.truncf %402 : vector<16x256xf32> to vector<16x256xbf16>
    %c240_i32_266 = arith.constant 240 : i32
    %404 = tpu.dynamic_rotate %362 by %c240_i32_266 dim 1 : vector<16x256xf32>, i32 -> vector<16x256xf32>
    %c7_267 = arith.constant 7 : index
    %c0_268 = arith.constant 0 : index
    %c0_269 = arith.constant 0 : index
    %405 = vector.load %arg2[%c7_267, %c0_268, %c0_269] : memref<9x1x256xf32, #tpu.memory_space<vmem>>, vector<1x1x256xf32>
    %406 = vector.shape_cast %405 : vector<1x1x256xf32> to vector<1x256xf32>
    %407 = vector.broadcast %406 : vector<1x256xf32> to vector<16x256xf32>
    %408 = arith.mulf %404, %407 : vector<16x256xf32>
    %409 = arith.truncf %408 : vector<16x256xf32> to vector<16x256xbf16>
    %c239_i32_270 = arith.constant 239 : i32
    %410 = tpu.dynamic_rotate %362 by %c239_i32_270 dim 1 : vector<16x256xf32>, i32 -> vector<16x256xf32>
    %c8_271 = arith.constant 8 : index
    %c0_272 = arith.constant 0 : index
    %c0_273 = arith.constant 0 : index
    %411 = vector.load %arg2[%c8_271, %c0_272, %c0_273] : memref<9x1x256xf32, #tpu.memory_space<vmem>>, vector<1x1x256xf32>
    %412 = vector.shape_cast %411 : vector<1x1x256xf32> to vector<1x256xf32>
    %413 = vector.broadcast %412 : vector<1x256xf32> to vector<16x256xf32>
    %414 = arith.mulf %410, %413 : vector<16x256xf32>
    %415 = arith.truncf %414 : vector<16x256xf32> to vector<16x256xbf16>
    %416 = tpu.concatenate %372, %378, %384, %390, %391, %397, %403, %409, %415 in 0 : vector<16x256xbf16>, vector<16x256xbf16>, vector<16x256xbf16>, vector<16x256xbf16>, vector<16x256xbf16>, vector<16x256xbf16>, vector<16x256xbf16>, vector<16x256xbf16>, vector<16x256xbf16> -> vector<144x256xbf16>
    %cst_274 = arith.constant dense<0.000000e+00> : vector<16x256xf32>
    %417 = tpu.matmul %364, %416, %cst_274 {dimension_numbers = #tpu.dot_dimension_numbers<[1], [0], [0], [1], [0, 0, 1, 1], [], []>} : vector<16x144xbf16>, vector<144x256xbf16>, vector<16x256xf32> -> vector<16x256xf32>
    %418 = vector.broadcast %366 : vector<16x1xf32> to vector<16x256xf32>
    %419 = arith.addf %417, %418 : vector<16x256xf32>
    %420 = arith.addf %419, %66 : vector<16x256xf32>
    %c6_275 = arith.constant 6 : index
    %c0_276 = arith.constant 0 : index
    %c0_277 = arith.constant 0 : index
    %421 = vector.load %arg3[%c6_275, %c0_276, %c0_277] : memref<12x16x144xbf16, #tpu.memory_space<vmem>>, vector<1x16x144xbf16>
    %422 = vector.shape_cast %421 : vector<1x16x144xbf16> to vector<16x144xbf16>
    %c6_278 = arith.constant 6 : index
    %c0_279 = arith.constant 0 : index
    %c0_280 = arith.constant 0 : index
    %423 = vector.load %arg4[%c6_278, %c0_279, %c0_280] : memref<12x16x1xf32, #tpu.memory_space<vmem>>, vector<1x16x1xf32>
    %424 = vector.shape_cast %423 : vector<1x16x1xf32> to vector<16x1xf32>
    %c17_i32_281 = arith.constant 17 : i32
    %425 = tpu.dynamic_rotate %420 by %c17_i32_281 dim 1 : vector<16x256xf32>, i32 -> vector<16x256xf32>
    %c0_282 = arith.constant 0 : index
    %c0_283 = arith.constant 0 : index
    %c0_284 = arith.constant 0 : index
    %426 = vector.load %arg2[%c0_282, %c0_283, %c0_284] : memref<9x1x256xf32, #tpu.memory_space<vmem>>, vector<1x1x256xf32>
    %427 = vector.shape_cast %426 : vector<1x1x256xf32> to vector<1x256xf32>
    %428 = vector.broadcast %427 : vector<1x256xf32> to vector<16x256xf32>
    %429 = arith.mulf %425, %428 : vector<16x256xf32>
    %430 = arith.truncf %429 : vector<16x256xf32> to vector<16x256xbf16>
    %c16_i32_285 = arith.constant 16 : i32
    %431 = tpu.dynamic_rotate %420 by %c16_i32_285 dim 1 : vector<16x256xf32>, i32 -> vector<16x256xf32>
    %c1_286 = arith.constant 1 : index
    %c0_287 = arith.constant 0 : index
    %c0_288 = arith.constant 0 : index
    %432 = vector.load %arg2[%c1_286, %c0_287, %c0_288] : memref<9x1x256xf32, #tpu.memory_space<vmem>>, vector<1x1x256xf32>
    %433 = vector.shape_cast %432 : vector<1x1x256xf32> to vector<1x256xf32>
    %434 = vector.broadcast %433 : vector<1x256xf32> to vector<16x256xf32>
    %435 = arith.mulf %431, %434 : vector<16x256xf32>
    %436 = arith.truncf %435 : vector<16x256xf32> to vector<16x256xbf16>
    %c15_i32_289 = arith.constant 15 : i32
    %437 = tpu.dynamic_rotate %420 by %c15_i32_289 dim 1 : vector<16x256xf32>, i32 -> vector<16x256xf32>
    %c2_290 = arith.constant 2 : index
    %c0_291 = arith.constant 0 : index
    %c0_292 = arith.constant 0 : index
    %438 = vector.load %arg2[%c2_290, %c0_291, %c0_292] : memref<9x1x256xf32, #tpu.memory_space<vmem>>, vector<1x1x256xf32>
    %439 = vector.shape_cast %438 : vector<1x1x256xf32> to vector<1x256xf32>
    %440 = vector.broadcast %439 : vector<1x256xf32> to vector<16x256xf32>
    %441 = arith.mulf %437, %440 : vector<16x256xf32>
    %442 = arith.truncf %441 : vector<16x256xf32> to vector<16x256xbf16>
    %c1_i32_293 = arith.constant 1 : i32
    %443 = tpu.dynamic_rotate %420 by %c1_i32_293 dim 1 : vector<16x256xf32>, i32 -> vector<16x256xf32>
    %c3_294 = arith.constant 3 : index
    %c0_295 = arith.constant 0 : index
    %c0_296 = arith.constant 0 : index
    %444 = vector.load %arg2[%c3_294, %c0_295, %c0_296] : memref<9x1x256xf32, #tpu.memory_space<vmem>>, vector<1x1x256xf32>
    %445 = vector.shape_cast %444 : vector<1x1x256xf32> to vector<1x256xf32>
    %446 = vector.broadcast %445 : vector<1x256xf32> to vector<16x256xf32>
    %447 = arith.mulf %443, %446 : vector<16x256xf32>
    %448 = arith.truncf %447 : vector<16x256xf32> to vector<16x256xbf16>
    %449 = arith.truncf %420 : vector<16x256xf32> to vector<16x256xbf16>
    %c255_i32_297 = arith.constant 255 : i32
    %450 = tpu.dynamic_rotate %420 by %c255_i32_297 dim 1 : vector<16x256xf32>, i32 -> vector<16x256xf32>
    %c5_298 = arith.constant 5 : index
    %c0_299 = arith.constant 0 : index
    %c0_300 = arith.constant 0 : index
    %451 = vector.load %arg2[%c5_298, %c0_299, %c0_300] : memref<9x1x256xf32, #tpu.memory_space<vmem>>, vector<1x1x256xf32>
    %452 = vector.shape_cast %451 : vector<1x1x256xf32> to vector<1x256xf32>
    %453 = vector.broadcast %452 : vector<1x256xf32> to vector<16x256xf32>
    %454 = arith.mulf %450, %453 : vector<16x256xf32>
    %455 = arith.truncf %454 : vector<16x256xf32> to vector<16x256xbf16>
    %c241_i32_301 = arith.constant 241 : i32
    %456 = tpu.dynamic_rotate %420 by %c241_i32_301 dim 1 : vector<16x256xf32>, i32 -> vector<16x256xf32>
    %c6_302 = arith.constant 6 : index
    %c0_303 = arith.constant 0 : index
    %c0_304 = arith.constant 0 : index
    %457 = vector.load %arg2[%c6_302, %c0_303, %c0_304] : memref<9x1x256xf32, #tpu.memory_space<vmem>>, vector<1x1x256xf32>
    %458 = vector.shape_cast %457 : vector<1x1x256xf32> to vector<1x256xf32>
    %459 = vector.broadcast %458 : vector<1x256xf32> to vector<16x256xf32>
    %460 = arith.mulf %456, %459 : vector<16x256xf32>
    %461 = arith.truncf %460 : vector<16x256xf32> to vector<16x256xbf16>
    %c240_i32_305 = arith.constant 240 : i32
    %462 = tpu.dynamic_rotate %420 by %c240_i32_305 dim 1 : vector<16x256xf32>, i32 -> vector<16x256xf32>
    %c7_306 = arith.constant 7 : index
    %c0_307 = arith.constant 0 : index
    %c0_308 = arith.constant 0 : index
    %463 = vector.load %arg2[%c7_306, %c0_307, %c0_308] : memref<9x1x256xf32, #tpu.memory_space<vmem>>, vector<1x1x256xf32>
    %464 = vector.shape_cast %463 : vector<1x1x256xf32> to vector<1x256xf32>
    %465 = vector.broadcast %464 : vector<1x256xf32> to vector<16x256xf32>
    %466 = arith.mulf %462, %465 : vector<16x256xf32>
    %467 = arith.truncf %466 : vector<16x256xf32> to vector<16x256xbf16>
    %c239_i32_309 = arith.constant 239 : i32
    %468 = tpu.dynamic_rotate %420 by %c239_i32_309 dim 1 : vector<16x256xf32>, i32 -> vector<16x256xf32>
    %c8_310 = arith.constant 8 : index
    %c0_311 = arith.constant 0 : index
    %c0_312 = arith.constant 0 : index
    %469 = vector.load %arg2[%c8_310, %c0_311, %c0_312] : memref<9x1x256xf32, #tpu.memory_space<vmem>>, vector<1x1x256xf32>
    %470 = vector.shape_cast %469 : vector<1x1x256xf32> to vector<1x256xf32>
    %471 = vector.broadcast %470 : vector<1x256xf32> to vector<16x256xf32>
    %472 = arith.mulf %468, %471 : vector<16x256xf32>
    %473 = arith.truncf %472 : vector<16x256xf32> to vector<16x256xbf16>
    %474 = tpu.concatenate %430, %436, %442, %448, %449, %455, %461, %467, %473 in 0 : vector<16x256xbf16>, vector<16x256xbf16>, vector<16x256xbf16>, vector<16x256xbf16>, vector<16x256xbf16>, vector<16x256xbf16>, vector<16x256xbf16>, vector<16x256xbf16>, vector<16x256xbf16> -> vector<144x256xbf16>
    %cst_313 = arith.constant dense<0.000000e+00> : vector<16x256xf32>
    %475 = tpu.matmul %422, %474, %cst_313 {dimension_numbers = #tpu.dot_dimension_numbers<[1], [0], [0], [1], [0, 0, 1, 1], [], []>} : vector<16x144xbf16>, vector<144x256xbf16>, vector<16x256xf32> -> vector<16x256xf32>
    %476 = vector.broadcast %424 : vector<16x1xf32> to vector<16x256xf32>
    %477 = arith.addf %475, %476 : vector<16x256xf32>
    %cst_314 = arith.constant 0.000000e+00 : f32
    %478 = vector.broadcast %cst_314 : f32 to vector<16x256xf32>
    %479 = arith.maximumf %477, %478 : vector<16x256xf32>
    %c7_315 = arith.constant 7 : index
    %c0_316 = arith.constant 0 : index
    %c0_317 = arith.constant 0 : index
    %480 = vector.load %arg3[%c7_315, %c0_316, %c0_317] : memref<12x16x144xbf16, #tpu.memory_space<vmem>>, vector<1x16x144xbf16>
    %481 = vector.shape_cast %480 : vector<1x16x144xbf16> to vector<16x144xbf16>
    %c7_318 = arith.constant 7 : index
    %c0_319 = arith.constant 0 : index
    %c0_320 = arith.constant 0 : index
    %482 = vector.load %arg4[%c7_318, %c0_319, %c0_320] : memref<12x16x1xf32, #tpu.memory_space<vmem>>, vector<1x16x1xf32>
    %483 = vector.shape_cast %482 : vector<1x16x1xf32> to vector<16x1xf32>
    %c17_i32_321 = arith.constant 17 : i32
    %484 = tpu.dynamic_rotate %479 by %c17_i32_321 dim 1 : vector<16x256xf32>, i32 -> vector<16x256xf32>
    %c0_322 = arith.constant 0 : index
    %c0_323 = arith.constant 0 : index
    %c0_324 = arith.constant 0 : index
    %485 = vector.load %arg2[%c0_322, %c0_323, %c0_324] : memref<9x1x256xf32, #tpu.memory_space<vmem>>, vector<1x1x256xf32>
    %486 = vector.shape_cast %485 : vector<1x1x256xf32> to vector<1x256xf32>
    %487 = vector.broadcast %486 : vector<1x256xf32> to vector<16x256xf32>
    %488 = arith.mulf %484, %487 : vector<16x256xf32>
    %489 = arith.truncf %488 : vector<16x256xf32> to vector<16x256xbf16>
    %c16_i32_325 = arith.constant 16 : i32
    %490 = tpu.dynamic_rotate %479 by %c16_i32_325 dim 1 : vector<16x256xf32>, i32 -> vector<16x256xf32>
    %c1_326 = arith.constant 1 : index
    %c0_327 = arith.constant 0 : index
    %c0_328 = arith.constant 0 : index
    %491 = vector.load %arg2[%c1_326, %c0_327, %c0_328] : memref<9x1x256xf32, #tpu.memory_space<vmem>>, vector<1x1x256xf32>
    %492 = vector.shape_cast %491 : vector<1x1x256xf32> to vector<1x256xf32>
    %493 = vector.broadcast %492 : vector<1x256xf32> to vector<16x256xf32>
    %494 = arith.mulf %490, %493 : vector<16x256xf32>
    %495 = arith.truncf %494 : vector<16x256xf32> to vector<16x256xbf16>
    %c15_i32_329 = arith.constant 15 : i32
    %496 = tpu.dynamic_rotate %479 by %c15_i32_329 dim 1 : vector<16x256xf32>, i32 -> vector<16x256xf32>
    %c2_330 = arith.constant 2 : index
    %c0_331 = arith.constant 0 : index
    %c0_332 = arith.constant 0 : index
    %497 = vector.load %arg2[%c2_330, %c0_331, %c0_332] : memref<9x1x256xf32, #tpu.memory_space<vmem>>, vector<1x1x256xf32>
    %498 = vector.shape_cast %497 : vector<1x1x256xf32> to vector<1x256xf32>
    %499 = vector.broadcast %498 : vector<1x256xf32> to vector<16x256xf32>
    %500 = arith.mulf %496, %499 : vector<16x256xf32>
    %501 = arith.truncf %500 : vector<16x256xf32> to vector<16x256xbf16>
    %c1_i32_333 = arith.constant 1 : i32
    %502 = tpu.dynamic_rotate %479 by %c1_i32_333 dim 1 : vector<16x256xf32>, i32 -> vector<16x256xf32>
    %c3_334 = arith.constant 3 : index
    %c0_335 = arith.constant 0 : index
    %c0_336 = arith.constant 0 : index
    %503 = vector.load %arg2[%c3_334, %c0_335, %c0_336] : memref<9x1x256xf32, #tpu.memory_space<vmem>>, vector<1x1x256xf32>
    %504 = vector.shape_cast %503 : vector<1x1x256xf32> to vector<1x256xf32>
    %505 = vector.broadcast %504 : vector<1x256xf32> to vector<16x256xf32>
    %506 = arith.mulf %502, %505 : vector<16x256xf32>
    %507 = arith.truncf %506 : vector<16x256xf32> to vector<16x256xbf16>
    %508 = arith.truncf %479 : vector<16x256xf32> to vector<16x256xbf16>
    %c255_i32_337 = arith.constant 255 : i32
    %509 = tpu.dynamic_rotate %479 by %c255_i32_337 dim 1 : vector<16x256xf32>, i32 -> vector<16x256xf32>
    %c5_338 = arith.constant 5 : index
    %c0_339 = arith.constant 0 : index
    %c0_340 = arith.constant 0 : index
    %510 = vector.load %arg2[%c5_338, %c0_339, %c0_340] : memref<9x1x256xf32, #tpu.memory_space<vmem>>, vector<1x1x256xf32>
    %511 = vector.shape_cast %510 : vector<1x1x256xf32> to vector<1x256xf32>
    %512 = vector.broadcast %511 : vector<1x256xf32> to vector<16x256xf32>
    %513 = arith.mulf %509, %512 : vector<16x256xf32>
    %514 = arith.truncf %513 : vector<16x256xf32> to vector<16x256xbf16>
    %c241_i32_341 = arith.constant 241 : i32
    %515 = tpu.dynamic_rotate %479 by %c241_i32_341 dim 1 : vector<16x256xf32>, i32 -> vector<16x256xf32>
    %c6_342 = arith.constant 6 : index
    %c0_343 = arith.constant 0 : index
    %c0_344 = arith.constant 0 : index
    %516 = vector.load %arg2[%c6_342, %c0_343, %c0_344] : memref<9x1x256xf32, #tpu.memory_space<vmem>>, vector<1x1x256xf32>
    %517 = vector.shape_cast %516 : vector<1x1x256xf32> to vector<1x256xf32>
    %518 = vector.broadcast %517 : vector<1x256xf32> to vector<16x256xf32>
    %519 = arith.mulf %515, %518 : vector<16x256xf32>
    %520 = arith.truncf %519 : vector<16x256xf32> to vector<16x256xbf16>
    %c240_i32_345 = arith.constant 240 : i32
    %521 = tpu.dynamic_rotate %479 by %c240_i32_345 dim 1 : vector<16x256xf32>, i32 -> vector<16x256xf32>
    %c7_346 = arith.constant 7 : index
    %c0_347 = arith.constant 0 : index
    %c0_348 = arith.constant 0 : index
    %522 = vector.load %arg2[%c7_346, %c0_347, %c0_348] : memref<9x1x256xf32, #tpu.memory_space<vmem>>, vector<1x1x256xf32>
    %523 = vector.shape_cast %522 : vector<1x1x256xf32> to vector<1x256xf32>
    %524 = vector.broadcast %523 : vector<1x256xf32> to vector<16x256xf32>
    %525 = arith.mulf %521, %524 : vector<16x256xf32>
    %526 = arith.truncf %525 : vector<16x256xf32> to vector<16x256xbf16>
    %c239_i32_349 = arith.constant 239 : i32
    %527 = tpu.dynamic_rotate %479 by %c239_i32_349 dim 1 : vector<16x256xf32>, i32 -> vector<16x256xf32>
    %c8_350 = arith.constant 8 : index
    %c0_351 = arith.constant 0 : index
    %c0_352 = arith.constant 0 : index
    %528 = vector.load %arg2[%c8_350, %c0_351, %c0_352] : memref<9x1x256xf32, #tpu.memory_space<vmem>>, vector<1x1x256xf32>
    %529 = vector.shape_cast %528 : vector<1x1x256xf32> to vector<1x256xf32>
    %530 = vector.broadcast %529 : vector<1x256xf32> to vector<16x256xf32>
    %531 = arith.mulf %527, %530 : vector<16x256xf32>
    %532 = arith.truncf %531 : vector<16x256xf32> to vector<16x256xbf16>
    %533 = tpu.concatenate %489, %495, %501, %507, %508, %514, %520, %526, %532 in 0 : vector<16x256xbf16>, vector<16x256xbf16>, vector<16x256xbf16>, vector<16x256xbf16>, vector<16x256xbf16>, vector<16x256xbf16>, vector<16x256xbf16>, vector<16x256xbf16>, vector<16x256xbf16> -> vector<144x256xbf16>
    %cst_353 = arith.constant dense<0.000000e+00> : vector<16x256xf32>
    %534 = tpu.matmul %481, %533, %cst_353 {dimension_numbers = #tpu.dot_dimension_numbers<[1], [0], [0], [1], [0, 0, 1, 1], [], []>} : vector<16x144xbf16>, vector<144x256xbf16>, vector<16x256xf32> -> vector<16x256xf32>
    %535 = vector.broadcast %483 : vector<16x1xf32> to vector<16x256xf32>
    %536 = arith.addf %534, %535 : vector<16x256xf32>
    %cst_354 = arith.constant dense<0.000000e+00> : vector<16xf32>
    %537 = vector.multi_reduction <add>, %536, %cst_354 [1] : vector<16x256xf32> to vector<16xf32>
    %538 = vector.shape_cast %537 : vector<16xf32> to vector<16x1xf32>
    %cst_355 = arith.constant 3.906250e-03 : f32
    %539 = vector.broadcast %cst_355 : f32 to vector<16x1xf32>
    %540 = arith.mulf %538, %539 : vector<16x1xf32>
    %c1_356 = arith.constant 1 : index
    %c0_357 = arith.constant 0 : index
    %c0_358 = arith.constant 0 : index
    %c0_359 = arith.constant 0 : index
    %c0_360 = arith.constant 0 : index
    %541 = vector.load %arg5[%c1_356, %c0_357, %c0_358, %c0_359, %c0_360] : memref<2x2x2x16x4xf32, #tpu.memory_space<vmem>>, vector<1x1x1x16x4xf32>
    %542 = vector.shape_cast %541 : vector<1x1x1x16x4xf32> to vector<16x4xf32>
    %543 = vector.broadcast %540 : vector<16x1xf32> to vector<16x4xf32>
    %544 = arith.mulf %542, %543 : vector<16x4xf32>
    %cst_361 = arith.constant dense<0.000000e+00> : vector<4xf32>
    %545 = vector.multi_reduction <add>, %544, %cst_361 [0] : vector<16x4xf32> to vector<4xf32>
    %546 = vector.shape_cast %545 : vector<4xf32> to vector<1x4xf32>
    %c1_362 = arith.constant 1 : index
    %c0_363 = arith.constant 0 : index
    %c0_364 = arith.constant 0 : index
    %c0_365 = arith.constant 0 : index
    %547 = vector.load %arg6[%c1_362, %c0_363, %c0_364, %c0_365] : memref<2x2x1x4xf32, #tpu.memory_space<vmem>>, vector<1x1x1x4xf32>
    %548 = vector.shape_cast %547 : vector<1x1x1x4xf32> to vector<1x4xf32>
    %549 = arith.addf %546, %548 : vector<1x4xf32>
    %cst_366 = arith.constant 0.000000e+00 : f32
    %550 = vector.broadcast %cst_366 : f32 to vector<1x4xf32>
    %551 = arith.maximumf %549, %550 : vector<1x4xf32>
    %c1_367 = arith.constant 1 : index
    %c0_368 = arith.constant 0 : index
    %c1_369 = arith.constant 1 : index
    %c0_370 = arith.constant 0 : index
    %c0_371 = arith.constant 0 : index
    %552 = vector.load %arg5[%c1_367, %c0_368, %c1_369, %c0_370, %c0_371] : memref<2x2x2x16x4xf32, #tpu.memory_space<vmem>>, vector<1x1x1x16x4xf32>
    %553 = vector.shape_cast %552 : vector<1x1x1x16x4xf32> to vector<16x4xf32>
    %554 = vector.broadcast %551 : vector<1x4xf32> to vector<16x4xf32>
    %555 = arith.mulf %553, %554 : vector<16x4xf32>
    %cst_372 = arith.constant dense<0.000000e+00> : vector<16xf32>
    %556 = vector.multi_reduction <add>, %555, %cst_372 [1] : vector<16x4xf32> to vector<16xf32>
    %557 = vector.shape_cast %556 : vector<16xf32> to vector<16x1xf32>
    %c1_373 = arith.constant 1 : index
    %c0_374 = arith.constant 0 : index
    %c0_375 = arith.constant 0 : index
    %c0_376 = arith.constant 0 : index
    %558 = vector.load %arg7[%c1_373, %c0_374, %c0_375, %c0_376] : memref<2x2x16x1xf32, #tpu.memory_space<vmem>>, vector<1x1x16x1xf32>
    %559 = vector.shape_cast %558 : vector<1x1x16x1xf32> to vector<16x1xf32>
    %560 = arith.addf %557, %559 : vector<16x1xf32>
    %561 = arith.negf %560 : vector<16x1xf32>
    %562 = math.exp %561 : vector<16x1xf32>
    %cst_377 = arith.constant 1.000000e+00 : f32
    %563 = vector.broadcast %cst_377 : f32 to vector<16x1xf32>
    %564 = arith.addf %563, %562 : vector<16x1xf32>
    %565 = arith.divf %563, %564 : vector<16x1xf32>
    %566 = vector.broadcast %565 : vector<16x1xf32> to vector<16x256xf32>
    %567 = arith.mulf %536, %566 : vector<16x256xf32>
    %568 = arith.addf %567, %420 : vector<16x256xf32>
    %c8_378 = arith.constant 8 : index
    %c0_379 = arith.constant 0 : index
    %c0_380 = arith.constant 0 : index
    %569 = vector.load %arg3[%c8_378, %c0_379, %c0_380] : memref<12x16x144xbf16, #tpu.memory_space<vmem>>, vector<1x16x144xbf16>
    %570 = vector.shape_cast %569 : vector<1x16x144xbf16> to vector<16x144xbf16>
    %c8_381 = arith.constant 8 : index
    %c0_382 = arith.constant 0 : index
    %c0_383 = arith.constant 0 : index
    %571 = vector.load %arg4[%c8_381, %c0_382, %c0_383] : memref<12x16x1xf32, #tpu.memory_space<vmem>>, vector<1x16x1xf32>
    %572 = vector.shape_cast %571 : vector<1x16x1xf32> to vector<16x1xf32>
    %c17_i32_384 = arith.constant 17 : i32
    %573 = tpu.dynamic_rotate %568 by %c17_i32_384 dim 1 : vector<16x256xf32>, i32 -> vector<16x256xf32>
    %c0_385 = arith.constant 0 : index
    %c0_386 = arith.constant 0 : index
    %c0_387 = arith.constant 0 : index
    %574 = vector.load %arg2[%c0_385, %c0_386, %c0_387] : memref<9x1x256xf32, #tpu.memory_space<vmem>>, vector<1x1x256xf32>
    %575 = vector.shape_cast %574 : vector<1x1x256xf32> to vector<1x256xf32>
    %576 = vector.broadcast %575 : vector<1x256xf32> to vector<16x256xf32>
    %577 = arith.mulf %573, %576 : vector<16x256xf32>
    %578 = arith.truncf %577 : vector<16x256xf32> to vector<16x256xbf16>
    %c16_i32_388 = arith.constant 16 : i32
    %579 = tpu.dynamic_rotate %568 by %c16_i32_388 dim 1 : vector<16x256xf32>, i32 -> vector<16x256xf32>
    %c1_389 = arith.constant 1 : index
    %c0_390 = arith.constant 0 : index
    %c0_391 = arith.constant 0 : index
    %580 = vector.load %arg2[%c1_389, %c0_390, %c0_391] : memref<9x1x256xf32, #tpu.memory_space<vmem>>, vector<1x1x256xf32>
    %581 = vector.shape_cast %580 : vector<1x1x256xf32> to vector<1x256xf32>
    %582 = vector.broadcast %581 : vector<1x256xf32> to vector<16x256xf32>
    %583 = arith.mulf %579, %582 : vector<16x256xf32>
    %584 = arith.truncf %583 : vector<16x256xf32> to vector<16x256xbf16>
    %c15_i32_392 = arith.constant 15 : i32
    %585 = tpu.dynamic_rotate %568 by %c15_i32_392 dim 1 : vector<16x256xf32>, i32 -> vector<16x256xf32>
    %c2_393 = arith.constant 2 : index
    %c0_394 = arith.constant 0 : index
    %c0_395 = arith.constant 0 : index
    %586 = vector.load %arg2[%c2_393, %c0_394, %c0_395] : memref<9x1x256xf32, #tpu.memory_space<vmem>>, vector<1x1x256xf32>
    %587 = vector.shape_cast %586 : vector<1x1x256xf32> to vector<1x256xf32>
    %588 = vector.broadcast %587 : vector<1x256xf32> to vector<16x256xf32>
    %589 = arith.mulf %585, %588 : vector<16x256xf32>
    %590 = arith.truncf %589 : vector<16x256xf32> to vector<16x256xbf16>
    %c1_i32_396 = arith.constant 1 : i32
    %591 = tpu.dynamic_rotate %568 by %c1_i32_396 dim 1 : vector<16x256xf32>, i32 -> vector<16x256xf32>
    %c3_397 = arith.constant 3 : index
    %c0_398 = arith.constant 0 : index
    %c0_399 = arith.constant 0 : index
    %592 = vector.load %arg2[%c3_397, %c0_398, %c0_399] : memref<9x1x256xf32, #tpu.memory_space<vmem>>, vector<1x1x256xf32>
    %593 = vector.shape_cast %592 : vector<1x1x256xf32> to vector<1x256xf32>
    %594 = vector.broadcast %593 : vector<1x256xf32> to vector<16x256xf32>
    %595 = arith.mulf %591, %594 : vector<16x256xf32>
    %596 = arith.truncf %595 : vector<16x256xf32> to vector<16x256xbf16>
    %597 = arith.truncf %568 : vector<16x256xf32> to vector<16x256xbf16>
    %c255_i32_400 = arith.constant 255 : i32
    %598 = tpu.dynamic_rotate %568 by %c255_i32_400 dim 1 : vector<16x256xf32>, i32 -> vector<16x256xf32>
    %c5_401 = arith.constant 5 : index
    %c0_402 = arith.constant 0 : index
    %c0_403 = arith.constant 0 : index
    %599 = vector.load %arg2[%c5_401, %c0_402, %c0_403] : memref<9x1x256xf32, #tpu.memory_space<vmem>>, vector<1x1x256xf32>
    %600 = vector.shape_cast %599 : vector<1x1x256xf32> to vector<1x256xf32>
    %601 = vector.broadcast %600 : vector<1x256xf32> to vector<16x256xf32>
    %602 = arith.mulf %598, %601 : vector<16x256xf32>
    %603 = arith.truncf %602 : vector<16x256xf32> to vector<16x256xbf16>
    %c241_i32_404 = arith.constant 241 : i32
    %604 = tpu.dynamic_rotate %568 by %c241_i32_404 dim 1 : vector<16x256xf32>, i32 -> vector<16x256xf32>
    %c6_405 = arith.constant 6 : index
    %c0_406 = arith.constant 0 : index
    %c0_407 = arith.constant 0 : index
    %605 = vector.load %arg2[%c6_405, %c0_406, %c0_407] : memref<9x1x256xf32, #tpu.memory_space<vmem>>, vector<1x1x256xf32>
    %606 = vector.shape_cast %605 : vector<1x1x256xf32> to vector<1x256xf32>
    %607 = vector.broadcast %606 : vector<1x256xf32> to vector<16x256xf32>
    %608 = arith.mulf %604, %607 : vector<16x256xf32>
    %609 = arith.truncf %608 : vector<16x256xf32> to vector<16x256xbf16>
    %c240_i32_408 = arith.constant 240 : i32
    %610 = tpu.dynamic_rotate %568 by %c240_i32_408 dim 1 : vector<16x256xf32>, i32 -> vector<16x256xf32>
    %c7_409 = arith.constant 7 : index
    %c0_410 = arith.constant 0 : index
    %c0_411 = arith.constant 0 : index
    %611 = vector.load %arg2[%c7_409, %c0_410, %c0_411] : memref<9x1x256xf32, #tpu.memory_space<vmem>>, vector<1x1x256xf32>
    %612 = vector.shape_cast %611 : vector<1x1x256xf32> to vector<1x256xf32>
    %613 = vector.broadcast %612 : vector<1x256xf32> to vector<16x256xf32>
    %614 = arith.mulf %610, %613 : vector<16x256xf32>
    %615 = arith.truncf %614 : vector<16x256xf32> to vector<16x256xbf16>
    %c239_i32_412 = arith.constant 239 : i32
    %616 = tpu.dynamic_rotate %568 by %c239_i32_412 dim 1 : vector<16x256xf32>, i32 -> vector<16x256xf32>
    %c8_413 = arith.constant 8 : index
    %c0_414 = arith.constant 0 : index
    %c0_415 = arith.constant 0 : index
    %617 = vector.load %arg2[%c8_413, %c0_414, %c0_415] : memref<9x1x256xf32, #tpu.memory_space<vmem>>, vector<1x1x256xf32>
    %618 = vector.shape_cast %617 : vector<1x1x256xf32> to vector<1x256xf32>
    %619 = vector.broadcast %618 : vector<1x256xf32> to vector<16x256xf32>
    %620 = arith.mulf %616, %619 : vector<16x256xf32>
    %621 = arith.truncf %620 : vector<16x256xf32> to vector<16x256xbf16>
    %622 = tpu.concatenate %578, %584, %590, %596, %597, %603, %609, %615, %621 in 0 : vector<16x256xbf16>, vector<16x256xbf16>, vector<16x256xbf16>, vector<16x256xbf16>, vector<16x256xbf16>, vector<16x256xbf16>, vector<16x256xbf16>, vector<16x256xbf16>, vector<16x256xbf16> -> vector<144x256xbf16>
    %cst_416 = arith.constant dense<0.000000e+00> : vector<16x256xf32>
    %623 = tpu.matmul %570, %622, %cst_416 {dimension_numbers = #tpu.dot_dimension_numbers<[1], [0], [0], [1], [0, 0, 1, 1], [], []>} : vector<16x144xbf16>, vector<144x256xbf16>, vector<16x256xf32> -> vector<16x256xf32>
    %624 = vector.broadcast %572 : vector<16x1xf32> to vector<16x256xf32>
    %625 = arith.addf %623, %624 : vector<16x256xf32>
    %cst_417 = arith.constant 0.000000e+00 : f32
    %626 = vector.broadcast %cst_417 : f32 to vector<16x256xf32>
    %627 = arith.maximumf %625, %626 : vector<16x256xf32>
    %c9 = arith.constant 9 : index
    %c0_418 = arith.constant 0 : index
    %c0_419 = arith.constant 0 : index
    %628 = vector.load %arg3[%c9, %c0_418, %c0_419] : memref<12x16x144xbf16, #tpu.memory_space<vmem>>, vector<1x16x144xbf16>
    %629 = vector.shape_cast %628 : vector<1x16x144xbf16> to vector<16x144xbf16>
    %c9_420 = arith.constant 9 : index
    %c0_421 = arith.constant 0 : index
    %c0_422 = arith.constant 0 : index
    %630 = vector.load %arg4[%c9_420, %c0_421, %c0_422] : memref<12x16x1xf32, #tpu.memory_space<vmem>>, vector<1x16x1xf32>
    %631 = vector.shape_cast %630 : vector<1x16x1xf32> to vector<16x1xf32>
    %c17_i32_423 = arith.constant 17 : i32
    %632 = tpu.dynamic_rotate %627 by %c17_i32_423 dim 1 : vector<16x256xf32>, i32 -> vector<16x256xf32>
    %c0_424 = arith.constant 0 : index
    %c0_425 = arith.constant 0 : index
    %c0_426 = arith.constant 0 : index
    %633 = vector.load %arg2[%c0_424, %c0_425, %c0_426] : memref<9x1x256xf32, #tpu.memory_space<vmem>>, vector<1x1x256xf32>
    %634 = vector.shape_cast %633 : vector<1x1x256xf32> to vector<1x256xf32>
    %635 = vector.broadcast %634 : vector<1x256xf32> to vector<16x256xf32>
    %636 = arith.mulf %632, %635 : vector<16x256xf32>
    %637 = arith.truncf %636 : vector<16x256xf32> to vector<16x256xbf16>
    %c16_i32_427 = arith.constant 16 : i32
    %638 = tpu.dynamic_rotate %627 by %c16_i32_427 dim 1 : vector<16x256xf32>, i32 -> vector<16x256xf32>
    %c1_428 = arith.constant 1 : index
    %c0_429 = arith.constant 0 : index
    %c0_430 = arith.constant 0 : index
    %639 = vector.load %arg2[%c1_428, %c0_429, %c0_430] : memref<9x1x256xf32, #tpu.memory_space<vmem>>, vector<1x1x256xf32>
    %640 = vector.shape_cast %639 : vector<1x1x256xf32> to vector<1x256xf32>
    %641 = vector.broadcast %640 : vector<1x256xf32> to vector<16x256xf32>
    %642 = arith.mulf %638, %641 : vector<16x256xf32>
    %643 = arith.truncf %642 : vector<16x256xf32> to vector<16x256xbf16>
    %c15_i32_431 = arith.constant 15 : i32
    %644 = tpu.dynamic_rotate %627 by %c15_i32_431 dim 1 : vector<16x256xf32>, i32 -> vector<16x256xf32>
    %c2_432 = arith.constant 2 : index
    %c0_433 = arith.constant 0 : index
    %c0_434 = arith.constant 0 : index
    %645 = vector.load %arg2[%c2_432, %c0_433, %c0_434] : memref<9x1x256xf32, #tpu.memory_space<vmem>>, vector<1x1x256xf32>
    %646 = vector.shape_cast %645 : vector<1x1x256xf32> to vector<1x256xf32>
    %647 = vector.broadcast %646 : vector<1x256xf32> to vector<16x256xf32>
    %648 = arith.mulf %644, %647 : vector<16x256xf32>
    %649 = arith.truncf %648 : vector<16x256xf32> to vector<16x256xbf16>
    %c1_i32_435 = arith.constant 1 : i32
    %650 = tpu.dynamic_rotate %627 by %c1_i32_435 dim 1 : vector<16x256xf32>, i32 -> vector<16x256xf32>
    %c3_436 = arith.constant 3 : index
    %c0_437 = arith.constant 0 : index
    %c0_438 = arith.constant 0 : index
    %651 = vector.load %arg2[%c3_436, %c0_437, %c0_438] : memref<9x1x256xf32, #tpu.memory_space<vmem>>, vector<1x1x256xf32>
    %652 = vector.shape_cast %651 : vector<1x1x256xf32> to vector<1x256xf32>
    %653 = vector.broadcast %652 : vector<1x256xf32> to vector<16x256xf32>
    %654 = arith.mulf %650, %653 : vector<16x256xf32>
    %655 = arith.truncf %654 : vector<16x256xf32> to vector<16x256xbf16>
    %656 = arith.truncf %627 : vector<16x256xf32> to vector<16x256xbf16>
    %c255_i32_439 = arith.constant 255 : i32
    %657 = tpu.dynamic_rotate %627 by %c255_i32_439 dim 1 : vector<16x256xf32>, i32 -> vector<16x256xf32>
    %c5_440 = arith.constant 5 : index
    %c0_441 = arith.constant 0 : index
    %c0_442 = arith.constant 0 : index
    %658 = vector.load %arg2[%c5_440, %c0_441, %c0_442] : memref<9x1x256xf32, #tpu.memory_space<vmem>>, vector<1x1x256xf32>
    %659 = vector.shape_cast %658 : vector<1x1x256xf32> to vector<1x256xf32>
    %660 = vector.broadcast %659 : vector<1x256xf32> to vector<16x256xf32>
    %661 = arith.mulf %657, %660 : vector<16x256xf32>
    %662 = arith.truncf %661 : vector<16x256xf32> to vector<16x256xbf16>
    %c241_i32_443 = arith.constant 241 : i32
    %663 = tpu.dynamic_rotate %627 by %c241_i32_443 dim 1 : vector<16x256xf32>, i32 -> vector<16x256xf32>
    %c6_444 = arith.constant 6 : index
    %c0_445 = arith.constant 0 : index
    %c0_446 = arith.constant 0 : index
    %664 = vector.load %arg2[%c6_444, %c0_445, %c0_446] : memref<9x1x256xf32, #tpu.memory_space<vmem>>, vector<1x1x256xf32>
    %665 = vector.shape_cast %664 : vector<1x1x256xf32> to vector<1x256xf32>
    %666 = vector.broadcast %665 : vector<1x256xf32> to vector<16x256xf32>
    %667 = arith.mulf %663, %666 : vector<16x256xf32>
    %668 = arith.truncf %667 : vector<16x256xf32> to vector<16x256xbf16>
    %c240_i32_447 = arith.constant 240 : i32
    %669 = tpu.dynamic_rotate %627 by %c240_i32_447 dim 1 : vector<16x256xf32>, i32 -> vector<16x256xf32>
    %c7_448 = arith.constant 7 : index
    %c0_449 = arith.constant 0 : index
    %c0_450 = arith.constant 0 : index
    %670 = vector.load %arg2[%c7_448, %c0_449, %c0_450] : memref<9x1x256xf32, #tpu.memory_space<vmem>>, vector<1x1x256xf32>
    %671 = vector.shape_cast %670 : vector<1x1x256xf32> to vector<1x256xf32>
    %672 = vector.broadcast %671 : vector<1x256xf32> to vector<16x256xf32>
    %673 = arith.mulf %669, %672 : vector<16x256xf32>
    %674 = arith.truncf %673 : vector<16x256xf32> to vector<16x256xbf16>
    %c239_i32_451 = arith.constant 239 : i32
    %675 = tpu.dynamic_rotate %627 by %c239_i32_451 dim 1 : vector<16x256xf32>, i32 -> vector<16x256xf32>
    %c8_452 = arith.constant 8 : index
    %c0_453 = arith.constant 0 : index
    %c0_454 = arith.constant 0 : index
    %676 = vector.load %arg2[%c8_452, %c0_453, %c0_454] : memref<9x1x256xf32, #tpu.memory_space<vmem>>, vector<1x1x256xf32>
    %677 = vector.shape_cast %676 : vector<1x1x256xf32> to vector<1x256xf32>
    %678 = vector.broadcast %677 : vector<1x256xf32> to vector<16x256xf32>
    %679 = arith.mulf %675, %678 : vector<16x256xf32>
    %680 = arith.truncf %679 : vector<16x256xf32> to vector<16x256xbf16>
    %681 = tpu.concatenate %637, %643, %649, %655, %656, %662, %668, %674, %680 in 0 : vector<16x256xbf16>, vector<16x256xbf16>, vector<16x256xbf16>, vector<16x256xbf16>, vector<16x256xbf16>, vector<16x256xbf16>, vector<16x256xbf16>, vector<16x256xbf16>, vector<16x256xbf16> -> vector<144x256xbf16>
    %cst_455 = arith.constant dense<0.000000e+00> : vector<16x256xf32>
    %682 = tpu.matmul %629, %681, %cst_455 {dimension_numbers = #tpu.dot_dimension_numbers<[1], [0], [0], [1], [0, 0, 1, 1], [], []>} : vector<16x144xbf16>, vector<144x256xbf16>, vector<16x256xf32> -> vector<16x256xf32>
    %683 = vector.broadcast %631 : vector<16x1xf32> to vector<16x256xf32>
    %684 = arith.addf %682, %683 : vector<16x256xf32>
    %cst_456 = arith.constant dense<0.000000e+00> : vector<16xf32>
    %685 = vector.multi_reduction <add>, %684, %cst_456 [1] : vector<16x256xf32> to vector<16xf32>
    %686 = vector.shape_cast %685 : vector<16xf32> to vector<16x1xf32>
    %cst_457 = arith.constant 3.906250e-03 : f32
    %687 = vector.broadcast %cst_457 : f32 to vector<16x1xf32>
    %688 = arith.mulf %686, %687 : vector<16x1xf32>
    %c1_458 = arith.constant 1 : index
    %c1_459 = arith.constant 1 : index
    %c0_460 = arith.constant 0 : index
    %c0_461 = arith.constant 0 : index
    %c0_462 = arith.constant 0 : index
    %689 = vector.load %arg5[%c1_458, %c1_459, %c0_460, %c0_461, %c0_462] : memref<2x2x2x16x4xf32, #tpu.memory_space<vmem>>, vector<1x1x1x16x4xf32>
    %690 = vector.shape_cast %689 : vector<1x1x1x16x4xf32> to vector<16x4xf32>
    %691 = vector.broadcast %688 : vector<16x1xf32> to vector<16x4xf32>
    %692 = arith.mulf %690, %691 : vector<16x4xf32>
    %cst_463 = arith.constant dense<0.000000e+00> : vector<4xf32>
    %693 = vector.multi_reduction <add>, %692, %cst_463 [0] : vector<16x4xf32> to vector<4xf32>
    %694 = vector.shape_cast %693 : vector<4xf32> to vector<1x4xf32>
    %c1_464 = arith.constant 1 : index
    %c1_465 = arith.constant 1 : index
    %c0_466 = arith.constant 0 : index
    %c0_467 = arith.constant 0 : index
    %695 = vector.load %arg6[%c1_464, %c1_465, %c0_466, %c0_467] : memref<2x2x1x4xf32, #tpu.memory_space<vmem>>, vector<1x1x1x4xf32>
    %696 = vector.shape_cast %695 : vector<1x1x1x4xf32> to vector<1x4xf32>
    %697 = arith.addf %694, %696 : vector<1x4xf32>
    %cst_468 = arith.constant 0.000000e+00 : f32
    %698 = vector.broadcast %cst_468 : f32 to vector<1x4xf32>
    %699 = arith.maximumf %697, %698 : vector<1x4xf32>
    %c1_469 = arith.constant 1 : index
    %c1_470 = arith.constant 1 : index
    %c1_471 = arith.constant 1 : index
    %c0_472 = arith.constant 0 : index
    %c0_473 = arith.constant 0 : index
    %700 = vector.load %arg5[%c1_469, %c1_470, %c1_471, %c0_472, %c0_473] : memref<2x2x2x16x4xf32, #tpu.memory_space<vmem>>, vector<1x1x1x16x4xf32>
    %701 = vector.shape_cast %700 : vector<1x1x1x16x4xf32> to vector<16x4xf32>
    %702 = vector.broadcast %699 : vector<1x4xf32> to vector<16x4xf32>
    %703 = arith.mulf %701, %702 : vector<16x4xf32>
    %cst_474 = arith.constant dense<0.000000e+00> : vector<16xf32>
    %704 = vector.multi_reduction <add>, %703, %cst_474 [1] : vector<16x4xf32> to vector<16xf32>
    %705 = vector.shape_cast %704 : vector<16xf32> to vector<16x1xf32>
    %c1_475 = arith.constant 1 : index
    %c1_476 = arith.constant 1 : index
    %c0_477 = arith.constant 0 : index
    %c0_478 = arith.constant 0 : index
    %706 = vector.load %arg7[%c1_475, %c1_476, %c0_477, %c0_478] : memref<2x2x16x1xf32, #tpu.memory_space<vmem>>, vector<1x1x16x1xf32>
    %707 = vector.shape_cast %706 : vector<1x1x16x1xf32> to vector<16x1xf32>
    %708 = arith.addf %705, %707 : vector<16x1xf32>
    %709 = arith.negf %708 : vector<16x1xf32>
    %710 = math.exp %709 : vector<16x1xf32>
    %cst_479 = arith.constant 1.000000e+00 : f32
    %711 = vector.broadcast %cst_479 : f32 to vector<16x1xf32>
    %712 = arith.addf %711, %710 : vector<16x1xf32>
    %713 = arith.divf %711, %712 : vector<16x1xf32>
    %714 = vector.broadcast %713 : vector<16x1xf32> to vector<16x256xf32>
    %715 = arith.mulf %684, %714 : vector<16x256xf32>
    %716 = arith.addf %715, %568 : vector<16x256xf32>
    %c10 = arith.constant 10 : index
    %c0_480 = arith.constant 0 : index
    %c0_481 = arith.constant 0 : index
    %717 = vector.load %arg3[%c10, %c0_480, %c0_481] : memref<12x16x144xbf16, #tpu.memory_space<vmem>>, vector<1x16x144xbf16>
    %718 = vector.shape_cast %717 : vector<1x16x144xbf16> to vector<16x144xbf16>
    %c10_482 = arith.constant 10 : index
    %c0_483 = arith.constant 0 : index
    %c0_484 = arith.constant 0 : index
    %719 = vector.load %arg4[%c10_482, %c0_483, %c0_484] : memref<12x16x1xf32, #tpu.memory_space<vmem>>, vector<1x16x1xf32>
    %720 = vector.shape_cast %719 : vector<1x16x1xf32> to vector<16x1xf32>
    %c17_i32_485 = arith.constant 17 : i32
    %721 = tpu.dynamic_rotate %716 by %c17_i32_485 dim 1 : vector<16x256xf32>, i32 -> vector<16x256xf32>
    %c0_486 = arith.constant 0 : index
    %c0_487 = arith.constant 0 : index
    %c0_488 = arith.constant 0 : index
    %722 = vector.load %arg2[%c0_486, %c0_487, %c0_488] : memref<9x1x256xf32, #tpu.memory_space<vmem>>, vector<1x1x256xf32>
    %723 = vector.shape_cast %722 : vector<1x1x256xf32> to vector<1x256xf32>
    %724 = vector.broadcast %723 : vector<1x256xf32> to vector<16x256xf32>
    %725 = arith.mulf %721, %724 : vector<16x256xf32>
    %726 = arith.truncf %725 : vector<16x256xf32> to vector<16x256xbf16>
    %c16_i32_489 = arith.constant 16 : i32
    %727 = tpu.dynamic_rotate %716 by %c16_i32_489 dim 1 : vector<16x256xf32>, i32 -> vector<16x256xf32>
    %c1_490 = arith.constant 1 : index
    %c0_491 = arith.constant 0 : index
    %c0_492 = arith.constant 0 : index
    %728 = vector.load %arg2[%c1_490, %c0_491, %c0_492] : memref<9x1x256xf32, #tpu.memory_space<vmem>>, vector<1x1x256xf32>
    %729 = vector.shape_cast %728 : vector<1x1x256xf32> to vector<1x256xf32>
    %730 = vector.broadcast %729 : vector<1x256xf32> to vector<16x256xf32>
    %731 = arith.mulf %727, %730 : vector<16x256xf32>
    %732 = arith.truncf %731 : vector<16x256xf32> to vector<16x256xbf16>
    %c15_i32_493 = arith.constant 15 : i32
    %733 = tpu.dynamic_rotate %716 by %c15_i32_493 dim 1 : vector<16x256xf32>, i32 -> vector<16x256xf32>
    %c2_494 = arith.constant 2 : index
    %c0_495 = arith.constant 0 : index
    %c0_496 = arith.constant 0 : index
    %734 = vector.load %arg2[%c2_494, %c0_495, %c0_496] : memref<9x1x256xf32, #tpu.memory_space<vmem>>, vector<1x1x256xf32>
    %735 = vector.shape_cast %734 : vector<1x1x256xf32> to vector<1x256xf32>
    %736 = vector.broadcast %735 : vector<1x256xf32> to vector<16x256xf32>
    %737 = arith.mulf %733, %736 : vector<16x256xf32>
    %738 = arith.truncf %737 : vector<16x256xf32> to vector<16x256xbf16>
    %c1_i32_497 = arith.constant 1 : i32
    %739 = tpu.dynamic_rotate %716 by %c1_i32_497 dim 1 : vector<16x256xf32>, i32 -> vector<16x256xf32>
    %c3_498 = arith.constant 3 : index
    %c0_499 = arith.constant 0 : index
    %c0_500 = arith.constant 0 : index
    %740 = vector.load %arg2[%c3_498, %c0_499, %c0_500] : memref<9x1x256xf32, #tpu.memory_space<vmem>>, vector<1x1x256xf32>
    %741 = vector.shape_cast %740 : vector<1x1x256xf32> to vector<1x256xf32>
    %742 = vector.broadcast %741 : vector<1x256xf32> to vector<16x256xf32>
    %743 = arith.mulf %739, %742 : vector<16x256xf32>
    %744 = arith.truncf %743 : vector<16x256xf32> to vector<16x256xbf16>
    %745 = arith.truncf %716 : vector<16x256xf32> to vector<16x256xbf16>
    %c255_i32_501 = arith.constant 255 : i32
    %746 = tpu.dynamic_rotate %716 by %c255_i32_501 dim 1 : vector<16x256xf32>, i32 -> vector<16x256xf32>
    %c5_502 = arith.constant 5 : index
    %c0_503 = arith.constant 0 : index
    %c0_504 = arith.constant 0 : index
    %747 = vector.load %arg2[%c5_502, %c0_503, %c0_504] : memref<9x1x256xf32, #tpu.memory_space<vmem>>, vector<1x1x256xf32>
    %748 = vector.shape_cast %747 : vector<1x1x256xf32> to vector<1x256xf32>
    %749 = vector.broadcast %748 : vector<1x256xf32> to vector<16x256xf32>
    %750 = arith.mulf %746, %749 : vector<16x256xf32>
    %751 = arith.truncf %750 : vector<16x256xf32> to vector<16x256xbf16>
    %c241_i32_505 = arith.constant 241 : i32
    %752 = tpu.dynamic_rotate %716 by %c241_i32_505 dim 1 : vector<16x256xf32>, i32 -> vector<16x256xf32>
    %c6_506 = arith.constant 6 : index
    %c0_507 = arith.constant 0 : index
    %c0_508 = arith.constant 0 : index
    %753 = vector.load %arg2[%c6_506, %c0_507, %c0_508] : memref<9x1x256xf32, #tpu.memory_space<vmem>>, vector<1x1x256xf32>
    %754 = vector.shape_cast %753 : vector<1x1x256xf32> to vector<1x256xf32>
    %755 = vector.broadcast %754 : vector<1x256xf32> to vector<16x256xf32>
    %756 = arith.mulf %752, %755 : vector<16x256xf32>
    %757 = arith.truncf %756 : vector<16x256xf32> to vector<16x256xbf16>
    %c240_i32_509 = arith.constant 240 : i32
    %758 = tpu.dynamic_rotate %716 by %c240_i32_509 dim 1 : vector<16x256xf32>, i32 -> vector<16x256xf32>
    %c7_510 = arith.constant 7 : index
    %c0_511 = arith.constant 0 : index
    %c0_512 = arith.constant 0 : index
    %759 = vector.load %arg2[%c7_510, %c0_511, %c0_512] : memref<9x1x256xf32, #tpu.memory_space<vmem>>, vector<1x1x256xf32>
    %760 = vector.shape_cast %759 : vector<1x1x256xf32> to vector<1x256xf32>
    %761 = vector.broadcast %760 : vector<1x256xf32> to vector<16x256xf32>
    %762 = arith.mulf %758, %761 : vector<16x256xf32>
    %763 = arith.truncf %762 : vector<16x256xf32> to vector<16x256xbf16>
    %c239_i32_513 = arith.constant 239 : i32
    %764 = tpu.dynamic_rotate %716 by %c239_i32_513 dim 1 : vector<16x256xf32>, i32 -> vector<16x256xf32>
    %c8_514 = arith.constant 8 : index
    %c0_515 = arith.constant 0 : index
    %c0_516 = arith.constant 0 : index
    %765 = vector.load %arg2[%c8_514, %c0_515, %c0_516] : memref<9x1x256xf32, #tpu.memory_space<vmem>>, vector<1x1x256xf32>
    %766 = vector.shape_cast %765 : vector<1x1x256xf32> to vector<1x256xf32>
    %767 = vector.broadcast %766 : vector<1x256xf32> to vector<16x256xf32>
    %768 = arith.mulf %764, %767 : vector<16x256xf32>
    %769 = arith.truncf %768 : vector<16x256xf32> to vector<16x256xbf16>
    %770 = tpu.concatenate %726, %732, %738, %744, %745, %751, %757, %763, %769 in 0 : vector<16x256xbf16>, vector<16x256xbf16>, vector<16x256xbf16>, vector<16x256xbf16>, vector<16x256xbf16>, vector<16x256xbf16>, vector<16x256xbf16>, vector<16x256xbf16>, vector<16x256xbf16> -> vector<144x256xbf16>
    %cst_517 = arith.constant dense<0.000000e+00> : vector<16x256xf32>
    %771 = tpu.matmul %718, %770, %cst_517 {dimension_numbers = #tpu.dot_dimension_numbers<[1], [0], [0], [1], [0, 0, 1, 1], [], []>} : vector<16x144xbf16>, vector<144x256xbf16>, vector<16x256xf32> -> vector<16x256xf32>
    %772 = vector.broadcast %720 : vector<16x1xf32> to vector<16x256xf32>
    %773 = arith.addf %771, %772 : vector<16x256xf32>
    %774 = arith.addf %773, %420 : vector<16x256xf32>
    %c11 = arith.constant 11 : index
    %c0_518 = arith.constant 0 : index
    %c0_519 = arith.constant 0 : index
    %775 = vector.load %arg3[%c11, %c0_518, %c0_519] : memref<12x16x144xbf16, #tpu.memory_space<vmem>>, vector<1x16x144xbf16>
    %776 = vector.shape_cast %775 : vector<1x16x144xbf16> to vector<16x144xbf16>
    %c11_520 = arith.constant 11 : index
    %c0_521 = arith.constant 0 : index
    %c0_522 = arith.constant 0 : index
    %777 = vector.load %arg4[%c11_520, %c0_521, %c0_522] : memref<12x16x1xf32, #tpu.memory_space<vmem>>, vector<1x16x1xf32>
    %778 = vector.shape_cast %777 : vector<1x16x1xf32> to vector<16x1xf32>
    %c17_i32_523 = arith.constant 17 : i32
    %779 = tpu.dynamic_rotate %774 by %c17_i32_523 dim 1 : vector<16x256xf32>, i32 -> vector<16x256xf32>
    %c0_524 = arith.constant 0 : index
    %c0_525 = arith.constant 0 : index
    %c0_526 = arith.constant 0 : index
    %780 = vector.load %arg2[%c0_524, %c0_525, %c0_526] : memref<9x1x256xf32, #tpu.memory_space<vmem>>, vector<1x1x256xf32>
    %781 = vector.shape_cast %780 : vector<1x1x256xf32> to vector<1x256xf32>
    %782 = vector.broadcast %781 : vector<1x256xf32> to vector<16x256xf32>
    %783 = arith.mulf %779, %782 : vector<16x256xf32>
    %784 = arith.truncf %783 : vector<16x256xf32> to vector<16x256xbf16>
    %c16_i32_527 = arith.constant 16 : i32
    %785 = tpu.dynamic_rotate %774 by %c16_i32_527 dim 1 : vector<16x256xf32>, i32 -> vector<16x256xf32>
    %c1_528 = arith.constant 1 : index
    %c0_529 = arith.constant 0 : index
    %c0_530 = arith.constant 0 : index
    %786 = vector.load %arg2[%c1_528, %c0_529, %c0_530] : memref<9x1x256xf32, #tpu.memory_space<vmem>>, vector<1x1x256xf32>
    %787 = vector.shape_cast %786 : vector<1x1x256xf32> to vector<1x256xf32>
    %788 = vector.broadcast %787 : vector<1x256xf32> to vector<16x256xf32>
    %789 = arith.mulf %785, %788 : vector<16x256xf32>
    %790 = arith.truncf %789 : vector<16x256xf32> to vector<16x256xbf16>
    %c15_i32_531 = arith.constant 15 : i32
    %791 = tpu.dynamic_rotate %774 by %c15_i32_531 dim 1 : vector<16x256xf32>, i32 -> vector<16x256xf32>
    %c2_532 = arith.constant 2 : index
    %c0_533 = arith.constant 0 : index
    %c0_534 = arith.constant 0 : index
    %792 = vector.load %arg2[%c2_532, %c0_533, %c0_534] : memref<9x1x256xf32, #tpu.memory_space<vmem>>, vector<1x1x256xf32>
    %793 = vector.shape_cast %792 : vector<1x1x256xf32> to vector<1x256xf32>
    %794 = vector.broadcast %793 : vector<1x256xf32> to vector<16x256xf32>
    %795 = arith.mulf %791, %794 : vector<16x256xf32>
    %796 = arith.truncf %795 : vector<16x256xf32> to vector<16x256xbf16>
    %c1_i32_535 = arith.constant 1 : i32
    %797 = tpu.dynamic_rotate %774 by %c1_i32_535 dim 1 : vector<16x256xf32>, i32 -> vector<16x256xf32>
    %c3_536 = arith.constant 3 : index
    %c0_537 = arith.constant 0 : index
    %c0_538 = arith.constant 0 : index
    %798 = vector.load %arg2[%c3_536, %c0_537, %c0_538] : memref<9x1x256xf32, #tpu.memory_space<vmem>>, vector<1x1x256xf32>
    %799 = vector.shape_cast %798 : vector<1x1x256xf32> to vector<1x256xf32>
    %800 = vector.broadcast %799 : vector<1x256xf32> to vector<16x256xf32>
    %801 = arith.mulf %797, %800 : vector<16x256xf32>
    %802 = arith.truncf %801 : vector<16x256xf32> to vector<16x256xbf16>
    %803 = arith.truncf %774 : vector<16x256xf32> to vector<16x256xbf16>
    %c255_i32_539 = arith.constant 255 : i32
    %804 = tpu.dynamic_rotate %774 by %c255_i32_539 dim 1 : vector<16x256xf32>, i32 -> vector<16x256xf32>
    %c5_540 = arith.constant 5 : index
    %c0_541 = arith.constant 0 : index
    %c0_542 = arith.constant 0 : index
    %805 = vector.load %arg2[%c5_540, %c0_541, %c0_542] : memref<9x1x256xf32, #tpu.memory_space<vmem>>, vector<1x1x256xf32>
    %806 = vector.shape_cast %805 : vector<1x1x256xf32> to vector<1x256xf32>
    %807 = vector.broadcast %806 : vector<1x256xf32> to vector<16x256xf32>
    %808 = arith.mulf %804, %807 : vector<16x256xf32>
    %809 = arith.truncf %808 : vector<16x256xf32> to vector<16x256xbf16>
    %c241_i32_543 = arith.constant 241 : i32
    %810 = tpu.dynamic_rotate %774 by %c241_i32_543 dim 1 : vector<16x256xf32>, i32 -> vector<16x256xf32>
    %c6_544 = arith.constant 6 : index
    %c0_545 = arith.constant 0 : index
    %c0_546 = arith.constant 0 : index
    %811 = vector.load %arg2[%c6_544, %c0_545, %c0_546] : memref<9x1x256xf32, #tpu.memory_space<vmem>>, vector<1x1x256xf32>
    %812 = vector.shape_cast %811 : vector<1x1x256xf32> to vector<1x256xf32>
    %813 = vector.broadcast %812 : vector<1x256xf32> to vector<16x256xf32>
    %814 = arith.mulf %810, %813 : vector<16x256xf32>
    %815 = arith.truncf %814 : vector<16x256xf32> to vector<16x256xbf16>
    %c240_i32_547 = arith.constant 240 : i32
    %816 = tpu.dynamic_rotate %774 by %c240_i32_547 dim 1 : vector<16x256xf32>, i32 -> vector<16x256xf32>
    %c7_548 = arith.constant 7 : index
    %c0_549 = arith.constant 0 : index
    %c0_550 = arith.constant 0 : index
    %817 = vector.load %arg2[%c7_548, %c0_549, %c0_550] : memref<9x1x256xf32, #tpu.memory_space<vmem>>, vector<1x1x256xf32>
    %818 = vector.shape_cast %817 : vector<1x1x256xf32> to vector<1x256xf32>
    %819 = vector.broadcast %818 : vector<1x256xf32> to vector<16x256xf32>
    %820 = arith.mulf %816, %819 : vector<16x256xf32>
    %821 = arith.truncf %820 : vector<16x256xf32> to vector<16x256xbf16>
    %c239_i32_551 = arith.constant 239 : i32
    %822 = tpu.dynamic_rotate %774 by %c239_i32_551 dim 1 : vector<16x256xf32>, i32 -> vector<16x256xf32>
    %c8_552 = arith.constant 8 : index
    %c0_553 = arith.constant 0 : index
    %c0_554 = arith.constant 0 : index
    %823 = vector.load %arg2[%c8_552, %c0_553, %c0_554] : memref<9x1x256xf32, #tpu.memory_space<vmem>>, vector<1x1x256xf32>
    %824 = vector.shape_cast %823 : vector<1x1x256xf32> to vector<1x256xf32>
    %825 = vector.broadcast %824 : vector<1x256xf32> to vector<16x256xf32>
    %826 = arith.mulf %822, %825 : vector<16x256xf32>
    %827 = arith.truncf %826 : vector<16x256xf32> to vector<16x256xbf16>
    %828 = tpu.concatenate %784, %790, %796, %802, %803, %809, %815, %821, %827 in 0 : vector<16x256xbf16>, vector<16x256xbf16>, vector<16x256xbf16>, vector<16x256xbf16>, vector<16x256xbf16>, vector<16x256xbf16>, vector<16x256xbf16>, vector<16x256xbf16>, vector<16x256xbf16> -> vector<144x256xbf16>
    %cst_555 = arith.constant dense<0.000000e+00> : vector<16x256xf32>
    %829 = tpu.matmul %776, %828, %cst_555 {dimension_numbers = #tpu.dot_dimension_numbers<[1], [0], [0], [1], [0, 0, 1, 1], [], []>} : vector<16x144xbf16>, vector<144x256xbf16>, vector<16x256xf32> -> vector<16x256xf32>
    %830 = vector.broadcast %778 : vector<16x1xf32> to vector<16x256xf32>
    %831 = arith.addf %829, %830 : vector<16x256xf32>
    %832 = arith.addf %831, %66 : vector<16x256xf32>
    %c0_556 = arith.constant 0 : index
    %c0_557 = arith.constant 0 : index
    %833 = vector.load %arg9[%c0_556, %c0_557] : memref<64x144xbf16, #tpu.memory_space<vmem>>, vector<64x144xbf16>
    %c0_558 = arith.constant 0 : index
    %c0_559 = arith.constant 0 : index
    %834 = vector.load %arg10[%c0_558, %c0_559] : memref<64x1xf32, #tpu.memory_space<vmem>>, vector<64x1xf32>
    %c17_i32_560 = arith.constant 17 : i32
    %835 = tpu.dynamic_rotate %832 by %c17_i32_560 dim 1 : vector<16x256xf32>, i32 -> vector<16x256xf32>
    %c0_561 = arith.constant 0 : index
    %c0_562 = arith.constant 0 : index
    %c0_563 = arith.constant 0 : index
    %836 = vector.load %arg2[%c0_561, %c0_562, %c0_563] : memref<9x1x256xf32, #tpu.memory_space<vmem>>, vector<1x1x256xf32>
    %837 = vector.shape_cast %836 : vector<1x1x256xf32> to vector<1x256xf32>
    %838 = vector.broadcast %837 : vector<1x256xf32> to vector<16x256xf32>
    %839 = arith.mulf %835, %838 : vector<16x256xf32>
    %840 = arith.truncf %839 : vector<16x256xf32> to vector<16x256xbf16>
    %c16_i32_564 = arith.constant 16 : i32
    %841 = tpu.dynamic_rotate %832 by %c16_i32_564 dim 1 : vector<16x256xf32>, i32 -> vector<16x256xf32>
    %c1_565 = arith.constant 1 : index
    %c0_566 = arith.constant 0 : index
    %c0_567 = arith.constant 0 : index
    %842 = vector.load %arg2[%c1_565, %c0_566, %c0_567] : memref<9x1x256xf32, #tpu.memory_space<vmem>>, vector<1x1x256xf32>
    %843 = vector.shape_cast %842 : vector<1x1x256xf32> to vector<1x256xf32>
    %844 = vector.broadcast %843 : vector<1x256xf32> to vector<16x256xf32>
    %845 = arith.mulf %841, %844 : vector<16x256xf32>
    %846 = arith.truncf %845 : vector<16x256xf32> to vector<16x256xbf16>
    %c15_i32_568 = arith.constant 15 : i32
    %847 = tpu.dynamic_rotate %832 by %c15_i32_568 dim 1 : vector<16x256xf32>, i32 -> vector<16x256xf32>
    %c2_569 = arith.constant 2 : index
    %c0_570 = arith.constant 0 : index
    %c0_571 = arith.constant 0 : index
    %848 = vector.load %arg2[%c2_569, %c0_570, %c0_571] : memref<9x1x256xf32, #tpu.memory_space<vmem>>, vector<1x1x256xf32>
    %849 = vector.shape_cast %848 : vector<1x1x256xf32> to vector<1x256xf32>
    %850 = vector.broadcast %849 : vector<1x256xf32> to vector<16x256xf32>
    %851 = arith.mulf %847, %850 : vector<16x256xf32>
    %852 = arith.truncf %851 : vector<16x256xf32> to vector<16x256xbf16>
    %c1_i32_572 = arith.constant 1 : i32
    %853 = tpu.dynamic_rotate %832 by %c1_i32_572 dim 1 : vector<16x256xf32>, i32 -> vector<16x256xf32>
    %c3_573 = arith.constant 3 : index
    %c0_574 = arith.constant 0 : index
    %c0_575 = arith.constant 0 : index
    %854 = vector.load %arg2[%c3_573, %c0_574, %c0_575] : memref<9x1x256xf32, #tpu.memory_space<vmem>>, vector<1x1x256xf32>
    %855 = vector.shape_cast %854 : vector<1x1x256xf32> to vector<1x256xf32>
    %856 = vector.broadcast %855 : vector<1x256xf32> to vector<16x256xf32>
    %857 = arith.mulf %853, %856 : vector<16x256xf32>
    %858 = arith.truncf %857 : vector<16x256xf32> to vector<16x256xbf16>
    %859 = arith.truncf %832 : vector<16x256xf32> to vector<16x256xbf16>
    %c255_i32_576 = arith.constant 255 : i32
    %860 = tpu.dynamic_rotate %832 by %c255_i32_576 dim 1 : vector<16x256xf32>, i32 -> vector<16x256xf32>
    %c5_577 = arith.constant 5 : index
    %c0_578 = arith.constant 0 : index
    %c0_579 = arith.constant 0 : index
    %861 = vector.load %arg2[%c5_577, %c0_578, %c0_579] : memref<9x1x256xf32, #tpu.memory_space<vmem>>, vector<1x1x256xf32>
    %862 = vector.shape_cast %861 : vector<1x1x256xf32> to vector<1x256xf32>
    %863 = vector.broadcast %862 : vector<1x256xf32> to vector<16x256xf32>
    %864 = arith.mulf %860, %863 : vector<16x256xf32>
    %865 = arith.truncf %864 : vector<16x256xf32> to vector<16x256xbf16>
    %c241_i32_580 = arith.constant 241 : i32
    %866 = tpu.dynamic_rotate %832 by %c241_i32_580 dim 1 : vector<16x256xf32>, i32 -> vector<16x256xf32>
    %c6_581 = arith.constant 6 : index
    %c0_582 = arith.constant 0 : index
    %c0_583 = arith.constant 0 : index
    %867 = vector.load %arg2[%c6_581, %c0_582, %c0_583] : memref<9x1x256xf32, #tpu.memory_space<vmem>>, vector<1x1x256xf32>
    %868 = vector.shape_cast %867 : vector<1x1x256xf32> to vector<1x256xf32>
    %869 = vector.broadcast %868 : vector<1x256xf32> to vector<16x256xf32>
    %870 = arith.mulf %866, %869 : vector<16x256xf32>
    %871 = arith.truncf %870 : vector<16x256xf32> to vector<16x256xbf16>
    %c240_i32_584 = arith.constant 240 : i32
    %872 = tpu.dynamic_rotate %832 by %c240_i32_584 dim 1 : vector<16x256xf32>, i32 -> vector<16x256xf32>
    %c7_585 = arith.constant 7 : index
    %c0_586 = arith.constant 0 : index
    %c0_587 = arith.constant 0 : index
    %873 = vector.load %arg2[%c7_585, %c0_586, %c0_587] : memref<9x1x256xf32, #tpu.memory_space<vmem>>, vector<1x1x256xf32>
    %874 = vector.shape_cast %873 : vector<1x1x256xf32> to vector<1x256xf32>
    %875 = vector.broadcast %874 : vector<1x256xf32> to vector<16x256xf32>
    %876 = arith.mulf %872, %875 : vector<16x256xf32>
    %877 = arith.truncf %876 : vector<16x256xf32> to vector<16x256xbf16>
    %c239_i32_588 = arith.constant 239 : i32
    %878 = tpu.dynamic_rotate %832 by %c239_i32_588 dim 1 : vector<16x256xf32>, i32 -> vector<16x256xf32>
    %c8_589 = arith.constant 8 : index
    %c0_590 = arith.constant 0 : index
    %c0_591 = arith.constant 0 : index
    %879 = vector.load %arg2[%c8_589, %c0_590, %c0_591] : memref<9x1x256xf32, #tpu.memory_space<vmem>>, vector<1x1x256xf32>
    %880 = vector.shape_cast %879 : vector<1x1x256xf32> to vector<1x256xf32>
    %881 = vector.broadcast %880 : vector<1x256xf32> to vector<16x256xf32>
    %882 = arith.mulf %878, %881 : vector<16x256xf32>
    %883 = arith.truncf %882 : vector<16x256xf32> to vector<16x256xbf16>
    %884 = tpu.concatenate %840, %846, %852, %858, %859, %865, %871, %877, %883 in 0 : vector<16x256xbf16>, vector<16x256xbf16>, vector<16x256xbf16>, vector<16x256xbf16>, vector<16x256xbf16>, vector<16x256xbf16>, vector<16x256xbf16>, vector<16x256xbf16>, vector<16x256xbf16> -> vector<144x256xbf16>
    %cst_592 = arith.constant dense<0.000000e+00> : vector<64x256xf32>
    %885 = tpu.matmul %833, %884, %cst_592 {dimension_numbers = #tpu.dot_dimension_numbers<[1], [0], [0], [1], [0, 0, 1, 1], [], []>} : vector<64x144xbf16>, vector<144x256xbf16>, vector<64x256xf32> -> vector<64x256xf32>
    %886 = vector.broadcast %834 : vector<64x1xf32> to vector<64x256xf32>
    %887 = arith.addf %885, %886 : vector<64x256xf32>
    %c0_593 = arith.constant 0 : index
    %c0_594 = arith.constant 0 : index
    %888 = vector.load %arg11[%c0_593, %c0_594] : memref<3x144xbf16, #tpu.memory_space<vmem>>, vector<3x144xbf16>
    %c0_595 = arith.constant 0 : index
    %c0_596 = arith.constant 0 : index
    %889 = vector.load %arg12[%c0_595, %c0_596] : memref<3x1xf32, #tpu.memory_space<vmem>>, vector<3x1xf32>
    %890 = vector.extract_strided_slice %887 {offsets = [48, 0], sizes = [16, 256], strides = [1, 1]} : vector<64x256xf32> to vector<16x256xf32>
    %c17_i32_597 = arith.constant 17 : i32
    %891 = tpu.dynamic_rotate %890 by %c17_i32_597 dim 1 : vector<16x256xf32>, i32 -> vector<16x256xf32>
    %c0_598 = arith.constant 0 : index
    %c0_599 = arith.constant 0 : index
    %c0_600 = arith.constant 0 : index
    %892 = vector.load %arg2[%c0_598, %c0_599, %c0_600] : memref<9x1x256xf32, #tpu.memory_space<vmem>>, vector<1x1x256xf32>
    %893 = vector.shape_cast %892 : vector<1x1x256xf32> to vector<1x256xf32>
    %894 = vector.broadcast %893 : vector<1x256xf32> to vector<16x256xf32>
    %895 = arith.mulf %891, %894 : vector<16x256xf32>
    %896 = arith.truncf %895 : vector<16x256xf32> to vector<16x256xbf16>
    %897 = vector.extract_strided_slice %887 {offsets = [32, 0], sizes = [16, 256], strides = [1, 1]} : vector<64x256xf32> to vector<16x256xf32>
    %c16_i32_601 = arith.constant 16 : i32
    %898 = tpu.dynamic_rotate %897 by %c16_i32_601 dim 1 : vector<16x256xf32>, i32 -> vector<16x256xf32>
    %c1_602 = arith.constant 1 : index
    %c0_603 = arith.constant 0 : index
    %c0_604 = arith.constant 0 : index
    %899 = vector.load %arg2[%c1_602, %c0_603, %c0_604] : memref<9x1x256xf32, #tpu.memory_space<vmem>>, vector<1x1x256xf32>
    %900 = vector.shape_cast %899 : vector<1x1x256xf32> to vector<1x256xf32>
    %901 = vector.broadcast %900 : vector<1x256xf32> to vector<16x256xf32>
    %902 = arith.mulf %898, %901 : vector<16x256xf32>
    %903 = arith.truncf %902 : vector<16x256xf32> to vector<16x256xbf16>
    %904 = vector.extract_strided_slice %887 {offsets = [48, 0], sizes = [16, 256], strides = [1, 1]} : vector<64x256xf32> to vector<16x256xf32>
    %c16_i32_605 = arith.constant 16 : i32
    %905 = tpu.dynamic_rotate %904 by %c16_i32_605 dim 1 : vector<16x256xf32>, i32 -> vector<16x256xf32>
    %c1_606 = arith.constant 1 : index
    %c0_607 = arith.constant 0 : index
    %c0_608 = arith.constant 0 : index
    %906 = vector.load %arg2[%c1_606, %c0_607, %c0_608] : memref<9x1x256xf32, #tpu.memory_space<vmem>>, vector<1x1x256xf32>
    %907 = vector.shape_cast %906 : vector<1x1x256xf32> to vector<1x256xf32>
    %908 = vector.broadcast %907 : vector<1x256xf32> to vector<16x256xf32>
    %909 = arith.mulf %905, %908 : vector<16x256xf32>
    %910 = arith.truncf %909 : vector<16x256xf32> to vector<16x256xbf16>
    %911 = vector.extract_strided_slice %887 {offsets = [16, 0], sizes = [16, 256], strides = [1, 1]} : vector<64x256xf32> to vector<16x256xf32>
    %c1_i32_609 = arith.constant 1 : i32
    %912 = tpu.dynamic_rotate %911 by %c1_i32_609 dim 1 : vector<16x256xf32>, i32 -> vector<16x256xf32>
    %c3_610 = arith.constant 3 : index
    %c0_611 = arith.constant 0 : index
    %c0_612 = arith.constant 0 : index
    %913 = vector.load %arg2[%c3_610, %c0_611, %c0_612] : memref<9x1x256xf32, #tpu.memory_space<vmem>>, vector<1x1x256xf32>
    %914 = vector.shape_cast %913 : vector<1x1x256xf32> to vector<1x256xf32>
    %915 = vector.broadcast %914 : vector<1x256xf32> to vector<16x256xf32>
    %916 = arith.mulf %912, %915 : vector<16x256xf32>
    %917 = arith.truncf %916 : vector<16x256xf32> to vector<16x256xbf16>
    %918 = vector.extract_strided_slice %887 {offsets = [0, 0], sizes = [16, 256], strides = [1, 1]} : vector<64x256xf32> to vector<16x256xf32>
    %919 = arith.truncf %918 : vector<16x256xf32> to vector<16x256xbf16>
    %920 = vector.extract_strided_slice %887 {offsets = [16, 0], sizes = [16, 256], strides = [1, 1]} : vector<64x256xf32> to vector<16x256xf32>
    %921 = arith.truncf %920 : vector<16x256xf32> to vector<16x256xbf16>
    %922 = vector.extract_strided_slice %887 {offsets = [48, 0], sizes = [16, 256], strides = [1, 1]} : vector<64x256xf32> to vector<16x256xf32>
    %c1_i32_613 = arith.constant 1 : i32
    %923 = tpu.dynamic_rotate %922 by %c1_i32_613 dim 1 : vector<16x256xf32>, i32 -> vector<16x256xf32>
    %c3_614 = arith.constant 3 : index
    %c0_615 = arith.constant 0 : index
    %c0_616 = arith.constant 0 : index
    %924 = vector.load %arg2[%c3_614, %c0_615, %c0_616] : memref<9x1x256xf32, #tpu.memory_space<vmem>>, vector<1x1x256xf32>
    %925 = vector.shape_cast %924 : vector<1x1x256xf32> to vector<1x256xf32>
    %926 = vector.broadcast %925 : vector<1x256xf32> to vector<16x256xf32>
    %927 = arith.mulf %923, %926 : vector<16x256xf32>
    %928 = arith.truncf %927 : vector<16x256xf32> to vector<16x256xbf16>
    %929 = vector.extract_strided_slice %887 {offsets = [32, 0], sizes = [16, 256], strides = [1, 1]} : vector<64x256xf32> to vector<16x256xf32>
    %930 = arith.truncf %929 : vector<16x256xf32> to vector<16x256xbf16>
    %931 = vector.extract_strided_slice %887 {offsets = [48, 0], sizes = [16, 256], strides = [1, 1]} : vector<64x256xf32> to vector<16x256xf32>
    %932 = arith.truncf %931 : vector<16x256xf32> to vector<16x256xbf16>
    %933 = tpu.concatenate %896, %903, %910, %917, %919, %921, %928, %930, %932 in 0 : vector<16x256xbf16>, vector<16x256xbf16>, vector<16x256xbf16>, vector<16x256xbf16>, vector<16x256xbf16>, vector<16x256xbf16>, vector<16x256xbf16>, vector<16x256xbf16>, vector<16x256xbf16> -> vector<144x256xbf16>
    %cst_617 = arith.constant dense<0.000000e+00> : vector<3x256xf32>
    %934 = tpu.matmul %888, %933, %cst_617 {dimension_numbers = #tpu.dot_dimension_numbers<[1], [0], [0], [1], [0, 0, 1, 1], [], []>} : vector<3x144xbf16>, vector<144x256xbf16>, vector<3x256xf32> -> vector<3x256xf32>
    %935 = vector.broadcast %889 : vector<3x1xf32> to vector<3x256xf32>
    %936 = arith.addf %934, %935 : vector<3x256xf32>
    %c0_618 = arith.constant 0 : index
    %c0_619 = arith.constant 0 : index
    %c0_620 = arith.constant 0 : index
    %c0_621 = arith.constant 0 : index
    %937 = vector.load %arg13[%c0_618, %c0_619, %c0_620, %c0_621] : memref<1x4x3x256xf32, #tpu.memory_space<vmem>>, vector<1x1x3x256xf32>
    %938 = vector.shape_cast %937 : vector<1x1x3x256xf32> to vector<3x256xf32>
    %939 = vector.shape_cast %936 : vector<3x256xf32> to vector<1x1x3x256xf32>
    tpu.vector_store %arg13[%c0_618, %c0_619, %c0_620, %c0_621], %939 {strides = array<i32>} : memref<1x4x3x256xf32, #tpu.memory_space<vmem>>, vector<1x1x3x256xf32>,
    %940 = vector.extract_strided_slice %887 {offsets = [32, 0], sizes = [16, 256], strides = [1, 1]} : vector<64x256xf32> to vector<16x256xf32>
    %c16_i32_622 = arith.constant 16 : i32
    %941 = tpu.dynamic_rotate %940 by %c16_i32_622 dim 1 : vector<16x256xf32>, i32 -> vector<16x256xf32>
    %c1_623 = arith.constant 1 : index
    %c0_624 = arith.constant 0 : index
    %c0_625 = arith.constant 0 : index
    %942 = vector.load %arg2[%c1_623, %c0_624, %c0_625] : memref<9x1x256xf32, #tpu.memory_space<vmem>>, vector<1x1x256xf32>
    %943 = vector.shape_cast %942 : vector<1x1x256xf32> to vector<1x256xf32>
    %944 = vector.broadcast %943 : vector<1x256xf32> to vector<16x256xf32>
    %945 = arith.mulf %941, %944 : vector<16x256xf32>
    %946 = arith.truncf %945 : vector<16x256xf32> to vector<16x256xbf16>
    %947 = vector.extract_strided_slice %887 {offsets = [48, 0], sizes = [16, 256], strides = [1, 1]} : vector<64x256xf32> to vector<16x256xf32>
    %c16_i32_626 = arith.constant 16 : i32
    %948 = tpu.dynamic_rotate %947 by %c16_i32_626 dim 1 : vector<16x256xf32>, i32 -> vector<16x256xf32>
    %c1_627 = arith.constant 1 : index
    %c0_628 = arith.constant 0 : index
    %c0_629 = arith.constant 0 : index
    %949 = vector.load %arg2[%c1_627, %c0_628, %c0_629] : memref<9x1x256xf32, #tpu.memory_space<vmem>>, vector<1x1x256xf32>
    %950 = vector.shape_cast %949 : vector<1x1x256xf32> to vector<1x256xf32>
    %951 = vector.broadcast %950 : vector<1x256xf32> to vector<16x256xf32>
    %952 = arith.mulf %948, %951 : vector<16x256xf32>
    %953 = arith.truncf %952 : vector<16x256xf32> to vector<16x256xbf16>
    %954 = vector.extract_strided_slice %887 {offsets = [32, 0], sizes = [16, 256], strides = [1, 1]} : vector<64x256xf32> to vector<16x256xf32>
    %c15_i32_630 = arith.constant 15 : i32
    %955 = tpu.dynamic_rotate %954 by %c15_i32_630 dim 1 : vector<16x256xf32>, i32 -> vector<16x256xf32>
    %c2_631 = arith.constant 2 : index
    %c0_632 = arith.constant 0 : index
    %c0_633 = arith.constant 0 : index
    %956 = vector.load %arg2[%c2_631, %c0_632, %c0_633] : memref<9x1x256xf32, #tpu.memory_space<vmem>>, vector<1x1x256xf32>
    %957 = vector.shape_cast %956 : vector<1x1x256xf32> to vector<1x256xf32>
    %958 = vector.broadcast %957 : vector<1x256xf32> to vector<16x256xf32>
    %959 = arith.mulf %955, %958 : vector<16x256xf32>
    %960 = arith.truncf %959 : vector<16x256xf32> to vector<16x256xbf16>
    %961 = vector.extract_strided_slice %887 {offsets = [0, 0], sizes = [16, 256], strides = [1, 1]} : vector<64x256xf32> to vector<16x256xf32>
    %962 = arith.truncf %961 : vector<16x256xf32> to vector<16x256xbf16>
    %963 = vector.extract_strided_slice %887 {offsets = [16, 0], sizes = [16, 256], strides = [1, 1]} : vector<64x256xf32> to vector<16x256xf32>
    %964 = arith.truncf %963 : vector<16x256xf32> to vector<16x256xbf16>
    %965 = vector.extract_strided_slice %887 {offsets = [0, 0], sizes = [16, 256], strides = [1, 1]} : vector<64x256xf32> to vector<16x256xf32>
    %c255_i32_634 = arith.constant 255 : i32
    %966 = tpu.dynamic_rotate %965 by %c255_i32_634 dim 1 : vector<16x256xf32>, i32 -> vector<16x256xf32>
    %c5_635 = arith.constant 5 : index
    %c0_636 = arith.constant 0 : index
    %c0_637 = arith.constant 0 : index
    %967 = vector.load %arg2[%c5_635, %c0_636, %c0_637] : memref<9x1x256xf32, #tpu.memory_space<vmem>>, vector<1x1x256xf32>
    %968 = vector.shape_cast %967 : vector<1x1x256xf32> to vector<1x256xf32>
    %969 = vector.broadcast %968 : vector<1x256xf32> to vector<16x256xf32>
    %970 = arith.mulf %966, %969 : vector<16x256xf32>
    %971 = arith.truncf %970 : vector<16x256xf32> to vector<16x256xbf16>
    %972 = vector.extract_strided_slice %887 {offsets = [32, 0], sizes = [16, 256], strides = [1, 1]} : vector<64x256xf32> to vector<16x256xf32>
    %973 = arith.truncf %972 : vector<16x256xf32> to vector<16x256xbf16>
    %974 = vector.extract_strided_slice %887 {offsets = [48, 0], sizes = [16, 256], strides = [1, 1]} : vector<64x256xf32> to vector<16x256xf32>
    %975 = arith.truncf %974 : vector<16x256xf32> to vector<16x256xbf16>
    %976 = vector.extract_strided_slice %887 {offsets = [32, 0], sizes = [16, 256], strides = [1, 1]} : vector<64x256xf32> to vector<16x256xf32>
    %c255_i32_638 = arith.constant 255 : i32
    %977 = tpu.dynamic_rotate %976 by %c255_i32_638 dim 1 : vector<16x256xf32>, i32 -> vector<16x256xf32>
    %c5_639 = arith.constant 5 : index
    %c0_640 = arith.constant 0 : index
    %c0_641 = arith.constant 0 : index
    %978 = vector.load %arg2[%c5_639, %c0_640, %c0_641] : memref<9x1x256xf32, #tpu.memory_space<vmem>>, vector<1x1x256xf32>
    %979 = vector.shape_cast %978 : vector<1x1x256xf32> to vector<1x256xf32>
    %980 = vector.broadcast %979 : vector<1x256xf32> to vector<16x256xf32>
    %981 = arith.mulf %977, %980 : vector<16x256xf32>
    %982 = arith.truncf %981 : vector<16x256xf32> to vector<16x256xbf16>
    %983 = tpu.concatenate %946, %953, %960, %962, %964, %971, %973, %975, %982 in 0 : vector<16x256xbf16>, vector<16x256xbf16>, vector<16x256xbf16>, vector<16x256xbf16>, vector<16x256xbf16>, vector<16x256xbf16>, vector<16x256xbf16>, vector<16x256xbf16>, vector<16x256xbf16> -> vector<144x256xbf16>
    %cst_642 = arith.constant dense<0.000000e+00> : vector<3x256xf32>
    %984 = tpu.matmul %888, %983, %cst_642 {dimension_numbers = #tpu.dot_dimension_numbers<[1], [0], [0], [1], [0, 0, 1, 1], [], []>} : vector<3x144xbf16>, vector<144x256xbf16>, vector<3x256xf32> -> vector<3x256xf32>
    %985 = vector.broadcast %889 : vector<3x1xf32> to vector<3x256xf32>
    %986 = arith.addf %984, %985 : vector<3x256xf32>
    %c0_643 = arith.constant 0 : index
    %c1_644 = arith.constant 1 : index
    %c0_645 = arith.constant 0 : index
    %c0_646 = arith.constant 0 : index
    %987 = vector.load %arg13[%c0_643, %c1_644, %c0_645, %c0_646] : memref<1x4x3x256xf32, #tpu.memory_space<vmem>>, vector<1x1x3x256xf32>
    %988 = vector.shape_cast %987 : vector<1x1x3x256xf32> to vector<3x256xf32>
    %989 = vector.shape_cast %986 : vector<3x256xf32> to vector<1x1x3x256xf32>
    tpu.vector_store %arg13[%c0_643, %c1_644, %c0_645, %c0_646], %989 {strides = array<i32>} : memref<1x4x3x256xf32, #tpu.memory_space<vmem>>, vector<1x1x3x256xf32>,
    %990 = vector.extract_strided_slice %887 {offsets = [16, 0], sizes = [16, 256], strides = [1, 1]} : vector<64x256xf32> to vector<16x256xf32>
    %c1_i32_647 = arith.constant 1 : i32
    %991 = tpu.dynamic_rotate %990 by %c1_i32_647 dim 1 : vector<16x256xf32>, i32 -> vector<16x256xf32>
    %c3_648 = arith.constant 3 : index
    %c0_649 = arith.constant 0 : index
    %c0_650 = arith.constant 0 : index
    %992 = vector.load %arg2[%c3_648, %c0_649, %c0_650] : memref<9x1x256xf32, #tpu.memory_space<vmem>>, vector<1x1x256xf32>
    %993 = vector.shape_cast %992 : vector<1x1x256xf32> to vector<1x256xf32>
    %994 = vector.broadcast %993 : vector<1x256xf32> to vector<16x256xf32>
    %995 = arith.mulf %991, %994 : vector<16x256xf32>
    %996 = arith.truncf %995 : vector<16x256xf32> to vector<16x256xbf16>
    %997 = vector.extract_strided_slice %887 {offsets = [0, 0], sizes = [16, 256], strides = [1, 1]} : vector<64x256xf32> to vector<16x256xf32>
    %998 = arith.truncf %997 : vector<16x256xf32> to vector<16x256xbf16>
    %999 = vector.extract_strided_slice %887 {offsets = [16, 0], sizes = [16, 256], strides = [1, 1]} : vector<64x256xf32> to vector<16x256xf32>
    %1000 = arith.truncf %999 : vector<16x256xf32> to vector<16x256xbf16>
    %1001 = vector.extract_strided_slice %887 {offsets = [48, 0], sizes = [16, 256], strides = [1, 1]} : vector<64x256xf32> to vector<16x256xf32>
    %c1_i32_651 = arith.constant 1 : i32
    %1002 = tpu.dynamic_rotate %1001 by %c1_i32_651 dim 1 : vector<16x256xf32>, i32 -> vector<16x256xf32>
    %c3_652 = arith.constant 3 : index
    %c0_653 = arith.constant 0 : index
    %c0_654 = arith.constant 0 : index
    %1003 = vector.load %arg2[%c3_652, %c0_653, %c0_654] : memref<9x1x256xf32, #tpu.memory_space<vmem>>, vector<1x1x256xf32>
    %1004 = vector.shape_cast %1003 : vector<1x1x256xf32> to vector<1x256xf32>
    %1005 = vector.broadcast %1004 : vector<1x256xf32> to vector<16x256xf32>
    %1006 = arith.mulf %1002, %1005 : vector<16x256xf32>
    %1007 = arith.truncf %1006 : vector<16x256xf32> to vector<16x256xbf16>
    %1008 = vector.extract_strided_slice %887 {offsets = [32, 0], sizes = [16, 256], strides = [1, 1]} : vector<64x256xf32> to vector<16x256xf32>
    %1009 = arith.truncf %1008 : vector<16x256xf32> to vector<16x256xbf16>
    %1010 = vector.extract_strided_slice %887 {offsets = [48, 0], sizes = [16, 256], strides = [1, 1]} : vector<64x256xf32> to vector<16x256xf32>
    %1011 = arith.truncf %1010 : vector<16x256xf32> to vector<16x256xbf16>
    %1012 = vector.extract_strided_slice %887 {offsets = [16, 0], sizes = [16, 256], strides = [1, 1]} : vector<64x256xf32> to vector<16x256xf32>
    %c241_i32_655 = arith.constant 241 : i32
    %1013 = tpu.dynamic_rotate %1012 by %c241_i32_655 dim 1 : vector<16x256xf32>, i32 -> vector<16x256xf32>
    %c6_656 = arith.constant 6 : index
    %c0_657 = arith.constant 0 : index
    %c0_658 = arith.constant 0 : index
    %1014 = vector.load %arg2[%c6_656, %c0_657, %c0_658] : memref<9x1x256xf32, #tpu.memory_space<vmem>>, vector<1x1x256xf32>
    %1015 = vector.shape_cast %1014 : vector<1x1x256xf32> to vector<1x256xf32>
    %1016 = vector.broadcast %1015 : vector<1x256xf32> to vector<16x256xf32>
    %1017 = arith.mulf %1013, %1016 : vector<16x256xf32>
    %1018 = arith.truncf %1017 : vector<16x256xf32> to vector<16x256xbf16>
    %1019 = vector.extract_strided_slice %887 {offsets = [0, 0], sizes = [16, 256], strides = [1, 1]} : vector<64x256xf32> to vector<16x256xf32>
    %c240_i32_659 = arith.constant 240 : i32
    %1020 = tpu.dynamic_rotate %1019 by %c240_i32_659 dim 1 : vector<16x256xf32>, i32 -> vector<16x256xf32>
    %c7_660 = arith.constant 7 : index
    %c0_661 = arith.constant 0 : index
    %c0_662 = arith.constant 0 : index
    %1021 = vector.load %arg2[%c7_660, %c0_661, %c0_662] : memref<9x1x256xf32, #tpu.memory_space<vmem>>, vector<1x1x256xf32>
    %1022 = vector.shape_cast %1021 : vector<1x1x256xf32> to vector<1x256xf32>
    %1023 = vector.broadcast %1022 : vector<1x256xf32> to vector<16x256xf32>
    %1024 = arith.mulf %1020, %1023 : vector<16x256xf32>
    %1025 = arith.truncf %1024 : vector<16x256xf32> to vector<16x256xbf16>
    %1026 = vector.extract_strided_slice %887 {offsets = [16, 0], sizes = [16, 256], strides = [1, 1]} : vector<64x256xf32> to vector<16x256xf32>
    %c240_i32_663 = arith.constant 240 : i32
    %1027 = tpu.dynamic_rotate %1026 by %c240_i32_663 dim 1 : vector<16x256xf32>, i32 -> vector<16x256xf32>
    %c7_664 = arith.constant 7 : index
    %c0_665 = arith.constant 0 : index
    %c0_666 = arith.constant 0 : index
    %1028 = vector.load %arg2[%c7_664, %c0_665, %c0_666] : memref<9x1x256xf32, #tpu.memory_space<vmem>>, vector<1x1x256xf32>
    %1029 = vector.shape_cast %1028 : vector<1x1x256xf32> to vector<1x256xf32>
    %1030 = vector.broadcast %1029 : vector<1x256xf32> to vector<16x256xf32>
    %1031 = arith.mulf %1027, %1030 : vector<16x256xf32>
    %1032 = arith.truncf %1031 : vector<16x256xf32> to vector<16x256xbf16>
    %1033 = tpu.concatenate %996, %998, %1000, %1007, %1009, %1011, %1018, %1025, %1032 in 0 : vector<16x256xbf16>, vector<16x256xbf16>, vector<16x256xbf16>, vector<16x256xbf16>, vector<16x256xbf16>, vector<16x256xbf16>, vector<16x256xbf16>, vector<16x256xbf16>, vector<16x256xbf16> -> vector<144x256xbf16>
    %cst_667 = arith.constant dense<0.000000e+00> : vector<3x256xf32>
    %1034 = tpu.matmul %888, %1033, %cst_667 {dimension_numbers = #tpu.dot_dimension_numbers<[1], [0], [0], [1], [0, 0, 1, 1], [], []>} : vector<3x144xbf16>, vector<144x256xbf16>, vector<3x256xf32> -> vector<3x256xf32>
    %1035 = vector.broadcast %889 : vector<3x1xf32> to vector<3x256xf32>
    %1036 = arith.addf %1034, %1035 : vector<3x256xf32>
    %c0_668 = arith.constant 0 : index
    %c2_669 = arith.constant 2 : index
    %c0_670 = arith.constant 0 : index
    %c0_671 = arith.constant 0 : index
    %1037 = vector.load %arg13[%c0_668, %c2_669, %c0_670, %c0_671] : memref<1x4x3x256xf32, #tpu.memory_space<vmem>>, vector<1x1x3x256xf32>
    %1038 = vector.shape_cast %1037 : vector<1x1x3x256xf32> to vector<3x256xf32>
    %1039 = vector.shape_cast %1036 : vector<3x256xf32> to vector<1x1x3x256xf32>
    tpu.vector_store %arg13[%c0_668, %c2_669, %c0_670, %c0_671], %1039 {strides = array<i32>} : memref<1x4x3x256xf32, #tpu.memory_space<vmem>>, vector<1x1x3x256xf32>,
    %1040 = vector.extract_strided_slice %887 {offsets = [0, 0], sizes = [16, 256], strides = [1, 1]} : vector<64x256xf32> to vector<16x256xf32>
    %1041 = arith.truncf %1040 : vector<16x256xf32> to vector<16x256xbf16>
    %1042 = vector.extract_strided_slice %887 {offsets = [16, 0], sizes = [16, 256], strides = [1, 1]} : vector<64x256xf32> to vector<16x256xf32>
    %1043 = arith.truncf %1042 : vector<16x256xf32> to vector<16x256xbf16>
    %1044 = vector.extract_strided_slice %887 {offsets = [0, 0], sizes = [16, 256], strides = [1, 1]} : vector<64x256xf32> to vector<16x256xf32>
    %c255_i32_672 = arith.constant 255 : i32
    %1045 = tpu.dynamic_rotate %1044 by %c255_i32_672 dim 1 : vector<16x256xf32>, i32 -> vector<16x256xf32>
    %c5_673 = arith.constant 5 : index
    %c0_674 = arith.constant 0 : index
    %c0_675 = arith.constant 0 : index
    %1046 = vector.load %arg2[%c5_673, %c0_674, %c0_675] : memref<9x1x256xf32, #tpu.memory_space<vmem>>, vector<1x1x256xf32>
    %1047 = vector.shape_cast %1046 : vector<1x1x256xf32> to vector<1x256xf32>
    %1048 = vector.broadcast %1047 : vector<1x256xf32> to vector<16x256xf32>
    %1049 = arith.mulf %1045, %1048 : vector<16x256xf32>
    %1050 = arith.truncf %1049 : vector<16x256xf32> to vector<16x256xbf16>
    %1051 = vector.extract_strided_slice %887 {offsets = [32, 0], sizes = [16, 256], strides = [1, 1]} : vector<64x256xf32> to vector<16x256xf32>
    %1052 = arith.truncf %1051 : vector<16x256xf32> to vector<16x256xbf16>
    %1053 = vector.extract_strided_slice %887 {offsets = [48, 0], sizes = [16, 256], strides = [1, 1]} : vector<64x256xf32> to vector<16x256xf32>
    %1054 = arith.truncf %1053 : vector<16x256xf32> to vector<16x256xbf16>
    %1055 = vector.extract_strided_slice %887 {offsets = [32, 0], sizes = [16, 256], strides = [1, 1]} : vector<64x256xf32> to vector<16x256xf32>
    %c255_i32_676 = arith.constant 255 : i32
    %1056 = tpu.dynamic_rotate %1055 by %c255_i32_676 dim 1 : vector<16x256xf32>, i32 -> vector<16x256xf32>
    %c5_677 = arith.constant 5 : index
    %c0_678 = arith.constant 0 : index
    %c0_679 = arith.constant 0 : index
    %1057 = vector.load %arg2[%c5_677, %c0_678, %c0_679] : memref<9x1x256xf32, #tpu.memory_space<vmem>>, vector<1x1x256xf32>
    %1058 = vector.shape_cast %1057 : vector<1x1x256xf32> to vector<1x256xf32>
    %1059 = vector.broadcast %1058 : vector<1x256xf32> to vector<16x256xf32>
    %1060 = arith.mulf %1056, %1059 : vector<16x256xf32>
    %1061 = arith.truncf %1060 : vector<16x256xf32> to vector<16x256xbf16>
    %1062 = vector.extract_strided_slice %887 {offsets = [0, 0], sizes = [16, 256], strides = [1, 1]} : vector<64x256xf32> to vector<16x256xf32>
    %c240_i32_680 = arith.constant 240 : i32
    %1063 = tpu.dynamic_rotate %1062 by %c240_i32_680 dim 1 : vector<16x256xf32>, i32 -> vector<16x256xf32>
    %c7_681 = arith.constant 7 : index
    %c0_682 = arith.constant 0 : index
    %c0_683 = arith.constant 0 : index
    %1064 = vector.load %arg2[%c7_681, %c0_682, %c0_683] : memref<9x1x256xf32, #tpu.memory_space<vmem>>, vector<1x1x256xf32>
    %1065 = vector.shape_cast %1064 : vector<1x1x256xf32> to vector<1x256xf32>
    %1066 = vector.broadcast %1065 : vector<1x256xf32> to vector<16x256xf32>
    %1067 = arith.mulf %1063, %1066 : vector<16x256xf32>
    %1068 = arith.truncf %1067 : vector<16x256xf32> to vector<16x256xbf16>
    %1069 = vector.extract_strided_slice %887 {offsets = [16, 0], sizes = [16, 256], strides = [1, 1]} : vector<64x256xf32> to vector<16x256xf32>
    %c240_i32_684 = arith.constant 240 : i32
    %1070 = tpu.dynamic_rotate %1069 by %c240_i32_684 dim 1 : vector<16x256xf32>, i32 -> vector<16x256xf32>
    %c7_685 = arith.constant 7 : index
    %c0_686 = arith.constant 0 : index
    %c0_687 = arith.constant 0 : index
    %1071 = vector.load %arg2[%c7_685, %c0_686, %c0_687] : memref<9x1x256xf32, #tpu.memory_space<vmem>>, vector<1x1x256xf32>
    %1072 = vector.shape_cast %1071 : vector<1x1x256xf32> to vector<1x256xf32>
    %1073 = vector.broadcast %1072 : vector<1x256xf32> to vector<16x256xf32>
    %1074 = arith.mulf %1070, %1073 : vector<16x256xf32>
    %1075 = arith.truncf %1074 : vector<16x256xf32> to vector<16x256xbf16>
    %1076 = vector.extract_strided_slice %887 {offsets = [0, 0], sizes = [16, 256], strides = [1, 1]} : vector<64x256xf32> to vector<16x256xf32>
    %c239_i32_688 = arith.constant 239 : i32
    %1077 = tpu.dynamic_rotate %1076 by %c239_i32_688 dim 1 : vector<16x256xf32>, i32 -> vector<16x256xf32>
    %c8_689 = arith.constant 8 : index
    %c0_690 = arith.constant 0 : index
    %c0_691 = arith.constant 0 : index
    %1078 = vector.load %arg2[%c8_689, %c0_690, %c0_691] : memref<9x1x256xf32, #tpu.memory_space<vmem>>, vector<1x1x256xf32>
    %1079 = vector.shape_cast %1078 : vector<1x1x256xf32> to vector<1x256xf32>
    %1080 = vector.broadcast %1079 : vector<1x256xf32> to vector<16x256xf32>
    %1081 = arith.mulf %1077, %1080 : vector<16x256xf32>
    %1082 = arith.truncf %1081 : vector<16x256xf32> to vector<16x256xbf16>
    %1083 = tpu.concatenate %1041, %1043, %1050, %1052, %1054, %1061, %1068, %1075, %1082 in 0 : vector<16x256xbf16>, vector<16x256xbf16>, vector<16x256xbf16>, vector<16x256xbf16>, vector<16x256xbf16>, vector<16x256xbf16>, vector<16x256xbf16>, vector<16x256xbf16>, vector<16x256xbf16> -> vector<144x256xbf16>
    %cst_692 = arith.constant dense<0.000000e+00> : vector<3x256xf32>
    %1084 = tpu.matmul %888, %1083, %cst_692 {dimension_numbers = #tpu.dot_dimension_numbers<[1], [0], [0], [1], [0, 0, 1, 1], [], []>} : vector<3x144xbf16>, vector<144x256xbf16>, vector<3x256xf32> -> vector<3x256xf32>
    %1085 = vector.broadcast %889 : vector<3x1xf32> to vector<3x256xf32>
    %1086 = arith.addf %1084, %1085 : vector<3x256xf32>
    %c0_693 = arith.constant 0 : index
    %c3_694 = arith.constant 3 : index
    %c0_695 = arith.constant 0 : index
    %c0_696 = arith.constant 0 : index
    %1087 = vector.load %arg13[%c0_693, %c3_694, %c0_695, %c0_696] : memref<1x4x3x256xf32, #tpu.memory_space<vmem>>, vector<1x1x3x256xf32>
    %1088 = vector.shape_cast %1087 : vector<1x1x3x256xf32> to vector<3x256xf32>
    %1089 = vector.shape_cast %1086 : vector<3x256xf32> to vector<1x1x3x256xf32>
    tpu.vector_store %arg13[%c0_693, %c3_694, %c0_695, %c0_696], %1089 {strides = array<i32>} : memref<1x4x3x256xf32, #tpu.memory_space<vmem>>, vector<1x1x3x256xf32>,
    return
  }
  func.func @transform_0(%arg0: i32) -> (i32, i32, i32) {
    %c0_i32 = arith.constant 0 : i32
    %c0_i32_0 = arith.constant 0 : i32
    %c0_i32_1 = arith.constant 0 : i32
    return %arg0, %c0_i32, %c0_i32_0 : i32, i32, i32
  }
  func.func @transform_1(%arg0: i32) -> (i32, i32, i32) {
    %c0_i32 = arith.constant 0 : i32
    %c0_i32_0 = arith.constant 0 : i32
    %c0_i32_1 = arith.constant 0 : i32
    %c0_i32_2 = arith.constant 0 : i32
    return %c0_i32, %c0_i32_0, %c0_i32_1 : i32, i32, i32
  }
  func.func @transform_2(%arg0: i32) -> (i32, i32, i32) {
    %c0_i32 = arith.constant 0 : i32
    %c0_i32_0 = arith.constant 0 : i32
    %c0_i32_1 = arith.constant 0 : i32
    %c0_i32_2 = arith.constant 0 : i32
    return %c0_i32, %c0_i32_0, %c0_i32_1 : i32, i32, i32
  }
  func.func @transform_3(%arg0: i32) -> (i32, i32, i32) {
    %c0_i32 = arith.constant 0 : i32
    %c0_i32_0 = arith.constant 0 : i32
    %c0_i32_1 = arith.constant 0 : i32
    %c0_i32_2 = arith.constant 0 : i32
    return %c0_i32, %c0_i32_0, %c0_i32_1 : i32, i32, i32
  }
  func.func @transform_4(%arg0: i32) -> (i32, i32, i32, i32, i32) {
    %c0_i32 = arith.constant 0 : i32
    %c0_i32_0 = arith.constant 0 : i32
    %c0_i32_1 = arith.constant 0 : i32
    %c0_i32_2 = arith.constant 0 : i32
    %c0_i32_3 = arith.constant 0 : i32
    %c0_i32_4 = arith.constant 0 : i32
    return %c0_i32, %c0_i32_0, %c0_i32_1, %c0_i32_2, %c0_i32_3 : i32, i32, i32, i32, i32
  }
  func.func @transform_5(%arg0: i32) -> (i32, i32, i32, i32) {
    %c0_i32 = arith.constant 0 : i32
    %c0_i32_0 = arith.constant 0 : i32
    %c0_i32_1 = arith.constant 0 : i32
    %c0_i32_2 = arith.constant 0 : i32
    %c0_i32_3 = arith.constant 0 : i32
    return %c0_i32, %c0_i32_0, %c0_i32_1, %c0_i32_2 : i32, i32, i32, i32
  }
  func.func @transform_6(%arg0: i32) -> (i32, i32, i32, i32) {
    %c0_i32 = arith.constant 0 : i32
    %c0_i32_0 = arith.constant 0 : i32
    %c0_i32_1 = arith.constant 0 : i32
    %c0_i32_2 = arith.constant 0 : i32
    %c0_i32_3 = arith.constant 0 : i32
    return %c0_i32, %c0_i32_0, %c0_i32_1, %c0_i32_2 : i32, i32, i32, i32
  }
  func.func @transform_7(%arg0: i32) -> (i32, i32, i32) {
    %c0_i32 = arith.constant 0 : i32
    %c0_i32_0 = arith.constant 0 : i32
    %c0_i32_1 = arith.constant 0 : i32
    %c0_i32_2 = arith.constant 0 : i32
    return %c0_i32, %c0_i32_0, %c0_i32_1 : i32, i32, i32
  }
  func.func @transform_8(%arg0: i32) -> (i32, i32) {
    %c0_i32 = arith.constant 0 : i32
    %c0_i32_0 = arith.constant 0 : i32
    %c0_i32_1 = arith.constant 0 : i32
    return %c0_i32, %c0_i32_0 : i32, i32
  }
  func.func @transform_9(%arg0: i32) -> (i32, i32) {
    %c0_i32 = arith.constant 0 : i32
    %c0_i32_0 = arith.constant 0 : i32
    %c0_i32_1 = arith.constant 0 : i32
    return %c0_i32, %c0_i32_0 : i32, i32
  }
  func.func @transform_10(%arg0: i32) -> (i32, i32) {
    %c0_i32 = arith.constant 0 : i32
    %c0_i32_0 = arith.constant 0 : i32
    %c0_i32_1 = arith.constant 0 : i32
    return %c0_i32, %c0_i32_0 : i32, i32
  }
  func.func @transform_11(%arg0: i32) -> (i32, i32) {
    %c0_i32 = arith.constant 0 : i32
    %c0_i32_0 = arith.constant 0 : i32
    %c0_i32_1 = arith.constant 0 : i32
    return %c0_i32, %c0_i32_0 : i32, i32
  }
  func.func @transform_12(%arg0: i32) -> (i32, i32, i32, i32) {
    %c0_i32 = arith.constant 0 : i32
    %c0_i32_0 = arith.constant 0 : i32
    %c0_i32_1 = arith.constant 0 : i32
    %c0_i32_2 = arith.constant 0 : i32
    return %arg0, %c0_i32, %c0_i32_0, %c0_i32_1 : i32, i32, i32, i32
  }
}

</mosaic_0001>

<llo_original>
// kernel: rcan_forward.1
$region0: #{rcan_forward.1}
  #allocation0 [shape = 'u32[]', space=smem, size = 0x4, offset = 0x4, fixed_abs, tag = 'smem constant byte address 0x4 - core index']
  #allocation1 [shape = 'u32[144,128]{1,0:T(1,128)}', space=vmem, size = 0x12000, scoped, tag = 'internal scratch']
  %s0 = inlined_call_operand.vmem [shape: f32[2,16,256], index: 0, kind: input, shape index: {}]
  %s1 = inlined_call_operand.vmem [shape: f32[9,1,256], index: 1, kind: input, shape index: {}]
  %s2 = inlined_call_operand.hbm [shape: bf16[12,16,144], index: 2, kind: input, shape index: {}]
  %s3 = inlined_call_operand.vmem [shape: f32[12,16,1], index: 3, kind: input, shape index: {}]
  %s4 = inlined_call_operand.vmem [shape: f32[2,2,2,16,4], index: 4, kind: input, shape index: {}]
  %s5 = inlined_call_operand.hbm [shape: f32[2,2,1,4], index: 5, kind: input, shape index: {}]
  %s6 = inlined_call_operand.vmem [shape: f32[2,2,16,1], index: 6, kind: input, shape index: {}]
  %s7 = inlined_call_operand.vmem [shape: f32[2,16,1], index: 7, kind: input, shape index: {}]
  %s8 = inlined_call_operand.hbm [shape: bf16[64,144], index: 8, kind: input, shape index: {}]
  %s9 = inlined_call_operand.vmem [shape: f32[64,1], index: 9, kind: input, shape index: {}]
  %s10 = inlined_call_operand.hbm [shape: bf16[3,144], index: 10, kind: input, shape index: {}]
  %s11 = inlined_call_operand.vmem [shape: f32[3,1], index: 11, kind: input, shape index: {}]
  %s12 = inlined_call_operand.vmem [shape: f32[2,4,3,256], index: 12, kind: output, shape index: {}]
  %s13 = sld [smem:[#allocation0]]
  $region97: #{rcan_forward.1} parent=0
    _
  %s15 = ssub.s32 1, %s13
  %s16 = scalar_select 0, %s15, %s13
  $region1: #{rcan_forward.1} parent=0
    #allocation2 [shape = 'u8[98304]{0}', space=vmem, size = 0x18000, scoped, tag = 'input window, operand 2, single buffered']
    #allocation3 [shape = 's32[2]{0}', space=sflag, size = 0x8, scoped, tag = 'scoped memory for rcan_forward.1']
    #allocation4 [shape = 'u8[2048]{0}', space=vmem, size = 0x800, scoped, tag = 'input window, operand 5, single buffered']
    #allocation5 [shape = 's32[1]{0}', space=sflag, size = 0x4, scoped, tag = 'scoped memory for rcan_forward.1']
    #allocation6 [shape = 'u8[32768]{0}', space=vmem, size = 0x8000, scoped, tag = 'input window, operand 8, single buffered']
    #allocation7 [shape = 'u8[2048]{0}', space=vmem, size = 0x800, scoped, tag = 'input window, operand 10, single buffered']
    #allocation8 [shape = 's32[1]{0}', space=sflag, size = 0x4, scoped, tag = 'scoped memory for rcan_forward.1']
    %17 = vsyncpa [#allocation3], 0
    %18 = vsyncpa [#allocation5], 0
    %19 = vsyncpa [#allocation8], 0
    loop: start=0, step=1, limit=4
    $region2: #{rcan_forward.1} parent=1 // loop_pre_header
      _
    $region3: #{rcan_forward.1} parent=1 // loop_header
      %s21 = sphi 0, %s25
      %p22 = scmp.ge.s32.totalorder %s21, 4
      %s31 = sphi 0, %s33
      %s34 = sphi 0, %s31
      %s35 = sphi 0, %s34
      %s51 = sphi 0, %s35
      %s55 = sphi 0, %s55
      %s57 = sphi 0, %s55
      %s58 = sphi 0, %s57
      %s72 = sphi 0, %s58
      %s76 = sphi 0, %s76
      %s78 = sphi 0, %s76
      %s79 = sphi 0, %s78
      %s93 = sphi 0, %s79
      %s97 = sphi 0, %s97
      %s99 = sphi 0, %s97
      %s100 = sphi 0, %s99
      %s114 = sphi 0, %s100
      %s118 = sphi 0, %s118
      %s120 = sphi 0, %s118
      %s121 = sphi 0, %s120
      %s135 = sphi 0, %s121
      %s139 = sphi 0, %s139
      %s141 = sphi 0, %s139
      %s142 = sphi 0, %s141
      %s156 = sphi 0, %s142
      %s160 = sphi 0, %s160
      %s162 = sphi 0, %s160
      %s163 = sphi 0, %s162
      %s177 = sphi 0, %s163
      %s181 = sphi 0, %s181
      %s183 = sphi 0, %s181
      %s184 = sphi 0, %s183
      %s198 = sphi 0, %s184
      %s202 = sphi 0, %s202
      %s204 = sphi 0, %s202
      %s205 = sphi 0, %s204
      %s219 = sphi 0, %s205
      %s223 = sphi 0, %s223
      %s225 = sphi 0, %s223
      %s226 = sphi 0, %s225
      %s240 = sphi 0, %s226
      %s244 = sphi 0, %s244
      %s246 = sphi 0, %s244
      %s247 = sphi 0, %s246
      %s261 = sphi 0, %s247
      %s265 = sphi 0, %s265
      %s267 = sphi 0, %s265
      %s268 = sphi 0, %s267
      %s282 = sphi 0, %s268
      %s288 = sphi 0, %s290
      %s291 = sphi 0, %s288
      %s292 = sphi 0, %s291
      %s308 = sphi 0, %s292
    $region4: #{rcan_forward.1} parent=1 // loop_header_branch
      %24 = sbr.rel (%p22) target = $region8
    $region5: #{rcan_forward.1} parent=1 // loop_body
      %s26 = ssub.s32 %s21, 1
      %s27 = ssub.s32 %s21, 2
      %s28 = sadd.s32 %s21, 1
      %s29 = ssub.s32 %s21, %s28
      %p30 = scmp.eq.s32.totalorder %s29, 0
      %s32 = sadd.s32 %s31, 1
      %s33 = scalar_select %p30, %s31, %s32
      %p36 = pneg %p30
      %p37 = scmp.eq.s32.totalorder %s21, 1
      %p38 = por %p36, %p37
      %p39 = scmp.ne.s32.totalorder %s31, %s34
      %p40 = scmp.eq.s32.totalorder %s21, 0
      %p41 = por %p39, %p40
      %p42 = scmp.ne.s32.totalorder %s31, %s34
      %p43 = scmp.eq.s32.totalorder %s26, 1
      %p44 = por %p42, %p43
      %p45 = scmp.ne.s32.totalorder %s34, %s35
      %p46 = scmp.eq.s32.totalorder %s26, 0
      %p47 = por %p45, %p46
      %p48 = scmp.ne.s32.totalorder %s34, %s35
      %p49 = scmp.eq.s32.totalorder %s27, 1
      %p50 = por %p48, %p49
      %p52 = scmp.ne.s32.totalorder %s35, %s51
      %p53 = scmp.eq.s32.totalorder %s27, 0
      %p54 = por %p52, %p53
      %s56 = sadd.s32 %s55, 1
      %p59 = scmp.eq.s32.totalorder %s21, 1
      %p60 = scmp.ne.s32.totalorder %s55, %s57
      %p61 = scmp.eq.s32.totalorder %s21, 0
      %p62 = por %p60, %p61
      %p63 = scmp.ne.s32.totalorder %s55, %s57
      %p64 = scmp.eq.s32.totalorder %s26, 1
      %p65 = por %p63, %p64
      %p66 = scmp.ne.s32.totalorder %s57, %s58
      %p67 = scmp.eq.s32.totalorder %s26, 0
      %p68 = por %p66, %p67
      %p69 = scmp.ne.s32.totalorder %s57, %s58
      %p70 = scmp.eq.s32.totalorder %s27, 1
      %p71 = por %p69, %p70
      %p73 = scmp.ne.s32.totalorder %s58, %s72
      %p74 = scmp.eq.s32.totalorder %s27, 0
      %p75 = por %p73, %p74
      %s77 = sadd.s32 %s76, 1
      %p80 = scmp.eq.s32.totalorder %s21, 1
      %p81 = scmp.ne.s32.totalorder %s76, %s78
      %p82 = scmp.eq.s32.totalorder %s21, 0
      %p83 = por %p81, %p82
      %p84 = scmp.ne.s32.totalorder %s76, %s78
      %p85 = scmp.eq.s32.totalorder %s26, 1
      %p86 = por %p84, %p85
      %p87 = scmp.ne.s32.totalorder %s78, %s79
      %p88 = scmp.eq.s32.totalorder %s26, 0
      %p89 = por %p87, %p88
      %p90 = scmp.ne.s32.totalorder %s78, %s79
      %p91 = scmp.eq.s32.totalorder %s27, 1
      %p92 = por %p90, %p91
      %p94 = scmp.ne.s32.totalorder %s79, %s93
      %p95 = scmp.eq.s32.totalorder %s27, 0
      %p96 = por %p94, %p95
      %s98 = sadd.s32 %s97, 1
      %p101 = scmp.eq.s32.totalorder %s21, 1
      %p102 = scmp.ne.s32.totalorder %s97, %s99
      %p103 = scmp.eq.s32.totalorder %s21, 0
      %p104 = por %p102, %p103
      %p105 = scmp.ne.s32.totalorder %s97, %s99
      %p106 = scmp.eq.s32.totalorder %s26, 1
      %p107 = por %p105, %p106
      %p108 = scmp.ne.s32.totalorder %s99, %s100
      %p109 = scmp.eq.s32.totalorder %s26, 0
      %p110 = por %p108, %p109
      %p111 = scmp.ne.s32.totalorder %s99, %s100
      %p112 = scmp.eq.s32.totalorder %s27, 1
      %p113 = por %p111, %p112
      %p115 = scmp.ne.s32.totalorder %s100, %s114
      %p116 = scmp.eq.s32.totalorder %s27, 0
      %p117 = por %p115, %p116
      %s119 = sadd.s32 %s118, 1
      %p122 = scmp.eq.s32.totalorder %s21, 1
      %p123 = scmp.ne.s32.totalorder %s118, %s120
      %p124 = scmp.eq.s32.totalorder %s21, 0
      %p125 = por %p123, %p124
      %p126 = scmp.ne.s32.totalorder %s118, %s120
      %p127 = scmp.eq.s32.totalorder %s26, 1
      %p128 = por %p126, %p127
      %p129 = scmp.ne.s32.totalorder %s120, %s121
      %p130 = scmp.eq.s32.totalorder %s26, 0
      %p131 = por %p129, %p130
      %p132 = scmp.ne.s32.totalorder %s120, %s121
      %p133 = scmp.eq.s32.totalorder %s27, 1
      %p134 = por %p132, %p133
      %p136 = scmp.ne.s32.totalorder %s121, %s135
      %p137 = scmp.eq.s32.totalorder %s27, 0
      %p138 = por %p136, %p137
      %s140 = sadd.s32 %s139, 1
      %p143 = scmp.eq.s32.totalorder %s21, 1
      %p144 = scmp.ne.s32.totalorder %s139, %s141
      %p145 = scmp.eq.s32.totalorder %s21, 0
      %p146 = por %p144, %p145
      %p147 = scmp.ne.s32.totalorder %s139, %s141
      %p148 = scmp.eq.s32.totalorder %s26, 1
      %p149 = por %p147, %p148
      %p150 = scmp.ne.s32.totalorder %s141, %s142
      %p151 = scmp.eq.s32.totalorder %s26, 0
      %p152 = por %p150, %p151
      %p153 = scmp.ne.s32.totalorder %s141, %s142
      %p154 = scmp.eq.s32.totalorder %s27, 1
      %p155 = por %p153, %p154
      %p157 = scmp.ne.s32.totalorder %s142, %s156
      %p158 = scmp.eq.s32.totalorder %s27, 0
      %p159 = por %p157, %p158
      %s161 = sadd.s32 %s160, 1
      %p164 = scmp.eq.s32.totalorder %s21, 1
      %p165 = scmp.ne.s32.totalorder %s160, %s162
      %p166 = scmp.eq.s32.totalorder %s21, 0
      %p167 = por %p165, %p166
      %p168 = scmp.ne.s32.totalorder %s160, %s162
      %p169 = scmp.eq.s32.totalorder %s26, 1
      %p170 = por %p168, %p169
      %p171 = scmp.ne.s32.totalorder %s162, %s163
      %p172 = scmp.eq.s32.totalorder %s26, 0
      %p173 = por %p171, %p172
      %p174 = scmp.ne.s32.totalorder %s162, %s163
      %p175 = scmp.eq.s32.totalorder %s27, 1
      %p176 = por %p174, %p175
      %p178 = scmp.ne.s32.totalorder %s163, %s177
      %p179 = scmp.eq.s32.totalorder %s27, 0
      %p180 = por %p178, %p179
      %s182 = sadd.s32 %s181, 1
      %p185 = scmp.eq.s32.totalorder %s21, 1
      %p186 = scmp.ne.s32.totalorder %s181, %s183
      %p187 = scmp.eq.s32.totalorder %s21, 0
      %p188 = por %p186, %p187
      %p189 = scmp.ne.s32.totalorder %s181, %s183
      %p190 = scmp.eq.s32.totalorder %s26, 1
      %p191 = por %p189, %p190
      %p192 = scmp.ne.s32.totalorder %s183, %s184
      %p193 = scmp.eq.s32.totalorder %s26, 0
      %p194 = por %p192, %p193
      %p195 = scmp.ne.s32.totalorder %s183, %s184
      %p196 = scmp.eq.s32.totalorder %s27, 1
      %p197 = por %p195, %p196
      %p199 = scmp.ne.s32.totalorder %s184, %s198
      %p200 = scmp.eq.s32.totalorder %s27, 0
      %p201 = por %p199, %p200
      %s203 = sadd.s32 %s202, 1
      %p206 = scmp.eq.s32.totalorder %s21, 1
      %p207 = scmp.ne.s32.totalorder %s202, %s204
      %p208 = scmp.eq.s32.totalorder %s21, 0
      %p209 = por %p207, %p208
      %p210 = scmp.ne.s32.totalorder %s202, %s204
      %p211 = scmp.eq.s32.totalorder %s26, 1
      %p212 = por %p210, %p211
      %p213 = scmp.ne.s32.totalorder %s204, %s205
      %p214 = scmp.eq.s32.totalorder %s26, 0
      %p215 = por %p213, %p214
      %p216 = scmp.ne.s32.totalorder %s204, %s205
      %p217 = scmp.eq.s32.totalorder %s27, 1
      %p218 = por %p216, %p217
      %p220 = scmp.ne.s32.totalorder %s205, %s219
      %p221 = scmp.eq.s32.totalorder %s27, 0
      %p222 = por %p220, %p221
      %s224 = sadd.s32 %s223, 1
      %p227 = scmp.eq.s32.totalorder %s21, 1
      %p228 = scmp.ne.s32.totalorder %s223, %s225
      %p229 = scmp.eq.s32.totalorder %s21, 0
      %p230 = por %p228, %p229
      %p231 = scmp.ne.s32.totalorder %s223, %s225
      %p232 = scmp.eq.s32.totalorder %s26, 1
      %p233 = por %p231, %p232
      %p234 = scmp.ne.s32.totalorder %s225, %s226
      %p235 = scmp.eq.s32.totalorder %s26, 0
      %p236 = por %p234, %p235
      %p237 = scmp.ne.s32.totalorder %s225, %s226
      %p238 = scmp.eq.s32.totalorder %s27, 1
      %p239 = por %p237, %p238
      %p241 = scmp.ne.s32.totalorder %s226, %s240
      %p242 = scmp.eq.s32.totalorder %s27, 0
      %p243 = por %p241, %p242
      %s245 = sadd.s32 %s244, 1
      %p248 = scmp.eq.s32.totalorder %s21, 1
      %p249 = scmp.ne.s32.totalorder %s244, %s246
      %p250 = scmp.eq.s32.totalorder %s21, 0
      %p251 = por %p249, %p250
      %p252 = scmp.ne.s32.totalorder %s244, %s246
      %p253 = scmp.eq.s32.totalorder %s26, 1
      %p254 = por %p252, %p253
      %p255 = scmp.ne.s32.totalorder %s246, %s247
      %p256 = scmp.eq.s32.totalorder %s26, 0
      %p257 = por %p255, %p256
      %p258 = scmp.ne.s32.totalorder %s246, %s247
      %p259 = scmp.eq.s32.totalorder %s27, 1
      %p260 = por %p258, %p259
      %p262 = scmp.ne.s32.totalorder %s247, %s261
      %p263 = scmp.eq.s32.totalorder %s27, 0
      %p264 = por %p262, %p263
      %s266 = sadd.s32 %s265, 1
      %p269 = scmp.eq.s32.totalorder %s21, 1
      %p270 = scmp.ne.s32.totalorder %s265, %s267
      %p271 = scmp.eq.s32.totalorder %s21, 0
      %p272 = por %p270, %p271
      %p273 = scmp.ne.s32.totalorder %s265, %s267
      %p274 = scmp.eq.s32.totalorder %s26, 1
      %p275 = por %p273, %p274
      %p276 = scmp.ne.s32.totalorder %s267, %s268
      %p277 = scmp.eq.s32.totalorder %s26, 0
      %p278 = por %p276, %p277
      %p279 = scmp.ne.s32.totalorder %s267, %s268
      %p280 = scmp.eq.s32.totalorder %s27, 1
      %p281 = por %p279, %p280
      %p283 = scmp.ne.s32.totalorder %s268, %s282
      %p284 = scmp.eq.s32.totalorder %s27, 0
      %p285 = por %p283, %p284
      %s286 = ssub.s32 %s21, %s28
      %p287 = scmp.eq.s32.totalorder %s286, 0
      %s289 = sadd.s32 %s288, 1
      %s290 = scalar_select %p287, %s288, %s289
      %p293 = pneg %p287
      %p294 = scmp.eq.s32.totalorder %s21, 1
      %p295 = por %p293, %p294
      %p296 = scmp.ne.s32.totalorder %s288, %s291
      %p297 = scmp.eq.s32.totalorder %s21, 0
      %p298 = por %p296, %p297
      %p299 = scmp.ne.s32.totalorder %s288, %s291
      %p300 = scmp.eq.s32.totalorder %s26, 1
      %p301 = por %p299, %p300
      %p302 = scmp.ne.s32.totalorder %s291, %s292
      %p303 = scmp.eq.s32.totalorder %s26, 0
      %p304 = por %p302, %p303
      %p305 = scmp.ne.s32.totalorder %s291, %s292
      %p306 = scmp.eq.s32.totalorder %s27, 1
      %p307 = por %p305, %p306
      %p309 = scmp.ne.s32.totalorder %s292, %s308
      %p310 = scmp.eq.s32.totalorder %s27, 0
      %p311 = por %p309, %p310
      %p312 = scmp.le.s32.totalorder 1, %s21
      %p313 = scmp.lt.s32.totalorder %s21, 3
      %p314 = pnand %p312, %p313
      %p315 = pneg %p314
      // Predicated region
      $region9: #{rcan_forward.1} parent=5 // pred_check
        _
      $region10: #{rcan_forward.1} parent=5 // pred_check_branch
        %317 = sbr.rel (%p314) target = $region12
      $region11: #{rcan_forward.1} parent=5 // pred_region
        %s318 = ssub.s32 %s21, 1
        // Predicated region
        $region13: #{rcan_forward.1} parent=11 // pred_check
          %p319 = pneg %p68
        $region14: #{rcan_forward.1} parent=11 // pred_check_branch
          %321 = sbr.rel (%p319) target = $region16
        $region15: #{rcan_forward.1} parent=11 // pred_region
          _
        $region16: #{rcan_forward.1} parent=11 // pred_fallthru
          _
        // Predicated region
        $region17: #{rcan_forward.1} parent=11 // pred_check
          %p322 = pneg %p89
        $region18: #{rcan_forward.1} parent=11 // pred_check_branch
          %324 = sbr.rel (%p322) target = $region20
        $region19: #{rcan_forward.1} parent=11 // pred_region
          %s326 = ssub.s32 3072, 3072
          %327 = vsyncadd [#allocation3], %s326
          %s328 = sshll.u32 [#allocation2], 4
          %s329 = int_to_ptr.vmem [resolvable:$true] %s328
          %334 = dma.hbm_to_vmem [thread:$0]  %s2, 3072, %s329, [#allocation3], 128, 128, 8
        $region20: #{rcan_forward.1} parent=11 // pred_fallthru
          _
        // Predicated region
        $region21: #{rcan_forward.1} parent=11 // pred_check
          %p335 = pneg %p110
        $region22: #{rcan_forward.1} parent=11 // pred_check_branch
          %337 = sbr.rel (%p335) target = $region24
        $region23: #{rcan_forward.1} parent=11 // pred_region
          _
        $region24: #{rcan_forward.1} parent=11 // pred_fallthru
          _
        // Predicated region
        $region25: #{rcan_forward.1} parent=11 // pred_check
          %p338 = pneg %p131
        $region26: #{rcan_forward.1} parent=11 // pred_check_branch
          %340 = sbr.rel (%p338) target = $region28
        $region27: #{rcan_forward.1} parent=11 // pred_region
          _
        $region28: #{rcan_forward.1} parent=11 // pred_fallthru
          _
        // Predicated region
        $region29: #{rcan_forward.1} parent=11 // pred_check
          %p341 = pneg %p152
        $region30: #{rcan_forward.1} parent=11 // pred_check_branch
          %343 = sbr.rel (%p341) target = $region32
        $region31: #{rcan_forward.1} parent=11 // pred_region
          %s345 = ssub.s32 64, 64
          %346 = vsyncadd [#allocation5], %s345
          %s347 = sshll.u32 [#allocation4], 4
          %s348 = int_to_ptr.vmem [resolvable:$true] %s347
          %353 = dma.hbm_to_vmem [thread:$0]  %s5, 64, %s348, [#allocation5], 16, 16, 1
        $region32: #{rcan_forward.1} parent=11 // pred_fallthru
          _
        // Predicated region
        $region33: #{rcan_forward.1} parent=11 // pred_check
          %p354 = pneg %p173
        $region34: #{rcan_forward.1} parent=11 // pred_check_branch
          %356 = sbr.rel (%p354) target = $region36
        $region35: #{rcan_forward.1} parent=11 // pred_region
          _
        $region36: #{rcan_forward.1} parent=11 // pred_fallthru
          _
        // Predicated region
        $region37: #{rcan_forward.1} parent=11 // pred_check
          %p357 = pneg %p194
        $region38: #{rcan_forward.1} parent=11 // pred_check_branch
          %359 = sbr.rel (%p357) target = $region40
        $region39: #{rcan_forward.1} parent=11 // pred_region
          _
        $region40: #{rcan_forward.1} parent=11 // pred_fallthru
          _
        // Predicated region
        $region41: #{rcan_forward.1} parent=11 // pred_check
          %p360 = pneg %p215
        $region42: #{rcan_forward.1} parent=11 // pred_check_branch
          %362 = sbr.rel (%p360) target = $region44
        $region43: #{rcan_forward.1} parent=11 // pred_region
          %s364 = ssub.s32 1024, 1024
          %365 = vsyncadd [#allocation5], %s364
          %s366 = sshll.u32 [#allocation6], 4
          %s367 = int_to_ptr.vmem [resolvable:$true] %s366
          %372 = dma.hbm_to_vmem [thread:$0]  %s8, 1024, %s367, [#allocation5], 128, 128, 8
        $region44: #{rcan_forward.1} parent=11 // pred_fallthru
          _
        // Predicated region
        $region45: #{rcan_forward.1} parent=11 // pred_check
          %p373 = pneg %p236
        $region46: #{rcan_forward.1} parent=11 // pred_check_branch
          %375 = sbr.rel (%p373) target = $region48
        $region47: #{rcan_forward.1} parent=11 // pred_region
          _
        $region48: #{rcan_forward.1} parent=11 // pred_fallthru
          _
        // Predicated region
        $region49: #{rcan_forward.1} parent=11 // pred_check
          %p376 = pneg %p257
        $region50: #{rcan_forward.1} parent=11 // pred_check_branch
          %378 = sbr.rel (%p376) target = $region52
        $region51: #{rcan_forward.1} parent=11 // pred_region
          %s380 = ssub.s32 64, 64
          %381 = vsyncadd [#allocation8], %s380
          %s383 = sshll.u32 [#allocation7], 4
          %s384 = int_to_ptr.vmem [resolvable:$true] %s383
          %386 = dma.hbm_to_vmem [thread:$0]  %s10, 64, %s384, [#allocation8]
        $region52: #{rcan_forward.1} parent=11 // pred_fallthru
          _
        // Predicated region
        $region53: #{rcan_forward.1} parent=11 // pred_check
          %p387 = pneg %p278
        $region54: #{rcan_forward.1} parent=11 // pred_check_branch
          %389 = sbr.rel (%p387) target = $region56
        $region55: #{rcan_forward.1} parent=11 // pred_region
          _
        $region56: #{rcan_forward.1} parent=11 // pred_fallthru
          _
      $region12: #{rcan_forward.1} parent=5 // pred_fallthru
        _
      %p390 = scmp.lt.s32.totalorder %s21, 2
      // Predicated region
      $region57: #{rcan_forward.1} parent=5 // pred_check
        %p391 = pneg %p390
      $region58: #{rcan_forward.1} parent=5 // pred_check_branch
        %393 = sbr.rel (%p391) target = $region60
      $region59: #{rcan_forward.1} parent=5 // pred_region
        // Predicated region
        $region61: #{rcan_forward.1} parent=59 // pred_check
          %p394 = pneg %p41
        $region62: #{rcan_forward.1} parent=59 // pred_check_branch
          %396 = sbr.rel (%p394) target = $region64
        $region63: #{rcan_forward.1} parent=59 // pred_region
          %p397 = scmp.lt.s32.totalorder %s21, 1
          %s398 = scalar_select %p397, %s21, 1
          %s399 = smul.addr %s398, 4
          %s400 = smul.addr %s399, 8
          %s401 = scalar_lea.vmem %s0, %s400
        $region64: #{rcan_forward.1} parent=59 // pred_fallthru
          _
      $region60: #{rcan_forward.1} parent=5 // pred_fallthru
        _
      %p402 = scmp.le.s32.totalorder 1, %s21
      %p403 = scmp.lt.s32.totalorder %s21, 3
      %p404 = pnand %p402, %p403
      %p405 = pneg %p404
      // Predicated region
      $region65: #{rcan_forward.1} parent=5 // pred_check
        _
      $region66: #{rcan_forward.1} parent=5 // pred_check_branch
        %407 = sbr.rel (%p404) target = $region68
      $region67: #{rcan_forward.1} parent=5 // pred_region
        %s408 = ssub.s32 %s21, 1
        // Predicated region
        $region69: #{rcan_forward.1} parent=67 // pred_check
          %p409 = pneg %p89
        $region70: #{rcan_forward.1} parent=67 // pred_check_branch
          %411 = sbr.rel (%p409) target = $region72
        $region71: #{rcan_forward.1} parent=67 // pred_region
          %412 = dma.done [#allocation3], 3072
        $region72: #{rcan_forward.1} parent=67 // pred_fallthru
          _
        // Predicated region
        $region73: #{rcan_forward.1} parent=67 // pred_check
          %p413 = pneg %p152
        $region74: #{rcan_forward.1} parent=67 // pred_check_branch
          %415 = sbr.rel (%p413) target = $region76
        $region75: #{rcan_forward.1} parent=67 // pred_region
          %416 = dma.done [#allocation5], 64
        $region76: #{rcan_forward.1} parent=67 // pred_fallthru
          _
        // Predicated region
        $region77: #{rcan_forward.1} parent=67 // pred_check
          %p417 = pneg %p215
        $region78: #{rcan_forward.1} parent=67 // pred_check_branch
          %419 = sbr.rel (%p417) target = $region80
        $region79: #{rcan_forward.1} parent=67 // pred_region
          %420 = dma.done [#allocation5], 1024
        $region80: #{rcan_forward.1} parent=67 // pred_fallthru
          _
        // Predicated region
        $region81: #{rcan_forward.1} parent=67 // pred_check
          %p421 = pneg %p257
        $region82: #{rcan_forward.1} parent=67 // pred_check_branch
          %423 = sbr.rel (%p421) target = $region84
        $region83: #{rcan_forward.1} parent=67 // pred_region
          %424 = dma.done [#allocation8], 64
        $region84: #{rcan_forward.1} parent=67 // pred_fallthru
          _
        %p425 = scmp.lt.s32.totalorder %s26, 1
        %s426 = scalar_select %p425, %s26, 1
        %s427 = smul.addr %s426, 4
        %s428 = smul.addr %s427, 8
        %s429 = scalar_lea.vmem %s0, %s428
        %p430 = pneg %p47
        %p431 = pneg %p44
        %p432 = pneg %p68
        %p433 = pneg %p65
        %p434 = pneg %p89
        %p435 = pneg %p86
        %p436 = pneg %p110
        %p437 = pneg %p107
        %p438 = pneg %p131
        %p439 = pneg %p128
        %p440 = pneg %p152
        %p441 = pneg %p149
        %p442 = pneg %p173
        %p443 = pneg %p170
        %p444 = pneg %p194
        %p445 = pneg %p191
        %p446 = pneg %p215
        %p447 = pneg %p212
        %p448 = pneg %p236
        %p449 = pneg %p233
        %p450 = pneg %p257
        %p451 = pneg %p254
        %p452 = pneg %p278
        %p453 = pneg %p275
        %p454 = pneg %p304
        %p455 = pneg %p301
        %p456 = scmp.lt.s32.totalorder %s26, 1
        %s457 = scalar_select %p456, %s26, 1
        %s458 = smul.addr %s457, 8
        %s459 = smul.addr %s458, 4
        %s460 = scalar_lea.vmem %s12, %s459
        %p461 = scmp.lt.s32.totalorder %s26, 1
        %s462 = scalar_select %p461, %s26, 1
        %s463 = smul.addr %s462, 4
        %s464 = smul.addr %s463, 8
        %s465 = scalar_lea.vmem %s0, %s464
        %p466 = scmp.lt.s32.totalorder %s26, 1
        %s467 = scalar_select %p466, %s26, 1
        %s468 = smul.addr %s467, 8
        %s469 = smul.addr %s468, 4
        %s470 = scalar_lea.vmem %s12, %s469
        %v472 = vld [vmem:[%s465] sm:$0xff]
        %v473 = vld [vmem:[%s465 + $0x8] sm:$0xff]
        %v474 = vld [vmem:[%s465 + $0x10] sm:$0xff]
        %v475 = vld [vmem:[%s465 + $0x18] sm:$0xff]
        %v476 = vld [vmem:[%s7] sm:$0xff]
        %v477 = vld [vmem:[%s7 + $0x8] sm:$0xff]
        %479 = vset.pattern.permute.xlu0 0
        %480 = vperm.xlu0 %479, %v476
        %v481 = vpop.permute.xlu0 %480
        %484 = vset.pattern.permute.xlu0 0
        %485 = vperm.xlu0 %484, %v477
        %v486 = vpop.permute.xlu0 %485
        %v488 = vmul.f32 %v472, %v481
        %v489 = vmul.f32 %v473, %v481
        %v490 = vmul.f32 %v474, %v486
        %v491 = vmul.f32 %v475, %v486
        %s492 = scalar_lea.vmem %s7, 16
        %v493 = vld [vmem:[%s492] sm:$0xff]
        %v494 = vld [vmem:[%s492 + $0x8] sm:$0xff]
        %496 = vset.pattern.permute.xlu0 0
        %497 = vperm.xlu0 %496, %v493
        %v498 = vpop.permute.xlu0 %497
        %501 = vset.pattern.permute.xlu0 0
        %502 = vperm.xlu0 %501, %v494
        %v503 = vpop.permute.xlu0 %502
        %v505 = vadd.f32 %v488, %v498
        %v506 = vadd.f32 %v489, %v498
        %v507 = vadd.f32 %v490, %v503
        %v508 = vadd.f32 %v491, %v503
        %v509 = vld [vmem:[#allocation2] sm:$0xff]
        %v510 = vld [vmem:[#allocation2 + $0x8] sm:$0xff]
        %v511 = vld [vmem:[%s3] sm:$0xff]
        %v512 = vld [vmem:[%s3 + $0x8] sm:$0xff]
        %513 = vrot.lane.b32.xlu0 %v505, 17
        %v514 = vpop.permute.xlu0 %513
        %515 = vrot.lane.b32.xlu0 %v507, 17
        %v516 = vpop.permute.xlu0 %515
        %517 = vrot.lane.b32.xlu0 %v506, 17
        %v518 = vpop.permute.xlu0 %517
        %519 = vrot.lane.b32.xlu0 %v508, 17
        %v520 = vpop.permute.xlu0 %519
        %v521 = vlaneseq
        %v522 = vand.u32 %v521, 127
        %vm523 = vcmp.lt.s32.totalorder %v522, 17
        %v524 = vsel %vm523, %v514, %v518
        %v525 = vsel %vm523, %v516, %v520
        %v526 = vsel %vm523, %v518, %v514
        %v527 = vsel %vm523, %v520, %v516
        %v528 = vld [vmem:[%s1] sm:$0x3]
        %v530 = vlaneseq
        %v531 = vshrl.u32 %v530, 7
        %v532 = vsub.s32 0, %v531
        %v533 = vrot.slane %v528, %v532
        %v534 = vlaneseq
        %v535 = vshrl.u32 %v534, 7
        %v536 = vsub.s32 1, %v535
        %v537 = vrot.slane %v528, %v536
        %v540 = vmul.f32 %v526, %v533
        %v541 = vmul.f32 %v524, %v537
        %v542 = vmul.f32 %v527, %v533
        %v543 = vmul.f32 %v525, %v537
        %v544 = vpack.c.bf16 %v542, %v540
        %v545 = vpack.c.bf16 %v543, %v541
        %546 = vrot.lane.b32.xlu0 %v505, 16
        %v547 = vpop.permute.xlu0 %546
        %548 = vrot.lane.b32.xlu0 %v507, 16
        %v549 = vpop.permute.xlu0 %548
        %550 = vrot.lane.b32.xlu0 %v506, 16
        %v551 = vpop.permute.xlu0 %550
        %552 = vrot.lane.b32.xlu0 %v508, 16
        %v553 = vpop.permute.xlu0 %552
        %vm554 = vcmp.lt.s32.totalorder %v522, 16
        %v555 = vsel %vm554, %v547, %v551
        %v556 = vsel %vm554, %v549, %v553
        %v557 = vsel %vm554, %v551, %v547
        %v558 = vsel %vm554, %v553, %v549
        %s559 = scalar_lea.vmem %s1, 2
        %v560 = vld [vmem:[%s559] sm:$0x3]
        %v562 = vlaneseq
        %v563 = vshrl.u32 %v562, 7
        %v564 = vsub.s32 0, %v563
        %v565 = vrot.slane %v560, %v564
        %v566 = vlaneseq
        %v567 = vshrl.u32 %v566, 7
        %v568 = vsub.s32 1, %v567
        %v569 = vrot.slane %v560, %v568
        %v572 = vmul.f32 %v557, %v565
        %v573 = vmul.f32 %v555, %v569
        %v574 = vmul.f32 %v558, %v565
        %v575 = vmul.f32 %v556, %v569
        %v576 = vpack.c.bf16 %v574, %v572
        %v577 = vpack.c.bf16 %v575, %v573
        %578 = vrot.lane.b32.xlu0 %v505, 15
        %v579 = vpop.permute.xlu0 %578
        %580 = vrot.lane.b32.xlu0 %v507, 15
        %v581 = vpop.permute.xlu0 %580
        %582 = vrot.lane.b32.xlu0 %v506, 15
        %v583 = vpop.permute.xlu0 %582
        %584 = vrot.lane.b32.xlu0 %v508, 15
        %v585 = vpop.permute.xlu0 %584
        %vm586 = vcmp.lt.s32.totalorder %v522, 15
        %v587 = vsel %vm586, %v579, %v583
        %v588 = vsel %vm586, %v581, %v585
        %v589 = vsel %vm586, %v583, %v579
        %v590 = vsel %vm586, %v585, %v581
        %s591 = scalar_lea.vmem %s1, 4
        %v592 = vld [vmem:[%s591] sm:$0x3]
        %v594 = vlaneseq
        %v595 = vshrl.u32 %v594, 7
        %v596 = vsub.s32 0, %v595
        %v597 = vrot.slane %v592, %v596
        %v598 = vlaneseq
        %v599 = vshrl.u32 %v598, 7
        %v600 = vsub.s32 1, %v599
        %v601 = vrot.slane %v592, %v600
        %v604 = vmul.f32 %v589, %v597
        %v605 = vmul.f32 %v587, %v601
        %v606 = vmul.f32 %v590, %v597
        %v607 = vmul.f32 %v588, %v601
        %v608 = vpack.c.bf16 %v606, %v604
        %v609 = vpack.c.bf16 %v607, %v605
        %610 = vrot.lane.b32.xlu0 %v505, 1
        %v611 = vpop.permute.xlu0 %610
        %612 = vrot.lane.b32.xlu0 %v507, 1
        %v613 = vpop.permute.xlu0 %612
        %614 = vrot.lane.b32.xlu0 %v506, 1
        %v615 = vpop.permute.xlu0 %614
        %616 = vrot.lane.b32.xlu0 %v508, 1
        %v617 = vpop.permute.xlu0 %616
        %vm618 = vcmp.lt.s32.totalorder %v522, 1
        %v619 = vsel %vm618, %v611, %v615
        %v620 = vsel %vm618, %v613, %v617
        %v621 = vsel %vm618, %v615, %v611
        %v622 = vsel %vm618, %v617, %v613
        %s623 = scalar_lea.vmem %s1, 6
        %v624 = vld [vmem:[%s623] sm:$0x3]
        %v626 = vlaneseq
        %v627 = vshrl.u32 %v626, 7
        %v628 = vsub.s32 0, %v627
        %v629 = vrot.slane %v624, %v628
        %v630 = vlaneseq
        %v631 = vshrl.u32 %v630, 7
        %v632 = vsub.s32 1, %v631
        %v633 = vrot.slane %v624, %v632
        %v636 = vmul.f32 %v621, %v629
        %v637 = vmul.f32 %v619, %v633
        %v638 = vmul.f32 %v622, %v629
        %v639 = vmul.f32 %v620, %v633
        %v640 = vpack.c.bf16 %v638, %v636
        %v641 = vpack.c.bf16 %v639, %v637
        %v642 = vpack.c.bf16 %v507, %v505
        %v643 = vpack.c.bf16 %v508, %v506
        %644 = vrot.lane.b32.xlu0 %v505, 127
        %v645 = vpop.permute.xlu0 %644
        %646 = vrot.lane.b32.xlu0 %v507, 127
        %v647 = vpop.permute.xlu0 %646
        %648 = vrot.lane.b32.xlu0 %v506, 127
        %v649 = vpop.permute.xlu0 %648
        %650 = vrot.lane.b32.xlu0 %v508, 127
        %v651 = vpop.permute.xlu0 %650
        %vm652 = vcmp.lt.s32.totalorder %v522, 127
        %v653 = vsel %vm652, %v645, %v649
        %v654 = vsel %vm652, %v647, %v651
        %v655 = vsel %vm652, %v649, %v645
        %v656 = vsel %vm652, %v651, %v647
        %s657 = scalar_lea.vmem %s1, 10
        %v658 = vld [vmem:[%s657] sm:$0x3]
        %v660 = vlaneseq
        %v661 = vshrl.u32 %v660, 7
        %v662 = vsub.s32 0, %v661
        %v663 = vrot.slane %v658, %v662
        %v664 = vlaneseq
        %v665 = vshrl.u32 %v664, 7
        %v666 = vsub.s32 1, %v665
        %v667 = vrot.slane %v658, %v666
        %v670 = vmul.f32 %v653, %v663
        %v671 = vmul.f32 %v655, %v667
        %v672 = vmul.f32 %v654, %v663
        %v673 = vmul.f32 %v656, %v667
        %v674 = vpack.c.bf16 %v672, %v670
        %v675 = vpack.c.bf16 %v673, %v671
        %676 = vrot.lane.b32.xlu0 %v505, 113
        %v677 = vpop.permute.xlu0 %676
        %678 = vrot.lane.b32.xlu0 %v507, 113
        %v679 = vpop.permute.xlu0 %678
        %680 = vrot.lane.b32.xlu0 %v506, 113
        %v681 = vpop.permute.xlu0 %680
        %682 = vrot.lane.b32.xlu0 %v508, 113
        %v683 = vpop.permute.xlu0 %682
        %vm684 = vcmp.lt.s32.totalorder %v522, 113
        %v685 = vsel %vm684, %v677, %v681
        %v686 = vsel %vm684, %v679, %v683
        %v687 = vsel %vm684, %v681, %v677
        %v688 = vsel %vm684, %v683, %v679
        %s689 = scalar_lea.vmem %s1, 12
        %v690 = vld [vmem:[%s689] sm:$0x3]
        %v692 = vlaneseq
        %v693 = vshrl.u32 %v692, 7
        %v694 = vsub.s32 0, %v693
        %v695 = vrot.slane %v690, %v694
        %v696 = vlaneseq
        %v697 = vshrl.u32 %v696, 7
        %v698 = vsub.s32 1, %v697
        %v699 = vrot.slane %v690, %v698
        %v702 = vmul.f32 %v685, %v695
        %v703 = vmul.f32 %v687, %v699
        %v704 = vmul.f32 %v686, %v695
        %v705 = vmul.f32 %v688, %v699
        %v706 = vpack.c.bf16 %v704, %v702
        %v707 = vpack.c.bf16 %v705, %v703
        %708 = vrot.lane.b32.xlu0 %v505, 112
        %v709 = vpop.permute.xlu0 %708
        %710 = vrot.lane.b32.xlu0 %v507, 112
        %v711 = vpop.permute.xlu0 %710
        %712 = vrot.lane.b32.xlu0 %v506, 112
        %v713 = vpop.permute.xlu0 %712
        %714 = vrot.lane.b32.xlu0 %v508, 112
        %v715 = vpop.permute.xlu0 %714
        %vm716 = vcmp.lt.s32.totalorder %v522, 112
        %v717 = vsel %vm716, %v709, %v713
        %v718 = vsel %vm716, %v711, %v715
        %v719 = vsel %vm716, %v713, %v709
        %v720 = vsel %vm716, %v715, %v711
        %s721 = scalar_lea.vmem %s1, 14
        %v722 = vld [vmem:[%s721] sm:$0x3]
        %v724 = vlaneseq
        %v725 = vshrl.u32 %v724, 7
        %v726 = vsub.s32 0, %v725
        %v727 = vrot.slane %v722, %v726
        %v728 = vlaneseq
        %v729 = vshrl.u32 %v728, 7
        %v730 = vsub.s32 1, %v729
        %v731 = vrot.slane %v722, %v730
        %v734 = vmul.f32 %v717, %v727
        %v735 = vmul.f32 %v719, %v731
        %v736 = vmul.f32 %v718, %v727
        %v737 = vmul.f32 %v720, %v731
        %v738 = vpack.c.bf16 %v736, %v734
        %v739 = vpack.c.bf16 %v737, %v735
        %740 = vrot.lane.b32.xlu0 %v505, 111
        %v741 = vpop.permute.xlu0 %740
        %742 = vrot.lane.b32.xlu0 %v507, 111
        %v743 = vpop.permute.xlu0 %742
        %744 = vrot.lane.b32.xlu0 %v506, 111
        %v745 = vpop.permute.xlu0 %744
        %746 = vrot.lane.b32.xlu0 %v508, 111
        %v747 = vpop.permute.xlu0 %746
        %vm748 = vcmp.lt.s32.totalorder %v522, 111
        %v749 = vsel %vm748, %v741, %v745
        %v750 = vsel %vm748, %v743, %v747
        %v751 = vsel %vm748, %v745, %v741
        %v752 = vsel %vm748, %v747, %v743
        %s753 = scalar_lea.vmem %s1, 16
        %v754 = vld [vmem:[%s753] sm:$0x3]
        %v756 = vlaneseq
        %v757 = vshrl.u32 %v756, 7
        %v758 = vsub.s32 0, %v757
        %v759 = vrot.slane %v754, %v758
        %v760 = vlaneseq
        %v761 = vshrl.u32 %v760, 7
        %v762 = vsub.s32 1, %v761
        %v763 = vrot.slane %v754, %v762
        %v766 = vmul.f32 %v749, %v759
        %v767 = vmul.f32 %v751, %v763
        %v768 = vmul.f32 %v750, %v759
        %v769 = vmul.f32 %v752, %v763
        %v770 = vpack.c.bf16 %v768, %v766
        %v771 = vpack.c.bf16 %v769, %v767
        %773 = vset.pattern.permute.xlu0 0
        %774 = vperm.xlu0 %773, %v511
        %v775 = vpop.permute.xlu0 %774
        %778 = vset.pattern.permute.xlu0 0
        %779 = vperm.xlu0 %778, %v512
        %v780 = vpop.permute.xlu0 %779
        %v784 = vunpack.c.l.b16 %v509
        %v785 = vunpack.c.h.b16 %v509
        %v786 = vunpack.c.l.b16 %v510
        %v787 = vunpack.c.h.b16 %v510
        %v788 = vpack.c.b16 %v786, %v784
        %v789 = vpack.c.b16 %v787, %v785
        %vm791 = vcmask 130048
        %v793 = vsel %vm791, %v789, 0
        %795 = vmatprep.subr.bf16.mxu0 %v739
        %796 = vmatpush1.bf16.msra.mxu0 %v738
        %797 = vmatprep.subr.bf16.mxu0 %v707
        %798 = vmatpush1.bf16.msra.mxu0 %v706
        %799 = vmatprep.subr.bf16.mxu0 %v675
        %800 = vmatpush1.bf16.msra.mxu0 %v674
        %801 = vmatprep.subr.bf16.mxu0 %v643
        %802 = vmatpush1.bf16.msra.mxu0 %v642
        %803 = vmatprep.subr.bf16.mxu0 %v641
        %804 = vmatpush1.bf16.msra.mxu0 %v640
        %805 = vmatprep.subr.bf16.mxu0 %v609
        %806 = vmatpush1.bf16.msra.mxu0 %v608
        %807 = vmatprep.subr.bf16.mxu0 %v577
        %808 = vmatpush1.bf16.msra.mxu0 %v576
        %809 = vmatprep.subr.bf16.mxu0 %v545
        %810 = vmatpush1.bf16.msra.mxu0 %v544
        %811 = vmatprep.subr.bf16.mxu0 0
        %812 = vmatpush2.bf16.msra.mxu0 0
        %813 = vmatprep.subr.bf16.mxu0 0
        %814 = vmatpush2.bf16.msra.mxu0 0
        %815 = vmatprep.subr.bf16.mxu0 0
        %816 = vmatpush2.bf16.msra.mxu0 0
        %817 = vmatprep.subr.bf16.mxu0 0
        %818 = vmatpush2.bf16.msra.mxu0 0
        %819 = vmatprep.subr.bf16.mxu0 0
        %820 = vmatpush2.bf16.msra.mxu0 0
        %821 = vmatprep.subr.bf16.mxu0 0
        %822 = vmatpush2.bf16.msra.mxu0 0
        %823 = vmatprep.subr.bf16.mxu0 0
        %824 = vmatpush2.bf16.msra.mxu0 0
        %825 = vmatprep.subr.bf16.mxu0 %v771
        %826 = vmatpush2.bf16.msra.mxu0 %v770
        %827 = vmatprep.mubr.bf16.mxu0 %v793
        %828 = vmatmul.mubr.bf16.gmra.mxu0 %v788
        %v829 = vpop.f32.mrf.mxu0
        %v830 = vadd.f32 %v775, %v829
        %v831 = vpop.f32.mrf.mxu0
        %v832 = vadd.f32 %v775, %v831
        %v833 = vpop.f32.mrf.mxu0
        %v834 = vadd.f32 %v780, %v833
        %v835 = vpop.f32.mrf.mxu0
        %v836 = vadd.f32 %v780, %v835
        %837 = vdwg.mxu0
        %s838 = scalar_lea.vmem [#allocation2], 16
        %v839 = vld [vmem:[%s838] sm:$0xff]
        %v840 = vld [vmem:[%s838 + $0x8] sm:$0xff]
        %s841 = scalar_lea.vmem %s3, 16
        %v842 = vld [vmem:[%s841] sm:$0xff]
        %v843 = vld [vmem:[%s841 + $0x8] sm:$0xff]
        %844 = vrot.lane.b32.xlu0 %v830, 17
        %v845 = vpop.permute.xlu0 %844
        %846 = vrot.lane.b32.xlu0 %v834, 17
        %v847 = vpop.permute.xlu0 %846
        %848 = vrot.lane.b32.xlu0 %v832, 17
        %v849 = vpop.permute.xlu0 %848
        %850 = vrot.lane.b32.xlu0 %v836, 17
        %v851 = vpop.permute.xlu0 %850
        %v852 = vsel %vm523, %v845, %v849
        %v853 = vsel %vm523, %v847, %v851
        %v854 = vsel %vm523, %v849, %v845
        %v855 = vsel %vm523, %v851, %v847
        %v856 = vmul.f32 %v854, %v533
        %v857 = vmul.f32 %v852, %v537
        %v858 = vmul.f32 %v855, %v533
        %v859 = vmul.f32 %v853, %v537
        %v860 = vpack.c.bf16 %v858, %v856
        %v861 = vpack.c.bf16 %v859, %v857
        %862 = vrot.lane.b32.xlu0 %v830, 16
        %v863 = vpop.permute.xlu0 %862
        %864 = vrot.lane.b32.xlu0 %v834, 16
        %v865 = vpop.permute.xlu0 %864
        %866 = vrot.lane.b32.xlu0 %v832, 16
        %v867 = vpop.permute.xlu0 %866
        %868 = vrot.lane.b32.xlu0 %v836, 16
        %v869 = vpop.permute.xlu0 %868
        %v870 = vsel %vm554, %v863, %v867
        %v871 = vsel %vm554, %v865, %v869
        %v872 = vsel %vm554, %v867, %v863
        %v873 = vsel %vm554, %v869, %v865
        %v874 = vmul.f32 %v872, %v565
        %v875 = vmul.f32 %v870, %v569
        %v876 = vmul.f32 %v873, %v565
        %v877 = vmul.f32 %v871, %v569
        %v878 = vpack.c.bf16 %v876, %v874
        %v879 = vpack.c.bf16 %v877, %v875
        %880 = vrot.lane.b32.xlu0 %v830, 15
        %v881 = vpop.permute.xlu0 %880
        %882 = vrot.lane.b32.xlu0 %v834, 15
        %v883 = vpop.permute.xlu0 %882
        %884 = vrot.lane.b32.xlu0 %v832, 15
        %v885 = vpop.permute.xlu0 %884
        %886 = vrot.lane.b32.xlu0 %v836, 15
        %v887 = vpop.permute.xlu0 %886
        %v888 = vsel %vm586, %v881, %v885
        %v889 = vsel %vm586, %v883, %v887
        %v890 = vsel %vm586, %v885, %v881
        %v891 = vsel %vm586, %v887, %v883
        %v892 = vmul.f32 %v890, %v597
        %v893 = vmul.f32 %v888, %v601
        %v894 = vmul.f32 %v891, %v597
        %v895 = vmul.f32 %v889, %v601
        %v896 = vpack.c.bf16 %v894, %v892
        %v897 = vpack.c.bf16 %v895, %v893
        %898 = vrot.lane.b32.xlu0 %v830, 1
        %v899 = vpop.permute.xlu0 %898
        %900 = vrot.lane.b32.xlu0 %v834, 1
        %v901 = vpop.permute.xlu0 %900
        %902 = vrot.lane.b32.xlu0 %v832, 1
        %v903 = vpop.permute.xlu0 %902
        %904 = vrot.lane.b32.xlu0 %v836, 1
        %v905 = vpop.permute.xlu0 %904
        %v906 = vsel %vm618, %v899, %v903
        %v907 = vsel %vm618, %v901, %v905
        %v908 = vsel %vm618, %v903, %v899
        %v909 = vsel %vm618, %v905, %v901
        %v910 = vmul.f32 %v908, %v629
        %v911 = vmul.f32 %v906, %v633
        %v912 = vmul.f32 %v909, %v629
        %v913 = vmul.f32 %v907, %v633
        %v914 = vpack.c.bf16 %v912, %v910
        %v915 = vpack.c.bf16 %v913, %v911
        %v916 = vpack.c.bf16 %v834, %v830
        %v917 = vpack.c.bf16 %v836, %v832
        %918 = vrot.lane.b32.xlu0 %v830, 127
        %v919 = vpop.permute.xlu0 %918
        %920 = vrot.lane.b32.xlu0 %v834, 127
        %v921 = vpop.permute.xlu0 %920
        %922 = vrot.lane.b32.xlu0 %v832, 127
        %v923 = vpop.permute.xlu0 %922
        %924 = vrot.lane.b32.xlu0 %v836, 127
        %v925 = vpop.permute.xlu0 %924
        %v926 = vsel %vm652, %v919, %v923
        %v927 = vsel %vm652, %v921, %v925
        %v928 = vsel %vm652, %v923, %v919
        %v929 = vsel %vm652, %v925, %v921
        %v930 = vmul.f32 %v926, %v663
        %v931 = vmul.f32 %v928, %v667
        %v932 = vmul.f32 %v927, %v663
        %v933 = vmul.f32 %v929, %v667
        %v934 = vpack.c.bf16 %v932, %v930
        %v935 = vpack.c.bf16 %v933, %v931
        %936 = vrot.lane.b32.xlu0 %v830, 113
        %v937 = vpop.permute.xlu0 %936
        %938 = vrot.lane.b32.xlu0 %v834, 113
        %v939 = vpop.permute.xlu0 %938
        %940 = vrot.lane.b32.xlu0 %v832, 113
        %v941 = vpop.permute.xlu0 %940
        %942 = vrot.lane.b32.xlu0 %v836, 113
        %v943 = vpop.permute.xlu0 %942
        %v944 = vsel %vm684, %v937, %v941
        %v945 = vsel %vm684, %v939, %v943
        %v946 = vsel %vm684, %v941, %v937
        %v947 = vsel %vm684, %v943, %v939
        %v948 = vmul.f32 %v944, %v695
        %v949 = vmul.f32 %v946, %v699
        %v950 = vmul.f32 %v945, %v695
        %v951 = vmul.f32 %v947, %v699
        %v952 = vpack.c.bf16 %v950, %v948
        %v953 = vpack.c.bf16 %v951, %v949
        %954 = vrot.lane.b32.xlu0 %v830, 112
        %v955 = vpop.permute.xlu0 %954
        %956 = vrot.lane.b32.xlu0 %v834, 112
        %v957 = vpop.permute.xlu0 %956
        %958 = vrot.lane.b32.xlu0 %v832, 112
        %v959 = vpop.permute.xlu0 %958
        %960 = vrot.lane.b32.xlu0 %v836, 112
        %v961 = vpop.permute.xlu0 %960
        %v962 = vsel %vm716, %v955, %v959
        %v963 = vsel %vm716, %v957, %v961
        %v964 = vsel %vm716, %v959, %v955
        %v965 = vsel %vm716, %v961, %v957
        %v966 = vmul.f32 %v962, %v727
        %v967 = vmul.f32 %v964, %v731
        %v968 = vmul.f32 %v963, %v727
        %v969 = vmul.f32 %v965, %v731
        %v970 = vpack.c.bf16 %v968, %v966
        %v971 = vpack.c.bf16 %v969, %v967
        %972 = vrot.lane.b32.xlu0 %v830, 111
        %v973 = vpop.permute.xlu0 %972
        %974 = vrot.lane.b32.xlu0 %v834, 111
        %v975 = vpop.permute.xlu0 %974
        %976 = vrot.lane.b32.xlu0 %v832, 111
        %v977 = vpop.permute.xlu0 %976
        %978 = vrot.lane.b32.xlu0 %v836, 111
        %v979 = vpop.permute.xlu0 %978
        %v980 = vsel %vm748, %v973, %v977
        %v981 = vsel %vm748, %v975, %v979
        %v982 = vsel %vm748, %v977, %v973
        %v983 = vsel %vm748, %v979, %v975
        %v984 = vmul.f32 %v980, %v759
        %v985 = vmul.f32 %v982, %v763
        %v986 = vmul.f32 %v981, %v759
        %v987 = vmul.f32 %v983, %v763
        %v988 = vpack.c.bf16 %v986, %v984
        %v989 = vpack.c.bf16 %v987, %v985
        %991 = vset.pattern.permute.xlu0 0
        %992 = vperm.xlu0 %991, %v842
        %v993 = vpop.permute.xlu0 %992
        %996 = vset.pattern.permute.xlu0 0
        %997 = vperm.xlu0 %996, %v843
        %v998 = vpop.permute.xlu0 %997
        %v1002 = vunpack.c.l.b16 %v839
        %v1003 = vunpack.c.h.b16 %v839
        %v1004 = vunpack.c.l.b16 %v840
        %v1005 = vunpack.c.h.b16 %v840
        %v1006 = vpack.c.b16 %v1004, %v1002
        %v1007 = vpack.c.b16 %v1005, %v1003
        %v1010 = vsel %vm791, %v1007, 0
        %1012 = vmatprep.subr.bf16.mxu0 %v971
        %1013 = vmatpush1.bf16.msra.mxu0 %v970
        %1014 = vmatprep.subr.bf16.mxu0 %v953
        %1015 = vmatpush1.bf16.msra.mxu0 %v952
        %1016 = vmatprep.subr.bf16.mxu0 %v935
        %1017 = vmatpush1.bf16.msra.mxu0 %v934
        %1018 = vmatprep.subr.bf16.mxu0 %v917
        %1019 = vmatpush1.bf16.msra.mxu0 %v916
        %1020 = vmatprep.subr.bf16.mxu0 %v915
        %1021 = vmatpush1.bf16.msra.mxu0 %v914
        %1022 = vmatprep.subr.bf16.mxu0 %v897
        %1023 = vmatpush1.bf16.msra.mxu0 %v896
        %1024 = vmatprep.subr.bf16.mxu0 %v879
        %1025 = vmatpush1.bf16.msra.mxu0 %v878
        %1026 = vmatprep.subr.bf16.mxu0 %v861
        %1027 = vmatpush1.bf16.msra.mxu0 %v860
        %1028 = vmatprep.subr.bf16.mxu0 0
        %1029 = vmatpush2.bf16.msra.mxu0 0
        %1030 = vmatprep.subr.bf16.mxu0 0
        %1031 = vmatpush2.bf16.msra.mxu0 0
        %1032 = vmatprep.subr.bf16.mxu0 0
        %1033 = vmatpush2.bf16.msra.mxu0 0
        %1034 = vmatprep.subr.bf16.mxu0 0
        %1035 = vmatpush2.bf16.msra.mxu0 0
        %1036 = vmatprep.subr.bf16.mxu0 0
        %1037 = vmatpush2.bf16.msra.mxu0 0
        %1038 = vmatprep.subr.bf16.mxu0 0
        %1039 = vmatpush2.bf16.msra.mxu0 0
        %1040 = vmatprep.subr.bf16.mxu0 0
        %1041 = vmatpush2.bf16.msra.mxu0 0
        %1042 = vmatprep.subr.bf16.mxu0 %v989
        %1043 = vmatpush2.bf16.msra.mxu0 %v988
        %1044 = vmatprep.mubr.bf16.mxu0 %v1010
        %1045 = vmatmul.mubr.bf16.gmra.mxu0 %v1006
        %v1046 = vpop.f32.mrf.mxu0
        %v1047 = vadd.f32 %v993, %v1046
        %v1048 = vpop.f32.mrf.mxu0
        %v1049 = vadd.f32 %v993, %v1048
        %v1050 = vpop.f32.mrf.mxu0
        %v1051 = vadd.f32 %v998, %v1050
        %v1052 = vpop.f32.mrf.mxu0
        %v1053 = vadd.f32 %v998, %v1052
        %1054 = vdwg.mxu0
        %v1055 = vmax.f32 %v1047, 0.0
        %v1056 = vmax.f32 %v1049, 0.0
        %v1057 = vmax.f32 %v1051, 0.0
        %v1058 = vmax.f32 %v1053, 0.0
        %s1059 = scalar_lea.vmem [#allocation2], 32
        %v1060 = vld [vmem:[%s1059] sm:$0xff]
        %v1061 = vld [vmem:[%s1059 + $0x8] sm:$0xff]
        %s1062 = scalar_lea.vmem %s3, 32
        %v1063 = vld [vmem:[%s1062] sm:$0xff]
        %v1064 = vld [vmem:[%s1062 + $0x8] sm:$0xff]
        %1065 = vrot.lane.b32.xlu0 %v1055, 17
        %v1066 = vpop.permute.xlu0 %1065
        %1067 = vrot.lane.b32.xlu0 %v1057, 17
        %v1068 = vpop.permute.xlu0 %1067
        %1069 = vrot.lane.b32.xlu0 %v1056, 17
        %v1070 = vpop.permute.xlu0 %1069
        %1071 = vrot.lane.b32.xlu0 %v1058, 17
        %v1072 = vpop.permute.xlu0 %1071
        %v1073 = vsel %vm523, %v1066, %v1070
        %v1074 = vsel %vm523, %v1068, %v1072
        %v1075 = vsel %vm523, %v1070, %v1066
        %v1076 = vsel %vm523, %v1072, %v1068
        %v1077 = vmul.f32 %v1075, %v533
        %v1078 = vmul.f32 %v1073, %v537
        %v1079 = vmul.f32 %v1076, %v533
        %v1080 = vmul.f32 %v1074, %v537
        %v1081 = vpack.c.bf16 %v1079, %v1077
        %v1082 = vpack.c.bf16 %v1080, %v1078
        %1083 = vrot.lane.b32.xlu0 %v1055, 16
        %v1084 = vpop.permute.xlu0 %1083
        %1085 = vrot.lane.b32.xlu0 %v1057, 16
        %v1086 = vpop.permute.xlu0 %1085
        %1087 = vrot.lane.b32.xlu0 %v1056, 16
        %v1088 = vpop.permute.xlu0 %1087
        %1089 = vrot.lane.b32.xlu0 %v1058, 16
        %v1090 = vpop.permute.xlu0 %1089
        %v1091 = vsel %vm554, %v1084, %v1088
        %v1092 = vsel %vm554, %v1086, %v1090
        %v1093 = vsel %vm554, %v1088, %v1084
        %v1094 = vsel %vm554, %v1090, %v1086
        %v1095 = vmul.f32 %v1093, %v565
        %v1096 = vmul.f32 %v1091, %v569
        %v1097 = vmul.f32 %v1094, %v565
        %v1098 = vmul.f32 %v1092, %v569
        %v1099 = vpack.c.bf16 %v1097, %v1095
        %v1100 = vpack.c.bf16 %v1098, %v1096
        %1101 = vrot.lane.b32.xlu0 %v1055, 15
        %v1102 = vpop.permute.xlu0 %1101
        %1103 = vrot.lane.b32.xlu0 %v1057, 15
        %v1104 = vpop.permute.xlu0 %1103
        %1105 = vrot.lane.b32.xlu0 %v1056, 15
        %v1106 = vpop.permute.xlu0 %1105
        %1107 = vrot.lane.b32.xlu0 %v1058, 15
        %v1108 = vpop.permute.xlu0 %1107
        %v1109 = vsel %vm586, %v1102, %v1106
        %v1110 = vsel %vm586, %v1104, %v1108
        %v1111 = vsel %vm586, %v1106, %v1102
        %v1112 = vsel %vm586, %v1108, %v1104
        %v1113 = vmul.f32 %v1111, %v597
        %v1114 = vmul.f32 %v1109, %v601
        %v1115 = vmul.f32 %v1112, %v597
        %v1116 = vmul.f32 %v1110, %v601
        %v1117 = vpack.c.bf16 %v1115, %v1113
        %v1118 = vpack.c.bf16 %v1116, %v1114
        %1119 = vrot.lane.b32.xlu0 %v1055, 1
        %v1120 = vpop.permute.xlu0 %1119
        %1121 = vrot.lane.b32.xlu0 %v1057, 1
        %v1122 = vpop.permute.xlu0 %1121
        %1123 = vrot.lane.b32.xlu0 %v1056, 1
        %v1124 = vpop.permute.xlu0 %1123
        %1125 = vrot.lane.b32.xlu0 %v1058, 1
        %v1126 = vpop.permute.xlu0 %1125
        %v1127 = vsel %vm618, %v1120, %v1124
        %v1128 = vsel %vm618, %v1122, %v1126
        %v1129 = vsel %vm618, %v1124, %v1120
        %v1130 = vsel %vm618, %v1126, %v1122
        %v1131 = vmul.f32 %v1129, %v629
        %v1132 = vmul.f32 %v1127, %v633
        %v1133 = vmul.f32 %v1130, %v629
        %v1134 = vmul.f32 %v1128, %v633
        %v1135 = vpack.c.bf16 %v1133, %v1131
        %v1136 = vpack.c.bf16 %v1134, %v1132
        %v1137 = vpack.c.bf16 %v1057, %v1055
        %v1138 = vpack.c.bf16 %v1058, %v1056
        %1139 = vrot.lane.b32.xlu0 %v1055, 127
        %v1140 = vpop.permute.xlu0 %1139
        %1141 = vrot.lane.b32.xlu0 %v1057, 127
        %v1142 = vpop.permute.xlu0 %1141
        %1143 = vrot.lane.b32.xlu0 %v1056, 127
        %v1144 = vpop.permute.xlu0 %1143
        %1145 = vrot.lane.b32.xlu0 %v1058, 127
        %v1146 = vpop.permute.xlu0 %1145
        %v1147 = vsel %vm652, %v1140, %v1144
        %v1148 = vsel %vm652, %v1142, %v1146
        %v1149 = vsel %vm652, %v1144, %v1140
        %v1150 = vsel %vm652, %v1146, %v1142
        %v1151 = vmul.f32 %v1147, %v663
        %v1152 = vmul.f32 %v1149, %v667
        %v1153 = vmul.f32 %v1148, %v663
        %v1154 = vmul.f32 %v1150, %v667
        %v1155 = vpack.c.bf16 %v1153, %v1151
        %v1156 = vpack.c.bf16 %v1154, %v1152
        %1157 = vrot.lane.b32.xlu0 %v1055, 113
        %v1158 = vpop.permute.xlu0 %1157
        %1159 = vrot.lane.b32.xlu0 %v1057, 113
        %v1160 = vpop.permute.xlu0 %1159
        %1161 = vrot.lane.b32.xlu0 %v1056, 113
        %v1162 = vpop.permute.xlu0 %1161
        %1163 = vrot.lane.b32.xlu0 %v1058, 113
        %v1164 = vpop.permute.xlu0 %1163
        %v1165 = vsel %vm684, %v1158, %v1162
        %v1166 = vsel %vm684, %v1160, %v1164
        %v1167 = vsel %vm684, %v1162, %v1158
        %v1168 = vsel %vm684, %v1164, %v1160
        %v1169 = vmul.f32 %v1165, %v695
        %v1170 = vmul.f32 %v1167, %v699
        %v1171 = vmul.f32 %v1166, %v695
        %v1172 = vmul.f32 %v1168, %v699
        %v1173 = vpack.c.bf16 %v1171, %v1169
        %v1174 = vpack.c.bf16 %v1172, %v1170
        %1175 = vrot.lane.b32.xlu0 %v1055, 112
        %v1176 = vpop.permute.xlu0 %1175
        %1177 = vrot.lane.b32.xlu0 %v1057, 112
        %v1178 = vpop.permute.xlu0 %1177
        %1179 = vrot.lane.b32.xlu0 %v1056, 112
        %v1180 = vpop.permute.xlu0 %1179
        %1181 = vrot.lane.b32.xlu0 %v1058, 112
        %v1182 = vpop.permute.xlu0 %1181
        %v1183 = vsel %vm716, %v1176, %v1180
        %v1184 = vsel %vm716, %v1178, %v1182
        %v1185 = vsel %vm716, %v1180, %v1176
        %v1186 = vsel %vm716, %v1182, %v1178
        %v1187 = vmul.f32 %v1183, %v727
        %v1188 = vmul.f32 %v1185, %v731
        %v1189 = vmul.f32 %v1184, %v727
        %v1190 = vmul.f32 %v1186, %v731
        %v1191 = vpack.c.bf16 %v1189, %v1187
        %v1192 = vpack.c.bf16 %v1190, %v1188
        %1193 = vrot.lane.b32.xlu0 %v1055, 111
        %v1194 = vpop.permute.xlu0 %1193
        %1195 = vrot.lane.b32.xlu0 %v1057, 111
        %v1196 = vpop.permute.xlu0 %1195
        %1197 = vrot.lane.b32.xlu0 %v1056, 111
        %v1198 = vpop.permute.xlu0 %1197
        %1199 = vrot.lane.b32.xlu0 %v1058, 111
        %v1200 = vpop.permute.xlu0 %1199
        %v1201 = vsel %vm748, %v1194, %v1198
        %v1202 = vsel %vm748, %v1196, %v1200
        %v1203 = vsel %vm748, %v1198, %v1194
        %v1204 = vsel %vm748, %v1200, %v1196
        %v1205 = vmul.f32 %v1201, %v759
        %v1206 = vmul.f32 %v1203, %v763
        %v1207 = vmul.f32 %v1202, %v759
        %v1208 = vmul.f32 %v1204, %v763
        %v1209 = vpack.c.bf16 %v1207, %v1205
        %v1210 = vpack.c.bf16 %v1208, %v1206
        %1212 = vset.pattern.permute.xlu0 0
        %1213 = vperm.xlu0 %1212, %v1063
        %v1214 = vpop.permute.xlu0 %1213
        %1217 = vset.pattern.permute.xlu0 0
        %1218 = vperm.xlu0 %1217, %v1064
        %v1219 = vpop.permute.xlu0 %1218
        %v1223 = vunpack.c.l.b16 %v1060
        %v1224 = vunpack.c.h.b16 %v1060
        %v1225 = vunpack.c.l.b16 %v1061
        %v1226 = vunpack.c.h.b16 %v1061
        %v1227 = vpack.c.b16 %v1225, %v1223
        %v1228 = vpack.c.b16 %v1226, %v1224
        %v1231 = vsel %vm791, %v1228, 0
        %1233 = vmatprep.subr.bf16.mxu0 %v1192
        %1234 = vmatpush1.bf16.msra.mxu0 %v1191
        %1235 = vmatprep.subr.bf16.mxu0 %v1174
        %1236 = vmatpush1.bf16.msra.mxu0 %v1173
        %1237 = vmatprep.subr.bf16.mxu0 %v1156
        %1238 = vmatpush1.bf16.msra.mxu0 %v1155
        %1239 = vmatprep.subr.bf16.mxu0 %v1138
        %1240 = vmatpush1.bf16.msra.mxu0 %v1137
        %1241 = vmatprep.subr.bf16.mxu0 %v1136
        %1242 = vmatpush1.bf16.msra.mxu0 %v1135
        %1243 = vmatprep.subr.bf16.mxu0 %v1118
        %1244 = vmatpush1.bf16.msra.mxu0 %v1117
        %1245 = vmatprep.subr.bf16.mxu0 %v1100
        %1246 = vmatpush1.bf16.msra.mxu0 %v1099
        %1247 = vmatprep.subr.bf16.mxu0 %v1082
        %1248 = vmatpush1.bf16.msra.mxu0 %v1081
        %1249 = vmatprep.subr.bf16.mxu0 0
        %1250 = vmatpush2.bf16.msra.mxu0 0
        %1251 = vmatprep.subr.bf16.mxu0 0
        %1252 = vmatpush2.bf16.msra.mxu0 0
        %1253 = vmatprep.subr.bf16.mxu0 0
        %1254 = vmatpush2.bf16.msra.mxu0 0
        %1255 = vmatprep.subr.bf16.mxu0 0
        %1256 = vmatpush2.bf16.msra.mxu0 0
        %1257 = vmatprep.subr.bf16.mxu0 0
        %1258 = vmatpush2.bf16.msra.mxu0 0
        %1259 = vmatprep.subr.bf16.mxu0 0
        %1260 = vmatpush2.bf16.msra.mxu0 0
        %1261 = vmatprep.subr.bf16.mxu0 0
        %1262 = vmatpush2.bf16.msra.mxu0 0
        %1263 = vmatprep.subr.bf16.mxu0 %v1210
        %1264 = vmatpush2.bf16.msra.mxu0 %v1209
        %1265 = vmatprep.mubr.bf16.mxu0 %v1231
        %1266 = vmatmul.mubr.bf16.gmra.mxu0 %v1227
        %v1267 = vpop.f32.mrf.mxu0
        %v1268 = vadd.f32 %v1214, %v1267
        %v1269 = vpop.f32.mrf.mxu0
        %v1270 = vadd.f32 %v1214, %v1269
        %v1271 = vpop.f32.mrf.mxu0
        %v1272 = vadd.f32 %v1219, %v1271
        %v1273 = vpop.f32.mrf.mxu0
        %v1274 = vadd.f32 %v1219, %v1273
        %1275 = vdwg.mxu0
        %v1276 = vadd.f32 %v1268, %v1270
        %1277 = vadd.xlane.f32.xlu0 %v1276
        %v1278 = vpop.xlane.xlu0 %1277
        %v1279 = vadd.f32 %v1272, %v1274
        %1280 = vadd.xlane.f32.xlu0 %v1279
        %v1281 = vpop.xlane.xlu0 %1280
        %v1282 = vmul.f32 %v1278, 0.00390625
        %v1283 = vmul.f32 %v1281, 0.00390625
        %v1284 = vld [vmem:[%s4] sm:$0xff]
        %v1285 = vld [vmem:[%s4 + $0x8] sm:$0xff]
        %v1286 = vmul.f32 %v1284, %v1282
        %v1287 = vmul.f32 %v1285, %v1283
        %vm1288 = vcmask 31744
        %v1289 = vsel %vm1288, %v1286, 0.0
        %v1290 = vsel %vm1288, %v1287, 0.0
        %v1291 = vadd.f32 %v1289, %v1290
        %v1292 = vrot.slane %v1291, 4
        %v1293 = vadd.f32 %v1291, %v1292
        %v1294 = vrot.slane %v1293, 2
        %v1295 = vadd.f32 %v1293, %v1294
        %v1296 = vrot.slane %v1295, 1
        %v1297 = vadd.f32 %v1295, %v1296
        %v1298 = vld [vmem:[#allocation4] sm:$0x1]
        %v1299 = vadd.f32 %v1297, %v1298
        %v1300 = vmax.f32 %v1299, 0.0
        %s1301 = scalar_lea.vmem %s4, 16
        %v1302 = vld [vmem:[%s1301] sm:$0xff]
        %v1303 = vld [vmem:[%s1301 + $0x8] sm:$0xff]
        %v1304 = vlaneseq
        %v1305 = vshrl.u32 %v1304, 7
        %v1306 = vsub.s32 0, %v1305
        %v1307 = vrot.slane %v1300, %v1306
        %v1308 = vmul.f32 %v1302, %v1307
        %v1309 = vmul.f32 %v1303, %v1307
        %v1310 = vsel %vm1288, %v1308, 0.0
        %1311 = vadd.xlane.f32.xlu0 %v1310
        %v1312 = vpop.xlane.xlu0 %1311
        %v1313 = vsel %vm1288, %v1309, 0.0
        %1314 = vadd.xlane.f32.xlu0 %v1313
        %v1315 = vpop.xlane.xlu0 %1314
        %v1316 = vld [vmem:[%s6] sm:$0xff]
        %v1317 = vld [vmem:[%s6 + $0x8] sm:$0xff]
        %v1318 = vadd.f32 %v1312, %v1316
        %v1319 = vadd.f32 %v1315, %v1317
        %v1320 = vxor.u32 %v1318, 2147483648
        %v1321 = vxor.u32 %v1319, 2147483648
        %v1322 = vmul.f32 %v1320, 1.442695
        %v1323 = vpow.pop %v1322
        %v1324 = vmul.f32 %v1321, 1.442695
        %v1325 = vpow.pop %v1324
        %v1326 = vadd.f32 %v1323, 1.0
        %v1327 = vadd.f32 %v1325, 1.0
        %v1328 = vrcp.pop %v1326
        %v1329 = vmul.f32 1.0, %v1328
        %v1330 = vrcp.pop %v1327
        %v1331 = vmul.f32 1.0, %v1330
        %1333 = vset.pattern.permute.xlu0 0
        %1334 = vperm.xlu0 %1333, %v1329
        %v1335 = vpop.permute.xlu0 %1334
        %1338 = vset.pattern.permute.xlu0 0
        %1339 = vperm.xlu0 %1338, %v1331
        %v1340 = vpop.permute.xlu0 %1339
        %v1342 = vmul.f32 %v1268, %v1335
        %v1343 = vmul.f32 %v1270, %v1335
        %v1344 = vmul.f32 %v1272, %v1340
        %v1345 = vmul.f32 %v1274, %v1340
        %v1346 = vadd.f32 %v1342, %v830
        %v1347 = vadd.f32 %v1343, %v832
        %v1348 = vadd.f32 %v1344, %v834
        %v1349 = vadd.f32 %v1345, %v836
        %s1350 = scalar_lea.vmem [#allocation2], 48
        %v1351 = vld [vmem:[%s1350] sm:$0xff]
        %v1352 = vld [vmem:[%s1350 + $0x8] sm:$0xff]
        %s1353 = scalar_lea.vmem %s3, 48
        %v1354 = vld [vmem:[%s1353] sm:$0xff]
        %v1355 = vld [vmem:[%s1353 + $0x8] sm:$0xff]
        %1356 = vrot.lane.b32.xlu0 %v1346, 17
        %v1357 = vpop.permute.xlu0 %1356
        %1358 = vrot.lane.b32.xlu0 %v1348, 17
        %v1359 = vpop.permute.xlu0 %1358
        %1360 = vrot.lane.b32.xlu0 %v1347, 17
        %v1361 = vpop.permute.xlu0 %1360
        %1362 = vrot.lane.b32.xlu0 %v1349, 17
        %v1363 = vpop.permute.xlu0 %1362
        %v1364 = vsel %vm523, %v1357, %v1361
        %v1365 = vsel %vm523, %v1359, %v1363
        %v1366 = vsel %vm523, %v1361, %v1357
        %v1367 = vsel %vm523, %v1363, %v1359
        %v1368 = vmul.f32 %v1366, %v533
        %v1369 = vmul.f32 %v1364, %v537
        %v1370 = vmul.f32 %v1367, %v533
        %v1371 = vmul.f32 %v1365, %v537
        %v1372 = vpack.c.bf16 %v1370, %v1368
        %v1373 = vpack.c.bf16 %v1371, %v1369
        %1374 = vrot.lane.b32.xlu0 %v1346, 16
        %v1375 = vpop.permute.xlu0 %1374
        %1376 = vrot.lane.b32.xlu0 %v1348, 16
        %v1377 = vpop.permute.xlu0 %1376
        %1378 = vrot.lane.b32.xlu0 %v1347, 16
        %v1379 = vpop.permute.xlu0 %1378
        %1380 = vrot.lane.b32.xlu0 %v1349, 16
        %v1381 = vpop.permute.xlu0 %1380
        %v1382 = vsel %vm554, %v1375, %v1379
        %v1383 = vsel %vm554, %v1377, %v1381
        %v1384 = vsel %vm554, %v1379, %v1375
        %v1385 = vsel %vm554, %v1381, %v1377
        %v1386 = vmul.f32 %v1384, %v565
        %v1387 = vmul.f32 %v1382, %v569
        %v1388 = vmul.f32 %v1385, %v565
        %v1389 = vmul.f32 %v1383, %v569
        %v1390 = vpack.c.bf16 %v1388, %v1386
        %v1391 = vpack.c.bf16 %v1389, %v1387
        %1392 = vrot.lane.b32.xlu0 %v1346, 15
        %v1393 = vpop.permute.xlu0 %1392
        %1394 = vrot.lane.b32.xlu0 %v1348, 15
        %v1395 = vpop.permute.xlu0 %1394
        %1396 = vrot.lane.b32.xlu0 %v1347, 15
        %v1397 = vpop.permute.xlu0 %1396
        %1398 = vrot.lane.b32.xlu0 %v1349, 15
        %v1399 = vpop.permute.xlu0 %1398
        %v1400 = vsel %vm586, %v1393, %v1397
        %v1401 = vsel %vm586, %v1395, %v1399
        %v1402 = vsel %vm586, %v1397, %v1393
        %v1403 = vsel %vm586, %v1399, %v1395
        %v1404 = vmul.f32 %v1402, %v597
        %v1405 = vmul.f32 %v1400, %v601
        %v1406 = vmul.f32 %v1403, %v597
        %v1407 = vmul.f32 %v1401, %v601
        %v1408 = vpack.c.bf16 %v1406, %v1404
        %v1409 = vpack.c.bf16 %v1407, %v1405
        %1410 = vrot.lane.b32.xlu0 %v1346, 1
        %v1411 = vpop.permute.xlu0 %1410
        %1412 = vrot.lane.b32.xlu0 %v1348, 1
        %v1413 = vpop.permute.xlu0 %1412
        %1414 = vrot.lane.b32.xlu0 %v1347, 1
        %v1415 = vpop.permute.xlu0 %1414
        %1416 = vrot.lane.b32.xlu0 %v1349, 1
        %v1417 = vpop.permute.xlu0 %1416
        %v1418 = vsel %vm618, %v1411, %v1415
        %v1419 = vsel %vm618, %v1413, %v1417
        %v1420 = vsel %vm618, %v1415, %v1411
        %v1421 = vsel %vm618, %v1417, %v1413
        %v1422 = vmul.f32 %v1420, %v629
        %v1423 = vmul.f32 %v1418, %v633
        %v1424 = vmul.f32 %v1421, %v629
        %v1425 = vmul.f32 %v1419, %v633
        %v1426 = vpack.c.bf16 %v1424, %v1422
        %v1427 = vpack.c.bf16 %v1425, %v1423
        %v1428 = vpack.c.bf16 %v1348, %v1346
        %v1429 = vpack.c.bf16 %v1349, %v1347
        %1430 = vrot.lane.b32.xlu0 %v1346, 127
        %v1431 = vpop.permute.xlu0 %1430
        %1432 = vrot.lane.b32.xlu0 %v1348, 127
        %v1433 = vpop.permute.xlu0 %1432
        %1434 = vrot.lane.b32.xlu0 %v1347, 127
        %v1435 = vpop.permute.xlu0 %1434
        %1436 = vrot.lane.b32.xlu0 %v1349, 127
        %v1437 = vpop.permute.xlu0 %1436
        %v1438 = vsel %vm652, %v1431, %v1435
        %v1439 = vsel %vm652, %v1433, %v1437
        %v1440 = vsel %vm652, %v1435, %v1431
        %v1441 = vsel %vm652, %v1437, %v1433
        %v1442 = vmul.f32 %v1438, %v663
        %v1443 = vmul.f32 %v1440, %v667
        %v1444 = vmul.f32 %v1439, %v663
        %v1445 = vmul.f32 %v1441, %v667
        %v1446 = vpack.c.bf16 %v1444, %v1442
        %v1447 = vpack.c.bf16 %v1445, %v1443
        %1448 = vrot.lane.b32.xlu0 %v1346, 113
        %v1449 = vpop.permute.xlu0 %1448
        %1450 = vrot.lane.b32.xlu0 %v1348, 113
        %v1451 = vpop.permute.xlu0 %1450
        %1452 = vrot.lane.b32.xlu0 %v1347, 113
        %v1453 = vpop.permute.xlu0 %1452
        %1454 = vrot.lane.b32.xlu0 %v1349, 113
        %v1455 = vpop.permute.xlu0 %1454
        %v1456 = vsel %vm684, %v1449, %v1453
        %v1457 = vsel %vm684, %v1451, %v1455
        %v1458 = vsel %vm684, %v1453, %v1449
        %v1459 = vsel %vm684, %v1455, %v1451
        %v1460 = vmul.f32 %v1456, %v695
        %v1461 = vmul.f32 %v1458, %v699
        %v1462 = vmul.f32 %v1457, %v695
        %v1463 = vmul.f32 %v1459, %v699
        %v1464 = vpack.c.bf16 %v1462, %v1460
        %v1465 = vpack.c.bf16 %v1463, %v1461
        %1466 = vrot.lane.b32.xlu0 %v1346, 112
        %v1467 = vpop.permute.xlu0 %1466
        %1468 = vrot.lane.b32.xlu0 %v1348, 112
        %v1469 = vpop.permute.xlu0 %1468
        %1470 = vrot.lane.b32.xlu0 %v1347, 112
        %v1471 = vpop.permute.xlu0 %1470
        %1472 = vrot.lane.b32.xlu0 %v1349, 112
        %v1473 = vpop.permute.xlu0 %1472
        %v1474 = vsel %vm716, %v1467, %v1471
        %v1475 = vsel %vm716, %v1469, %v1473
        %v1476 = vsel %vm716, %v1471, %v1467
        %v1477 = vsel %vm716, %v1473, %v1469
        %v1478 = vmul.f32 %v1474, %v727
        %v1479 = vmul.f32 %v1476, %v731
        %v1480 = vmul.f32 %v1475, %v727
        %v1481 = vmul.f32 %v1477, %v731
        %v1482 = vpack.c.bf16 %v1480, %v1478
        %v1483 = vpack.c.bf16 %v1481, %v1479
        %1484 = vrot.lane.b32.xlu0 %v1346, 111
        %v1485 = vpop.permute.xlu0 %1484
        %1486 = vrot.lane.b32.xlu0 %v1348, 111
        %v1487 = vpop.permute.xlu0 %1486
        %1488 = vrot.lane.b32.xlu0 %v1347, 111
        %v1489 = vpop.permute.xlu0 %1488
        %1490 = vrot.lane.b32.xlu0 %v1349, 111
        %v1491 = vpop.permute.xlu0 %1490
        %v1492 = vsel %vm748, %v1485, %v1489
        %v1493 = vsel %vm748, %v1487, %v1491
        %v1494 = vsel %vm748, %v1489, %v1485
        %v1495 = vsel %vm748, %v1491, %v1487
        %v1496 = vmul.f32 %v1492, %v759
        %v1497 = vmul.f32 %v1494, %v763
        %v1498 = vmul.f32 %v1493, %v759
        %v1499 = vmul.f32 %v1495, %v763
        %v1500 = vpack.c.bf16 %v1498, %v1496
        %v1501 = vpack.c.bf16 %v1499, %v1497
        %1503 = vset.pattern.permute.xlu0 0
        %1504 = vperm.xlu0 %1503, %v1354
        %v1505 = vpop.permute.xlu0 %1504
        %1508 = vset.pattern.permute.xlu0 0
        %1509 = vperm.xlu0 %1508, %v1355
        %v1510 = vpop.permute.xlu0 %1509
        %v1514 = vunpack.c.l.b16 %v1351
        %v1515 = vunpack.c.h.b16 %v1351
        %v1516 = vunpack.c.l.b16 %v1352
        %v1517 = vunpack.c.h.b16 %v1352
        %v1518 = vpack.c.b16 %v1516, %v1514
        %v1519 = vpack.c.b16 %v1517, %v1515
        %v1522 = vsel %vm791, %v1519, 0
        %1524 = vmatprep.subr.bf16.mxu0 %v1483
        %1525 = vmatpush1.bf16.msra.mxu0 %v1482
        %1526 = vmatprep.subr.bf16.mxu0 %v1465
        %1527 = vmatpush1.bf16.msra.mxu0 %v1464
        %1528 = vmatprep.subr.bf16.mxu0 %v1447
        %1529 = vmatpush1.bf16.msra.mxu0 %v1446
        %1530 = vmatprep.subr.bf16.mxu0 %v1429
        %1531 = vmatpush1.bf16.msra.mxu0 %v1428
        %1532 = vmatprep.subr.bf16.mxu0 %v1427
        %1533 = vmatpush1.bf16.msra.mxu0 %v1426
        %1534 = vmatprep.subr.bf16.mxu0 %v1409
        %1535 = vmatpush1.bf16.msra.mxu0 %v1408
        %1536 = vmatprep.subr.bf16.mxu0 %v1391
        %1537 = vmatpush1.bf16.msra.mxu0 %v1390
        %1538 = vmatprep.subr.bf16.mxu0 %v1373
        %1539 = vmatpush1.bf16.msra.mxu0 %v1372
        %1540 = vmatprep.subr.bf16.mxu0 0
        %1541 = vmatpush2.bf16.msra.mxu0 0
        %1542 = vmatprep.subr.bf16.mxu0 0
        %1543 = vmatpush2.bf16.msra.mxu0 0
        %1544 = vmatprep.subr.bf16.mxu0 0
        %1545 = vmatpush2.bf16.msra.mxu0 0
        %1546 = vmatprep.subr.bf16.mxu0 0
        %1547 = vmatpush2.bf16.msra.mxu0 0
        %1548 = vmatprep.subr.bf16.mxu0 0
        %1549 = vmatpush2.bf16.msra.mxu0 0
        %1550 = vmatprep.subr.bf16.mxu0 0
        %1551 = vmatpush2.bf16.msra.mxu0 0
        %1552 = vmatprep.subr.bf16.mxu0 0
        %1553 = vmatpush2.bf16.msra.mxu0 0
        %1554 = vmatprep.subr.bf16.mxu0 %v1501
        %1555 = vmatpush2.bf16.msra.mxu0 %v1500
        %1556 = vmatprep.mubr.bf16.mxu0 %v1522
        %1557 = vmatmul.mubr.bf16.gmra.mxu0 %v1518
        %v1558 = vpop.f32.mrf.mxu0
        %v1559 = vadd.f32 %v1505, %v1558
        %v1560 = vpop.f32.mrf.mxu0
        %v1561 = vadd.f32 %v1505, %v1560
        %v1562 = vpop.f32.mrf.mxu0
        %v1563 = vadd.f32 %v1510, %v1562
        %v1564 = vpop.f32.mrf.mxu0
        %v1565 = vadd.f32 %v1510, %v1564
        %1566 = vdwg.mxu0
        %v1567 = vmax.f32 %v1559, 0.0
        %v1568 = vmax.f32 %v1561, 0.0
        %v1569 = vmax.f32 %v1563, 0.0
        %v1570 = vmax.f32 %v1565, 0.0
        %s1571 = scalar_lea.vmem [#allocation2], 64
        %v1572 = vld [vmem:[%s1571] sm:$0xff]
        %v1573 = vld [vmem:[%s1571 + $0x8] sm:$0xff]
        %s1574 = scalar_lea.vmem %s3, 64
        %v1575 = vld [vmem:[%s1574] sm:$0xff]
        %v1576 = vld [vmem:[%s1574 + $0x8] sm:$0xff]
        %1577 = vrot.lane.b32.xlu0 %v1567, 17
        %v1578 = vpop.permute.xlu0 %1577
        %1579 = vrot.lane.b32.xlu0 %v1569, 17
        %v1580 = vpop.permute.xlu0 %1579
        %1581 = vrot.lane.b32.xlu0 %v1568, 17
        %v1582 = vpop.permute.xlu0 %1581
        %1583 = vrot.lane.b32.xlu0 %v1570, 17
        %v1584 = vpop.permute.xlu0 %1583
        %v1585 = vsel %vm523, %v1578, %v1582
        %v1586 = vsel %vm523, %v1580, %v1584
        %v1587 = vsel %vm523, %v1582, %v1578
        %v1588 = vsel %vm523, %v1584, %v1580
        %v1589 = vmul.f32 %v1587, %v533
        %v1590 = vmul.f32 %v1585, %v537
        %v1591 = vmul.f32 %v1588, %v533
        %v1592 = vmul.f32 %v1586, %v537
        %v1593 = vpack.c.bf16 %v1591, %v1589
        %v1594 = vpack.c.bf16 %v1592, %v1590
        %1595 = vrot.lane.b32.xlu0 %v1567, 16
        %v1596 = vpop.permute.xlu0 %1595
        %1597 = vrot.lane.b32.xlu0 %v1569, 16
        %v1598 = vpop.permute.xlu0 %1597
        %1599 = vrot.lane.b32.xlu0 %v1568, 16
        %v1600 = vpop.permute.xlu0 %1599
        %1601 = vrot.lane.b32.xlu0 %v1570, 16
        %v1602 = vpop.permute.xlu0 %1601
        %v1603 = vsel %vm554, %v1596, %v1600
        %v1604 = vsel %vm554, %v1598, %v1602
        %v1605 = vsel %vm554, %v1600, %v1596
        %v1606 = vsel %vm554, %v1602, %v1598
        %v1607 = vmul.f32 %v1605, %v565
        %v1608 = vmul.f32 %v1603, %v569
        %v1609 = vmul.f32 %v1606, %v565
        %v1610 = vmul.f32 %v1604, %v569
        %v1611 = vpack.c.bf16 %v1609, %v1607
        %v1612 = vpack.c.bf16 %v1610, %v1608
        %1613 = vrot.lane.b32.xlu0 %v1567, 15
        %v1614 = vpop.permute.xlu0 %1613
        %1615 = vrot.lane.b32.xlu0 %v1569, 15
        %v1616 = vpop.permute.xlu0 %1615
        %1617 = vrot.lane.b32.xlu0 %v1568, 15
        %v1618 = vpop.permute.xlu0 %1617
        %1619 = vrot.lane.b32.xlu0 %v1570, 15
        %v1620 = vpop.permute.xlu0 %1619
        %v1621 = vsel %vm586, %v1614, %v1618
        %v1622 = vsel %vm586, %v1616, %v1620
        %v1623 = vsel %vm586, %v1618, %v1614
        %v1624 = vsel %vm586, %v1620, %v1616
        %v1625 = vmul.f32 %v1623, %v597
        %v1626 = vmul.f32 %v1621, %v601
        %v1627 = vmul.f32 %v1624, %v597
        %v1628 = vmul.f32 %v1622, %v601
        %v1629 = vpack.c.bf16 %v1627, %v1625
        %v1630 = vpack.c.bf16 %v1628, %v1626
        %1631 = vrot.lane.b32.xlu0 %v1567, 1
        %v1632 = vpop.permute.xlu0 %1631
        %1633 = vrot.lane.b32.xlu0 %v1569, 1
        %v1634 = vpop.permute.xlu0 %1633
        %1635 = vrot.lane.b32.xlu0 %v1568, 1
        %v1636 = vpop.permute.xlu0 %1635
        %1637 = vrot.lane.b32.xlu0 %v1570, 1
        %v1638 = vpop.permute.xlu0 %1637
        %v1639 = vsel %vm618, %v1632, %v1636
        %v1640 = vsel %vm618, %v1634, %v1638
        %v1641 = vsel %vm618, %v1636, %v1632
        %v1642 = vsel %vm618, %v1638, %v1634
        %v1643 = vmul.f32 %v1641, %v629
        %v1644 = vmul.f32 %v1639, %v633
        %v1645 = vmul.f32 %v1642, %v629
        %v1646 = vmul.f32 %v1640, %v633
        %v1647 = vpack.c.bf16 %v1645, %v1643
        %v1648 = vpack.c.bf16 %v1646, %v1644
        %v1649 = vpack.c.bf16 %v1569, %v1567
        %v1650 = vpack.c.bf16 %v1570, %v1568
        %1651 = vrot.lane.b32.xlu0 %v1567, 127
        %v1652 = vpop.permute.xlu0 %1651
        %1653 = vrot.lane.b32.xlu0 %v1569, 127
        %v1654 = vpop.permute.xlu0 %1653
        %1655 = vrot.lane.b32.xlu0 %v1568, 127
        %v1656 = vpop.permute.xlu0 %1655
        %1657 = vrot.lane.b32.xlu0 %v1570, 127
        %v1658 = vpop.permute.xlu0 %1657
        %v1659 = vsel %vm652, %v1652, %v1656
        %v1660 = vsel %vm652, %v1654, %v1658
        %v1661 = vsel %vm652, %v1656, %v1652
        %v1662 = vsel %vm652, %v1658, %v1654
        %v1663 = vmul.f32 %v1659, %v663
        %v1664 = vmul.f32 %v1661, %v667
        %v1665 = vmul.f32 %v1660, %v663
        %v1666 = vmul.f32 %v1662, %v667
        %v1667 = vpack.c.bf16 %v1665, %v1663
        %v1668 = vpack.c.bf16 %v1666, %v1664
        %1669 = vrot.lane.b32.xlu0 %v1567, 113
        %v1670 = vpop.permute.xlu0 %1669
        %1671 = vrot.lane.b32.xlu0 %v1569, 113
        %v1672 = vpop.permute.xlu0 %1671
        %1673 = vrot.lane.b32.xlu0 %v1568, 113
        %v1674 = vpop.permute.xlu0 %1673
        %1675 = vrot.lane.b32.xlu0 %v1570, 113
        %v1676 = vpop.permute.xlu0 %1675
        %v1677 = vsel %vm684, %v1670, %v1674
        %v1678 = vsel %vm684, %v1672, %v1676
        %v1679 = vsel %vm684, %v1674, %v1670
        %v1680 = vsel %vm684, %v1676, %v1672
        %v1681 = vmul.f32 %v1677, %v695
        %v1682 = vmul.f32 %v1679, %v699
        %v1683 = vmul.f32 %v1678, %v695
        %v1684 = vmul.f32 %v1680, %v699
        %v1685 = vpack.c.bf16 %v1683, %v1681
        %v1686 = vpack.c.bf16 %v1684, %v1682
        %1687 = vrot.lane.b32.xlu0 %v1567, 112
        %v1688 = vpop.permute.xlu0 %1687
        %1689 = vrot.lane.b32.xlu0 %v1569, 112
        %v1690 = vpop.permute.xlu0 %1689
        %1691 = vrot.lane.b32.xlu0 %v1568, 112
        %v1692 = vpop.permute.xlu0 %1691
        %1693 = vrot.lane.b32.xlu0 %v1570, 112
        %v1694 = vpop.permute.xlu0 %1693
        %v1695 = vsel %vm716, %v1688, %v1692
        %v1696 = vsel %vm716, %v1690, %v1694
        %v1697 = vsel %vm716, %v1692, %v1688
        %v1698 = vsel %vm716, %v1694, %v1690
        %v1699 = vmul.f32 %v1695, %v727
        %v1700 = vmul.f32 %v1697, %v731
        %v1701 = vmul.f32 %v1696, %v727
        %v1702 = vmul.f32 %v1698, %v731
        %v1703 = vpack.c.bf16 %v1701, %v1699
        %v1704 = vpack.c.bf16 %v1702, %v1700
        %1705 = vrot.lane.b32.xlu0 %v1567, 111
        %v1706 = vpop.permute.xlu0 %1705
        %1707 = vrot.lane.b32.xlu0 %v1569, 111
        %v1708 = vpop.permute.xlu0 %1707
        %1709 = vrot.lane.b32.xlu0 %v1568, 111
        %v1710 = vpop.permute.xlu0 %1709
        %1711 = vrot.lane.b32.xlu0 %v1570, 111
        %v1712 = vpop.permute.xlu0 %1711
        %v1713 = vsel %vm748, %v1706, %v1710
        %v1714 = vsel %vm748, %v1708, %v1712
        %v1715 = vsel %vm748, %v1710, %v1706
        %v1716 = vsel %vm748, %v1712, %v1708
        %v1717 = vmul.f32 %v1713, %v759
        %v1718 = vmul.f32 %v1715, %v763
        %v1719 = vmul.f32 %v1714, %v759
        %v1720 = vmul.f32 %v1716, %v763
        %v1721 = vpack.c.bf16 %v1719, %v1717
        %v1722 = vpack.c.bf16 %v1720, %v1718
        %1724 = vset.pattern.permute.xlu0 0
        %1725 = vperm.xlu0 %1724, %v1575
        %v1726 = vpop.permute.xlu0 %1725
        %1729 = vset.pattern.permute.xlu0 0
        %1730 = vperm.xlu0 %1729, %v1576
        %v1731 = vpop.permute.xlu0 %1730
        %v1735 = vunpack.c.l.b16 %v1572
        %v1736 = vunpack.c.h.b16 %v1572
        %v1737 = vunpack.c.l.b16 %v1573
        %v1738 = vunpack.c.h.b16 %v1573
        %v1739 = vpack.c.b16 %v1737, %v1735
        %v1740 = vpack.c.b16 %v1738, %v1736
        %v1743 = vsel %vm791, %v1740, 0
        %1745 = vmatprep.subr.bf16.mxu0 %v1704
        %1746 = vmatpush1.bf16.msra.mxu0 %v1703
        %1747 = vmatprep.subr.bf16.mxu0 %v1686
        %1748 = vmatpush1.bf16.msra.mxu0 %v1685
        %1749 = vmatprep.subr.bf16.mxu0 %v1668
        %1750 = vmatpush1.bf16.msra.mxu0 %v1667
        %1751 = vmatprep.subr.bf16.mxu0 %v1650
        %1752 = vmatpush1.bf16.msra.mxu0 %v1649
        %1753 = vmatprep.subr.bf16.mxu0 %v1648
        %1754 = vmatpush1.bf16.msra.mxu0 %v1647
        %1755 = vmatprep.subr.bf16.mxu0 %v1630
        %1756 = vmatpush1.bf16.msra.mxu0 %v1629
        %1757 = vmatprep.subr.bf16.mxu0 %v1612
        %1758 = vmatpush1.bf16.msra.mxu0 %v1611
        %1759 = vmatprep.subr.bf16.mxu0 %v1594
        %1760 = vmatpush1.bf16.msra.mxu0 %v1593
        %1761 = vmatprep.subr.bf16.mxu0 0
        %1762 = vmatpush2.bf16.msra.mxu0 0
        %1763 = vmatprep.subr.bf16.mxu0 0
        %1764 = vmatpush2.bf16.msra.mxu0 0
        %1765 = vmatprep.subr.bf16.mxu0 0
        %1766 = vmatpush2.bf16.msra.mxu0 0
        %1767 = vmatprep.subr.bf16.mxu0 0
        %1768 = vmatpush2.bf16.msra.mxu0 0
        %1769 = vmatprep.subr.bf16.mxu0 0
        %1770 = vmatpush2.bf16.msra.mxu0 0
        %1771 = vmatprep.subr.bf16.mxu0 0
        %1772 = vmatpush2.bf16.msra.mxu0 0
        %1773 = vmatprep.subr.bf16.mxu0 0
        %1774 = vmatpush2.bf16.msra.mxu0 0
        %1775 = vmatprep.subr.bf16.mxu0 %v1722
        %1776 = vmatpush2.bf16.msra.mxu0 %v1721
        %1777 = vmatprep.mubr.bf16.mxu0 %v1743
        %1778 = vmatmul.mubr.bf16.gmra.mxu0 %v1739
        %v1779 = vpop.f32.mrf.mxu0
        %v1780 = vadd.f32 %v1726, %v1779
        %v1781 = vpop.f32.mrf.mxu0
        %v1782 = vadd.f32 %v1726, %v1781
        %v1783 = vpop.f32.mrf.mxu0
        %v1784 = vadd.f32 %v1731, %v1783
        %v1785 = vpop.f32.mrf.mxu0
        %v1786 = vadd.f32 %v1731, %v1785
        %1787 = vdwg.mxu0
        %v1788 = vadd.f32 %v1780, %v1782
        %1789 = vadd.xlane.f32.xlu0 %v1788
        %v1790 = vpop.xlane.xlu0 %1789
        %v1791 = vadd.f32 %v1784, %v1786
        %1792 = vadd.xlane.f32.xlu0 %v1791
        %v1793 = vpop.xlane.xlu0 %1792
        %v1794 = vmul.f32 %v1790, 0.00390625
        %v1795 = vmul.f32 %v1793, 0.00390625
        %s1796 = scalar_lea.vmem %s4, 32
        %v1797 = vld [vmem:[%s1796] sm:$0xff]
        %v1798 = vld [vmem:[%s1796 + $0x8] sm:$0xff]
        %v1799 = vmul.f32 %v1797, %v1794
        %v1800 = vmul.f32 %v1798, %v1795
        %v1801 = vsel %vm1288, %v1799, 0.0
        %v1802 = vsel %vm1288, %v1800, 0.0
        %v1803 = vadd.f32 %v1801, %v1802
        %v1804 = vrot.slane %v1803, 4
        %v1805 = vadd.f32 %v1803, %v1804
        %v1806 = vrot.slane %v1805, 2
        %v1807 = vadd.f32 %v1805, %v1806
        %v1808 = vrot.slane %v1807, 1
        %v1809 = vadd.f32 %v1807, %v1808
        %s1810 = scalar_lea.vmem [#allocation4], 1
        %v1811 = vld [vmem:[%s1810] sm:$0x1]
        %v1812 = vadd.f32 %v1809, %v1811
        %v1813 = vmax.f32 %v1812, 0.0
        %s1814 = scalar_lea.vmem %s4, 48
        %v1815 = vld [vmem:[%s1814] sm:$0xff]
        %v1816 = vld [vmem:[%s1814 + $0x8] sm:$0xff]
        %v1817 = vlaneseq
        %v1818 = vshrl.u32 %v1817, 7
        %v1819 = vsub.s32 0, %v1818
        %v1820 = vrot.slane %v1813, %v1819
        %v1821 = vmul.f32 %v1815, %v1820
        %v1822 = vmul.f32 %v1816, %v1820
        %v1823 = vsel %vm1288, %v1821, 0.0
        %1824 = vadd.xlane.f32.xlu0 %v1823
        %v1825 = vpop.xlane.xlu0 %1824
        %v1826 = vsel %vm1288, %v1822, 0.0
        %1827 = vadd.xlane.f32.xlu0 %v1826
        %v1828 = vpop.xlane.xlu0 %1827
        %s1829 = scalar_lea.vmem %s6, 16
        %v1830 = vld [vmem:[%s1829] sm:$0xff]
        %v1831 = vld [vmem:[%s1829 + $0x8] sm:$0xff]
        %v1832 = vadd.f32 %v1825, %v1830
        %v1833 = vadd.f32 %v1828, %v1831
        %v1834 = vxor.u32 %v1832, 2147483648
        %v1835 = vxor.u32 %v1833, 2147483648
        %v1836 = vmul.f32 %v1834, 1.442695
        %v1837 = vpow.pop %v1836
        %v1838 = vmul.f32 %v1835, 1.442695
        %v1839 = vpow.pop %v1838
        %v1840 = vadd.f32 %v1837, 1.0
        %v1841 = vadd.f32 %v1839, 1.0
        %v1842 = vrcp.pop %v1840
        %v1843 = vmul.f32 1.0, %v1842
        %v1844 = vrcp.pop %v1841
        %v1845 = vmul.f32 1.0, %v1844
        %1847 = vset.pattern.permute.xlu0 0
        %1848 = vperm.xlu0 %1847, %v1843
        %v1849 = vpop.permute.xlu0 %1848
        %1852 = vset.pattern.permute.xlu0 0
        %1853 = vperm.xlu0 %1852, %v1845
        %v1854 = vpop.permute.xlu0 %1853
        %v1856 = vmul.f32 %v1780, %v1849
        %v1857 = vmul.f32 %v1782, %v1849
        %v1858 = vmul.f32 %v1784, %v1854
        %v1859 = vmul.f32 %v1786, %v1854
        %v1860 = vadd.f32 %v1856, %v1346
        %v1861 = vadd.f32 %v1857, %v1347
        %v1862 = vadd.f32 %v1858, %v1348
        %v1863 = vadd.f32 %v1859, %v1349
        %s1864 = scalar_lea.vmem [#allocation2], 80
        %v1865 = vld [vmem:[%s1864] sm:$0xff]
        %v1866 = vld [vmem:[%s1864 + $0x8] sm:$0xff]
        %s1867 = scalar_lea.vmem %s3, 80
        %v1868 = vld [vmem:[%s1867] sm:$0xff]
        %v1869 = vld [vmem:[%s1867 + $0x8] sm:$0xff]
        %1870 = vrot.lane.b32.xlu0 %v1860, 17
        %v1871 = vpop.permute.xlu0 %1870
        %1872 = vrot.lane.b32.xlu0 %v1862, 17
        %v1873 = vpop.permute.xlu0 %1872
        %1874 = vrot.lane.b32.xlu0 %v1861, 17
        %v1875 = vpop.permute.xlu0 %1874
        %1876 = vrot.lane.b32.xlu0 %v1863, 17
        %v1877 = vpop.permute.xlu0 %1876
        %v1878 = vsel %vm523, %v1871, %v1875
        %v1879 = vsel %vm523, %v1873, %v1877
        %v1880 = vsel %vm523, %v1875, %v1871
        %v1881 = vsel %vm523, %v1877, %v1873
        %v1882 = vmul.f32 %v1880, %v533
        %v1883 = vmul.f32 %v1878, %v537
        %v1884 = vmul.f32 %v1881, %v533
        %v1885 = vmul.f32 %v1879, %v537
        %v1886 = vpack.c.bf16 %v1884, %v1882
        %v1887 = vpack.c.bf16 %v1885, %v1883
        %1888 = vrot.lane.b32.xlu0 %v1860, 16
        %v1889 = vpop.permute.xlu0 %1888
        %1890 = vrot.lane.b32.xlu0 %v1862, 16
        %v1891 = vpop.permute.xlu0 %1890
        %1892 = vrot.lane.b32.xlu0 %v1861, 16
        %v1893 = vpop.permute.xlu0 %1892
        %1894 = vrot.lane.b32.xlu0 %v1863, 16
        %v1895 = vpop.permute.xlu0 %1894
        %v1896 = vsel %vm554, %v1889, %v1893
        %v1897 = vsel %vm554, %v1891, %v1895
        %v1898 = vsel %vm554, %v1893, %v1889
        %v1899 = vsel %vm554, %v1895, %v1891
        %v1900 = vmul.f32 %v1898, %v565
        %v1901 = vmul.f32 %v1896, %v569
        %v1902 = vmul.f32 %v1899, %v565
        %v1903 = vmul.f32 %v1897, %v569
        %v1904 = vpack.c.bf16 %v1902, %v1900
        %v1905 = vpack.c.bf16 %v1903, %v1901
        %1906 = vrot.lane.b32.xlu0 %v1860, 15
        %v1907 = vpop.permute.xlu0 %1906
        %1908 = vrot.lane.b32.xlu0 %v1862, 15
        %v1909 = vpop.permute.xlu0 %1908
        %1910 = vrot.lane.b32.xlu0 %v1861, 15
        %v1911 = vpop.permute.xlu0 %1910
        %1912 = vrot.lane.b32.xlu0 %v1863, 15
        %v1913 = vpop.permute.xlu0 %1912
        %v1914 = vsel %vm586, %v1907, %v1911
        %v1915 = vsel %vm586, %v1909, %v1913
        %v1916 = vsel %vm586, %v1911, %v1907
        %v1917 = vsel %vm586, %v1913, %v1909
        %v1918 = vmul.f32 %v1916, %v597
        %v1919 = vmul.f32 %v1914, %v601
        %v1920 = vmul.f32 %v1917, %v597
        %v1921 = vmul.f32 %v1915, %v601
        %v1922 = vpack.c.bf16 %v1920, %v1918
        %v1923 = vpack.c.bf16 %v1921, %v1919
        %1924 = vrot.lane.b32.xlu0 %v1860, 1
        %v1925 = vpop.permute.xlu0 %1924
        %1926 = vrot.lane.b32.xlu0 %v1862, 1
        %v1927 = vpop.permute.xlu0 %1926
        %1928 = vrot.lane.b32.xlu0 %v1861, 1
        %v1929 = vpop.permute.xlu0 %1928
        %1930 = vrot.lane.b32.xlu0 %v1863, 1
        %v1931 = vpop.permute.xlu0 %1930
        %v1932 = vsel %vm618, %v1925, %v1929
        %v1933 = vsel %vm618, %v1927, %v1931
        %v1934 = vsel %vm618, %v1929, %v1925
        %v1935 = vsel %vm618, %v1931, %v1927
        %v1936 = vmul.f32 %v1934, %v629
        %v1937 = vmul.f32 %v1932, %v633
        %v1938 = vmul.f32 %v1935, %v629
        %v1939 = vmul.f32 %v1933, %v633
        %v1940 = vpack.c.bf16 %v1938, %v1936
        %v1941 = vpack.c.bf16 %v1939, %v1937
        %v1942 = vpack.c.bf16 %v1862, %v1860
        %v1943 = vpack.c.bf16 %v1863, %v1861
        %1944 = vrot.lane.b32.xlu0 %v1860, 127
        %v1945 = vpop.permute.xlu0 %1944
        %1946 = vrot.lane.b32.xlu0 %v1862, 127
        %v1947 = vpop.permute.xlu0 %1946
        %1948 = vrot.lane.b32.xlu0 %v1861, 127
        %v1949 = vpop.permute.xlu0 %1948
        %1950 = vrot.lane.b32.xlu0 %v1863, 127
        %v1951 = vpop.permute.xlu0 %1950
        %v1952 = vsel %vm652, %v1945, %v1949
        %v1953 = vsel %vm652, %v1947, %v1951
        %v1954 = vsel %vm652, %v1949, %v1945
        %v1955 = vsel %vm652, %v1951, %v1947
        %v1956 = vmul.f32 %v1952, %v663
        %v1957 = vmul.f32 %v1954, %v667
        %v1958 = vmul.f32 %v1953, %v663
        %v1959 = vmul.f32 %v1955, %v667
        %v1960 = vpack.c.bf16 %v1958, %v1956
        %v1961 = vpack.c.bf16 %v1959, %v1957
        %1962 = vrot.lane.b32.xlu0 %v1860, 113
        %v1963 = vpop.permute.xlu0 %1962
        %1964 = vrot.lane.b32.xlu0 %v1862, 113
        %v1965 = vpop.permute.xlu0 %1964
        %1966 = vrot.lane.b32.xlu0 %v1861, 113
        %v1967 = vpop.permute.xlu0 %1966
        %1968 = vrot.lane.b32.xlu0 %v1863, 113
        %v1969 = vpop.permute.xlu0 %1968
        %v1970 = vsel %vm684, %v1963, %v1967
        %v1971 = vsel %vm684, %v1965, %v1969
        %v1972 = vsel %vm684, %v1967, %v1963
        %v1973 = vsel %vm684, %v1969, %v1965
        %v1974 = vmul.f32 %v1970, %v695
        %v1975 = vmul.f32 %v1972, %v699
        %v1976 = vmul.f32 %v1971, %v695
        %v1977 = vmul.f32 %v1973, %v699
        %v1978 = vpack.c.bf16 %v1976, %v1974
        %v1979 = vpack.c.bf16 %v1977, %v1975
        %1980 = vrot.lane.b32.xlu0 %v1860, 112
        %v1981 = vpop.permute.xlu0 %1980
        %1982 = vrot.lane.b32.xlu0 %v1862, 112
        %v1983 = vpop.permute.xlu0 %1982
        %1984 = vrot.lane.b32.xlu0 %v1861, 112
        %v1985 = vpop.permute.xlu0 %1984
        %1986 = vrot.lane.b32.xlu0 %v1863, 112
        %v1987 = vpop.permute.xlu0 %1986
        %v1988 = vsel %vm716, %v1981, %v1985
        %v1989 = vsel %vm716, %v1983, %v1987
        %v1990 = vsel %vm716, %v1985, %v1981
        %v1991 = vsel %vm716, %v1987, %v1983
        %v1992 = vmul.f32 %v1988, %v727
        %v1993 = vmul.f32 %v1990, %v731
        %v1994 = vmul.f32 %v1989, %v727
        %v1995 = vmul.f32 %v1991, %v731
        %v1996 = vpack.c.bf16 %v1994, %v1992
        %v1997 = vpack.c.bf16 %v1995, %v1993
        %1998 = vrot.lane.b32.xlu0 %v1860, 111
        %v1999 = vpop.permute.xlu0 %1998
        %2000 = vrot.lane.b32.xlu0 %v1862, 111
        %v2001 = vpop.permute.xlu0 %2000
        %2002 = vrot.lane.b32.xlu0 %v1861, 111
        %v2003 = vpop.permute.xlu0 %2002
        %2004 = vrot.lane.b32.xlu0 %v1863, 111
        %v2005 = vpop.permute.xlu0 %2004
        %v2006 = vsel %vm748, %v1999, %v2003
        %v2007 = vsel %vm748, %v2001, %v2005
        %v2008 = vsel %vm748, %v2003, %v1999
        %v2009 = vsel %vm748, %v2005, %v2001
        %v2010 = vmul.f32 %v2006, %v759
        %v2011 = vmul.f32 %v2008, %v763
        %v2012 = vmul.f32 %v2007, %v759
        %v2013 = vmul.f32 %v2009, %v763
        %v2014 = vpack.c.bf16 %v2012, %v2010
        %v2015 = vpack.c.bf16 %v2013, %v2011
        %2017 = vset.pattern.permute.xlu0 0
        %2018 = vperm.xlu0 %2017, %v1868
        %v2019 = vpop.permute.xlu0 %2018
        %2022 = vset.pattern.permute.xlu0 0
        %2023 = vperm.xlu0 %2022, %v1869
        %v2024 = vpop.permute.xlu0 %2023
        %v2028 = vunpack.c.l.b16 %v1865
        %v2029 = vunpack.c.h.b16 %v1865
        %v2030 = vunpack.c.l.b16 %v1866
        %v2031 = vunpack.c.h.b16 %v1866
        %v2032 = vpack.c.b16 %v2030, %v2028
        %v2033 = vpack.c.b16 %v2031, %v2029
        %v2036 = vsel %vm791, %v2033, 0
        %2038 = vmatprep.subr.bf16.mxu0 %v1997
        %2039 = vmatpush1.bf16.msra.mxu0 %v1996
        %2040 = vmatprep.subr.bf16.mxu0 %v1979
        %2041 = vmatpush1.bf16.msra.mxu0 %v1978
        %2042 = vmatprep.subr.bf16.mxu0 %v1961
        %2043 = vmatpush1.bf16.msra.mxu0 %v1960
        %2044 = vmatprep.subr.bf16.mxu0 %v1943
        %2045 = vmatpush1.bf16.msra.mxu0 %v1942
        %2046 = vmatprep.subr.bf16.mxu0 %v1941
        %2047 = vmatpush1.bf16.msra.mxu0 %v1940
        %2048 = vmatprep.subr.bf16.mxu0 %v1923
        %2049 = vmatpush1.bf16.msra.mxu0 %v1922
        %2050 = vmatprep.subr.bf16.mxu0 %v1905
        %2051 = vmatpush1.bf16.msra.mxu0 %v1904
        %2052 = vmatprep.subr.bf16.mxu0 %v1887
        %2053 = vmatpush1.bf16.msra.mxu0 %v1886
        %2054 = vmatprep.subr.bf16.mxu0 0
        %2055 = vmatpush2.bf16.msra.mxu0 0
        %2056 = vmatprep.subr.bf16.mxu0 0
        %2057 = vmatpush2.bf16.msra.mxu0 0
        %2058 = vmatprep.subr.bf16.mxu0 0
        %2059 = vmatpush2.bf16.msra.mxu0 0
        %2060 = vmatprep.subr.bf16.mxu0 0
        %2061 = vmatpush2.bf16.msra.mxu0 0
        %2062 = vmatprep.subr.bf16.mxu0 0
        %2063 = vmatpush2.bf16.msra.mxu0 0
        %2064 = vmatprep.subr.bf16.mxu0 0
        %2065 = vmatpush2.bf16.msra.mxu0 0
        %2066 = vmatprep.subr.bf16.mxu0 0
        %2067 = vmatpush2.bf16.msra.mxu0 0
        %2068 = vmatprep.subr.bf16.mxu0 %v2015
        %2069 = vmatpush2.bf16.msra.mxu0 %v2014
        %2070 = vmatprep.mubr.bf16.mxu0 %v2036
        %2071 = vmatmul.mubr.bf16.gmra.mxu0 %v2032
        %v2072 = vpop.f32.mrf.mxu0
        %v2073 = vadd.f32 %v2019, %v2072
        %v2074 = vpop.f32.mrf.mxu0
        %v2075 = vadd.f32 %v2019, %v2074
        %v2076 = vpop.f32.mrf.mxu0
        %v2077 = vadd.f32 %v2024, %v2076
        %v2078 = vpop.f32.mrf.mxu0
        %v2079 = vadd.f32 %v2024, %v2078
        %2080 = vdwg.mxu0
        %v2081 = vadd.f32 %v2073, %v830
        %v2082 = vadd.f32 %v2075, %v832
        %v2083 = vadd.f32 %v2077, %v834
        %v2084 = vadd.f32 %v2079, %v836
        %s2085 = scalar_lea.vmem [#allocation2], 96
        %v2086 = vld [vmem:[%s2085] sm:$0xff]
        %v2087 = vld [vmem:[%s2085 + $0x8] sm:$0xff]
        %s2088 = scalar_lea.vmem %s3, 96
        %v2089 = vld [vmem:[%s2088] sm:$0xff]
        %v2090 = vld [vmem:[%s2088 + $0x8] sm:$0xff]
        %2091 = vrot.lane.b32.xlu0 %v2081, 17
        %v2092 = vpop.permute.xlu0 %2091
        %2093 = vrot.lane.b32.xlu0 %v2083, 17
        %v2094 = vpop.permute.xlu0 %2093
        %2095 = vrot.lane.b32.xlu0 %v2082, 17
        %v2096 = vpop.permute.xlu0 %2095
        %2097 = vrot.lane.b32.xlu0 %v2084, 17
        %v2098 = vpop.permute.xlu0 %2097
        %v2099 = vsel %vm523, %v2092, %v2096
        %v2100 = vsel %vm523, %v2094, %v2098
        %v2101 = vsel %vm523, %v2096, %v2092
        %v2102 = vsel %vm523, %v2098, %v2094
        %v2103 = vmul.f32 %v2101, %v533
        %v2104 = vmul.f32 %v2099, %v537
        %v2105 = vmul.f32 %v2102, %v533
        %v2106 = vmul.f32 %v2100, %v537
        %v2107 = vpack.c.bf16 %v2105, %v2103
        %v2108 = vpack.c.bf16 %v2106, %v2104
        %2109 = vrot.lane.b32.xlu0 %v2081, 16
        %v2110 = vpop.permute.xlu0 %2109
        %2111 = vrot.lane.b32.xlu0 %v2083, 16
        %v2112 = vpop.permute.xlu0 %2111
        %2113 = vrot.lane.b32.xlu0 %v2082, 16
        %v2114 = vpop.permute.xlu0 %2113
        %2115 = vrot.lane.b32.xlu0 %v2084, 16
        %v2116 = vpop.permute.xlu0 %2115
        %v2117 = vsel %vm554, %v2110, %v2114
        %v2118 = vsel %vm554, %v2112, %v2116
        %v2119 = vsel %vm554, %v2114, %v2110
        %v2120 = vsel %vm554, %v2116, %v2112
        %v2121 = vmul.f32 %v2119, %v565
        %v2122 = vmul.f32 %v2117, %v569
        %v2123 = vmul.f32 %v2120, %v565
        %v2124 = vmul.f32 %v2118, %v569
        %v2125 = vpack.c.bf16 %v2123, %v2121
        %v2126 = vpack.c.bf16 %v2124, %v2122
        %2127 = vrot.lane.b32.xlu0 %v2081, 15
        %v2128 = vpop.permute.xlu0 %2127
        %2129 = vrot.lane.b32.xlu0 %v2083, 15
        %v2130 = vpop.permute.xlu0 %2129
        %2131 = vrot.lane.b32.xlu0 %v2082, 15
        %v2132 = vpop.permute.xlu0 %2131
        %2133 = vrot.lane.b32.xlu0 %v2084, 15
        %v2134 = vpop.permute.xlu0 %2133
        %v2135 = vsel %vm586, %v2128, %v2132
        %v2136 = vsel %vm586, %v2130, %v2134
        %v2137 = vsel %vm586, %v2132, %v2128
        %v2138 = vsel %vm586, %v2134, %v2130
        %v2139 = vmul.f32 %v2137, %v597
        %v2140 = vmul.f32 %v2135, %v601
        %v2141 = vmul.f32 %v2138, %v597
        %v2142 = vmul.f32 %v2136, %v601
        %v2143 = vpack.c.bf16 %v2141, %v2139
        %v2144 = vpack.c.bf16 %v2142, %v2140
        %2145 = vrot.lane.b32.xlu0 %v2081, 1
        %v2146 = vpop.permute.xlu0 %2145
        %2147 = vrot.lane.b32.xlu0 %v2083, 1
        %v2148 = vpop.permute.xlu0 %2147
        %2149 = vrot.lane.b32.xlu0 %v2082, 1
        %v2150 = vpop.permute.xlu0 %2149
        %2151 = vrot.lane.b32.xlu0 %v2084, 1
        %v2152 = vpop.permute.xlu0 %2151
        %v2153 = vsel %vm618, %v2146, %v2150
        %v2154 = vsel %vm618, %v2148, %v2152
        %v2155 = vsel %vm618, %v2150, %v2146
        %v2156 = vsel %vm618, %v2152, %v2148
        %v2157 = vmul.f32 %v2155, %v629
        %v2158 = vmul.f32 %v2153, %v633
        %v2159 = vmul.f32 %v2156, %v629
        %v2160 = vmul.f32 %v2154, %v633
        %v2161 = vpack.c.bf16 %v2159, %v2157
        %v2162 = vpack.c.bf16 %v2160, %v2158
        %v2163 = vpack.c.bf16 %v2083, %v2081
        %v2164 = vpack.c.bf16 %v2084, %v2082
        %2165 = vrot.lane.b32.xlu0 %v2081, 127
        %v2166 = vpop.permute.xlu0 %2165
        %2167 = vrot.lane.b32.xlu0 %v2083, 127
        %v2168 = vpop.permute.xlu0 %2167
        %2169 = vrot.lane.b32.xlu0 %v2082, 127
        %v2170 = vpop.permute.xlu0 %2169
        %2171 = vrot.lane.b32.xlu0 %v2084, 127
        %v2172 = vpop.permute.xlu0 %2171
        %v2173 = vsel %vm652, %v2166, %v2170
        %v2174 = vsel %vm652, %v2168, %v2172
        %v2175 = vsel %vm652, %v2170, %v2166
        %v2176 = vsel %vm652, %v2172, %v2168
        %v2177 = vmul.f32 %v2173, %v663
        %v2178 = vmul.f32 %v2175, %v667
        %v2179 = vmul.f32 %v2174, %v663
        %v2180 = vmul.f32 %v2176, %v667
        %v2181 = vpack.c.bf16 %v2179, %v2177
        %v2182 = vpack.c.bf16 %v2180, %v2178
        %2183 = vrot.lane.b32.xlu0 %v2081, 113
        %v2184 = vpop.permute.xlu0 %2183
        %2185 = vrot.lane.b32.xlu0 %v2083, 113
        %v2186 = vpop.permute.xlu0 %2185
        %2187 = vrot.lane.b32.xlu0 %v2082, 113
        %v2188 = vpop.permute.xlu0 %2187
        %2189 = vrot.lane.b32.xlu0 %v2084, 113
        %v2190 = vpop.permute.xlu0 %2189
        %v2191 = vsel %vm684, %v2184, %v2188
        %v2192 = vsel %vm684, %v2186, %v2190
        %v2193 = vsel %vm684, %v2188, %v2184
        %v2194 = vsel %vm684, %v2190, %v2186
        %v2195 = vmul.f32 %v2191, %v695
        %v2196 = vmul.f32 %v2193, %v699
        %v2197 = vmul.f32 %v2192, %v695
        %v2198 = vmul.f32 %v2194, %v699
        %v2199 = vpack.c.bf16 %v2197, %v2195
        %v2200 = vpack.c.bf16 %v2198, %v2196
        %2201 = vrot.lane.b32.xlu0 %v2081, 112
        %v2202 = vpop.permute.xlu0 %2201
        %2203 = vrot.lane.b32.xlu0 %v2083, 112
        %v2204 = vpop.permute.xlu0 %2203
        %2205 = vrot.lane.b32.xlu0 %v2082, 112
        %v2206 = vpop.permute.xlu0 %2205
        %2207 = vrot.lane.b32.xlu0 %v2084, 112
        %v2208 = vpop.permute.xlu0 %2207
        %v2209 = vsel %vm716, %v2202, %v2206
        %v2210 = vsel %vm716, %v2204, %v2208
        %v2211 = vsel %vm716, %v2206, %v2202
        %v2212 = vsel %vm716, %v2208, %v2204
        %v2213 = vmul.f32 %v2209, %v727
        %v2214 = vmul.f32 %v2211, %v731
        %v2215 = vmul.f32 %v2210, %v727
        %v2216 = vmul.f32 %v2212, %v731
        %v2217 = vpack.c.bf16 %v2215, %v2213
        %v2218 = vpack.c.bf16 %v2216, %v2214
        %2219 = vrot.lane.b32.xlu0 %v2081, 111
        %v2220 = vpop.permute.xlu0 %2219
        %2221 = vrot.lane.b32.xlu0 %v2083, 111
        %v2222 = vpop.permute.xlu0 %2221
        %2223 = vrot.lane.b32.xlu0 %v2082, 111
        %v2224 = vpop.permute.xlu0 %2223
        %2225 = vrot.lane.b32.xlu0 %v2084, 111
        %v2226 = vpop.permute.xlu0 %2225
        %v2227 = vsel %vm748, %v2220, %v2224
        %v2228 = vsel %vm748, %v2222, %v2226
        %v2229 = vsel %vm748, %v2224, %v2220
        %v2230 = vsel %vm748, %v2226, %v2222
        %v2231 = vmul.f32 %v2227, %v759
        %v2232 = vmul.f32 %v2229, %v763
        %v2233 = vmul.f32 %v2228, %v759
        %v2234 = vmul.f32 %v2230, %v763
        %v2235 = vpack.c.bf16 %v2233, %v2231
        %v2236 = vpack.c.bf16 %v2234, %v2232
        %2238 = vset.pattern.permute.xlu0 0
        %2239 = vperm.xlu0 %2238, %v2089
        %v2240 = vpop.permute.xlu0 %2239
        %2243 = vset.pattern.permute.xlu0 0
        %2244 = vperm.xlu0 %2243, %v2090
        %v2245 = vpop.permute.xlu0 %2244
        %v2249 = vunpack.c.l.b16 %v2086
        %v2250 = vunpack.c.h.b16 %v2086
        %v2251 = vunpack.c.l.b16 %v2087
        %v2252 = vunpack.c.h.b16 %v2087
        %v2253 = vpack.c.b16 %v2251, %v2249
        %v2254 = vpack.c.b16 %v2252, %v2250
        %v2257 = vsel %vm791, %v2254, 0
        %2259 = vmatprep.subr.bf16.mxu0 %v2218
        %2260 = vmatpush1.bf16.msra.mxu0 %v2217
        %2261 = vmatprep.subr.bf16.mxu0 %v2200
        %2262 = vmatpush1.bf16.msra.mxu0 %v2199
        %2263 = vmatprep.subr.bf16.mxu0 %v2182
        %2264 = vmatpush1.bf16.msra.mxu0 %v2181
        %2265 = vmatprep.subr.bf16.mxu0 %v2164
        %2266 = vmatpush1.bf16.msra.mxu0 %v2163
        %2267 = vmatprep.subr.bf16.mxu0 %v2162
        %2268 = vmatpush1.bf16.msra.mxu0 %v2161
        %2269 = vmatprep.subr.bf16.mxu0 %v2144
        %2270 = vmatpush1.bf16.msra.mxu0 %v2143
        %2271 = vmatprep.subr.bf16.mxu0 %v2126
        %2272 = vmatpush1.bf16.msra.mxu0 %v2125
        %2273 = vmatprep.subr.bf16.mxu0 %v2108
        %2274 = vmatpush1.bf16.msra.mxu0 %v2107
        %2275 = vmatprep.subr.bf16.mxu0 0
        %2276 = vmatpush2.bf16.msra.mxu0 0
        %2277 = vmatprep.subr.bf16.mxu0 0
        %2278 = vmatpush2.bf16.msra.mxu0 0
        %2279 = vmatprep.subr.bf16.mxu0 0
        %2280 = vmatpush2.bf16.msra.mxu0 0
        %2281 = vmatprep.subr.bf16.mxu0 0
        %2282 = vmatpush2.bf16.msra.mxu0 0
        %2283 = vmatprep.subr.bf16.mxu0 0
        %2284 = vmatpush2.bf16.msra.mxu0 0
        %2285 = vmatprep.subr.bf16.mxu0 0
        %2286 = vmatpush2.bf16.msra.mxu0 0
        %2287 = vmatprep.subr.bf16.mxu0 0
        %2288 = vmatpush2.bf16.msra.mxu0 0
        %2289 = vmatprep.subr.bf16.mxu0 %v2236
        %2290 = vmatpush2.bf16.msra.mxu0 %v2235
        %2291 = vmatprep.mubr.bf16.mxu0 %v2257
        %2292 = vmatmul.mubr.bf16.gmra.mxu0 %v2253
        %v2293 = vpop.f32.mrf.mxu0
        %v2294 = vadd.f32 %v2240, %v2293
        %v2295 = vpop.f32.mrf.mxu0
        %v2296 = vadd.f32 %v2240, %v2295
        %v2297 = vpop.f32.mrf.mxu0
        %v2298 = vadd.f32 %v2245, %v2297
        %v2299 = vpop.f32.mrf.mxu0
        %v2300 = vadd.f32 %v2245, %v2299
        %2301 = vdwg.mxu0
        %v2302 = vmax.f32 %v2294, 0.0
        %v2303 = vmax.f32 %v2296, 0.0
        %v2304 = vmax.f32 %v2298, 0.0
        %v2305 = vmax.f32 %v2300, 0.0
        %s2306 = scalar_lea.vmem [#allocation2], 112
        %v2307 = vld [vmem:[%s2306] sm:$0xff]
        %v2308 = vld [vmem:[%s2306 + $0x8] sm:$0xff]
        %s2309 = scalar_lea.vmem %s3, 112
        %v2310 = vld [vmem:[%s2309] sm:$0xff]
        %v2311 = vld [vmem:[%s2309 + $0x8] sm:$0xff]
        %2312 = vrot.lane.b32.xlu0 %v2302, 17
        %v2313 = vpop.permute.xlu0 %2312
        %2314 = vrot.lane.b32.xlu0 %v2304, 17
        %v2315 = vpop.permute.xlu0 %2314
        %2316 = vrot.lane.b32.xlu0 %v2303, 17
        %v2317 = vpop.permute.xlu0 %2316
        %2318 = vrot.lane.b32.xlu0 %v2305, 17
        %v2319 = vpop.permute.xlu0 %2318
        %v2320 = vsel %vm523, %v2313, %v2317
        %v2321 = vsel %vm523, %v2315, %v2319
        %v2322 = vsel %vm523, %v2317, %v2313
        %v2323 = vsel %vm523, %v2319, %v2315
        %v2324 = vmul.f32 %v2322, %v533
        %v2325 = vmul.f32 %v2320, %v537
        %v2326 = vmul.f32 %v2323, %v533
        %v2327 = vmul.f32 %v2321, %v537
        %v2328 = vpack.c.bf16 %v2326, %v2324
        %v2329 = vpack.c.bf16 %v2327, %v2325
        %2330 = vrot.lane.b32.xlu0 %v2302, 16
        %v2331 = vpop.permute.xlu0 %2330
        %2332 = vrot.lane.b32.xlu0 %v2304, 16
        %v2333 = vpop.permute.xlu0 %2332
        %2334 = vrot.lane.b32.xlu0 %v2303, 16
        %v2335 = vpop.permute.xlu0 %2334
        %2336 = vrot.lane.b32.xlu0 %v2305, 16
        %v2337 = vpop.permute.xlu0 %2336
        %v2338 = vsel %vm554, %v2331, %v2335
        %v2339 = vsel %vm554, %v2333, %v2337
        %v2340 = vsel %vm554, %v2335, %v2331
        %v2341 = vsel %vm554, %v2337, %v2333
        %v2342 = vmul.f32 %v2340, %v565
        %v2343 = vmul.f32 %v2338, %v569
        %v2344 = vmul.f32 %v2341, %v565
        %v2345 = vmul.f32 %v2339, %v569
        %v2346 = vpack.c.bf16 %v2344, %v2342
        %v2347 = vpack.c.bf16 %v2345, %v2343
        %2348 = vrot.lane.b32.xlu0 %v2302, 15
        %v2349 = vpop.permute.xlu0 %2348
        %2350 = vrot.lane.b32.xlu0 %v2304, 15
        %v2351 = vpop.permute.xlu0 %2350
        %2352 = vrot.lane.b32.xlu0 %v2303, 15
        %v2353 = vpop.permute.xlu0 %2352
        %2354 = vrot.lane.b32.xlu0 %v2305, 15
        %v2355 = vpop.permute.xlu0 %2354
        %v2356 = vsel %vm586, %v2349, %v2353
        %v2357 = vsel %vm586, %v2351, %v2355
        %v2358 = vsel %vm586, %v2353, %v2349
        %v2359 = vsel %vm586, %v2355, %v2351
        %v2360 = vmul.f32 %v2358, %v597
        %v2361 = vmul.f32 %v2356, %v601
        %v2362 = vmul.f32 %v2359, %v597
        %v2363 = vmul.f32 %v2357, %v601
        %v2364 = vpack.c.bf16 %v2362, %v2360
        %v2365 = vpack.c.bf16 %v2363, %v2361
        %2366 = vrot.lane.b32.xlu0 %v2302, 1
        %v2367 = vpop.permute.xlu0 %2366
        %2368 = vrot.lane.b32.xlu0 %v2304, 1
        %v2369 = vpop.permute.xlu0 %2368
        %2370 = vrot.lane.b32.xlu0 %v2303, 1
        %v2371 = vpop.permute.xlu0 %2370
        %2372 = vrot.lane.b32.xlu0 %v2305, 1
        %v2373 = vpop.permute.xlu0 %2372
        %v2374 = vsel %vm618, %v2367, %v2371
        %v2375 = vsel %vm618, %v2369, %v2373
        %v2376 = vsel %vm618, %v2371, %v2367
        %v2377 = vsel %vm618, %v2373, %v2369
        %v2378 = vmul.f32 %v2376, %v629
        %v2379 = vmul.f32 %v2374, %v633
        %v2380 = vmul.f32 %v2377, %v629
        %v2381 = vmul.f32 %v2375, %v633
        %v2382 = vpack.c.bf16 %v2380, %v2378
        %v2383 = vpack.c.bf16 %v2381, %v2379
        %v2384 = vpack.c.bf16 %v2304, %v2302
        %v2385 = vpack.c.bf16 %v2305, %v2303
        %2386 = vrot.lane.b32.xlu0 %v2302, 127
        %v2387 = vpop.permute.xlu0 %2386
        %2388 = vrot.lane.b32.xlu0 %v2304, 127
        %v2389 = vpop.permute.xlu0 %2388
        %2390 = vrot.lane.b32.xlu0 %v2303, 127
        %v2391 = vpop.permute.xlu0 %2390
        %2392 = vrot.lane.b32.xlu0 %v2305, 127
        %v2393 = vpop.permute.xlu0 %2392
        %v2394 = vsel %vm652, %v2387, %v2391
        %v2395 = vsel %vm652, %v2389, %v2393
        %v2396 = vsel %vm652, %v2391, %v2387
        %v2397 = vsel %vm652, %v2393, %v2389
        %v2398 = vmul.f32 %v2394, %v663
        %v2399 = vmul.f32 %v2396, %v667
        %v2400 = vmul.f32 %v2395, %v663
        %v2401 = vmul.f32 %v2397, %v667
        %v2402 = vpack.c.bf16 %v2400, %v2398
        %v2403 = vpack.c.bf16 %v2401, %v2399
        %2404 = vrot.lane.b32.xlu0 %v2302, 113
        %v2405 = vpop.permute.xlu0 %2404
        %2406 = vrot.lane.b32.xlu0 %v2304, 113
        %v2407 = vpop.permute.xlu0 %2406
        %2408 = vrot.lane.b32.xlu0 %v2303, 113
        %v2409 = vpop.permute.xlu0 %2408
        %2410 = vrot.lane.b32.xlu0 %v2305, 113
        %v2411 = vpop.permute.xlu0 %2410
        %v2412 = vsel %vm684, %v2405, %v2409
        %v2413 = vsel %vm684, %v2407, %v2411
        %v2414 = vsel %vm684, %v2409, %v2405
        %v2415 = vsel %vm684, %v2411, %v2407
        %v2416 = vmul.f32 %v2412, %v695
        %v2417 = vmul.f32 %v2414, %v699
        %v2418 = vmul.f32 %v2413, %v695
        %v2419 = vmul.f32 %v2415, %v699
        %v2420 = vpack.c.bf16 %v2418, %v2416
        %v2421 = vpack.c.bf16 %v2419, %v2417
        %2422 = vrot.lane.b32.xlu0 %v2302, 112
        %v2423 = vpop.permute.xlu0 %2422
        %2424 = vrot.lane.b32.xlu0 %v2304, 112
        %v2425 = vpop.permute.xlu0 %2424
        %2426 = vrot.lane.b32.xlu0 %v2303, 112
        %v2427 = vpop.permute.xlu0 %2426
        %2428 = vrot.lane.b32.xlu0 %v2305, 112
        %v2429 = vpop.permute.xlu0 %2428
        %v2430 = vsel %vm716, %v2423, %v2427
        %v2431 = vsel %vm716, %v2425, %v2429
        %v2432 = vsel %vm716, %v2427, %v2423
        %v2433 = vsel %vm716, %v2429, %v2425
        %v2434 = vmul.f32 %v2430, %v727
        %v2435 = vmul.f32 %v2432, %v731
        %v2436 = vmul.f32 %v2431, %v727
        %v2437 = vmul.f32 %v2433, %v731
        %v2438 = vpack.c.bf16 %v2436, %v2434
        %v2439 = vpack.c.bf16 %v2437, %v2435
        %2440 = vrot.lane.b32.xlu0 %v2302, 111
        %v2441 = vpop.permute.xlu0 %2440
        %2442 = vrot.lane.b32.xlu0 %v2304, 111
        %v2443 = vpop.permute.xlu0 %2442
        %2444 = vrot.lane.b32.xlu0 %v2303, 111
        %v2445 = vpop.permute.xlu0 %2444
        %2446 = vrot.lane.b32.xlu0 %v2305, 111
        %v2447 = vpop.permute.xlu0 %2446
        %v2448 = vsel %vm748, %v2441, %v2445
        %v2449 = vsel %vm748, %v2443, %v2447
        %v2450 = vsel %vm748, %v2445, %v2441
        %v2451 = vsel %vm748, %v2447, %v2443
        %v2452 = vmul.f32 %v2448, %v759
        %v2453 = vmul.f32 %v2450, %v763
        %v2454 = vmul.f32 %v2449, %v759
        %v2455 = vmul.f32 %v2451, %v763
        %v2456 = vpack.c.bf16 %v2454, %v2452
        %v2457 = vpack.c.bf16 %v2455, %v2453
        %2459 = vset.pattern.permute.xlu0 0
        %2460 = vperm.xlu0 %2459, %v2310
        %v2461 = vpop.permute.xlu0 %2460
        %2464 = vset.pattern.permute.xlu0 0
        %2465 = vperm.xlu0 %2464, %v2311
        %v2466 = vpop.permute.xlu0 %2465
        %v2470 = vunpack.c.l.b16 %v2307
        %v2471 = vunpack.c.h.b16 %v2307
        %v2472 = vunpack.c.l.b16 %v2308
        %v2473 = vunpack.c.h.b16 %v2308
        %v2474 = vpack.c.b16 %v2472, %v2470
        %v2475 = vpack.c.b16 %v2473, %v2471
        %v2478 = vsel %vm791, %v2475, 0
        %2480 = vmatprep.subr.bf16.mxu0 %v2439
        %2481 = vmatpush1.bf16.msra.mxu0 %v2438
        %2482 = vmatprep.subr.bf16.mxu0 %v2421
        %2483 = vmatpush1.bf16.msra.mxu0 %v2420
        %2484 = vmatprep.subr.bf16.mxu0 %v2403
        %2485 = vmatpush1.bf16.msra.mxu0 %v2402
        %2486 = vmatprep.subr.bf16.mxu0 %v2385
        %2487 = vmatpush1.bf16.msra.mxu0 %v2384
        %2488 = vmatprep.subr.bf16.mxu0 %v2383
        %2489 = vmatpush1.bf16.msra.mxu0 %v2382
        %2490 = vmatprep.subr.bf16.mxu0 %v2365
        %2491 = vmatpush1.bf16.msra.mxu0 %v2364
        %2492 = vmatprep.subr.bf16.mxu0 %v2347
        %2493 = vmatpush1.bf16.msra.mxu0 %v2346
        %2494 = vmatprep.subr.bf16.mxu0 %v2329
        %2495 = vmatpush1.bf16.msra.mxu0 %v2328
        %2496 = vmatprep.subr.bf16.mxu0 0
        %2497 = vmatpush2.bf16.msra.mxu0 0
        %2498 = vmatprep.subr.bf16.mxu0 0
        %2499 = vmatpush2.bf16.msra.mxu0 0
        %2500 = vmatprep.subr.bf16.mxu0 0
        %2501 = vmatpush2.bf16.msra.mxu0 0
        %2502 = vmatprep.subr.bf16.mxu0 0
        %2503 = vmatpush2.bf16.msra.mxu0 0
        %2504 = vmatprep.subr.bf16.mxu0 0
        %2505 = vmatpush2.bf16.msra.mxu0 0
        %2506 = vmatprep.subr.bf16.mxu0 0
        %2507 = vmatpush2.bf16.msra.mxu0 0
        %2508 = vmatprep.subr.bf16.mxu0 0
        %2509 = vmatpush2.bf16.msra.mxu0 0
        %2510 = vmatprep.subr.bf16.mxu0 %v2457
        %2511 = vmatpush2.bf16.msra.mxu0 %v2456
        %2512 = vmatprep.mubr.bf16.mxu0 %v2478
        %2513 = vmatmul.mubr.bf16.gmra.mxu0 %v2474
        %v2514 = vpop.f32.mrf.mxu0
        %v2515 = vadd.f32 %v2461, %v2514
        %v2516 = vpop.f32.mrf.mxu0
        %v2517 = vadd.f32 %v2461, %v2516
        %v2518 = vpop.f32.mrf.mxu0
        %v2519 = vadd.f32 %v2466, %v2518
        %v2520 = vpop.f32.mrf.mxu0
        %v2521 = vadd.f32 %v2466, %v2520
        %2522 = vdwg.mxu0
        %v2523 = vadd.f32 %v2515, %v2517
        %2524 = vadd.xlane.f32.xlu0 %v2523
        %v2525 = vpop.xlane.xlu0 %2524
        %v2526 = vadd.f32 %v2519, %v2521
        %2527 = vadd.xlane.f32.xlu0 %v2526
        %v2528 = vpop.xlane.xlu0 %2527
        %v2529 = vmul.f32 %v2525, 0.00390625
        %v2530 = vmul.f32 %v2528, 0.00390625
        %s2531 = scalar_lea.vmem %s4, 64
        %v2532 = vld [vmem:[%s2531] sm:$0xff]
        %v2533 = vld [vmem:[%s2531 + $0x8] sm:$0xff]
        %v2534 = vmul.f32 %v2532, %v2529
        %v2535 = vmul.f32 %v2533, %v2530
        %v2536 = vsel %vm1288, %v2534, 0.0
        %v2537 = vsel %vm1288, %v2535, 0.0
        %v2538 = vadd.f32 %v2536, %v2537
        %v2539 = vrot.slane %v2538, 4
        %v2540 = vadd.f32 %v2538, %v2539
        %v2541 = vrot.slane %v2540, 2
        %v2542 = vadd.f32 %v2540, %v2541
        %v2543 = vrot.slane %v2542, 1
        %v2544 = vadd.f32 %v2542, %v2543
        %s2545 = scalar_lea.vmem [#allocation4], 2
        %v2546 = vld [vmem:[%s2545] sm:$0x1]
        %v2547 = vadd.f32 %v2544, %v2546
        %v2548 = vmax.f32 %v2547, 0.0
        %s2549 = scalar_lea.vmem %s4, 80
        %v2550 = vld [vmem:[%s2549] sm:$0xff]
        %v2551 = vld [vmem:[%s2549 + $0x8] sm:$0xff]
        %v2552 = vlaneseq
        %v2553 = vshrl.u32 %v2552, 7
        %v2554 = vsub.s32 0, %v2553
        %v2555 = vrot.slane %v2548, %v2554
        %v2556 = vmul.f32 %v2550, %v2555
        %v2557 = vmul.f32 %v2551, %v2555
        %v2558 = vsel %vm1288, %v2556, 0.0
        %2559 = vadd.xlane.f32.xlu0 %v2558
        %v2560 = vpop.xlane.xlu0 %2559
        %v2561 = vsel %vm1288, %v2557, 0.0
        %2562 = vadd.xlane.f32.xlu0 %v2561
        %v2563 = vpop.xlane.xlu0 %2562
        %s2564 = scalar_lea.vmem %s6, 32
        %v2565 = vld [vmem:[%s2564] sm:$0xff]
        %v2566 = vld [vmem:[%s2564 + $0x8] sm:$0xff]
        %v2567 = vadd.f32 %v2560, %v2565
        %v2568 = vadd.f32 %v2563, %v2566
        %v2569 = vxor.u32 %v2567, 2147483648
        %v2570 = vxor.u32 %v2568, 2147483648
        %v2571 = vmul.f32 %v2569, 1.442695
        %v2572 = vpow.pop %v2571
        %v2573 = vmul.f32 %v2570, 1.442695
        %v2574 = vpow.pop %v2573
        %v2575 = vadd.f32 %v2572, 1.0
        %v2576 = vadd.f32 %v2574, 1.0
        %v2577 = vrcp.pop %v2575
        %v2578 = vmul.f32 1.0, %v2577
        %v2579 = vrcp.pop %v2576
        %v2580 = vmul.f32 1.0, %v2579
        %2582 = vset.pattern.permute.xlu0 0
        %2583 = vperm.xlu0 %2582, %v2578
        %v2584 = vpop.permute.xlu0 %2583
        %2587 = vset.pattern.permute.xlu0 0
        %2588 = vperm.xlu0 %2587, %v2580
        %v2589 = vpop.permute.xlu0 %2588
        %v2591 = vmul.f32 %v2515, %v2584
        %v2592 = vmul.f32 %v2517, %v2584
        %v2593 = vmul.f32 %v2519, %v2589
        %v2594 = vmul.f32 %v2521, %v2589
        %v2595 = vadd.f32 %v2591, %v2081
        %v2596 = vadd.f32 %v2592, %v2082
        %v2597 = vadd.f32 %v2593, %v2083
        %v2598 = vadd.f32 %v2594, %v2084
        %s2599 = scalar_lea.vmem [#allocation2], 128
        %v2600 = vld [vmem:[%s2599] sm:$0xff]
        %v2601 = vld [vmem:[%s2599 + $0x8] sm:$0xff]
        %s2602 = scalar_lea.vmem %s3, 128
        %v2603 = vld [vmem:[%s2602] sm:$0xff]
        %v2604 = vld [vmem:[%s2602 + $0x8] sm:$0xff]
        %2605 = vrot.lane.b32.xlu0 %v2595, 17
        %v2606 = vpop.permute.xlu0 %2605
        %2607 = vrot.lane.b32.xlu0 %v2597, 17
        %v2608 = vpop.permute.xlu0 %2607
        %2609 = vrot.lane.b32.xlu0 %v2596, 17
        %v2610 = vpop.permute.xlu0 %2609
        %2611 = vrot.lane.b32.xlu0 %v2598, 17
        %v2612 = vpop.permute.xlu0 %2611
        %v2613 = vsel %vm523, %v2606, %v2610
        %v2614 = vsel %vm523, %v2608, %v2612
        %v2615 = vsel %vm523, %v2610, %v2606
        %v2616 = vsel %vm523, %v2612, %v2608
        %v2617 = vmul.f32 %v2615, %v533
        %v2618 = vmul.f32 %v2613, %v537
        %v2619 = vmul.f32 %v2616, %v533
        %v2620 = vmul.f32 %v2614, %v537
        %v2621 = vpack.c.bf16 %v2619, %v2617
        %v2622 = vpack.c.bf16 %v2620, %v2618
        %2623 = vrot.lane.b32.xlu0 %v2595, 16
        %v2624 = vpop.permute.xlu0 %2623
        %2625 = vrot.lane.b32.xlu0 %v2597, 16
        %v2626 = vpop.permute.xlu0 %2625
        %2627 = vrot.lane.b32.xlu0 %v2596, 16
        %v2628 = vpop.permute.xlu0 %2627
        %2629 = vrot.lane.b32.xlu0 %v2598, 16
        %v2630 = vpop.permute.xlu0 %2629
        %v2631 = vsel %vm554, %v2624, %v2628
        %v2632 = vsel %vm554, %v2626, %v2630
        %v2633 = vsel %vm554, %v2628, %v2624
        %v2634 = vsel %vm554, %v2630, %v2626
        %v2635 = vmul.f32 %v2633, %v565
        %v2636 = vmul.f32 %v2631, %v569
        %v2637 = vmul.f32 %v2634, %v565
        %v2638 = vmul.f32 %v2632, %v569
        %v2639 = vpack.c.bf16 %v2637, %v2635
        %v2640 = vpack.c.bf16 %v2638, %v2636
        %2641 = vrot.lane.b32.xlu0 %v2595, 15
        %v2642 = vpop.permute.xlu0 %2641
        %2643 = vrot.lane.b32.xlu0 %v2597, 15
        %v2644 = vpop.permute.xlu0 %2643
        %2645 = vrot.lane.b32.xlu0 %v2596, 15
        %v2646 = vpop.permute.xlu0 %2645
        %2647 = vrot.lane.b32.xlu0 %v2598, 15
        %v2648 = vpop.permute.xlu0 %2647
        %v2649 = vsel %vm586, %v2642, %v2646
        %v2650 = vsel %vm586, %v2644, %v2648
        %v2651 = vsel %vm586, %v2646, %v2642
        %v2652 = vsel %vm586, %v2648, %v2644
        %v2653 = vmul.f32 %v2651, %v597
        %v2654 = vmul.f32 %v2649, %v601
        %v2655 = vmul.f32 %v2652, %v597
        %v2656 = vmul.f32 %v2650, %v601
        %v2657 = vpack.c.bf16 %v2655, %v2653
        %v2658 = vpack.c.bf16 %v2656, %v2654
        %2659 = vrot.lane.b32.xlu0 %v2595, 1
        %v2660 = vpop.permute.xlu0 %2659
        %2661 = vrot.lane.b32.xlu0 %v2597, 1
        %v2662 = vpop.permute.xlu0 %2661
        %2663 = vrot.lane.b32.xlu0 %v2596, 1
        %v2664 = vpop.permute.xlu0 %2663
        %2665 = vrot.lane.b32.xlu0 %v2598, 1
        %v2666 = vpop.permute.xlu0 %2665
        %v2667 = vsel %vm618, %v2660, %v2664
        %v2668 = vsel %vm618, %v2662, %v2666
        %v2669 = vsel %vm618, %v2664, %v2660
        %v2670 = vsel %vm618, %v2666, %v2662
        %v2671 = vmul.f32 %v2669, %v629
        %v2672 = vmul.f32 %v2667, %v633
        %v2673 = vmul.f32 %v2670, %v629
        %v2674 = vmul.f32 %v2668, %v633
        %v2675 = vpack.c.bf16 %v2673, %v2671
        %v2676 = vpack.c.bf16 %v2674, %v2672
        %v2677 = vpack.c.bf16 %v2597, %v2595
        %v2678 = vpack.c.bf16 %v2598, %v2596
        %2679 = vrot.lane.b32.xlu0 %v2595, 127
        %v2680 = vpop.permute.xlu0 %2679
        %2681 = vrot.lane.b32.xlu0 %v2597, 127
        %v2682 = vpop.permute.xlu0 %2681
        %2683 = vrot.lane.b32.xlu0 %v2596, 127
        %v2684 = vpop.permute.xlu0 %2683
        %2685 = vrot.lane.b32.xlu0 %v2598, 127
        %v2686 = vpop.permute.xlu0 %2685
        %v2687 = vsel %vm652, %v2680, %v2684
        %v2688 = vsel %vm652, %v2682, %v2686
        %v2689 = vsel %vm652, %v2684, %v2680
        %v2690 = vsel %vm652, %v2686, %v2682
        %v2691 = vmul.f32 %v2687, %v663
        %v2692 = vmul.f32 %v2689, %v667
        %v2693 = vmul.f32 %v2688, %v663
        %v2694 = vmul.f32 %v2690, %v667
        %v2695 = vpack.c.bf16 %v2693, %v2691
        %v2696 = vpack.c.bf16 %v2694, %v2692
        %2697 = vrot.lane.b32.xlu0 %v2595, 113
        %v2698 = vpop.permute.xlu0 %2697
        %2699 = vrot.lane.b32.xlu0 %v2597, 113
        %v2700 = vpop.permute.xlu0 %2699
        %2701 = vrot.lane.b32.xlu0 %v2596, 113
        %v2702 = vpop.permute.xlu0 %2701
        %2703 = vrot.lane.b32.xlu0 %v2598, 113
        %v2704 = vpop.permute.xlu0 %2703
        %v2705 = vsel %vm684, %v2698, %v2702
        %v2706 = vsel %vm684, %v2700, %v2704
        %v2707 = vsel %vm684, %v2702, %v2698
        %v2708 = vsel %vm684, %v2704, %v2700
        %v2709 = vmul.f32 %v2705, %v695
        %v2710 = vmul.f32 %v2707, %v699
        %v2711 = vmul.f32 %v2706, %v695
        %v2712 = vmul.f32 %v2708, %v699
        %v2713 = vpack.c.bf16 %v2711, %v2709
        %v2714 = vpack.c.bf16 %v2712, %v2710
        %2715 = vrot.lane.b32.xlu0 %v2595, 112
        %v2716 = vpop.permute.xlu0 %2715
        %2717 = vrot.lane.b32.xlu0 %v2597, 112
        %v2718 = vpop.permute.xlu0 %2717
        %2719 = vrot.lane.b32.xlu0 %v2596, 112
        %v2720 = vpop.permute.xlu0 %2719
        %2721 = vrot.lane.b32.xlu0 %v2598, 112
        %v2722 = vpop.permute.xlu0 %2721
        %v2723 = vsel %vm716, %v2716, %v2720
        %v2724 = vsel %vm716, %v2718, %v2722
        %v2725 = vsel %vm716, %v2720, %v2716
        %v2726 = vsel %vm716, %v2722, %v2718
        %v2727 = vmul.f32 %v2723, %v727
        %v2728 = vmul.f32 %v2725, %v731
        %v2729 = vmul.f32 %v2724, %v727
        %v2730 = vmul.f32 %v2726, %v731
        %v2731 = vpack.c.bf16 %v2729, %v2727
        %v2732 = vpack.c.bf16 %v2730, %v2728
        %2733 = vrot.lane.b32.xlu0 %v2595, 111
        %v2734 = vpop.permute.xlu0 %2733
        %2735 = vrot.lane.b32.xlu0 %v2597, 111
        %v2736 = vpop.permute.xlu0 %2735
        %2737 = vrot.lane.b32.xlu0 %v2596, 111
        %v2738 = vpop.permute.xlu0 %2737
        %2739 = vrot.lane.b32.xlu0 %v2598, 111
        %v2740 = vpop.permute.xlu0 %2739
        %v2741 = vsel %vm748, %v2734, %v2738
        %v2742 = vsel %vm748, %v2736, %v2740
        %v2743 = vsel %vm748, %v2738, %v2734
        %v2744 = vsel %vm748, %v2740, %v2736
        %v2745 = vmul.f32 %v2741, %v759
        %v2746 = vmul.f32 %v2743, %v763
        %v2747 = vmul.f32 %v2742, %v759
        %v2748 = vmul.f32 %v2744, %v763
        %v2749 = vpack.c.bf16 %v2747, %v2745
        %v2750 = vpack.c.bf16 %v2748, %v2746
        %2752 = vset.pattern.permute.xlu0 0
        %2753 = vperm.xlu0 %2752, %v2603
        %v2754 = vpop.permute.xlu0 %2753
        %2757 = vset.pattern.permute.xlu0 0
        %2758 = vperm.xlu0 %2757, %v2604
        %v2759 = vpop.permute.xlu0 %2758
        %v2763 = vunpack.c.l.b16 %v2600
        %v2764 = vunpack.c.h.b16 %v2600
        %v2765 = vunpack.c.l.b16 %v2601
        %v2766 = vunpack.c.h.b16 %v2601
        %v2767 = vpack.c.b16 %v2765, %v2763
        %v2768 = vpack.c.b16 %v2766, %v2764
        %v2771 = vsel %vm791, %v2768, 0
        %2773 = vmatprep.subr.bf16.mxu0 %v2732
        %2774 = vmatpush1.bf16.msra.mxu0 %v2731
        %2775 = vmatprep.subr.bf16.mxu0 %v2714
        %2776 = vmatpush1.bf16.msra.mxu0 %v2713
        %2777 = vmatprep.subr.bf16.mxu0 %v2696
        %2778 = vmatpush1.bf16.msra.mxu0 %v2695
        %2779 = vmatprep.subr.bf16.mxu0 %v2678
        %2780 = vmatpush1.bf16.msra.mxu0 %v2677
        %2781 = vmatprep.subr.bf16.mxu0 %v2676
        %2782 = vmatpush1.bf16.msra.mxu0 %v2675
        %2783 = vmatprep.subr.bf16.mxu0 %v2658
        %2784 = vmatpush1.bf16.msra.mxu0 %v2657
        %2785 = vmatprep.subr.bf16.mxu0 %v2640
        %2786 = vmatpush1.bf16.msra.mxu0 %v2639
        %2787 = vmatprep.subr.bf16.mxu0 %v2622
        %2788 = vmatpush1.bf16.msra.mxu0 %v2621
        %2789 = vmatprep.subr.bf16.mxu0 0
        %2790 = vmatpush2.bf16.msra.mxu0 0
        %2791 = vmatprep.subr.bf16.mxu0 0
        %2792 = vmatpush2.bf16.msra.mxu0 0
        %2793 = vmatprep.subr.bf16.mxu0 0
        %2794 = vmatpush2.bf16.msra.mxu0 0
        %2795 = vmatprep.subr.bf16.mxu0 0
        %2796 = vmatpush2.bf16.msra.mxu0 0
        %2797 = vmatprep.subr.bf16.mxu0 0
        %2798 = vmatpush2.bf16.msra.mxu0 0
        %2799 = vmatprep.subr.bf16.mxu0 0
        %2800 = vmatpush2.bf16.msra.mxu0 0
        %2801 = vmatprep.subr.bf16.mxu0 0
        %2802 = vmatpush2.bf16.msra.mxu0 0
        %2803 = vmatprep.subr.bf16.mxu0 %v2750
        %2804 = vmatpush2.bf16.msra.mxu0 %v2749
        %2805 = vmatprep.mubr.bf16.mxu0 %v2771
        %2806 = vmatmul.mubr.bf16.gmra.mxu0 %v2767
        %v2807 = vpop.f32.mrf.mxu0
        %v2808 = vadd.f32 %v2754, %v2807
        %v2809 = vpop.f32.mrf.mxu0
        %v2810 = vadd.f32 %v2754, %v2809
        %v2811 = vpop.f32.mrf.mxu0
        %v2812 = vadd.f32 %v2759, %v2811
        %v2813 = vpop.f32.mrf.mxu0
        %v2814 = vadd.f32 %v2759, %v2813
        %2815 = vdwg.mxu0
        %v2816 = vmax.f32 %v2808, 0.0
        %v2817 = vmax.f32 %v2810, 0.0
        %v2818 = vmax.f32 %v2812, 0.0
        %v2819 = vmax.f32 %v2814, 0.0
        %s2820 = scalar_lea.vmem [#allocation2], 144
        %v2821 = vld [vmem:[%s2820] sm:$0xff]
        %v2822 = vld [vmem:[%s2820 + $0x8] sm:$0xff]
        %s2823 = scalar_lea.vmem %s3, 144
        %v2824 = vld [vmem:[%s2823] sm:$0xff]
        %v2825 = vld [vmem:[%s2823 + $0x8] sm:$0xff]
        %2826 = vrot.lane.b32.xlu0 %v2816, 17
        %v2827 = vpop.permute.xlu0 %2826
        %2828 = vrot.lane.b32.xlu0 %v2818, 17
        %v2829 = vpop.permute.xlu0 %2828
        %2830 = vrot.lane.b32.xlu0 %v2817, 17
        %v2831 = vpop.permute.xlu0 %2830
        %2832 = vrot.lane.b32.xlu0 %v2819, 17
        %v2833 = vpop.permute.xlu0 %2832
        %v2834 = vsel %vm523, %v2827, %v2831
        %v2835 = vsel %vm523, %v2829, %v2833
        %v2836 = vsel %vm523, %v2831, %v2827
        %v2837 = vsel %vm523, %v2833, %v2829
        %v2838 = vmul.f32 %v2836, %v533
        %v2839 = vmul.f32 %v2834, %v537
        %v2840 = vmul.f32 %v2837, %v533
        %v2841 = vmul.f32 %v2835, %v537
        %v2842 = vpack.c.bf16 %v2840, %v2838
        %v2843 = vpack.c.bf16 %v2841, %v2839
        %2844 = vrot.lane.b32.xlu0 %v2816, 16
        %v2845 = vpop.permute.xlu0 %2844
        %2846 = vrot.lane.b32.xlu0 %v2818, 16
        %v2847 = vpop.permute.xlu0 %2846
        %2848 = vrot.lane.b32.xlu0 %v2817, 16
        %v2849 = vpop.permute.xlu0 %2848
        %2850 = vrot.lane.b32.xlu0 %v2819, 16
        %v2851 = vpop.permute.xlu0 %2850
        %v2852 = vsel %vm554, %v2845, %v2849
        %v2853 = vsel %vm554, %v2847, %v2851
        %v2854 = vsel %vm554, %v2849, %v2845
        %v2855 = vsel %vm554, %v2851, %v2847
        %v2856 = vmul.f32 %v2854, %v565
        %v2857 = vmul.f32 %v2852, %v569
        %v2858 = vmul.f32 %v2855, %v565
        %v2859 = vmul.f32 %v2853, %v569
        %v2860 = vpack.c.bf16 %v2858, %v2856
        %v2861 = vpack.c.bf16 %v2859, %v2857
        %2862 = vrot.lane.b32.xlu0 %v2816, 15
        %v2863 = vpop.permute.xlu0 %2862
        %2864 = vrot.lane.b32.xlu0 %v2818, 15
        %v2865 = vpop.permute.xlu0 %2864
        %2866 = vrot.lane.b32.xlu0 %v2817, 15
        %v2867 = vpop.permute.xlu0 %2866
        %2868 = vrot.lane.b32.xlu0 %v2819, 15
        %v2869 = vpop.permute.xlu0 %2868
        %v2870 = vsel %vm586, %v2863, %v2867
        %v2871 = vsel %vm586, %v2865, %v2869
        %v2872 = vsel %vm586, %v2867, %v2863
        %v2873 = vsel %vm586, %v2869, %v2865
        %v2874 = vmul.f32 %v2872, %v597
        %v2875 = vmul.f32 %v2870, %v601
        %v2876 = vmul.f32 %v2873, %v597
        %v2877 = vmul.f32 %v2871, %v601
        %v2878 = vpack.c.bf16 %v2876, %v2874
        %v2879 = vpack.c.bf16 %v2877, %v2875
        %2880 = vrot.lane.b32.xlu0 %v2816, 1
        %v2881 = vpop.permute.xlu0 %2880
        %2882 = vrot.lane.b32.xlu0 %v2818, 1
        %v2883 = vpop.permute.xlu0 %2882
        %2884 = vrot.lane.b32.xlu0 %v2817, 1
        %v2885 = vpop.permute.xlu0 %2884
        %2886 = vrot.lane.b32.xlu0 %v2819, 1
        %v2887 = vpop.permute.xlu0 %2886
        %v2888 = vsel %vm618, %v2881, %v2885
        %v2889 = vsel %vm618, %v2883, %v2887
        %v2890 = vsel %vm618, %v2885, %v2881
        %v2891 = vsel %vm618, %v2887, %v2883
        %v2892 = vmul.f32 %v2890, %v629
        %v2893 = vmul.f32 %v2888, %v633
        %v2894 = vmul.f32 %v2891, %v629
        %v2895 = vmul.f32 %v2889, %v633
        %v2896 = vpack.c.bf16 %v2894, %v2892
        %v2897 = vpack.c.bf16 %v2895, %v2893
        %v2898 = vpack.c.bf16 %v2818, %v2816
        %v2899 = vpack.c.bf16 %v2819, %v2817
        %2900 = vrot.lane.b32.xlu0 %v2816, 127
        %v2901 = vpop.permute.xlu0 %2900
        %2902 = vrot.lane.b32.xlu0 %v2818, 127
        %v2903 = vpop.permute.xlu0 %2902
        %2904 = vrot.lane.b32.xlu0 %v2817, 127
        %v2905 = vpop.permute.xlu0 %2904
        %2906 = vrot.lane.b32.xlu0 %v2819, 127
        %v2907 = vpop.permute.xlu0 %2906
        %v2908 = vsel %vm652, %v2901, %v2905
        %v2909 = vsel %vm652, %v2903, %v2907
        %v2910 = vsel %vm652, %v2905, %v2901
        %v2911 = vsel %vm652, %v2907, %v2903
        %v2912 = vmul.f32 %v2908, %v663
        %v2913 = vmul.f32 %v2910, %v667
        %v2914 = vmul.f32 %v2909, %v663
        %v2915 = vmul.f32 %v2911, %v667
        %v2916 = vpack.c.bf16 %v2914, %v2912
        %v2917 = vpack.c.bf16 %v2915, %v2913
        %2918 = vrot.lane.b32.xlu0 %v2816, 113
        %v2919 = vpop.permute.xlu0 %2918
        %2920 = vrot.lane.b32.xlu0 %v2818, 113
        %v2921 = vpop.permute.xlu0 %2920
        %2922 = vrot.lane.b32.xlu0 %v2817, 113
        %v2923 = vpop.permute.xlu0 %2922
        %2924 = vrot.lane.b32.xlu0 %v2819, 113
        %v2925 = vpop.permute.xlu0 %2924
        %v2926 = vsel %vm684, %v2919, %v2923
        %v2927 = vsel %vm684, %v2921, %v2925
        %v2928 = vsel %vm684, %v2923, %v2919
        %v2929 = vsel %vm684, %v2925, %v2921
        %v2930 = vmul.f32 %v2926, %v695
        %v2931 = vmul.f32 %v2928, %v699
        %v2932 = vmul.f32 %v2927, %v695
        %v2933 = vmul.f32 %v2929, %v699
        %v2934 = vpack.c.bf16 %v2932, %v2930
        %v2935 = vpack.c.bf16 %v2933, %v2931
        %2936 = vrot.lane.b32.xlu0 %v2816, 112
        %v2937 = vpop.permute.xlu0 %2936
        %2938 = vrot.lane.b32.xlu0 %v2818, 112
        %v2939 = vpop.permute.xlu0 %2938
        %2940 = vrot.lane.b32.xlu0 %v2817, 112
        %v2941 = vpop.permute.xlu0 %2940
        %2942 = vrot.lane.b32.xlu0 %v2819, 112
        %v2943 = vpop.permute.xlu0 %2942
        %v2944 = vsel %vm716, %v2937, %v2941
        %v2945 = vsel %vm716, %v2939, %v2943
        %v2946 = vsel %vm716, %v2941, %v2937
        %v2947 = vsel %vm716, %v2943, %v2939
        %v2948 = vmul.f32 %v2944, %v727
        %v2949 = vmul.f32 %v2946, %v731
        %v2950 = vmul.f32 %v2945, %v727
        %v2951 = vmul.f32 %v2947, %v731
        %v2952 = vpack.c.bf16 %v2950, %v2948
        %v2953 = vpack.c.bf16 %v2951, %v2949
        %2954 = vrot.lane.b32.xlu0 %v2816, 111
        %v2955 = vpop.permute.xlu0 %2954
        %2956 = vrot.lane.b32.xlu0 %v2818, 111
        %v2957 = vpop.permute.xlu0 %2956
        %2958 = vrot.lane.b32.xlu0 %v2817, 111
        %v2959 = vpop.permute.xlu0 %2958
        %2960 = vrot.lane.b32.xlu0 %v2819, 111
        %v2961 = vpop.permute.xlu0 %2960
        %v2962 = vsel %vm748, %v2955, %v2959
        %v2963 = vsel %vm748, %v2957, %v2961
        %v2964 = vsel %vm748, %v2959, %v2955
        %v2965 = vsel %vm748, %v2961, %v2957
        %v2966 = vmul.f32 %v2962, %v759
        %v2967 = vmul.f32 %v2964, %v763
        %v2968 = vmul.f32 %v2963, %v759
        %v2969 = vmul.f32 %v2965, %v763
        %v2970 = vpack.c.bf16 %v2968, %v2966
        %v2971 = vpack.c.bf16 %v2969, %v2967
        %2973 = vset.pattern.permute.xlu0 0
        %2974 = vperm.xlu0 %2973, %v2824
        %v2975 = vpop.permute.xlu0 %2974
        %2978 = vset.pattern.permute.xlu0 0
        %2979 = vperm.xlu0 %2978, %v2825
        %v2980 = vpop.permute.xlu0 %2979
        %v2984 = vunpack.c.l.b16 %v2821
        %v2985 = vunpack.c.h.b16 %v2821
        %v2986 = vunpack.c.l.b16 %v2822
        %v2987 = vunpack.c.h.b16 %v2822
        %v2988 = vpack.c.b16 %v2986, %v2984
        %v2989 = vpack.c.b16 %v2987, %v2985
        %v2992 = vsel %vm791, %v2989, 0
        %2994 = vmatprep.subr.bf16.mxu0 %v2953
        %2995 = vmatpush1.bf16.msra.mxu0 %v2952
        %2996 = vmatprep.subr.bf16.mxu0 %v2935
        %2997 = vmatpush1.bf16.msra.mxu0 %v2934
        %2998 = vmatprep.subr.bf16.mxu0 %v2917
        %2999 = vmatpush1.bf16.msra.mxu0 %v2916
        %3000 = vmatprep.subr.bf16.mxu0 %v2899
        %3001 = vmatpush1.bf16.msra.mxu0 %v2898
        %3002 = vmatprep.subr.bf16.mxu0 %v2897
        %3003 = vmatpush1.bf16.msra.mxu0 %v2896
        %3004 = vmatprep.subr.bf16.mxu0 %v2879
        %3005 = vmatpush1.bf16.msra.mxu0 %v2878
        %3006 = vmatprep.subr.bf16.mxu0 %v2861
        %3007 = vmatpush1.bf16.msra.mxu0 %v2860
        %3008 = vmatprep.subr.bf16.mxu0 %v2843
        %3009 = vmatpush1.bf16.msra.mxu0 %v2842
        %3010 = vmatprep.subr.bf16.mxu0 0
        %3011 = vmatpush2.bf16.msra.mxu0 0
        %3012 = vmatprep.subr.bf16.mxu0 0
        %3013 = vmatpush2.bf16.msra.mxu0 0
        %3014 = vmatprep.subr.bf16.mxu0 0
        %3015 = vmatpush2.bf16.msra.mxu0 0
        %3016 = vmatprep.subr.bf16.mxu0 0
        %3017 = vmatpush2.bf16.msra.mxu0 0
        %3018 = vmatprep.subr.bf16.mxu0 0
        %3019 = vmatpush2.bf16.msra.mxu0 0
        %3020 = vmatprep.subr.bf16.mxu0 0
        %3021 = vmatpush2.bf16.msra.mxu0 0
        %3022 = vmatprep.subr.bf16.mxu0 0
        %3023 = vmatpush2.bf16.msra.mxu0 0
        %3024 = vmatprep.subr.bf16.mxu0 %v2971
        %3025 = vmatpush2.bf16.msra.mxu0 %v2970
        %3026 = vmatprep.mubr.bf16.mxu0 %v2992
        %3027 = vmatmul.mubr.bf16.gmra.mxu0 %v2988
        %v3028 = vpop.f32.mrf.mxu0
        %v3029 = vadd.f32 %v2975, %v3028
        %v3030 = vpop.f32.mrf.mxu0
        %v3031 = vadd.f32 %v2975, %v3030
        %v3032 = vpop.f32.mrf.mxu0
        %v3033 = vadd.f32 %v2980, %v3032
        %v3034 = vpop.f32.mrf.mxu0
        %v3035 = vadd.f32 %v2980, %v3034
        %3036 = vdwg.mxu0
        %v3037 = vadd.f32 %v3029, %v3031
        %3038 = vadd.xlane.f32.xlu0 %v3037
        %v3039 = vpop.xlane.xlu0 %3038
        %v3040 = vadd.f32 %v3033, %v3035
        %3041 = vadd.xlane.f32.xlu0 %v3040
        %v3042 = vpop.xlane.xlu0 %3041
        %v3043 = vmul.f32 %v3039, 0.00390625
        %v3044 = vmul.f32 %v3042, 0.00390625
        %s3045 = scalar_lea.vmem %s4, 96
        %v3046 = vld [vmem:[%s3045] sm:$0xff]
        %v3047 = vld [vmem:[%s3045 + $0x8] sm:$0xff]
        %v3048 = vmul.f32 %v3046, %v3043
        %v3049 = vmul.f32 %v3047, %v3044
        %v3050 = vsel %vm1288, %v3048, 0.0
        %v3051 = vsel %vm1288, %v3049, 0.0
        %v3052 = vadd.f32 %v3050, %v3051
        %v3053 = vrot.slane %v3052, 4
        %v3054 = vadd.f32 %v3052, %v3053
        %v3055 = vrot.slane %v3054, 2
        %v3056 = vadd.f32 %v3054, %v3055
        %v3057 = vrot.slane %v3056, 1
        %v3058 = vadd.f32 %v3056, %v3057
        %s3059 = scalar_lea.vmem [#allocation4], 3
        %v3060 = vld [vmem:[%s3059] sm:$0x1]
        %v3061 = vadd.f32 %v3058, %v3060
        %v3062 = vmax.f32 %v3061, 0.0
        %s3063 = scalar_lea.vmem %s4, 112
        %v3064 = vld [vmem:[%s3063] sm:$0xff]
        %v3065 = vld [vmem:[%s3063 + $0x8] sm:$0xff]
        %v3066 = vlaneseq
        %v3067 = vshrl.u32 %v3066, 7
        %v3068 = vsub.s32 0, %v3067
        %v3069 = vrot.slane %v3062, %v3068
        %v3070 = vmul.f32 %v3064, %v3069
        %v3071 = vmul.f32 %v3065, %v3069
        %v3072 = vsel %vm1288, %v3070, 0.0
        %3073 = vadd.xlane.f32.xlu0 %v3072
        %v3074 = vpop.xlane.xlu0 %3073
        %v3075 = vsel %vm1288, %v3071, 0.0
        %3076 = vadd.xlane.f32.xlu0 %v3075
        %v3077 = vpop.xlane.xlu0 %3076
        %s3078 = scalar_lea.vmem %s6, 48
        %v3079 = vld [vmem:[%s3078] sm:$0xff]
        %v3080 = vld [vmem:[%s3078 + $0x8] sm:$0xff]
        %v3081 = vadd.f32 %v3074, %v3079
        %v3082 = vadd.f32 %v3077, %v3080
        %v3083 = vxor.u32 %v3081, 2147483648
        %v3084 = vxor.u32 %v3082, 2147483648
        %v3085 = vmul.f32 %v3083, 1.442695
        %v3086 = vpow.pop %v3085
        %v3087 = vmul.f32 %v3084, 1.442695
        %v3088 = vpow.pop %v3087
        %v3089 = vadd.f32 %v3086, 1.0
        %v3090 = vadd.f32 %v3088, 1.0
        %v3091 = vrcp.pop %v3089
        %v3092 = vmul.f32 1.0, %v3091
        %v3093 = vrcp.pop %v3090
        %v3094 = vmul.f32 1.0, %v3093
        %3096 = vset.pattern.permute.xlu0 0
        %3097 = vperm.xlu0 %3096, %v3092
        %v3098 = vpop.permute.xlu0 %3097
        %3101 = vset.pattern.permute.xlu0 0
        %3102 = vperm.xlu0 %3101, %v3094
        %v3103 = vpop.permute.xlu0 %3102
        %v3105 = vmul.f32 %v3029, %v3098
        %v3106 = vmul.f32 %v3031, %v3098
        %v3107 = vmul.f32 %v3033, %v3103
        %v3108 = vmul.f32 %v3035, %v3103
        %v3109 = vadd.f32 %v3105, %v2595
        %v3110 = vadd.f32 %v3106, %v2596
        %v3111 = vadd.f32 %v3107, %v2597
        %v3112 = vadd.f32 %v3108, %v2598
        %s3113 = scalar_lea.vmem [#allocation2], 160
        %v3114 = vld [vmem:[%s3113] sm:$0xff]
        %v3115 = vld [vmem:[%s3113 + $0x8] sm:$0xff]
        %s3116 = scalar_lea.vmem %s3, 160
        %v3117 = vld [vmem:[%s3116] sm:$0xff]
        %v3118 = vld [vmem:[%s3116 + $0x8] sm:$0xff]
        %3119 = vrot.lane.b32.xlu0 %v3109, 17
        %v3120 = vpop.permute.xlu0 %3119
        %3121 = vrot.lane.b32.xlu0 %v3111, 17
        %v3122 = vpop.permute.xlu0 %3121
        %3123 = vrot.lane.b32.xlu0 %v3110, 17
        %v3124 = vpop.permute.xlu0 %3123
        %3125 = vrot.lane.b32.xlu0 %v3112, 17
        %v3126 = vpop.permute.xlu0 %3125
        %v3127 = vsel %vm523, %v3120, %v3124
        %v3128 = vsel %vm523, %v3122, %v3126
        %v3129 = vsel %vm523, %v3124, %v3120
        %v3130 = vsel %vm523, %v3126, %v3122
        %v3131 = vmul.f32 %v3129, %v533
        %v3132 = vmul.f32 %v3127, %v537
        %v3133 = vmul.f32 %v3130, %v533
        %v3134 = vmul.f32 %v3128, %v537
        %v3135 = vpack.c.bf16 %v3133, %v3131
        %v3136 = vpack.c.bf16 %v3134, %v3132
        %3137 = vrot.lane.b32.xlu0 %v3109, 16
        %v3138 = vpop.permute.xlu0 %3137
        %3139 = vrot.lane.b32.xlu0 %v3111, 16
        %v3140 = vpop.permute.xlu0 %3139
        %3141 = vrot.lane.b32.xlu0 %v3110, 16
        %v3142 = vpop.permute.xlu0 %3141
        %3143 = vrot.lane.b32.xlu0 %v3112, 16
        %v3144 = vpop.permute.xlu0 %3143
        %v3145 = vsel %vm554, %v3138, %v3142
        %v3146 = vsel %vm554, %v3140, %v3144
        %v3147 = vsel %vm554, %v3142, %v3138
        %v3148 = vsel %vm554, %v3144, %v3140
        %v3149 = vmul.f32 %v3147, %v565
        %v3150 = vmul.f32 %v3145, %v569
        %v3151 = vmul.f32 %v3148, %v565
        %v3152 = vmul.f32 %v3146, %v569
        %v3153 = vpack.c.bf16 %v3151, %v3149
        %v3154 = vpack.c.bf16 %v3152, %v3150
        %3155 = vrot.lane.b32.xlu0 %v3109, 15
        %v3156 = vpop.permute.xlu0 %3155
        %3157 = vrot.lane.b32.xlu0 %v3111, 15
        %v3158 = vpop.permute.xlu0 %3157
        %3159 = vrot.lane.b32.xlu0 %v3110, 15
        %v3160 = vpop.permute.xlu0 %3159
        %3161 = vrot.lane.b32.xlu0 %v3112, 15
        %v3162 = vpop.permute.xlu0 %3161
        %v3163 = vsel %vm586, %v3156, %v3160
        %v3164 = vsel %vm586, %v3158, %v3162
        %v3165 = vsel %vm586, %v3160, %v3156
        %v3166 = vsel %vm586, %v3162, %v3158
        %v3167 = vmul.f32 %v3165, %v597
        %v3168 = vmul.f32 %v3163, %v601
        %v3169 = vmul.f32 %v3166, %v597
        %v3170 = vmul.f32 %v3164, %v601
        %v3171 = vpack.c.bf16 %v3169, %v3167
        %v3172 = vpack.c.bf16 %v3170, %v3168
        %3173 = vrot.lane.b32.xlu0 %v3109, 1
        %v3174 = vpop.permute.xlu0 %3173
        %3175 = vrot.lane.b32.xlu0 %v3111, 1
        %v3176 = vpop.permute.xlu0 %3175
        %3177 = vrot.lane.b32.xlu0 %v3110, 1
        %v3178 = vpop.permute.xlu0 %3177
        %3179 = vrot.lane.b32.xlu0 %v3112, 1
        %v3180 = vpop.permute.xlu0 %3179
        %v3181 = vsel %vm618, %v3174, %v3178
        %v3182 = vsel %vm618, %v3176, %v3180
        %v3183 = vsel %vm618, %v3178, %v3174
        %v3184 = vsel %vm618, %v3180, %v3176
        %v3185 = vmul.f32 %v3183, %v629
        %v3186 = vmul.f32 %v3181, %v633
        %v3187 = vmul.f32 %v3184, %v629
        %v3188 = vmul.f32 %v3182, %v633
        %v3189 = vpack.c.bf16 %v3187, %v3185
        %v3190 = vpack.c.bf16 %v3188, %v3186
        %v3191 = vpack.c.bf16 %v3111, %v3109
        %v3192 = vpack.c.bf16 %v3112, %v3110
        %3193 = vrot.lane.b32.xlu0 %v3109, 127
        %v3194 = vpop.permute.xlu0 %3193
        %3195 = vrot.lane.b32.xlu0 %v3111, 127
        %v3196 = vpop.permute.xlu0 %3195
        %3197 = vrot.lane.b32.xlu0 %v3110, 127
        %v3198 = vpop.permute.xlu0 %3197
        %3199 = vrot.lane.b32.xlu0 %v3112, 127
        %v3200 = vpop.permute.xlu0 %3199
        %v3201 = vsel %vm652, %v3194, %v3198
        %v3202 = vsel %vm652, %v3196, %v3200
        %v3203 = vsel %vm652, %v3198, %v3194
        %v3204 = vsel %vm652, %v3200, %v3196
        %v3205 = vmul.f32 %v3201, %v663
        %v3206 = vmul.f32 %v3203, %v667
        %v3207 = vmul.f32 %v3202, %v663
        %v3208 = vmul.f32 %v3204, %v667
        %v3209 = vpack.c.bf16 %v3207, %v3205
        %v3210 = vpack.c.bf16 %v3208, %v3206
        %3211 = vrot.lane.b32.xlu0 %v3109, 113
        %v3212 = vpop.permute.xlu0 %3211
        %3213 = vrot.lane.b32.xlu0 %v3111, 113
        %v3214 = vpop.permute.xlu0 %3213
        %3215 = vrot.lane.b32.xlu0 %v3110, 113
        %v3216 = vpop.permute.xlu0 %3215
        %3217 = vrot.lane.b32.xlu0 %v3112, 113
        %v3218 = vpop.permute.xlu0 %3217
        %v3219 = vsel %vm684, %v3212, %v3216
        %v3220 = vsel %vm684, %v3214, %v3218
        %v3221 = vsel %vm684, %v3216, %v3212
        %v3222 = vsel %vm684, %v3218, %v3214
        %v3223 = vmul.f32 %v3219, %v695
        %v3224 = vmul.f32 %v3221, %v699
        %v3225 = vmul.f32 %v3220, %v695
        %v3226 = vmul.f32 %v3222, %v699
        %v3227 = vpack.c.bf16 %v3225, %v3223
        %v3228 = vpack.c.bf16 %v3226, %v3224
        %3229 = vrot.lane.b32.xlu0 %v3109, 112
        %v3230 = vpop.permute.xlu0 %3229
        %3231 = vrot.lane.b32.xlu0 %v3111, 112
        %v3232 = vpop.permute.xlu0 %3231
        %3233 = vrot.lane.b32.xlu0 %v3110, 112
        %v3234 = vpop.permute.xlu0 %3233
        %3235 = vrot.lane.b32.xlu0 %v3112, 112
        %v3236 = vpop.permute.xlu0 %3235
        %v3237 = vsel %vm716, %v3230, %v3234
        %v3238 = vsel %vm716, %v3232, %v3236
        %v3239 = vsel %vm716, %v3234, %v3230
        %v3240 = vsel %vm716, %v3236, %v3232
        %v3241 = vmul.f32 %v3237, %v727
        %v3242 = vmul.f32 %v3239, %v731
        %v3243 = vmul.f32 %v3238, %v727
        %v3244 = vmul.f32 %v3240, %v731
        %v3245 = vpack.c.bf16 %v3243, %v3241
        %v3246 = vpack.c.bf16 %v3244, %v3242
        %3247 = vrot.lane.b32.xlu0 %v3109, 111
        %v3248 = vpop.permute.xlu0 %3247
        %3249 = vrot.lane.b32.xlu0 %v3111, 111
        %v3250 = vpop.permute.xlu0 %3249
        %3251 = vrot.lane.b32.xlu0 %v3110, 111
        %v3252 = vpop.permute.xlu0 %3251
        %3253 = vrot.lane.b32.xlu0 %v3112, 111
        %v3254 = vpop.permute.xlu0 %3253
        %v3255 = vsel %vm748, %v3248, %v3252
        %v3256 = vsel %vm748, %v3250, %v3254
        %v3257 = vsel %vm748, %v3252, %v3248
        %v3258 = vsel %vm748, %v3254, %v3250
        %v3259 = vmul.f32 %v3255, %v759
        %v3260 = vmul.f32 %v3257, %v763
        %v3261 = vmul.f32 %v3256, %v759
        %v3262 = vmul.f32 %v3258, %v763
        %v3263 = vpack.c.bf16 %v3261, %v3259
        %v3264 = vpack.c.bf16 %v3262, %v3260
        %3266 = vset.pattern.permute.xlu0 0
        %3267 = vperm.xlu0 %3266, %v3117
        %v3268 = vpop.permute.xlu0 %3267
        %3271 = vset.pattern.permute.xlu0 0
        %3272 = vperm.xlu0 %3271, %v3118
        %v3273 = vpop.permute.xlu0 %3272
        %v3277 = vunpack.c.l.b16 %v3114
        %v3278 = vunpack.c.h.b16 %v3114
        %v3279 = vunpack.c.l.b16 %v3115
        %v3280 = vunpack.c.h.b16 %v3115
        %v3281 = vpack.c.b16 %v3279, %v3277
        %v3282 = vpack.c.b16 %v3280, %v3278
        %v3285 = vsel %vm791, %v3282, 0
        %3287 = vmatprep.subr.bf16.mxu0 %v3246
        %3288 = vmatpush1.bf16.msra.mxu0 %v3245
        %3289 = vmatprep.subr.bf16.mxu0 %v3228
        %3290 = vmatpush1.bf16.msra.mxu0 %v3227
        %3291 = vmatprep.subr.bf16.mxu0 %v3210
        %3292 = vmatpush1.bf16.msra.mxu0 %v3209
        %3293 = vmatprep.subr.bf16.mxu0 %v3192
        %3294 = vmatpush1.bf16.msra.mxu0 %v3191
        %3295 = vmatprep.subr.bf16.mxu0 %v3190
        %3296 = vmatpush1.bf16.msra.mxu0 %v3189
        %3297 = vmatprep.subr.bf16.mxu0 %v3172
        %3298 = vmatpush1.bf16.msra.mxu0 %v3171
        %3299 = vmatprep.subr.bf16.mxu0 %v3154
        %3300 = vmatpush1.bf16.msra.mxu0 %v3153
        %3301 = vmatprep.subr.bf16.mxu0 %v3136
        %3302 = vmatpush1.bf16.msra.mxu0 %v3135
        %3303 = vmatprep.subr.bf16.mxu0 0
        %3304 = vmatpush2.bf16.msra.mxu0 0
        %3305 = vmatprep.subr.bf16.mxu0 0
        %3306 = vmatpush2.bf16.msra.mxu0 0
        %3307 = vmatprep.subr.bf16.mxu0 0
        %3308 = vmatpush2.bf16.msra.mxu0 0
        %3309 = vmatprep.subr.bf16.mxu0 0
        %3310 = vmatpush2.bf16.msra.mxu0 0
        %3311 = vmatprep.subr.bf16.mxu0 0
        %3312 = vmatpush2.bf16.msra.mxu0 0
        %3313 = vmatprep.subr.bf16.mxu0 0
        %3314 = vmatpush2.bf16.msra.mxu0 0
        %3315 = vmatprep.subr.bf16.mxu0 0
        %3316 = vmatpush2.bf16.msra.mxu0 0
        %3317 = vmatprep.subr.bf16.mxu0 %v3264
        %3318 = vmatpush2.bf16.msra.mxu0 %v3263
        %3319 = vmatprep.mubr.bf16.mxu0 %v3285
        %3320 = vmatmul.mubr.bf16.gmra.mxu0 %v3281
        %v3321 = vpop.f32.mrf.mxu0
        %v3322 = vadd.f32 %v3268, %v3321
        %v3323 = vpop.f32.mrf.mxu0
        %v3324 = vadd.f32 %v3268, %v3323
        %v3325 = vpop.f32.mrf.mxu0
        %v3326 = vadd.f32 %v3273, %v3325
        %v3327 = vpop.f32.mrf.mxu0
        %v3328 = vadd.f32 %v3273, %v3327
        %3329 = vdwg.mxu0
        %v3330 = vadd.f32 %v3322, %v2081
        %v3331 = vadd.f32 %v3324, %v2082
        %v3332 = vadd.f32 %v3326, %v2083
        %v3333 = vadd.f32 %v3328, %v2084
        %s3334 = scalar_lea.vmem [#allocation2], 176
        %v3335 = vld [vmem:[%s3334] sm:$0xff]
        %v3336 = vld [vmem:[%s3334 + $0x8] sm:$0xff]
        %s3337 = scalar_lea.vmem %s3, 176
        %v3338 = vld [vmem:[%s3337] sm:$0xff]
        %v3339 = vld [vmem:[%s3337 + $0x8] sm:$0xff]
        %3340 = vrot.lane.b32.xlu0 %v3330, 17
        %v3341 = vpop.permute.xlu0 %3340
        %3342 = vrot.lane.b32.xlu0 %v3332, 17
        %v3343 = vpop.permute.xlu0 %3342
        %3344 = vrot.lane.b32.xlu0 %v3331, 17
        %v3345 = vpop.permute.xlu0 %3344
        %3346 = vrot.lane.b32.xlu0 %v3333, 17
        %v3347 = vpop.permute.xlu0 %3346
        %v3348 = vsel %vm523, %v3341, %v3345
        %v3349 = vsel %vm523, %v3343, %v3347
        %v3350 = vsel %vm523, %v3345, %v3341
        %v3351 = vsel %vm523, %v3347, %v3343
        %v3352 = vmul.f32 %v3350, %v533
        %v3353 = vmul.f32 %v3348, %v537
        %v3354 = vmul.f32 %v3351, %v533
        %v3355 = vmul.f32 %v3349, %v537
        %v3356 = vpack.c.bf16 %v3354, %v3352
        %v3357 = vpack.c.bf16 %v3355, %v3353
        %3358 = vrot.lane.b32.xlu0 %v3330, 16
        %v3359 = vpop.permute.xlu0 %3358
        %3360 = vrot.lane.b32.xlu0 %v3332, 16
        %v3361 = vpop.permute.xlu0 %3360
        %3362 = vrot.lane.b32.xlu0 %v3331, 16
        %v3363 = vpop.permute.xlu0 %3362
        %3364 = vrot.lane.b32.xlu0 %v3333, 16
        %v3365 = vpop.permute.xlu0 %3364
        %v3366 = vsel %vm554, %v3359, %v3363
        %v3367 = vsel %vm554, %v3361, %v3365
        %v3368 = vsel %vm554, %v3363, %v3359
        %v3369 = vsel %vm554, %v3365, %v3361
        %v3370 = vmul.f32 %v3368, %v565
        %v3371 = vmul.f32 %v3366, %v569
        %v3372 = vmul.f32 %v3369, %v565
        %v3373 = vmul.f32 %v3367, %v569
        %v3374 = vpack.c.bf16 %v3372, %v3370
        %v3375 = vpack.c.bf16 %v3373, %v3371
        %3376 = vrot.lane.b32.xlu0 %v3330, 15
        %v3377 = vpop.permute.xlu0 %3376
        %3378 = vrot.lane.b32.xlu0 %v3332, 15
        %v3379 = vpop.permute.xlu0 %3378
        %3380 = vrot.lane.b32.xlu0 %v3331, 15
        %v3381 = vpop.permute.xlu0 %3380
        %3382 = vrot.lane.b32.xlu0 %v3333, 15
        %v3383 = vpop.permute.xlu0 %3382
        %v3384 = vsel %vm586, %v3377, %v3381
        %v3385 = vsel %vm586, %v3379, %v3383
        %v3386 = vsel %vm586, %v3381, %v3377
        %v3387 = vsel %vm586, %v3383, %v3379
        %v3388 = vmul.f32 %v3386, %v597
        %v3389 = vmul.f32 %v3384, %v601
        %v3390 = vmul.f32 %v3387, %v597
        %v3391 = vmul.f32 %v3385, %v601
        %v3392 = vpack.c.bf16 %v3390, %v3388
        %v3393 = vpack.c.bf16 %v3391, %v3389
        %3394 = vrot.lane.b32.xlu0 %v3330, 1
        %v3395 = vpop.permute.xlu0 %3394
        %3396 = vrot.lane.b32.xlu0 %v3332, 1
        %v3397 = vpop.permute.xlu0 %3396
        %3398 = vrot.lane.b32.xlu0 %v3331, 1
        %v3399 = vpop.permute.xlu0 %3398
        %3400 = vrot.lane.b32.xlu0 %v3333, 1
        %v3401 = vpop.permute.xlu0 %3400
        %v3402 = vsel %vm618, %v3395, %v3399
        %v3403 = vsel %vm618, %v3397, %v3401
        %v3404 = vsel %vm618, %v3399, %v3395
        %v3405 = vsel %vm618, %v3401, %v3397
        %v3406 = vmul.f32 %v3404, %v629
        %v3407 = vmul.f32 %v3402, %v633
        %v3408 = vmul.f32 %v3405, %v629
        %v3409 = vmul.f32 %v3403, %v633
        %v3410 = vpack.c.bf16 %v3408, %v3406
        %v3411 = vpack.c.bf16 %v3409, %v3407
        %v3412 = vpack.c.bf16 %v3332, %v3330
        %v3413 = vpack.c.bf16 %v3333, %v3331
        %3414 = vrot.lane.b32.xlu0 %v3330, 127
        %v3415 = vpop.permute.xlu0 %3414
        %3416 = vrot.lane.b32.xlu0 %v3332, 127
        %v3417 = vpop.permute.xlu0 %3416
        %3418 = vrot.lane.b32.xlu0 %v3331, 127
        %v3419 = vpop.permute.xlu0 %3418
        %3420 = vrot.lane.b32.xlu0 %v3333, 127
        %v3421 = vpop.permute.xlu0 %3420
        %v3422 = vsel %vm652, %v3415, %v3419
        %v3423 = vsel %vm652, %v3417, %v3421
        %v3424 = vsel %vm652, %v3419, %v3415
        %v3425 = vsel %vm652, %v3421, %v3417
        %v3426 = vmul.f32 %v3422, %v663
        %v3427 = vmul.f32 %v3424, %v667
        %v3428 = vmul.f32 %v3423, %v663
        %v3429 = vmul.f32 %v3425, %v667
        %v3430 = vpack.c.bf16 %v3428, %v3426
        %v3431 = vpack.c.bf16 %v3429, %v3427
        %3432 = vrot.lane.b32.xlu0 %v3330, 113
        %v3433 = vpop.permute.xlu0 %3432
        %3434 = vrot.lane.b32.xlu0 %v3332, 113
        %v3435 = vpop.permute.xlu0 %3434
        %3436 = vrot.lane.b32.xlu0 %v3331, 113
        %v3437 = vpop.permute.xlu0 %3436
        %3438 = vrot.lane.b32.xlu0 %v3333, 113
        %v3439 = vpop.permute.xlu0 %3438
        %v3440 = vsel %vm684, %v3433, %v3437
        %v3441 = vsel %vm684, %v3435, %v3439
        %v3442 = vsel %vm684, %v3437, %v3433
        %v3443 = vsel %vm684, %v3439, %v3435
        %v3444 = vmul.f32 %v3440, %v695
        %v3445 = vmul.f32 %v3442, %v699
        %v3446 = vmul.f32 %v3441, %v695
        %v3447 = vmul.f32 %v3443, %v699
        %v3448 = vpack.c.bf16 %v3446, %v3444
        %v3449 = vpack.c.bf16 %v3447, %v3445
        %3450 = vrot.lane.b32.xlu0 %v3330, 112
        %v3451 = vpop.permute.xlu0 %3450
        %3452 = vrot.lane.b32.xlu0 %v3332, 112
        %v3453 = vpop.permute.xlu0 %3452
        %3454 = vrot.lane.b32.xlu0 %v3331, 112
        %v3455 = vpop.permute.xlu0 %3454
        %3456 = vrot.lane.b32.xlu0 %v3333, 112
        %v3457 = vpop.permute.xlu0 %3456
        %v3458 = vsel %vm716, %v3451, %v3455
        %v3459 = vsel %vm716, %v3453, %v3457
        %v3460 = vsel %vm716, %v3455, %v3451
        %v3461 = vsel %vm716, %v3457, %v3453
        %v3462 = vmul.f32 %v3458, %v727
        %v3463 = vmul.f32 %v3460, %v731
        %v3464 = vmul.f32 %v3459, %v727
        %v3465 = vmul.f32 %v3461, %v731
        %v3466 = vpack.c.bf16 %v3464, %v3462
        %v3467 = vpack.c.bf16 %v3465, %v3463
        %3468 = vrot.lane.b32.xlu0 %v3330, 111
        %v3469 = vpop.permute.xlu0 %3468
        %3470 = vrot.lane.b32.xlu0 %v3332, 111
        %v3471 = vpop.permute.xlu0 %3470
        %3472 = vrot.lane.b32.xlu0 %v3331, 111
        %v3473 = vpop.permute.xlu0 %3472
        %3474 = vrot.lane.b32.xlu0 %v3333, 111
        %v3475 = vpop.permute.xlu0 %3474
        %v3476 = vsel %vm748, %v3469, %v3473
        %v3477 = vsel %vm748, %v3471, %v3475
        %v3478 = vsel %vm748, %v3473, %v3469
        %v3479 = vsel %vm748, %v3475, %v3471
        %v3480 = vmul.f32 %v3476, %v759
        %v3481 = vmul.f32 %v3478, %v763
        %v3482 = vmul.f32 %v3477, %v759
        %v3483 = vmul.f32 %v3479, %v763
        %v3484 = vpack.c.bf16 %v3482, %v3480
        %v3485 = vpack.c.bf16 %v3483, %v3481
        %3487 = vset.pattern.permute.xlu0 0
        %3488 = vperm.xlu0 %3487, %v3338
        %v3489 = vpop.permute.xlu0 %3488
        %3492 = vset.pattern.permute.xlu0 0
        %3493 = vperm.xlu0 %3492, %v3339
        %v3494 = vpop.permute.xlu0 %3493
        %v3498 = vunpack.c.l.b16 %v3335
        %v3499 = vunpack.c.h.b16 %v3335
        %v3500 = vunpack.c.l.b16 %v3336
        %v3501 = vunpack.c.h.b16 %v3336
        %v3502 = vpack.c.b16 %v3500, %v3498
        %v3503 = vpack.c.b16 %v3501, %v3499
        %v3506 = vsel %vm791, %v3503, 0
        %3508 = vmatprep.subr.bf16.mxu0 %v3467
        %3509 = vmatpush1.bf16.msra.mxu0 %v3466
        %3510 = vmatprep.subr.bf16.mxu0 %v3449
        %3511 = vmatpush1.bf16.msra.mxu0 %v3448
        %3512 = vmatprep.subr.bf16.mxu0 %v3431
        %3513 = vmatpush1.bf16.msra.mxu0 %v3430
        %3514 = vmatprep.subr.bf16.mxu0 %v3413
        %3515 = vmatpush1.bf16.msra.mxu0 %v3412
        %3516 = vmatprep.subr.bf16.mxu0 %v3411
        %3517 = vmatpush1.bf16.msra.mxu0 %v3410
        %3518 = vmatprep.subr.bf16.mxu0 %v3393
        %3519 = vmatpush1.bf16.msra.mxu0 %v3392
        %3520 = vmatprep.subr.bf16.mxu0 %v3375
        %3521 = vmatpush1.bf16.msra.mxu0 %v3374
        %3522 = vmatprep.subr.bf16.mxu0 %v3357
        %3523 = vmatpush1.bf16.msra.mxu0 %v3356
        %3524 = vmatprep.subr.bf16.mxu0 0
        %3525 = vmatpush2.bf16.msra.mxu0 0
        %3526 = vmatprep.subr.bf16.mxu0 0
        %3527 = vmatpush2.bf16.msra.mxu0 0
        %3528 = vmatprep.subr.bf16.mxu0 0
        %3529 = vmatpush2.bf16.msra.mxu0 0
        %3530 = vmatprep.subr.bf16.mxu0 0
        %3531 = vmatpush2.bf16.msra.mxu0 0
        %3532 = vmatprep.subr.bf16.mxu0 0
        %3533 = vmatpush2.bf16.msra.mxu0 0
        %3534 = vmatprep.subr.bf16.mxu0 0
        %3535 = vmatpush2.bf16.msra.mxu0 0
        %3536 = vmatprep.subr.bf16.mxu0 0
        %3537 = vmatpush2.bf16.msra.mxu0 0
        %3538 = vmatprep.subr.bf16.mxu0 %v3485
        %3539 = vmatpush2.bf16.msra.mxu0 %v3484
        %3540 = vmatprep.mubr.bf16.mxu0 %v3506
        %3541 = vmatmul.mubr.bf16.gmra.mxu0 %v3502
        %v3542 = vpop.f32.mrf.mxu0
        %v3543 = vadd.f32 %v3489, %v3542
        %v3544 = vpop.f32.mrf.mxu0
        %v3545 = vadd.f32 %v3489, %v3544
        %v3546 = vpop.f32.mrf.mxu0
        %v3547 = vadd.f32 %v3494, %v3546
        %v3548 = vpop.f32.mrf.mxu0
        %v3549 = vadd.f32 %v3494, %v3548
        %3550 = vdwg.mxu0
        %v3551 = vadd.f32 %v3543, %v830
        %v3552 = vadd.f32 %v3545, %v832
        %v3553 = vadd.f32 %v3547, %v834
        %v3554 = vadd.f32 %v3549, %v836
        %v3555 = vld [vmem:[#allocation6] sm:$0xff]
        %v3556 = vld [vmem:[#allocation6 + $0x8] sm:$0xff]
        %v3557 = vld [vmem:[#allocation6 + $0x10] sm:$0xff]
        %v3558 = vld [vmem:[#allocation6 + $0x18] sm:$0xff]
        %v3559 = vld [vmem:[#allocation6 + $0x20] sm:$0xff]
        %v3560 = vld [vmem:[#allocation6 + $0x28] sm:$0xff]
        %v3561 = vld [vmem:[#allocation6 + $0x30] sm:$0xff]
        %v3562 = vld [vmem:[#allocation6 + $0x38] sm:$0xff]
        %v3563 = vld [vmem:[%s9] sm:$0xff]
        %v3564 = vld [vmem:[%s9 + $0x8] sm:$0xff]
        %v3565 = vld [vmem:[%s9 + $0x10] sm:$0xff]
        %v3566 = vld [vmem:[%s9 + $0x18] sm:$0xff]
        %v3567 = vld [vmem:[%s9 + $0x20] sm:$0xff]
        %v3568 = vld [vmem:[%s9 + $0x28] sm:$0xff]
        %v3569 = vld [vmem:[%s9 + $0x30] sm:$0xff]
        %v3570 = vld [vmem:[%s9 + $0x38] sm:$0xff]
        %3571 = vrot.lane.b32.xlu0 %v3551, 17
        %v3572 = vpop.permute.xlu0 %3571
        %3573 = vrot.lane.b32.xlu0 %v3553, 17
        %v3574 = vpop.permute.xlu0 %3573
        %3575 = vrot.lane.b32.xlu0 %v3552, 17
        %v3576 = vpop.permute.xlu0 %3575
        %3577 = vrot.lane.b32.xlu0 %v3554, 17
        %v3578 = vpop.permute.xlu0 %3577
        %v3579 = vsel %vm523, %v3572, %v3576
        %v3580 = vsel %vm523, %v3574, %v3578
        %v3581 = vsel %vm523, %v3576, %v3572
        %v3582 = vsel %vm523, %v3578, %v3574
        %v3583 = vmul.f32 %v3581, %v533
        %v3584 = vmul.f32 %v3579, %v537
        %v3585 = vmul.f32 %v3582, %v533
        %v3586 = vmul.f32 %v3580, %v537
        %v3587 = vpack.c.bf16 %v3585, %v3583
        %v3588 = vpack.c.bf16 %v3586, %v3584
        %3589 = vrot.lane.b32.xlu0 %v3551, 16
        %v3590 = vpop.permute.xlu0 %3589
        %3591 = vrot.lane.b32.xlu0 %v3553, 16
        %v3592 = vpop.permute.xlu0 %3591
        %3593 = vrot.lane.b32.xlu0 %v3552, 16
        %v3594 = vpop.permute.xlu0 %3593
        %3595 = vrot.lane.b32.xlu0 %v3554, 16
        %v3596 = vpop.permute.xlu0 %3595
        %v3597 = vsel %vm554, %v3590, %v3594
        %v3598 = vsel %vm554, %v3592, %v3596
        %v3599 = vsel %vm554, %v3594, %v3590
        %v3600 = vsel %vm554, %v3596, %v3592
        %v3601 = vmul.f32 %v3599, %v565
        %v3602 = vmul.f32 %v3597, %v569
        %v3603 = vmul.f32 %v3600, %v565
        %v3604 = vmul.f32 %v3598, %v569
        %v3605 = vpack.c.bf16 %v3603, %v3601
        %v3606 = vpack.c.bf16 %v3604, %v3602
        %3607 = vrot.lane.b32.xlu0 %v3551, 15
        %v3608 = vpop.permute.xlu0 %3607
        %3609 = vrot.lane.b32.xlu0 %v3553, 15
        %v3610 = vpop.permute.xlu0 %3609
        %3611 = vrot.lane.b32.xlu0 %v3552, 15
        %v3612 = vpop.permute.xlu0 %3611
        %3613 = vrot.lane.b32.xlu0 %v3554, 15
        %v3614 = vpop.permute.xlu0 %3613
        %v3615 = vsel %vm586, %v3608, %v3612
        %v3616 = vsel %vm586, %v3610, %v3614
        %v3617 = vsel %vm586, %v3612, %v3608
        %v3618 = vsel %vm586, %v3614, %v3610
        %v3619 = vmul.f32 %v3617, %v597
        %v3620 = vmul.f32 %v3615, %v601
        %v3621 = vmul.f32 %v3618, %v597
        %v3622 = vmul.f32 %v3616, %v601
        %v3623 = vpack.c.bf16 %v3621, %v3619
        %v3624 = vpack.c.bf16 %v3622, %v3620
        %3625 = vrot.lane.b32.xlu0 %v3551, 1
        %v3626 = vpop.permute.xlu0 %3625
        %3627 = vrot.lane.b32.xlu0 %v3553, 1
        %v3628 = vpop.permute.xlu0 %3627
        %3629 = vrot.lane.b32.xlu0 %v3552, 1
        %v3630 = vpop.permute.xlu0 %3629
        %3631 = vrot.lane.b32.xlu0 %v3554, 1
        %v3632 = vpop.permute.xlu0 %3631
        %v3633 = vsel %vm618, %v3626, %v3630
        %v3634 = vsel %vm618, %v3628, %v3632
        %v3635 = vsel %vm618, %v3630, %v3626
        %v3636 = vsel %vm618, %v3632, %v3628
        %v3637 = vmul.f32 %v3635, %v629
        %v3638 = vmul.f32 %v3633, %v633
        %v3639 = vmul.f32 %v3636, %v629
        %v3640 = vmul.f32 %v3634, %v633
        %v3641 = vpack.c.bf16 %v3639, %v3637
        %v3642 = vpack.c.bf16 %v3640, %v3638
        %v3643 = vpack.c.bf16 %v3553, %v3551
        %v3644 = vpack.c.bf16 %v3554, %v3552
        %3645 = vrot.lane.b32.xlu0 %v3551, 127
        %v3646 = vpop.permute.xlu0 %3645
        %3647 = vrot.lane.b32.xlu0 %v3553, 127
        %v3648 = vpop.permute.xlu0 %3647
        %3649 = vrot.lane.b32.xlu0 %v3552, 127
        %v3650 = vpop.permute.xlu0 %3649
        %3651 = vrot.lane.b32.xlu0 %v3554, 127
        %v3652 = vpop.permute.xlu0 %3651
        %v3653 = vsel %vm652, %v3646, %v3650
        %v3654 = vsel %vm652, %v3648, %v3652
        %v3655 = vsel %vm652, %v3650, %v3646
        %v3656 = vsel %vm652, %v3652, %v3648
        %v3657 = vmul.f32 %v3653, %v663
        %v3658 = vmul.f32 %v3655, %v667
        %v3659 = vmul.f32 %v3654, %v663
        %v3660 = vmul.f32 %v3656, %v667
        %v3661 = vpack.c.bf16 %v3659, %v3657
        %v3662 = vpack.c.bf16 %v3660, %v3658
        %3663 = vrot.lane.b32.xlu0 %v3551, 113
        %v3664 = vpop.permute.xlu0 %3663
        %3665 = vrot.lane.b32.xlu0 %v3553, 113
        %v3666 = vpop.permute.xlu0 %3665
        %3667 = vrot.lane.b32.xlu0 %v3552, 113
        %v3668 = vpop.permute.xlu0 %3667
        %3669 = vrot.lane.b32.xlu0 %v3554, 113
        %v3670 = vpop.permute.xlu0 %3669
        %v3671 = vsel %vm684, %v3664, %v3668
        %v3672 = vsel %vm684, %v3666, %v3670
        %v3673 = vsel %vm684, %v3668, %v3664
        %v3674 = vsel %vm684, %v3670, %v3666
        %v3675 = vmul.f32 %v3671, %v695
        %v3676 = vmul.f32 %v3673, %v699
        %v3677 = vmul.f32 %v3672, %v695
        %v3678 = vmul.f32 %v3674, %v699
        %v3679 = vpack.c.bf16 %v3677, %v3675
        %v3680 = vpack.c.bf16 %v3678, %v3676
        %3681 = vrot.lane.b32.xlu0 %v3551, 112
        %v3682 = vpop.permute.xlu0 %3681
        %3683 = vrot.lane.b32.xlu0 %v3553, 112
        %v3684 = vpop.permute.xlu0 %3683
        %3685 = vrot.lane.b32.xlu0 %v3552, 112
        %v3686 = vpop.permute.xlu0 %3685
        %3687 = vrot.lane.b32.xlu0 %v3554, 112
        %v3688 = vpop.permute.xlu0 %3687
        %v3689 = vsel %vm716, %v3682, %v3686
        %v3690 = vsel %vm716, %v3684, %v3688
        %v3691 = vsel %vm716, %v3686, %v3682
        %v3692 = vsel %vm716, %v3688, %v3684
        %v3693 = vmul.f32 %v3689, %v727
        %v3694 = vmul.f32 %v3691, %v731
        %v3695 = vmul.f32 %v3690, %v727
        %v3696 = vmul.f32 %v3692, %v731
        %v3697 = vpack.c.bf16 %v3695, %v3693
        %v3698 = vpack.c.bf16 %v3696, %v3694
        %3699 = vrot.lane.b32.xlu0 %v3551, 111
        %v3700 = vpop.permute.xlu0 %3699
        %3701 = vrot.lane.b32.xlu0 %v3553, 111
        %v3702 = vpop.permute.xlu0 %3701
        %3703 = vrot.lane.b32.xlu0 %v3552, 111
        %v3704 = vpop.permute.xlu0 %3703
        %3705 = vrot.lane.b32.xlu0 %v3554, 111
        %v3706 = vpop.permute.xlu0 %3705
        %v3707 = vsel %vm748, %v3700, %v3704
        %v3708 = vsel %vm748, %v3702, %v3706
        %v3709 = vsel %vm748, %v3704, %v3700
        %v3710 = vsel %vm748, %v3706, %v3702
        %v3711 = vmul.f32 %v3707, %v759
        %v3712 = vmul.f32 %v3709, %v763
        %v3713 = vmul.f32 %v3708, %v759
        %v3714 = vmul.f32 %v3710, %v763
        %v3715 = vpack.c.bf16 %v3713, %v3711
        %v3716 = vpack.c.bf16 %v3714, %v3712
        %3718 = vset.pattern.permute.xlu0 0
        %3719 = vperm.xlu0 %3718, %v3563
        %v3720 = vpop.permute.xlu0 %3719
        %3723 = vset.pattern.permute.xlu0 0
        %3724 = vperm.xlu0 %3723, %v3564
        %v3725 = vpop.permute.xlu0 %3724
        %3728 = vset.pattern.permute.xlu0 0
        %3729 = vperm.xlu0 %3728, %v3565
        %v3730 = vpop.permute.xlu0 %3729
        %3733 = vset.pattern.permute.xlu0 0
        %3734 = vperm.xlu0 %3733, %v3566
        %v3735 = vpop.permute.xlu0 %3734
        %3738 = vset.pattern.permute.xlu0 0
        %3739 = vperm.xlu0 %3738, %v3567
        %v3740 = vpop.permute.xlu0 %3739
        %3743 = vset.pattern.permute.xlu0 0
        %3744 = vperm.xlu0 %3743, %v3568
        %v3745 = vpop.permute.xlu0 %3744
        %3748 = vset.pattern.permute.xlu0 0
        %3749 = vperm.xlu0 %3748, %v3569
        %v3750 = vpop.permute.xlu0 %3749
        %3753 = vset.pattern.permute.xlu0 0
        %3754 = vperm.xlu0 %3753, %v3570
        %v3755 = vpop.permute.xlu0 %3754
        %v3765 = vunpack.c.l.b16 %v3555
        %v3766 = vunpack.c.h.b16 %v3555
        %v3767 = vunpack.c.l.b16 %v3556
        %v3768 = vunpack.c.h.b16 %v3556
        %v3769 = vunpack.c.l.b16 %v3557
        %v3770 = vunpack.c.h.b16 %v3557
        %v3771 = vunpack.c.l.b16 %v3558
        %v3772 = vunpack.c.h.b16 %v3558
        %v3773 = vunpack.c.l.b16 %v3559
        %v3774 = vunpack.c.h.b16 %v3559
        %v3775 = vunpack.c.l.b16 %v3560
        %v3776 = vunpack.c.h.b16 %v3560
        %v3777 = vunpack.c.l.b16 %v3561
        %v3778 = vunpack.c.h.b16 %v3561
        %v3779 = vunpack.c.l.b16 %v3562
        %v3780 = vunpack.c.h.b16 %v3562
        %v3781 = vpack.c.b16 %v3767, %v3765
        %v3782 = vpack.c.b16 %v3768, %v3766
        %v3783 = vpack.c.b16 %v3771, %v3769
        %v3784 = vpack.c.b16 %v3772, %v3770
        %v3785 = vpack.c.b16 %v3775, %v3773
        %v3786 = vpack.c.b16 %v3776, %v3774
        %v3787 = vpack.c.b16 %v3779, %v3777
        %v3788 = vpack.c.b16 %v3780, %v3778
        %v3794 = vsel %vm791, %v3782, 0
        %v3797 = vsel %vm791, %v3784, 0
        %v3800 = vsel %vm791, %v3786, 0
        %v3803 = vsel %vm791, %v3788, 0
        %3805 = vmatprep.subr.bf16.mxu0 %v3698
        %3806 = vmatpush1.bf16.msra.mxu0 %v3697
        %3807 = vmatprep.subr.bf16.mxu0 %v3680
        %3808 = vmatpush1.bf16.msra.mxu0 %v3679
        %3809 = vmatprep.subr.bf16.mxu0 %v3662
        %3810 = vmatpush1.bf16.msra.mxu0 %v3661
        %3811 = vmatprep.subr.bf16.mxu0 %v3644
        %3812 = vmatpush1.bf16.msra.mxu0 %v3643
        %3813 = vmatprep.subr.bf16.mxu0 %v3642
        %3814 = vmatpush1.bf16.msra.mxu0 %v3641
        %3815 = vmatprep.subr.bf16.mxu0 %v3624
        %3816 = vmatpush1.bf16.msra.mxu0 %v3623
        %3817 = vmatprep.subr.bf16.mxu0 %v3606
        %3818 = vmatpush1.bf16.msra.mxu0 %v3605
        %3819 = vmatprep.subr.bf16.mxu0 %v3588
        %3820 = vmatpush1.bf16.msra.mxu0 %v3587
        %3821 = vmatprep.subr.bf16.mxu0 0
        %3822 = vmatpush2.bf16.msra.mxu0 0
        %3823 = vmatprep.subr.bf16.mxu0 0
        %3824 = vmatpush2.bf16.msra.mxu0 0
        %3825 = vmatprep.subr.bf16.mxu0 0
        %3826 = vmatpush2.bf16.msra.mxu0 0
        %3827 = vmatprep.subr.bf16.mxu0 0
        %3828 = vmatpush2.bf16.msra.mxu0 0
        %3829 = vmatprep.subr.bf16.mxu0 0
        %3830 = vmatpush2.bf16.msra.mxu0 0
        %3831 = vmatprep.subr.bf16.mxu0 0
        %3832 = vmatpush2.bf16.msra.mxu0 0
        %3833 = vmatprep.subr.bf16.mxu0 0
        %3834 = vmatpush2.bf16.msra.mxu0 0
        %3835 = vmatprep.subr.bf16.mxu0 %v3716
        %3836 = vmatpush2.bf16.msra.mxu0 %v3715
        %3837 = vmatprep.mubr.bf16.mxu0 %v3794
        %3838 = vmatmul.mubr.bf16.gmra.mxu0 %v3781
        %v3839 = vpop.f32.mrf.mxu0
        %v3840 = vadd.f32 %v3720, %v3839
        %v3841 = vpop.f32.mrf.mxu0
        %v3842 = vadd.f32 %v3720, %v3841
        %v3843 = vpop.f32.mrf.mxu0
        %v3844 = vadd.f32 %v3725, %v3843
        %v3845 = vpop.f32.mrf.mxu0
        %v3846 = vadd.f32 %v3725, %v3845
        %3847 = vmatprep.mubr.bf16.mxu0 %v3797
        %3848 = vmatmul.mubr.bf16.gmra.mxu0 %v3783
        %v3849 = vpop.f32.mrf.mxu0
        %v3850 = vadd.f32 %v3730, %v3849
        %v3851 = vpop.f32.mrf.mxu0
        %v3852 = vadd.f32 %v3730, %v3851
        %v3853 = vpop.f32.mrf.mxu0
        %v3854 = vadd.f32 %v3735, %v3853
        %v3855 = vpop.f32.mrf.mxu0
        %v3856 = vadd.f32 %v3735, %v3855
        %3857 = vmatprep.mubr.bf16.mxu0 %v3800
        %3858 = vmatmul.mubr.bf16.gmra.mxu0 %v3785
        %v3859 = vpop.f32.mrf.mxu0
        %v3860 = vadd.f32 %v3740, %v3859
        %v3861 = vpop.f32.mrf.mxu0
        %v3862 = vadd.f32 %v3740, %v3861
        %v3863 = vpop.f32.mrf.mxu0
        %v3864 = vadd.f32 %v3745, %v3863
        %v3865 = vpop.f32.mrf.mxu0
        %v3866 = vadd.f32 %v3745, %v3865
        %3867 = vmatprep.mubr.bf16.mxu0 %v3803
        %3868 = vmatmul.mubr.bf16.gmra.mxu0 %v3787
        %v3869 = vpop.f32.mrf.mxu0
        %v3870 = vadd.f32 %v3750, %v3869
        %v3871 = vpop.f32.mrf.mxu0
        %v3872 = vadd.f32 %v3750, %v3871
        %v3873 = vpop.f32.mrf.mxu0
        %v3874 = vadd.f32 %v3755, %v3873
        %v3875 = vpop.f32.mrf.mxu0
        %v3876 = vadd.f32 %v3755, %v3875
        %3877 = vdwg.mxu0
        %v3878 = vld [vmem:[#allocation7] sm:$0xf]
        %v3879 = vld [vmem:[%s11] sm:$0x7]
        %3880 = vrot.lane.b32.xlu0 %v3870, 17
        %v3881 = vpop.permute.xlu0 %3880
        %3882 = vrot.lane.b32.xlu0 %v3874, 17
        %v3883 = vpop.permute.xlu0 %3882
        %3884 = vrot.lane.b32.xlu0 %v3872, 17
        %v3885 = vpop.permute.xlu0 %3884
        %3886 = vrot.lane.b32.xlu0 %v3876, 17
        %v3887 = vpop.permute.xlu0 %3886
        %v3888 = vsel %vm523, %v3881, %v3885
        %v3889 = vsel %vm523, %v3883, %v3887
        %v3890 = vsel %vm523, %v3885, %v3881
        %v3891 = vsel %vm523, %v3887, %v3883
        %v3892 = vmul.f32 %v3890, %v533
        %v3893 = vmul.f32 %v3888, %v537
        %v3894 = vmul.f32 %v3891, %v533
        %v3895 = vmul.f32 %v3889, %v537
        %v3896 = vpack.c.bf16 %v3894, %v3892
        %v3897 = vpack.c.bf16 %v3895, %v3893
        %3898 = vrot.lane.b32.xlu0 %v3860, 16
        %v3899 = vpop.permute.xlu0 %3898
        %3900 = vrot.lane.b32.xlu0 %v3864, 16
        %v3901 = vpop.permute.xlu0 %3900
        %3902 = vrot.lane.b32.xlu0 %v3862, 16
        %v3903 = vpop.permute.xlu0 %3902
        %3904 = vrot.lane.b32.xlu0 %v3866, 16
        %v3905 = vpop.permute.xlu0 %3904
        %v3906 = vsel %vm554, %v3899, %v3903
        %v3907 = vsel %vm554, %v3901, %v3905
        %v3908 = vsel %vm554, %v3903, %v3899
        %v3909 = vsel %vm554, %v3905, %v3901
        %v3910 = vmul.f32 %v3908, %v565
        %v3911 = vmul.f32 %v3906, %v569
        %v3912 = vmul.f32 %v3909, %v565
        %v3913 = vmul.f32 %v3907, %v569
        %v3914 = vpack.c.bf16 %v3912, %v3910
        %v3915 = vpack.c.bf16 %v3913, %v3911
        %3916 = vrot.lane.b32.xlu0 %v3870, 16
        %v3917 = vpop.permute.xlu0 %3916
        %3918 = vrot.lane.b32.xlu0 %v3874, 16
        %v3919 = vpop.permute.xlu0 %3918
        %3920 = vrot.lane.b32.xlu0 %v3872, 16
        %v3921 = vpop.permute.xlu0 %3920
        %3922 = vrot.lane.b32.xlu0 %v3876, 16
        %v3923 = vpop.permute.xlu0 %3922
        %v3924 = vsel %vm554, %v3917, %v3921
        %v3925 = vsel %vm554, %v3919, %v3923
        %v3926 = vsel %vm554, %v3921, %v3917
        %v3927 = vsel %vm554, %v3923, %v3919
        %v3928 = vmul.f32 %v3926, %v565
        %v3929 = vmul.f32 %v3924, %v569
        %v3930 = vmul.f32 %v3927, %v565
        %v3931 = vmul.f32 %v3925, %v569
        %v3932 = vpack.c.bf16 %v3930, %v3928
        %v3933 = vpack.c.bf16 %v3931, %v3929
        %3934 = vrot.lane.b32.xlu0 %v3850, 1
        %v3935 = vpop.permute.xlu0 %3934
        %3936 = vrot.lane.b32.xlu0 %v3854, 1
        %v3937 = vpop.permute.xlu0 %3936
        %3938 = vrot.lane.b32.xlu0 %v3852, 1
        %v3939 = vpop.permute.xlu0 %3938
        %3940 = vrot.lane.b32.xlu0 %v3856, 1
        %v3941 = vpop.permute.xlu0 %3940
        %v3942 = vsel %vm618, %v3935, %v3939
        %v3943 = vsel %vm618, %v3937, %v3941
        %v3944 = vsel %vm618, %v3939, %v3935
        %v3945 = vsel %vm618, %v3941, %v3937
        %v3946 = vmul.f32 %v3944, %v629
        %v3947 = vmul.f32 %v3942, %v633
        %v3948 = vmul.f32 %v3945, %v629
        %v3949 = vmul.f32 %v3943, %v633
        %v3950 = vpack.c.bf16 %v3948, %v3946
        %v3951 = vpack.c.bf16 %v3949, %v3947
        %v3952 = vpack.c.bf16 %v3844, %v3840
        %v3953 = vpack.c.bf16 %v3846, %v3842
        %v3954 = vpack.c.bf16 %v3854, %v3850
        %v3955 = vpack.c.bf16 %v3856, %v3852
        %3956 = vrot.lane.b32.xlu0 %v3870, 1
        %v3957 = vpop.permute.xlu0 %3956
        %3958 = vrot.lane.b32.xlu0 %v3874, 1
        %v3959 = vpop.permute.xlu0 %3958
        %3960 = vrot.lane.b32.xlu0 %v3872, 1
        %v3961 = vpop.permute.xlu0 %3960
        %3962 = vrot.lane.b32.xlu0 %v3876, 1
        %v3963 = vpop.permute.xlu0 %3962
        %v3964 = vsel %vm618, %v3957, %v3961
        %v3965 = vsel %vm618, %v3959, %v3963
        %v3966 = vsel %vm618, %v3961, %v3957
        %v3967 = vsel %vm618, %v3963, %v3959
        %v3968 = vmul.f32 %v3966, %v629
        %v3969 = vmul.f32 %v3964, %v633
        %v3970 = vmul.f32 %v3967, %v629
        %v3971 = vmul.f32 %v3965, %v633
        %v3972 = vpack.c.bf16 %v3970, %v3968
        %v3973 = vpack.c.bf16 %v3971, %v3969
        %v3974 = vpack.c.bf16 %v3864, %v3860
        %v3975 = vpack.c.bf16 %v3866, %v3862
        %v3976 = vpack.c.bf16 %v3874, %v3870
        %v3977 = vpack.c.bf16 %v3876, %v3872
        %3979 = vset.pattern.permute.xlu0 0
        %3980 = vperm.xlu0 %3979, %v3879
        %v3981 = vpop.permute.xlu0 %3980
        %v3985 = vunpack.c.l.s4 1983009808
        %v3986 = vunpack.c.0.s8 %v3985
        %v3987 = vlaneseq
        %v3988 = vshrl.u32 %v3987, 7
        %v3989 = vsub.s32 %v3986, %v3988
        %v3990 = vrot.slane %v3878, %v3989
        %v3991 = vcombine.high %v3990, %v3990
        %v3994 = vsel %vm791, %v3991, 0
        %3996 = vmatprep.subr.bf16.mxu0 %v3975
        %3997 = vmatpush1.bf16.msra.mxu0 %v3974
        %3998 = vmatprep.subr.bf16.mxu0 %v3973
        %3999 = vmatpush1.bf16.msra.mxu0 %v3972
        %4000 = vmatprep.subr.bf16.mxu0 %v3955
        %4001 = vmatpush1.bf16.msra.mxu0 %v3954
        %4002 = vmatprep.subr.bf16.mxu0 %v3953
        %4003 = vmatpush1.bf16.msra.mxu0 %v3952
        %4004 = vmatprep.subr.bf16.mxu0 %v3951
        %4005 = vmatpush1.bf16.msra.mxu0 %v3950
        %4006 = vmatprep.subr.bf16.mxu0 %v3933
        %4007 = vmatpush1.bf16.msra.mxu0 %v3932
        %4008 = vmatprep.subr.bf16.mxu0 %v3915
        %4009 = vmatpush1.bf16.msra.mxu0 %v3914
        %4010 = vmatprep.subr.bf16.mxu0 %v3897
        %4011 = vmatpush1.bf16.msra.mxu0 %v3896
        %4012 = vmatprep.subr.bf16.mxu0 0
        %4013 = vmatpush2.bf16.msra.mxu0 0
        %4014 = vmatprep.subr.bf16.mxu0 0
        %4015 = vmatpush2.bf16.msra.mxu0 0
        %4016 = vmatprep.subr.bf16.mxu0 0
        %4017 = vmatpush2.bf16.msra.mxu0 0
        %4018 = vmatprep.subr.bf16.mxu0 0
        %4019 = vmatpush2.bf16.msra.mxu0 0
        %4020 = vmatprep.subr.bf16.mxu0 0
        %4021 = vmatpush2.bf16.msra.mxu0 0
        %4022 = vmatprep.subr.bf16.mxu0 0
        %4023 = vmatpush2.bf16.msra.mxu0 0
        %4024 = vmatprep.subr.bf16.mxu0 0
        %4025 = vmatpush2.bf16.msra.mxu0 0
        %4026 = vmatprep.subr.bf16.mxu0 %v3977
        %4027 = vmatpush2.bf16.msra.mxu0 %v3976
        %4028 = vmatprep.mubr.bf16.mxu0 %v3994
        %4029 = vmatmul.mubr.bf16.gmra.mxu0 %v3990
        %v4030 = vpop.f32.mrf.mxu0
        %v4031 = vadd.f32 %v3981, %v4030
        %v4032 = vpop.f32.mrf.mxu0
        %v4033 = vadd.f32 %v3981, %v4032
        %v4034 = vpop.f32.mrf.mxu0
        %v4035 = vpop.f32.mrf.mxu0
        %4036 = vdwg.mxu0
        %v4039 = vcombine.low %v4031, %v4033
        %4041 = vst [vmem:[%s470] sm:$0x77] %v4039
        %v4042 = vld [vmem:[%s559] sm:$0x3]
        %v4044 = vlaneseq
        %v4045 = vshrl.u32 %v4044, 7
        %v4046 = vsub.s32 0, %v4045
        %v4047 = vrot.slane %v4042, %v4046
        %v4048 = vlaneseq
        %v4049 = vshrl.u32 %v4048, 7
        %v4050 = vsub.s32 1, %v4049
        %v4051 = vrot.slane %v4042, %v4050
        %v4054 = vmul.f32 %v3908, %v4047
        %v4055 = vmul.f32 %v3906, %v4051
        %v4056 = vmul.f32 %v3909, %v4047
        %v4057 = vmul.f32 %v3907, %v4051
        %v4058 = vpack.c.bf16 %v4056, %v4054
        %v4059 = vpack.c.bf16 %v4057, %v4055
        %v4060 = vmul.f32 %v3926, %v4047
        %v4061 = vmul.f32 %v3924, %v4051
        %v4062 = vmul.f32 %v3927, %v4047
        %v4063 = vmul.f32 %v3925, %v4051
        %v4064 = vpack.c.bf16 %v4062, %v4060
        %v4065 = vpack.c.bf16 %v4063, %v4061
        %4066 = vrot.lane.b32.xlu0 %v3860, 15
        %v4067 = vpop.permute.xlu0 %4066
        %4068 = vrot.lane.b32.xlu0 %v3864, 15
        %v4069 = vpop.permute.xlu0 %4068
        %4070 = vrot.lane.b32.xlu0 %v3862, 15
        %v4071 = vpop.permute.xlu0 %4070
        %4072 = vrot.lane.b32.xlu0 %v3866, 15
        %v4073 = vpop.permute.xlu0 %4072
        %v4074 = vsel %vm586, %v4067, %v4071
        %v4075 = vsel %vm586, %v4069, %v4073
        %v4076 = vsel %vm586, %v4071, %v4067
        %v4077 = vsel %vm586, %v4073, %v4069
        %v4078 = vld [vmem:[%s591] sm:$0x3]
        %v4080 = vlaneseq
        %v4081 = vshrl.u32 %v4080, 7
        %v4082 = vsub.s32 0, %v4081
        %v4083 = vrot.slane %v4078, %v4082
        %v4084 = vlaneseq
        %v4085 = vshrl.u32 %v4084, 7
        %v4086 = vsub.s32 1, %v4085
        %v4087 = vrot.slane %v4078, %v4086
        %v4090 = vmul.f32 %v4076, %v4083
        %v4091 = vmul.f32 %v4074, %v4087
        %v4092 = vmul.f32 %v4077, %v4083
        %v4093 = vmul.f32 %v4075, %v4087
        %v4094 = vpack.c.bf16 %v4092, %v4090
        %v4095 = vpack.c.bf16 %v4093, %v4091
        %4096 = vrot.lane.b32.xlu0 %v3840, 127
        %v4097 = vpop.permute.xlu0 %4096
        %4098 = vrot.lane.b32.xlu0 %v3844, 127
        %v4099 = vpop.permute.xlu0 %4098
        %4100 = vrot.lane.b32.xlu0 %v3842, 127
        %v4101 = vpop.permute.xlu0 %4100
        %4102 = vrot.lane.b32.xlu0 %v3846, 127
        %v4103 = vpop.permute.xlu0 %4102
        %v4104 = vsel %vm652, %v4097, %v4101
        %v4105 = vsel %vm652, %v4099, %v4103
        %v4106 = vsel %vm652, %v4101, %v4097
        %v4107 = vsel %vm652, %v4103, %v4099
        %v4108 = vld [vmem:[%s657] sm:$0x3]
        %v4110 = vlaneseq
        %v4111 = vshrl.u32 %v4110, 7
        %v4112 = vsub.s32 0, %v4111
        %v4113 = vrot.slane %v4108, %v4112
        %v4114 = vlaneseq
        %v4115 = vshrl.u32 %v4114, 7
        %v4116 = vsub.s32 1, %v4115
        %v4117 = vrot.slane %v4108, %v4116
        %v4120 = vmul.f32 %v4104, %v4113
        %v4121 = vmul.f32 %v4106, %v4117
        %v4122 = vmul.f32 %v4105, %v4113
        %v4123 = vmul.f32 %v4107, %v4117
        %v4124 = vpack.c.bf16 %v4122, %v4120
        %v4125 = vpack.c.bf16 %v4123, %v4121
        %4126 = vrot.lane.b32.xlu0 %v3860, 127
        %v4127 = vpop.permute.xlu0 %4126
        %4128 = vrot.lane.b32.xlu0 %v3864, 127
        %v4129 = vpop.permute.xlu0 %4128
        %4130 = vrot.lane.b32.xlu0 %v3862, 127
        %v4131 = vpop.permute.xlu0 %4130
        %4132 = vrot.lane.b32.xlu0 %v3866, 127
        %v4133 = vpop.permute.xlu0 %4132
        %v4134 = vsel %vm652, %v4127, %v4131
        %v4135 = vsel %vm652, %v4129, %v4133
        %v4136 = vsel %vm652, %v4131, %v4127
        %v4137 = vsel %vm652, %v4133, %v4129
        %v4138 = vmul.f32 %v4134, %v4113
        %v4139 = vmul.f32 %v4136, %v4117
        %v4140 = vmul.f32 %v4135, %v4113
        %v4141 = vmul.f32 %v4137, %v4117
        %v4142 = vpack.c.bf16 %v4140, %v4138
        %v4143 = vpack.c.bf16 %v4141, %v4139
        %4144 = vmatprep.subr.bf16.mxu0 %v3977
        %4145 = vmatpush1.bf16.msra.mxu0 %v3976
        %4146 = vmatprep.subr.bf16.mxu0 %v3975
        %4147 = vmatpush1.bf16.msra.mxu0 %v3974
        %4148 = vmatprep.subr.bf16.mxu0 %v4125
        %4149 = vmatpush1.bf16.msra.mxu0 %v4124
        %4150 = vmatprep.subr.bf16.mxu0 %v3955
        %4151 = vmatpush1.bf16.msra.mxu0 %v3954
        %4152 = vmatprep.subr.bf16.mxu0 %v3953
        %4153 = vmatpush1.bf16.msra.mxu0 %v3952
        %4154 = vmatprep.subr.bf16.mxu0 %v4095
        %4155 = vmatpush1.bf16.msra.mxu0 %v4094
        %4156 = vmatprep.subr.bf16.mxu0 %v4065
        %4157 = vmatpush1.bf16.msra.mxu0 %v4064
        %4158 = vmatprep.subr.bf16.mxu0 %v4059
        %4159 = vmatpush1.bf16.msra.mxu0 %v4058
        %4160 = vmatprep.subr.bf16.mxu0 0
        %4161 = vmatpush2.bf16.msra.mxu0 0
        %4162 = vmatprep.subr.bf16.mxu0 0
        %4163 = vmatpush2.bf16.msra.mxu0 0
        %4164 = vmatprep.subr.bf16.mxu0 0
        %4165 = vmatpush2.bf16.msra.mxu0 0
        %4166 = vmatprep.subr.bf16.mxu0 0
        %4167 = vmatpush2.bf16.msra.mxu0 0
        %4168 = vmatprep.subr.bf16.mxu0 0
        %4169 = vmatpush2.bf16.msra.mxu0 0
        %4170 = vmatprep.subr.bf16.mxu0 0
        %4171 = vmatpush2.bf16.msra.mxu0 0
        %4172 = vmatprep.subr.bf16.mxu0 0
        %4173 = vmatpush2.bf16.msra.mxu0 0
        %4174 = vmatprep.subr.bf16.mxu0 %v4143
        %4175 = vmatpush2.bf16.msra.mxu0 %v4142
        %4176 = vmatprep.mubr.bf16.mxu0 %v3994
        %4177 = vmatmul.mubr.bf16.gmra.mxu0 %v3990
        %v4178 = vpop.f32.mrf.mxu0
        %v4179 = vadd.f32 %v3981, %v4178
        %v4180 = vpop.f32.mrf.mxu0
        %v4181 = vadd.f32 %v3981, %v4180
        %v4182 = vpop.f32.mrf.mxu0
        %v4183 = vpop.f32.mrf.mxu0
        %4184 = vdwg.mxu0
        %v4187 = vcombine.low %v4179, %v4181
        %s4189 = scalar_lea.vmem %s470, 8
        %4190 = vst [vmem:[%s4189] sm:$0x77] %v4187
        %v4191 = vld [vmem:[%s623] sm:$0x3]
        %v4193 = vlaneseq
        %v4194 = vshrl.u32 %v4193, 7
        %v4195 = vsub.s32 0, %v4194
        %v4196 = vrot.slane %v4191, %v4195
        %v4197 = vlaneseq
        %v4198 = vshrl.u32 %v4197, 7
        %v4199 = vsub.s32 1, %v4198
        %v4200 = vrot.slane %v4191, %v4199
        %v4203 = vmul.f32 %v3944, %v4196
        %v4204 = vmul.f32 %v3942, %v4200
        %v4205 = vmul.f32 %v3945, %v4196
        %v4206 = vmul.f32 %v3943, %v4200
        %v4207 = vpack.c.bf16 %v4205, %v4203
        %v4208 = vpack.c.bf16 %v4206, %v4204
        %v4209 = vmul.f32 %v3966, %v4196
        %v4210 = vmul.f32 %v3964, %v4200
        %v4211 = vmul.f32 %v3967, %v4196
        %v4212 = vmul.f32 %v3965, %v4200
        %v4213 = vpack.c.bf16 %v4211, %v4209
        %v4214 = vpack.c.bf16 %v4212, %v4210
        %4215 = vrot.lane.b32.xlu0 %v3850, 113
        %v4216 = vpop.permute.xlu0 %4215
        %4217 = vrot.lane.b32.xlu0 %v3854, 113
        %v4218 = vpop.permute.xlu0 %4217
        %4219 = vrot.lane.b32.xlu0 %v3852, 113
        %v4220 = vpop.permute.xlu0 %4219
        %4221 = vrot.lane.b32.xlu0 %v3856, 113
        %v4222 = vpop.permute.xlu0 %4221
        %v4223 = vsel %vm684, %v4216, %v4220
        %v4224 = vsel %vm684, %v4218, %v4222
        %v4225 = vsel %vm684, %v4220, %v4216
        %v4226 = vsel %vm684, %v4222, %v4218
        %v4227 = vld [vmem:[%s689] sm:$0x3]
        %v4229 = vlaneseq
        %v4230 = vshrl.u32 %v4229, 7
        %v4231 = vsub.s32 0, %v4230
        %v4232 = vrot.slane %v4227, %v4231
        %v4233 = vlaneseq
        %v4234 = vshrl.u32 %v4233, 7
        %v4235 = vsub.s32 1, %v4234
        %v4236 = vrot.slane %v4227, %v4235
        %v4239 = vmul.f32 %v4223, %v4232
        %v4240 = vmul.f32 %v4225, %v4236
        %v4241 = vmul.f32 %v4224, %v4232
        %v4242 = vmul.f32 %v4226, %v4236
        %v4243 = vpack.c.bf16 %v4241, %v4239
        %v4244 = vpack.c.bf16 %v4242, %v4240
        %4245 = vrot.lane.b32.xlu0 %v3840, 112
        %v4246 = vpop.permute.xlu0 %4245
        %4247 = vrot.lane.b32.xlu0 %v3844, 112
        %v4248 = vpop.permute.xlu0 %4247
        %4249 = vrot.lane.b32.xlu0 %v3842, 112
        %v4250 = vpop.permute.xlu0 %4249
        %4251 = vrot.lane.b32.xlu0 %v3846, 112
        %v4252 = vpop.permute.xlu0 %4251
        %v4253 = vsel %vm716, %v4246, %v4250
        %v4254 = vsel %vm716, %v4248, %v4252
        %v4255 = vsel %vm716, %v4250, %v4246
        %v4256 = vsel %vm716, %v4252, %v4248
        %v4257 = vld [vmem:[%s721] sm:$0x3]
        %v4259 = vlaneseq
        %v4260 = vshrl.u32 %v4259, 7
        %v4261 = vsub.s32 0, %v4260
        %v4262 = vrot.slane %v4257, %v4261
        %v4263 = vlaneseq
        %v4264 = vshrl.u32 %v4263, 7
        %v4265 = vsub.s32 1, %v4264
        %v4266 = vrot.slane %v4257, %v4265
        %v4269 = vmul.f32 %v4253, %v4262
        %v4270 = vmul.f32 %v4255, %v4266
        %v4271 = vmul.f32 %v4254, %v4262
        %v4272 = vmul.f32 %v4256, %v4266
        %v4273 = vpack.c.bf16 %v4271, %v4269
        %v4274 = vpack.c.bf16 %v4272, %v4270
        %4275 = vrot.lane.b32.xlu0 %v3850, 112
        %v4276 = vpop.permute.xlu0 %4275
        %4277 = vrot.lane.b32.xlu0 %v3854, 112
        %v4278 = vpop.permute.xlu0 %4277
        %4279 = vrot.lane.b32.xlu0 %v3852, 112
        %v4280 = vpop.permute.xlu0 %4279
        %4281 = vrot.lane.b32.xlu0 %v3856, 112
        %v4282 = vpop.permute.xlu0 %4281
        %v4283 = vsel %vm716, %v4276, %v4280
        %v4284 = vsel %vm716, %v4278, %v4282
        %v4285 = vsel %vm716, %v4280, %v4276
        %v4286 = vsel %vm716, %v4282, %v4278
        %v4287 = vmul.f32 %v4283, %v4262
        %v4288 = vmul.f32 %v4285, %v4266
        %v4289 = vmul.f32 %v4284, %v4262
        %v4290 = vmul.f32 %v4286, %v4266
        %v4291 = vpack.c.bf16 %v4289, %v4287
        %v4292 = vpack.c.bf16 %v4290, %v4288
        %4293 = vmatprep.subr.bf16.mxu0 %v4274
        %4294 = vmatpush1.bf16.msra.mxu0 %v4273
        %4295 = vmatprep.subr.bf16.mxu0 %v4244
        %4296 = vmatpush1.bf16.msra.mxu0 %v4243
        %4297 = vmatprep.subr.bf16.mxu0 %v3977
        %4298 = vmatpush1.bf16.msra.mxu0 %v3976
        %4299 = vmatprep.subr.bf16.mxu0 %v3975
        %4300 = vmatpush1.bf16.msra.mxu0 %v3974
        %4301 = vmatprep.subr.bf16.mxu0 %v4214
        %4302 = vmatpush1.bf16.msra.mxu0 %v4213
        %4303 = vmatprep.subr.bf16.mxu0 %v3955
        %4304 = vmatpush1.bf16.msra.mxu0 %v3954
        %4305 = vmatprep.subr.bf16.mxu0 %v3953
        %4306 = vmatpush1.bf16.msra.mxu0 %v3952
        %4307 = vmatprep.subr.bf16.mxu0 %v4208
        %4308 = vmatpush1.bf16.msra.mxu0 %v4207
        %4309 = vmatprep.subr.bf16.mxu0 0
        %4310 = vmatpush2.bf16.msra.mxu0 0
        %4311 = vmatprep.subr.bf16.mxu0 0
        %4312 = vmatpush2.bf16.msra.mxu0 0
        %4313 = vmatprep.subr.bf16.mxu0 0
        %4314 = vmatpush2.bf16.msra.mxu0 0
        %4315 = vmatprep.subr.bf16.mxu0 0
        %4316 = vmatpush2.bf16.msra.mxu0 0
        %4317 = vmatprep.subr.bf16.mxu0 0
        %4318 = vmatpush2.bf16.msra.mxu0 0
        %4319 = vmatprep.subr.bf16.mxu0 0
        %4320 = vmatpush2.bf16.msra.mxu0 0
        %4321 = vmatprep.subr.bf16.mxu0 0
        %4322 = vmatpush2.bf16.msra.mxu0 0
        %4323 = vmatprep.subr.bf16.mxu0 %v4292
        %4324 = vmatpush2.bf16.msra.mxu0 %v4291
        %4325 = vmatprep.mubr.bf16.mxu0 %v3994
        %4326 = vmatmul.mubr.bf16.gmra.mxu0 %v3990
        %v4327 = vpop.f32.mrf.mxu0
        %v4328 = vadd.f32 %v3981, %v4327
        %v4329 = vpop.f32.mrf.mxu0
        %v4330 = vadd.f32 %v3981, %v4329
        %v4331 = vpop.f32.mrf.mxu0
        %v4332 = vpop.f32.mrf.mxu0
        %4333 = vdwg.mxu0
        %v4336 = vcombine.low %v4328, %v4330
        %s4338 = scalar_lea.vmem %s470, 16
        %4339 = vst [vmem:[%s4338] sm:$0x77] %v4336
        %v4340 = vld [vmem:[%s657] sm:$0x3]
        %v4342 = vlaneseq
        %v4343 = vshrl.u32 %v4342, 7
        %v4344 = vsub.s32 0, %v4343
        %v4345 = vrot.slane %v4340, %v4344
        %v4346 = vlaneseq
        %v4347 = vshrl.u32 %v4346, 7
        %v4348 = vsub.s32 1, %v4347
        %v4349 = vrot.slane %v4340, %v4348
        %v4352 = vmul.f32 %v4104, %v4345
        %v4353 = vmul.f32 %v4106, %v4349
        %v4354 = vmul.f32 %v4105, %v4345
        %v4355 = vmul.f32 %v4107, %v4349
        %v4356 = vpack.c.bf16 %v4354, %v4352
        %v4357 = vpack.c.bf16 %v4355, %v4353
        %v4358 = vmul.f32 %v4134, %v4345
        %v4359 = vmul.f32 %v4136, %v4349
        %v4360 = vmul.f32 %v4135, %v4345
        %v4361 = vmul.f32 %v4137, %v4349
        %v4362 = vpack.c.bf16 %v4360, %v4358
        %v4363 = vpack.c.bf16 %v4361, %v4359
        %v4364 = vld [vmem:[%s721] sm:$0x3]
        %v4366 = vlaneseq
        %v4367 = vshrl.u32 %v4366, 7
        %v4368 = vsub.s32 0, %v4367
        %v4369 = vrot.slane %v4364, %v4368
        %v4370 = vlaneseq
        %v4371 = vshrl.u32 %v4370, 7
        %v4372 = vsub.s32 1, %v4371
        %v4373 = vrot.slane %v4364, %v4372
        %v4376 = vmul.f32 %v4253, %v4369
        %v4377 = vmul.f32 %v4255, %v4373
        %v4378 = vmul.f32 %v4254, %v4369
        %v4379 = vmul.f32 %v4256, %v4373
        %v4380 = vpack.c.bf16 %v4378, %v4376
        %v4381 = vpack.c.bf16 %v4379, %v4377
        %v4382 = vmul.f32 %v4283, %v4369
        %v4383 = vmul.f32 %v4285, %v4373
        %v4384 = vmul.f32 %v4284, %v4369
        %v4385 = vmul.f32 %v4286, %v4373
        %v4386 = vpack.c.bf16 %v4384, %v4382
        %v4387 = vpack.c.bf16 %v4385, %v4383
        %4388 = vrot.lane.b32.xlu0 %v3840, 111
        %v4389 = vpop.permute.xlu0 %4388
        %4390 = vrot.lane.b32.xlu0 %v3844, 111
        %v4391 = vpop.permute.xlu0 %4390
        %4392 = vrot.lane.b32.xlu0 %v3842, 111
        %v4393 = vpop.permute.xlu0 %4392
        %4394 = vrot.lane.b32.xlu0 %v3846, 111
        %v4395 = vpop.permute.xlu0 %4394
        %v4396 = vsel %vm748, %v4389, %v4393
        %v4397 = vsel %vm748, %v4391, %v4395
        %v4398 = vsel %vm748, %v4393, %v4389
        %v4399 = vsel %vm748, %v4395, %v4391
        %v4400 = vld [vmem:[%s753] sm:$0x3]
        %v4402 = vlaneseq
        %v4403 = vshrl.u32 %v4402, 7
        %v4404 = vsub.s32 0, %v4403
        %v4405 = vrot.slane %v4400, %v4404
        %v4406 = vlaneseq
        %v4407 = vshrl.u32 %v4406, 7
        %v4408 = vsub.s32 1, %v4407
        %v4409 = vrot.slane %v4400, %v4408
        %v4412 = vmul.f32 %v4396, %v4405
        %v4413 = vmul.f32 %v4398, %v4409
        %v4414 = vmul.f32 %v4397, %v4405
        %v4415 = vmul.f32 %v4399, %v4409
        %v4416 = vpack.c.bf16 %v4414, %v4412
        %v4417 = vpack.c.bf16 %v4415, %v4413
        %4418 = vmatprep.subr.bf16.mxu0 %v4387
        %4419 = vmatpush1.bf16.msra.mxu0 %v4386
        %4420 = vmatprep.subr.bf16.mxu0 %v4381
        %4421 = vmatpush1.bf16.msra.mxu0 %v4380
        %4422 = vmatprep.subr.bf16.mxu0 %v4363
        %4423 = vmatpush1.bf16.msra.mxu0 %v4362
        %4424 = vmatprep.subr.bf16.mxu0 %v3977
        %4425 = vmatpush1.bf16.msra.mxu0 %v3976
        %4426 = vmatprep.subr.bf16.mxu0 %v3975
        %4427 = vmatpush1.bf16.msra.mxu0 %v3974
        %4428 = vmatprep.subr.bf16.mxu0 %v4357
        %4429 = vmatpush1.bf16.msra.mxu0 %v4356
        %4430 = vmatprep.subr.bf16.mxu0 %v3955
        %4431 = vmatpush1.bf16.msra.mxu0 %v3954
        %4432 = vmatprep.subr.bf16.mxu0 %v3953
        %4433 = vmatpush1.bf16.msra.mxu0 %v3952
        %4434 = vmatprep.subr.bf16.mxu0 0
        %4435 = vmatpush2.bf16.msra.mxu0 0
        %4436 = vmatprep.subr.bf16.mxu0 0
        %4437 = vmatpush2.bf16.msra.mxu0 0
        %4438 = vmatprep.subr.bf16.mxu0 0
        %4439 = vmatpush2.bf16.msra.mxu0 0
        %4440 = vmatprep.subr.bf16.mxu0 0
        %4441 = vmatpush2.bf16.msra.mxu0 0
        %4442 = vmatprep.subr.bf16.mxu0 0
        %4443 = vmatpush2.bf16.msra.mxu0 0
        %4444 = vmatprep.subr.bf16.mxu0 0
        %4445 = vmatpush2.bf16.msra.mxu0 0
        %4446 = vmatprep.subr.bf16.mxu0 0
        %4447 = vmatpush2.bf16.msra.mxu0 0
        %4448 = vmatprep.subr.bf16.mxu0 %v4417
        %4449 = vmatpush2.bf16.msra.mxu0 %v4416
        %4450 = vmatprep.mubr.bf16.mxu0 %v3994
        %4451 = vmatmul.mubr.bf16.gmra.mxu0 %v3990
        %v4452 = vpop.f32.mrf.mxu0
        %v4453 = vadd.f32 %v3981, %v4452
        %v4454 = vpop.f32.mrf.mxu0
        %v4455 = vadd.f32 %v3981, %v4454
        %v4456 = vpop.f32.mrf.mxu0
        %v4457 = vpop.f32.mrf.mxu0
        %4458 = vdwg.mxu0
        %v4461 = vcombine.low %v4453, %v4455
        %s4463 = scalar_lea.vmem %s470, 24
        %4464 = vst [vmem:[%s4463] sm:$0x77] %v4461
        %p4465 = scmp.lt.s32.totalorder %s26, 1
        %s4466 = scalar_select %p4465, %s26, 1
        %s4467 = smul.addr %s4466, 8
        %s4468 = smul.addr %s4467, 4
        %s4469 = scalar_lea.vmem %s12, %s4468
        // Predicated region
        $region85: #{rcan_forward.1} parent=67 // pred_check
          %p4470 = pneg %p301
        $region86: #{rcan_forward.1} parent=67 // pred_check_branch
          %4472 = sbr.rel (%p4470) target = $region88
        $region87: #{rcan_forward.1} parent=67 // pred_region
          _
        $region88: #{rcan_forward.1} parent=67 // pred_fallthru
          _
      $region68: #{rcan_forward.1} parent=5 // pred_fallthru
        _
      %p4473 = scmp.le.s32.totalorder 2, %s21
      // Predicated region
      $region89: #{rcan_forward.1} parent=5 // pred_check
        %p4474 = pneg %p4473
      $region90: #{rcan_forward.1} parent=5 // pred_check_branch
        %4476 = sbr.rel (%p4474) target = $region92
      $region91: #{rcan_forward.1} parent=5 // pred_region
        %s4477 = ssub.s32 %s21, 2
        // Predicated region
        $region93: #{rcan_forward.1} parent=91 // pred_check
          %p4478 = pneg %p307
        $region94: #{rcan_forward.1} parent=91 // pred_check_branch
          %4480 = sbr.rel (%p4478) target = $region96
        $region95: #{rcan_forward.1} parent=91 // pred_region
          %p4481 = scmp.lt.s32.totalorder %s27, 1
          %s4482 = scalar_select %p4481, %s27, 1
          %s4483 = smul.addr %s4482, 8
          %s4484 = smul.addr %s4483, 4
          %s4485 = scalar_lea.vmem %s12, %s4484
        $region96: #{rcan_forward.1} parent=91 // pred_fallthru
          _
      $region92: #{rcan_forward.1} parent=5 // pred_fallthru
        _
    $region6: #{rcan_forward.1} parent=1 // loop_footer
      %s25 = sadd.s32 1, %s21
    $region7: #{rcan_forward.1} parent=1 // loop_footer_branch
      %20 = sbr.rel target = $region3
    $region8: #{rcan_forward.1} parent=1 // loop_exit
      _
    %4486 = vsyncpa [#allocation3], 1
    %s4487 = scalar_lea.sflag [#allocation3], 1
    %4488 = vsyncpa %s4487, 1
    %4489 = vsyncpa [#allocation5], 1
    %4490 = vsyncpa [#allocation8], 1

</llo_original>
